<compile_context>
chip_gen: v6e
topology: v6e:2x2x1
jax: 0.10.0
libtpu: 0.0.40
codegen_flags: <defaults>
</compile_context>

<pallas_src>
import jax
import jax.numpy as jnp
from jax.experimental import pallas as pl
from jax.experimental.pallas import tpu as pltpu


# ----------------------------------------------------------------------------
# GroupNorm group-count rule copied from Conv3x3GNReLU.__init__
# ----------------------------------------------------------------------------
def _num_groups(out_channels: int) -> int:
    num_groups = 32
    if out_channels % num_groups != 0 or out_channels == num_groups:
        num_groups = out_channels // 2
    return num_groups


def _group_onehots(c: int, g: int):
    """One-hot group<->channel matrices used for per-group pooling."""
    gc = (jnp.arange(g)[:, None] ==
          (jnp.arange(c)[None, :] // (c // g))).astype(jnp.float32)   # (G, C)
    return gc.T, gc                                                   # (C, G), (G, C)


def _chunk_rows(h: int, wd: int) -> int:
    """Largest power-of-two row chunk with <= ~2048 output pixels per chunk."""
    hc = h
    while hc % 2 == 0 and hc * wd > 2048:
        hc //= 2
    return hc


# ----------------------------------------------------------------------------
# Fused DecoderBlock kernel:
#   conv3x3(no bias)+GN+ReLU -> VMEM scratch -> conv3x3(no bias)+GN+ReLU -> HBM
# One grid step per batch image.  bf16 MXU operands, f32 statistics.
# ----------------------------------------------------------------------------
def _block_kernel(x_ref, w1_ref, g1_ref, b1_ref, cg1_ref, gc1_ref,
                  w2_ref, g2_ref, b2_ref, cg2_ref, gc2_ref,
                  out_ref, mid_ref):
    _, h, wd, cout = out_ref.shape
    cin = x_ref.shape[3]
    cmid = mid_ref.shape[2]
    hc = _chunk_rows(h, wd)
    nc = h // hc

    w1 = w1_ref[...]
    w2 = w2_ref[...]

    # Re-zero only the 1-pixel border of the mid scratch (it is conv2's zero
    # padding); the interior is fully overwritten every grid step.  Doing it
    # every step keeps the kernel correct under megacore "parallel" sharding.
    mid_ref[0:1] = jnp.zeros((1, wd + 2, cmid), mid_ref.dtype)
    mid_ref[h + 1:h + 2] = jnp.zeros((1, wd + 2, cmid), mid_ref.dtype)
    mid_ref[:, 0:1, :] = jnp.zeros((h + 2, 1, cmid), mid_ref.dtype)
    mid_ref[:, wd + 1:wd + 2, :] = jnp.zeros((h + 2, 1, cmid), mid_ref.dtype)

    def im2col_dot(read_tap, w, c_in):
        # read_tap(dy, dx) -> (hc, wd, c_in) bf16 tap slab; one matmul per chunk.
        taps = [read_tap(dy, dx) for dy in range(3) for dx in range(3)]
        lhs = jnp.concatenate(taps, axis=2).reshape(hc * wd, 9 * c_in)
        return jnp.dot(lhs, w, preferred_element_type=jnp.float32)

    def gn_affine(s, ss, cnt, gamma_ref, beta_ref, cg_ref, gc_ref):
        # single-pass GroupNorm statistics -> fused per-channel scale / shift
        sg = jnp.dot(s, cg_ref[...], preferred_element_type=jnp.float32)    # (1,G)
        ssg = jnp.dot(ss, cg_ref[...], preferred_element_type=jnp.float32)  # (1,G)
        mean_g = sg / cnt
        var_g = jnp.maximum(ssg / cnt - mean_g * mean_g, 0.0)
        inv_g = jax.lax.rsqrt(var_g + 1e-5)
        mean_c = jnp.dot(mean_g, gc_ref[...], preferred_element_type=jnp.float32)
        inv_c = jnp.dot(inv_g, gc_ref[...], preferred_element_type=jnp.float32)
        scale = inv_c * gamma_ref[...]
        shift = beta_ref[...] - mean_c * scale
        return scale, shift                                                # (1, C)

    # -------- conv1: chunked im2col matmul, stats, pre-norm store into mid ---
    def conv1_chunk(i, carry):
        s, ss = carry
        r0 = i * hc
        acc = im2col_dot(
            lambda dy, dx: x_ref[0, pl.ds(r0 + dy, hc), dx:dx + wd, :],
            w1, cin)                                        # (hc*wd, cmid) f32
        s = s + jnp.sum(acc, axis=0, keepdims=True)
        ss = ss + jnp.sum(acc * acc, axis=0, keepdims=True)
        mid_ref[pl.ds(r0 + 1, hc), 1:wd + 1, :] = (
            acc.reshape(hc, wd, cmid).astype(mid_ref.dtype))
        return s, ss

    zero_c1 = jnp.zeros((1, cmid), jnp.float32)
    s1, ss1 = jax.lax.fori_loop(0, nc, conv1_chunk, (zero_c1, zero_c1))
    cnt1 = jnp.float32(h * wd * (cmid // gc1_ref.shape[0]))
    scale1, shift1 = gn_affine(s1, ss1, cnt1, g1_ref, b1_ref, cg1_ref, gc1_ref)

    def norm1_chunk(i, carry):                              # normalize mid in place
        r0 = i * hc
        v = mid_ref[pl.ds(r0 + 1, hc), 1:wd + 1, :].astype(jnp.float32)
        y = jnp.maximum(v * scale1 + shift1, 0.0)
        mid_ref[pl.ds(r0 + 1, hc), 1:wd + 1, :] = y.astype(mid_ref.dtype)
        return carry

    jax.lax.fori_loop(0, nc, norm1_chunk, 0)

    # -------- conv2: chunked im2col matmul, stats, pre-norm store into out ---
    def conv2_chunk(i, carry):
        s, ss = carry
        r0 = i * hc
        acc = im2col_dot(
            lambda dy, dx: mid_ref[pl.ds(r0 + dy, hc), dx:dx + wd, :],
            w2, cmid)                                       # (hc*wd, cout) f32
        s = s + jnp.sum(acc, axis=0, keepdims=True)
        ss = ss + jnp.sum(acc * acc, axis=0, keepdims=True)
        out_ref[0, pl.ds(r0, hc), :, :] = (
            acc.reshape(hc, wd, cout).astype(out_ref.dtype))
        return s, ss

    zero_c2 = jnp.zeros((1, cout), jnp.float32)
    s2, ss2 = jax.lax.fori_loop(0, nc, conv2_chunk, (zero_c2, zero_c2))
    cnt2 = jnp.float32(h * wd * (cout // gc2_ref.shape[0]))
    scale2, shift2 = gn_affine(s2, ss2, cnt2, g2_ref, b2_ref, cg2_ref, gc2_ref)

    def norm2_chunk(i, carry):                              # normalize out in place
        r0 = i * hc
        v = out_ref[0, pl.ds(r0, hc), :, :].astype(jnp.float32)
        y = jnp.maximum(v * scale2 + shift2, 0.0)
        out_ref[0, pl.ds(r0, hc), :, :] = y.astype(out_ref.dtype)
        return carry

    jax.lax.fori_loop(0, nc, norm2_chunk, 0)


def decoder_block(p, x, up_sample):
    """x: (N, H, W, Cin) bf16 -> (N, H', W', Cout) bf16 (H' = 2H if up_sample)."""
    if up_sample:
        # F.interpolate(scale_factor=2, mode='nearest') == index i // 2 == repeat.
        # TODO(synk): kept as a bf16 XLA op; in-kernel W-repeat needs a
        # lane/sublane-merging reshape that is not worth the lowering risk.
        x = jnp.repeat(jnp.repeat(x, 2, axis=1), 2, axis=2)
    n, h, wd, cin = x.shape
    cmid = p["w1"].shape[-1]
    cout = p["w2"].shape[-1]
    g1, g2 = _num_groups(cmid), _num_groups(cout)
    cg1, gc1 = _group_onehots(cmid, g1)
    cg2, gc2 = _group_onehots(cout, g2)
    xp = jnp.pad(x, ((0, 0), (1, 1), (1, 1), (0, 0)))

    return pl.pallas_call(
        _block_kernel,
        out_shape=jax.ShapeDtypeStruct((n, h, wd, cout), jnp.bfloat16),
        grid_spec=pltpu.PrefetchScalarGridSpec(
            num_scalar_prefetch=0,
            grid=(n,),
            in_specs=[
                pl.BlockSpec((1, h + 2, wd + 2, cin), lambda b: (b, 0, 0, 0)),
                pl.BlockSpec((9 * cin, cmid), lambda b: (0, 0)),
                pl.BlockSpec((1, cmid), lambda b: (0, 0)),
                pl.BlockSpec((1, cmid), lambda b: (0, 0)),
                pl.BlockSpec((cmid, g1), lambda b: (0, 0)),
                pl.BlockSpec((g1, cmid), lambda b: (0, 0)),
                pl.BlockSpec((9 * cmid, cout), lambda b: (0, 0)),
                pl.BlockSpec((1, cout), lambda b: (0, 0)),
                pl.BlockSpec((1, cout), lambda b: (0, 0)),
                pl.BlockSpec((cout, g2), lambda b: (0, 0)),
                pl.BlockSpec((g2, cout), lambda b: (0, 0)),
            ],
            out_specs=pl.BlockSpec((1, h, wd, cout), lambda b: (b, 0, 0, 0)),
            scratch_shapes=[pltpu.VMEM((h + 2, wd + 2, cmid), jnp.bfloat16)],
        ),
        compiler_params=pltpu.CompilerParams(
            dimension_semantics=("parallel",),
            vmem_limit_bytes=48 * 1024 * 1024),
    )(xp, p["w1"], p["gamma1"], p["beta1"], cg1, gc1,
      p["w2"], p["gamma2"], p["beta2"], cg2, gc2)


# ----------------------------------------------------------------------------
# Final 1x1 conv (with bias).  One whole-tile matmul, lane-dense (N,K,H*W) out.
# ----------------------------------------------------------------------------
def _final_kernel(x_ref, w_ref, b_ref, out_ref):
    # x_ref: (1, TR, W, Cin) bf16; w_ref: (K, Cin) bf16; b_ref: (K, 1) f32
    # out_ref: (1, K, TR*W) f32  -> lane-dense stores
    _, tr, wd, cin = x_ref.shape
    xt = x_ref[0].reshape(tr * wd, cin)
    y = jax.lax.dot_general(
        w_ref[...], xt,
        dimension_numbers=(((1,), (1,)), ((), ())),
        preferred_element_type=jnp.float32)                  # (K, TR*W)
    out_ref[0] = y + b_ref[...]


def final_conv(x, w_t, b):
    """1x1 conv + bias.  x: (N,H,W,Cin) bf16 -> logits (N,K,H,W) f32."""
    n, hh, ww, cin = x.shape
    k = w_t.shape[0]
    tr = hh
    if hh * ww * cin * 2 > 4 * 1024 * 1024:          # tile rows only when large
        for t in (128, 64, 32, 16, 8):
            if hh % t == 0 and (t * ww) % 128 == 0:
                tr = t
                break
    out = pl.pallas_call(
        _final_kernel,
        out_shape=jax.ShapeDtypeStruct((n, k, hh * ww), jnp.float32),
        grid_spec=pltpu.PrefetchScalarGridSpec(
            num_scalar_prefetch=0,
            grid=(n, hh // tr),
            in_specs=[
                pl.BlockSpec((1, tr, ww, cin), lambda nb, tb: (nb, tb, 0, 0)),
                pl.BlockSpec((k, cin), lambda nb, tb: (0, 0)),
                pl.BlockSpec((k, 1), lambda nb, tb: (0, 0)),
            ],
            out_specs=pl.BlockSpec((1, k, tr * ww), lambda nb, tb: (nb, 0, tb)),
        ),
        compiler_params=pltpu.CompilerParams(
            dimension_semantics=("parallel", "parallel")),
    )(x, w_t, b.reshape(k, 1))
    return out.reshape(n, k, hh, ww)


# ----------------------------------------------------------------------------
# Parameter construction (deterministic, synthetic — mirrors module __init__)
# ----------------------------------------------------------------------------
def init_decoder_params(key, num_classes, in_channels,
                        out_channels=(256, 128, 64, 32, 16)):
    keys = jax.random.split(key, 8)

    def conv_w(k, ci, co):
        w = jax.random.normal(k, (3, 3, ci, co), jnp.float32) * (1.0 / jnp.sqrt(9.0 * ci))
        return w.reshape(9 * ci, co).astype(jnp.bfloat16)    # im2col weight layout

    def block(k, ci, co):
        k1, k2 = jax.random.split(k)
        return {"w1": conv_w(k1, ci, co),
                "gamma1": jnp.ones((1, co), jnp.float32),
                "beta1": jnp.zeros((1, co), jnp.float32),
                "w2": conv_w(k2, co, co),
                "gamma2": jnp.ones((1, co), jnp.float32),
                "beta2": jnp.zeros((1, co), jnp.float32)}

    return {
        "center": block(keys[0], in_channels, in_channels),
        "layer1": block(keys[1], in_channels, out_channels[0]),
        "layer2": block(keys[2], out_channels[0], out_channels[1]),
        "layer3": block(keys[3], out_channels[1], out_channels[2]),
        "layer4": block(keys[4], out_channels[2], out_channels[3]),
        "layer5": block(keys[5], out_channels[3], out_channels[4]),
        "final": {
            "w_t": (jax.random.normal(keys[6], (num_classes, out_channels[4]),
                                      jnp.float32)
                    * (1.0 / jnp.sqrt(out_channels[4]))).astype(jnp.bfloat16),
            "b": jax.random.normal(keys[7], (num_classes,), jnp.float32) * 0.01,
        },
    }


# ----------------------------------------------------------------------------
# Decoder forward
# ----------------------------------------------------------------------------
def decoder_forward(params, x_nchw, size):
    """x_nchw: (N, Cin, H, W) f32 -> (N, num_classes, size, size) f32 (NCHW)."""
    x = jnp.transpose(x_nchw, (0, 2, 3, 1)).astype(jnp.bfloat16)   # NHWC bf16
    x = decoder_block(params["center"], x, up_sample=False)
    x = decoder_block(params["layer1"], x, up_sample=False)
    x = decoder_block(params["layer2"], x, up_sample=True)
    x = decoder_block(params["layer3"], x, up_sample=True)
    x = decoder_block(params["layer4"], x, up_sample=True)
    x = decoder_block(params["layer5"], x, up_sample=True)
    # The 1x1 conv (+bias) is per-pixel affine, so it commutes exactly with the
    # bilinear resize (interpolation weights sum to 1): apply it first so only
    # num_classes channels get resized; sigmoid stays after the resize.
    logits = final_conv(x, params["final"]["w_t"], params["final"]["b"])
    n, k = logits.shape[:2]
    # F.interpolate(mode='bilinear', align_corners=False) upsampling matches
    # jax.image.resize (half-pixel centers).  nn.Dropout2d is identity in eval.
    logits = jax.image.resize(logits, (n, k, size, size), method="bilinear")
    return jax.nn.sigmoid(logits)


# ----------------------------------------------------------------------------
# Pure-JAX references (sanity checks of the Pallas kernels)
# ----------------------------------------------------------------------------
def _ref_conv_gn_relu(x, w_flat, gamma, beta):
    cout = w_flat.shape[1]
    cin = w_flat.shape[0] // 9
    w = w_flat.astype(jnp.float32).reshape(3, 3, cin, cout)
    y = jax.lax.conv_general_dilated(
        x, w, window_strides=(1, 1), padding="SAME",
        dimension_numbers=("NHWC", "HWIO", "NHWC"), precision="highest")
    g = _num_groups(cout)
    n, h, wd, c = y.shape
    yg = y.reshape(n, h, wd, g, c // g)
    mean = yg.mean(axis=(1, 2, 4), keepdims=True)
    var = yg.var(axis=(1, 2, 4), keepdims=True)
    yn = ((yg - mean) / jnp.sqrt(var + 1e-5)).reshape(n, h, wd, c)
    return jnp.maximum(yn * gamma.reshape(1, 1, 1, c) + beta.reshape(1, 1, 1, c), 0.0)


def _ref_decoder_block(p, x, up_sample):
    if up_sample:
        x = jnp.repeat(jnp.repeat(x, 2, axis=1), 2, axis=2)
    y1 = _ref_conv_gn_relu(x.astype(jnp.float32), p["w1"], p["gamma1"], p["beta1"])
    y1 = y1.astype(jnp.bfloat16)                       # mirror the bf16 intermediate
    y2 = _ref_conv_gn_relu(y1.astype(jnp.float32), p["w2"], p["gamma2"], p["beta2"])
    return y2.astype(jnp.bfloat16)


def ref_decoder_forward(params, x_nchw, size):
    x = jnp.transpose(x_nchw, (0, 2, 3, 1)).astype(jnp.bfloat16)
    x = _ref_decoder_block(params["center"], x, False)
    x = _ref_decoder_block(params["layer1"], x, False)
    x = _ref_decoder_block(params["layer2"], x, True)
    x = _ref_decoder_block(params["layer3"], x, True)
    x = _ref_decoder_block(params["layer4"], x, True)
    x = _ref_decoder_block(params["layer5"], x, True)
    # Original op order: resize first, then 1x1 conv + bias, then sigmoid.
    n, _, _, c = x.shape
    xr = jax.image.resize(x.astype(jnp.float32), (n, size, size, c), method="bilinear")
    w = params["final"]["w_t"].astype(jnp.float32)
    y = jnp.einsum("nhwc,kc->nkhw", xr, w, precision="highest")
    y = y + params["final"]["b"].reshape(1, -1, 1, 1)
    return jax.nn.sigmoid(y)


if __name__ == "__main__":
    key = jax.random.PRNGKey(0)
    kp, kx, kb, kf = jax.random.split(key, 4)

    # ---- standalone check of the fused DecoderBlock kernel (upsample path) ----
    cin_t, cout_t = 16, 32
    kb1, kb2, kbx = jax.random.split(kb, 3)
    blk = {
        "w1": (jax.random.normal(kb1, (3, 3, cin_t, cout_t), jnp.float32) * 0.2
               ).reshape(9 * cin_t, cout_t).astype(jnp.bfloat16),
        "gamma1": jnp.linspace(0.5, 1.5, cout_t, dtype=jnp.float32).reshape(1, cout_t),
        "beta1": jnp.linspace(-0.2, 0.2, cout_t, dtype=jnp.float32).reshape(1, cout_t),
        "w2": (jax.random.normal(kb2, (3, 3, cout_t, cout_t), jnp.float32) * 0.2
               ).reshape(9 * cout_t, cout_t).astype(jnp.bfloat16),
        "gamma2": jnp.linspace(0.8, 1.2, cout_t, dtype=jnp.float32).reshape(1, cout_t),
        "beta2": jnp.linspace(-0.1, 0.1, cout_t, dtype=jnp.float32).reshape(1, cout_t),
    }
    xb = jax.random.normal(kbx, (2, 8, 8, cin_t), jnp.float32).astype(jnp.bfloat16)
    got_blk = jax.block_until_ready(decoder_block(blk, xb, up_sample=True))
    ref_blk = _ref_decoder_block(blk, xb, up_sample=True)
    assert got_blk.shape == (2, 16, 16, cout_t)
    err_blk = float(jnp.max(jnp.abs(got_blk.astype(jnp.float32)
                                    - ref_blk.astype(jnp.float32))))
    assert err_blk < 1e-1, f"block kernel mismatch vs reference: {err_blk}"

    # ---- standalone check of the final 1x1 conv kernel ----
    kf1, kf2, kf3 = jax.random.split(kf, 3)
    xf = jax.random.normal(kf1, (2, 64, 160, 16), jnp.float32).astype(jnp.bfloat16)
    wt = (jax.random.normal(kf2, (3, 16), jnp.float32) * 0.3).astype(jnp.bfloat16)
    bf = jax.random.normal(kf3, (3,), jnp.float32) * 0.1
    got_f = jax.block_until_ready(final_conv(xf, wt, bf))
    ref_f = (jnp.einsum("nhwc,kc->nkhw", xf.astype(jnp.float32),
                        wt.astype(jnp.float32), precision="highest")
             + bf.reshape(1, 3, 1, 1))
    err_f = float(jnp.max(jnp.abs(got_f - ref_f)))
    assert err_f < 1e-2, f"final kernel mismatch vs reference: {err_f}"

    # ---- full decoder forward (small, module-consistent shapes) ----
    batch, in_channels, spatial = 2, 64, 8
    num_classes, size = 3, 160
    params = init_decoder_params(kp, num_classes, in_channels)
    x = jax.random.normal(kx, (batch, in_channels, spatial, spatial), jnp.float32)

    out = jax.block_until_ready(decoder_forward(params, x, size))
    assert out.shape == (batch, num_classes, size, size)
    assert bool(jnp.all((out >= 0.0) & (out <= 1.0)))

    ref_out = ref_decoder_forward(params, x, size)
    err_e2e = float(jnp.max(jnp.abs(out - ref_out)))
    assert err_e2e < 1e-1, f"end-to-end mismatch vs reference: {err_e2e}"

    print("KERNEL_OK")
</pallas_src>

<mosaic_0001>
module attributes {stable_mosaic.version = 11 : i64} {
  func.func @_block_kernel(%arg0: i32, %arg1: memref<1x18x18x16xbf16, #tpu.memory_space<vmem>>, %arg2: memref<144x32xbf16, #tpu.memory_space<vmem>>, %arg3: memref<1x32xf32, #tpu.memory_space<vmem>>, %arg4: memref<1x32xf32, #tpu.memory_space<vmem>>, %arg5: memref<32x16xf32, #tpu.memory_space<vmem>>, %arg6: memref<16x32xf32, #tpu.memory_space<vmem>>, %arg7: memref<288x32xbf16, #tpu.memory_space<vmem>>, %arg8: memref<1x32xf32, #tpu.memory_space<vmem>>, %arg9: memref<1x32xf32, #tpu.memory_space<vmem>>, %arg10: memref<32x16xf32, #tpu.memory_space<vmem>>, %arg11: memref<16x32xf32, #tpu.memory_space<vmem>>, %arg12: memref<1x16x16x32xbf16, #tpu.memory_space<vmem>>, %arg13: memref<18x18x32xbf16, #tpu.memory_space<vmem>>) attributes {dimension_semantics = [#tpu.dimension_semantics<parallel>], iteration_bounds = array<i64: 2>, scalar_prefetch = 0 : i64, scratch_operands = 1 : i64, tpu.core_type = #tpu.core_type<tc>, window_params = [{transform_indices = @transform_0, window_bounds = array<i64: 1, 18, 18, 16>}, {pipeline_mode = #tpu.pipeline_mode<synchronous>, transform_indices = @transform_1, window_bounds = array<i64: 144, 32>}, {pipeline_mode = #tpu.pipeline_mode<synchronous>, transform_indices = @transform_2, window_bounds = array<i64: 1, 32>}, {pipeline_mode = #tpu.pipeline_mode<synchronous>, transform_indices = @transform_3, window_bounds = array<i64: 1, 32>}, {pipeline_mode = #tpu.pipeline_mode<synchronous>, transform_indices = @transform_4, window_bounds = array<i64: 32, 16>}, {pipeline_mode = #tpu.pipeline_mode<synchronous>, transform_indices = @transform_5, window_bounds = array<i64: 16, 32>}, {pipeline_mode = #tpu.pipeline_mode<synchronous>, transform_indices = @transform_6, window_bounds = array<i64: 288, 32>}, {pipeline_mode = #tpu.pipeline_mode<synchronous>, transform_indices = @transform_7, window_bounds = array<i64: 1, 32>}, {pipeline_mode = #tpu.pipeline_mode<synchronous>, transform_indices = @transform_8, window_bounds = array<i64: 1, 32>}, {pipeline_mode = #tpu.pipeline_mode<synchronous>, transform_indices = @transform_9, window_bounds = array<i64: 32, 16>}, {pipeline_mode = #tpu.pipeline_mode<synchronous>, transform_indices = @transform_10, window_bounds = array<i64: 16, 32>}, {transform_indices = @transform_11, window_bounds = array<i64: 1, 16, 16, 32>}]} {
    %c0 = arith.constant 0 : index
    %c0_0 = arith.constant 0 : index
    %0 = vector.load %arg2[%c0, %c0_0] : memref<144x32xbf16, #tpu.memory_space<vmem>>, vector<144x32xbf16>
    %c0_1 = arith.constant 0 : index
    %c0_2 = arith.constant 0 : index
    %1 = vector.load %arg7[%c0_1, %c0_2] : memref<288x32xbf16, #tpu.memory_space<vmem>>, vector<288x32xbf16>
    %cst = arith.constant 0.000000e+00 : bf16
    %2 = vector.broadcast %cst : bf16 to vector<1x18x32xbf16>
    %c0_3 = arith.constant 0 : index
    %c0_4 = arith.constant 0 : index
    %c0_5 = arith.constant 0 : index
    %3 = vector.load %arg13[%c0_3, %c0_4, %c0_5] : memref<18x18x32xbf16, #tpu.memory_space<vmem>>, vector<1x18x32xbf16>
    tpu.vector_store %arg13[%c0_3, %c0_4, %c0_5], %2 {strides = array<i32>} : memref<18x18x32xbf16, #tpu.memory_space<vmem>>, vector<1x18x32xbf16>,
    %cst_6 = arith.constant 0.000000e+00 : bf16
    %4 = vector.broadcast %cst_6 : bf16 to vector<1x18x32xbf16>
    %c17 = arith.constant 17 : index
    %c0_7 = arith.constant 0 : index
    %c0_8 = arith.constant 0 : index
    %5 = vector.load %arg13[%c17, %c0_7, %c0_8] : memref<18x18x32xbf16, #tpu.memory_space<vmem>>, vector<1x18x32xbf16>
    tpu.vector_store %arg13[%c17, %c0_7, %c0_8], %4 {strides = array<i32>} : memref<18x18x32xbf16, #tpu.memory_space<vmem>>, vector<1x18x32xbf16>,
    %cst_9 = arith.constant 0.000000e+00 : bf16
    %6 = vector.broadcast %cst_9 : bf16 to vector<18x1x32xbf16>
    %c0_10 = arith.constant 0 : index
    %c0_11 = arith.constant 0 : index
    %c0_12 = arith.constant 0 : index
    %7 = vector.load %arg13[%c0_10, %c0_11, %c0_12] : memref<18x18x32xbf16, #tpu.memory_space<vmem>>, vector<18x1x32xbf16>
    tpu.vector_store %arg13[%c0_10, %c0_11, %c0_12], %6 {strides = array<i32>} : memref<18x18x32xbf16, #tpu.memory_space<vmem>>, vector<18x1x32xbf16>,
    %cst_13 = arith.constant 0.000000e+00 : bf16
    %8 = vector.broadcast %cst_13 : bf16 to vector<18x1x32xbf16>
    %c0_14 = arith.constant 0 : index
    %c17_15 = arith.constant 17 : index
    %c0_16 = arith.constant 0 : index
    %9 = vector.load %arg13[%c0_14, %c17_15, %c0_16] : memref<18x18x32xbf16, #tpu.memory_space<vmem>>, vector<18x1x32xbf16>
    tpu.vector_store %arg13[%c0_14, %c17_15, %c0_16], %8 {strides = array<i32>} : memref<18x18x32xbf16, #tpu.memory_space<vmem>>, vector<18x1x32xbf16>,
    %cst_17 = arith.constant 0.000000e+00 : f32
    %10 = vector.broadcast %cst_17 : f32 to vector<1x32xf32>
    %c0_i32 = arith.constant 0 : i32
    %c16_i32 = arith.constant 16 : i32
    %11 = arith.muli %c0_i32, %c16_i32 : i32
    %c0_i32_18 = arith.constant 0 : i32
    %12 = arith.addi %11, %c0_i32_18 : i32
    %c0_19 = arith.constant 0 : index
    %13 = arith.index_cast %12 : i32 to index
    %c0_20 = arith.constant 0 : index
    %c0_21 = arith.constant 0 : index
    %14 = vector.load %arg1[%c0_19, %13, %c0_20, %c0_21] : memref<1x18x18x16xbf16, #tpu.memory_space<vmem>>, vector<1x16x16x16xbf16>
    %15 = vector.shape_cast %14 : vector<1x16x16x16xbf16> to vector<16x16x16xbf16>
    %c0_i32_22 = arith.constant 0 : i32
    %16 = arith.addi %11, %c0_i32_22 : i32
    %c0_23 = arith.constant 0 : index
    %17 = arith.index_cast %16 : i32 to index
    %c1 = arith.constant 1 : index
    %c0_24 = arith.constant 0 : index
    %18 = vector.load %arg1[%c0_23, %17, %c1, %c0_24] : memref<1x18x18x16xbf16, #tpu.memory_space<vmem>>, vector<1x16x16x16xbf16>
    %19 = vector.shape_cast %18 : vector<1x16x16x16xbf16> to vector<16x16x16xbf16>
    %c0_i32_25 = arith.constant 0 : i32
    %20 = arith.addi %11, %c0_i32_25 : i32
    %c0_26 = arith.constant 0 : index
    %21 = arith.index_cast %20 : i32 to index
    %c2 = arith.constant 2 : index
    %c0_27 = arith.constant 0 : index
    %22 = vector.load %arg1[%c0_26, %21, %c2, %c0_27] : memref<1x18x18x16xbf16, #tpu.memory_space<vmem>>, vector<1x16x16x16xbf16>
    %23 = vector.shape_cast %22 : vector<1x16x16x16xbf16> to vector<16x16x16xbf16>
    %c1_i32 = arith.constant 1 : i32
    %24 = arith.addi %11, %c1_i32 : i32
    %c0_28 = arith.constant 0 : index
    %25 = arith.index_cast %24 : i32 to index
    %c0_29 = arith.constant 0 : index
    %c0_30 = arith.constant 0 : index
    %26 = vector.load %arg1[%c0_28, %25, %c0_29, %c0_30] : memref<1x18x18x16xbf16, #tpu.memory_space<vmem>>, vector<1x16x16x16xbf16>
    %27 = vector.shape_cast %26 : vector<1x16x16x16xbf16> to vector<16x16x16xbf16>
    %c1_i32_31 = arith.constant 1 : i32
    %28 = arith.addi %11, %c1_i32_31 : i32
    %c0_32 = arith.constant 0 : index
    %29 = arith.index_cast %28 : i32 to index
    %c1_33 = arith.constant 1 : index
    %c0_34 = arith.constant 0 : index
    %30 = vector.load %arg1[%c0_32, %29, %c1_33, %c0_34] : memref<1x18x18x16xbf16, #tpu.memory_space<vmem>>, vector<1x16x16x16xbf16>
    %31 = vector.shape_cast %30 : vector<1x16x16x16xbf16> to vector<16x16x16xbf16>
    %c1_i32_35 = arith.constant 1 : i32
    %32 = arith.addi %11, %c1_i32_35 : i32
    %c0_36 = arith.constant 0 : index
    %33 = arith.index_cast %32 : i32 to index
    %c2_37 = arith.constant 2 : index
    %c0_38 = arith.constant 0 : index
    %34 = vector.load %arg1[%c0_36, %33, %c2_37, %c0_38] : memref<1x18x18x16xbf16, #tpu.memory_space<vmem>>, vector<1x16x16x16xbf16>
    %35 = vector.shape_cast %34 : vector<1x16x16x16xbf16> to vector<16x16x16xbf16>
    %c2_i32 = arith.constant 2 : i32
    %36 = arith.addi %11, %c2_i32 : i32
    %c0_39 = arith.constant 0 : index
    %37 = arith.index_cast %36 : i32 to index
    %c0_40 = arith.constant 0 : index
    %c0_41 = arith.constant 0 : index
    %38 = vector.load %arg1[%c0_39, %37, %c0_40, %c0_41] : memref<1x18x18x16xbf16, #tpu.memory_space<vmem>>, vector<1x16x16x16xbf16>
    %39 = vector.shape_cast %38 : vector<1x16x16x16xbf16> to vector<16x16x16xbf16>
    %c2_i32_42 = arith.constant 2 : i32
    %40 = arith.addi %11, %c2_i32_42 : i32
    %c0_43 = arith.constant 0 : index
    %41 = arith.index_cast %40 : i32 to index
    %c1_44 = arith.constant 1 : index
    %c0_45 = arith.constant 0 : index
    %42 = vector.load %arg1[%c0_43, %41, %c1_44, %c0_45] : memref<1x18x18x16xbf16, #tpu.memory_space<vmem>>, vector<1x16x16x16xbf16>
    %43 = vector.shape_cast %42 : vector<1x16x16x16xbf16> to vector<16x16x16xbf16>
    %c2_i32_46 = arith.constant 2 : i32
    %44 = arith.addi %11, %c2_i32_46 : i32
    %c0_47 = arith.constant 0 : index
    %45 = arith.index_cast %44 : i32 to index
    %c2_48 = arith.constant 2 : index
    %c0_49 = arith.constant 0 : index
    %46 = vector.load %arg1[%c0_47, %45, %c2_48, %c0_49] : memref<1x18x18x16xbf16, #tpu.memory_space<vmem>>, vector<1x16x16x16xbf16>
    %47 = vector.shape_cast %46 : vector<1x16x16x16xbf16> to vector<16x16x16xbf16>
    %48 = tpu.concatenate %15, %19, %23, %27, %31, %35, %39, %43, %47 in 2 : vector<16x16x16xbf16>, vector<16x16x16xbf16>, vector<16x16x16xbf16>, vector<16x16x16xbf16>, vector<16x16x16xbf16>, vector<16x16x16xbf16>, vector<16x16x16xbf16>, vector<16x16x16xbf16>, vector<16x16x16xbf16> -> vector<16x16x144xbf16>
    %49 = vector.shape_cast %48 : vector<16x16x144xbf16> to vector<256x144xbf16>
    %cst_50 = arith.constant dense<0.000000e+00> : vector<256x32xf32>
    %50 = tpu.matmul %49, %0, %cst_50 {dimension_numbers = #tpu.dot_dimension_numbers<[1], [0], [0], [1], [0, 0, 1, 1], [], []>} : vector<256x144xbf16>, vector<144x32xbf16>, vector<256x32xf32> -> vector<256x32xf32>
    %cst_51 = arith.constant dense<0.000000e+00> : vector<32xf32>
    %51 = vector.multi_reduction <add>, %50, %cst_51 [0] : vector<256x32xf32> to vector<32xf32>
    %52 = vector.shape_cast %51 : vector<32xf32> to vector<1x32xf32>
    %53 = arith.addf %10, %52 : vector<1x32xf32>
    %54 = arith.mulf %50, %50 : vector<256x32xf32>
    %cst_52 = arith.constant dense<0.000000e+00> : vector<32xf32>
    %55 = vector.multi_reduction <add>, %54, %cst_52 [0] : vector<256x32xf32> to vector<32xf32>
    %56 = vector.shape_cast %55 : vector<32xf32> to vector<1x32xf32>
    %57 = arith.addf %10, %56 : vector<1x32xf32>
    %58 = vector.shape_cast %50 : vector<256x32xf32> to vector<16x16x32xf32>
    %59 = arith.truncf %58 : vector<16x16x32xf32> to vector<16x16x32xbf16>
    %c1_i32_53 = arith.constant 1 : i32
    %60 = arith.addi %11, %c1_i32_53 : i32
    %61 = arith.index_cast %60 : i32 to index
    %c1_54 = arith.constant 1 : index
    %c0_55 = arith.constant 0 : index
    %62 = vector.load %arg13[%61, %c1_54, %c0_55] : memref<18x18x32xbf16, #tpu.memory_space<vmem>>, vector<16x16x32xbf16>
    tpu.vector_store %arg13[%61, %c1_54, %c0_55], %59 {strides = array<i32>} : memref<18x18x32xbf16, #tpu.memory_space<vmem>>, vector<16x16x32xbf16>,
    %c1_i32_56 = arith.constant 1 : i32
    %c0_57 = arith.constant 0 : index
    %c0_58 = arith.constant 0 : index
    %63 = vector.load %arg5[%c0_57, %c0_58] : memref<32x16xf32, #tpu.memory_space<vmem>>, vector<32x16xf32>
    %cst_59 = arith.constant dense<0.000000e+00> : vector<1x16xf32>
    %64 = tpu.matmul %53, %63, %cst_59 {dimension_numbers = #tpu.dot_dimension_numbers<[1], [0], [0], [1], [0, 0, 1, 1], [], []>} : vector<1x32xf32>, vector<32x16xf32>, vector<1x16xf32> -> vector<1x16xf32>
    %c0_60 = arith.constant 0 : index
    %c0_61 = arith.constant 0 : index
    %65 = vector.load %arg5[%c0_60, %c0_61] : memref<32x16xf32, #tpu.memory_space<vmem>>, vector<32x16xf32>
    %cst_62 = arith.constant dense<0.000000e+00> : vector<1x16xf32>
    %66 = tpu.matmul %57, %65, %cst_62 {dimension_numbers = #tpu.dot_dimension_numbers<[1], [0], [0], [1], [0, 0, 1, 1], [], []>} : vector<1x32xf32>, vector<32x16xf32>, vector<1x16xf32> -> vector<1x16xf32>
    %cst_63 = arith.constant 5.120000e+02 : f32
    %67 = vector.broadcast %cst_63 : f32 to vector<1x16xf32>
    %68 = arith.divf %64, %67 : vector<1x16xf32>
    %cst_64 = arith.constant 5.120000e+02 : f32
    %69 = vector.broadcast %cst_64 : f32 to vector<1x16xf32>
    %70 = arith.divf %66, %69 : vector<1x16xf32>
    %71 = arith.mulf %68, %68 : vector<1x16xf32>
    %72 = arith.subf %70, %71 : vector<1x16xf32>
    %cst_65 = arith.constant 0.000000e+00 : f32
    %73 = vector.broadcast %cst_65 : f32 to vector<1x16xf32>
    %74 = arith.maximumf %72, %73 : vector<1x16xf32>
    %cst_66 = arith.constant 9.99999974E-6 : f32
    %75 = vector.broadcast %cst_66 : f32 to vector<1x16xf32>
    %76 = arith.addf %74, %75 : vector<1x16xf32>
    %77 = math.rsqrt %76 : vector<1x16xf32>
    %c0_67 = arith.constant 0 : index
    %c0_68 = arith.constant 0 : index
    %78 = vector.load %arg6[%c0_67, %c0_68] : memref<16x32xf32, #tpu.memory_space<vmem>>, vector<16x32xf32>
    %cst_69 = arith.constant dense<0.000000e+00> : vector<1x32xf32>
    %79 = tpu.matmul %68, %78, %cst_69 {dimension_numbers = #tpu.dot_dimension_numbers<[1], [0], [0], [1], [0, 0, 1, 1], [], []>} : vector<1x16xf32>, vector<16x32xf32>, vector<1x32xf32> -> vector<1x32xf32>
    %c0_70 = arith.constant 0 : index
    %c0_71 = arith.constant 0 : index
    %80 = vector.load %arg6[%c0_70, %c0_71] : memref<16x32xf32, #tpu.memory_space<vmem>>, vector<16x32xf32>
    %cst_72 = arith.constant dense<0.000000e+00> : vector<1x32xf32>
    %81 = tpu.matmul %77, %80, %cst_72 {dimension_numbers = #tpu.dot_dimension_numbers<[1], [0], [0], [1], [0, 0, 1, 1], [], []>} : vector<1x16xf32>, vector<16x32xf32>, vector<1x32xf32> -> vector<1x32xf32>
    %c0_73 = arith.constant 0 : index
    %c0_74 = arith.constant 0 : index
    %82 = vector.load %arg3[%c0_73, %c0_74] : memref<1x32xf32, #tpu.memory_space<vmem>>, vector<1x32xf32>
    %83 = arith.mulf %81, %82 : vector<1x32xf32>
    %c0_75 = arith.constant 0 : index
    %c0_76 = arith.constant 0 : index
    %84 = vector.load %arg4[%c0_75, %c0_76] : memref<1x32xf32, #tpu.memory_space<vmem>>, vector<1x32xf32>
    %85 = arith.mulf %79, %83 : vector<1x32xf32>
    %86 = arith.subf %84, %85 : vector<1x32xf32>
    %c0_i32_77 = arith.constant 0 : i32
    %c16_i32_78 = arith.constant 16 : i32
    %87 = arith.muli %c0_i32_77, %c16_i32_78 : i32
    %c1_i32_79 = arith.constant 1 : i32
    %88 = arith.addi %87, %c1_i32_79 : i32
    %89 = arith.index_cast %88 : i32 to index
    %c1_80 = arith.constant 1 : index
    %c0_81 = arith.constant 0 : index
    %90 = vector.load %arg13[%89, %c1_80, %c0_81] : memref<18x18x32xbf16, #tpu.memory_space<vmem>>, vector<16x16x32xbf16>
    %91 = arith.extf %90 : vector<16x16x32xbf16> to vector<16x16x32xf32>
    %92 = vector.shape_cast %83 : vector<1x32xf32> to vector<1x1x32xf32>
    %93 = vector.broadcast %92 : vector<1x1x32xf32> to vector<16x16x32xf32>
    %94 = arith.mulf %91, %93 : vector<16x16x32xf32>
    %95 = vector.shape_cast %86 : vector<1x32xf32> to vector<1x1x32xf32>
    %96 = vector.broadcast %95 : vector<1x1x32xf32> to vector<16x16x32xf32>
    %97 = arith.addf %94, %96 : vector<16x16x32xf32>
    %cst_82 = arith.constant 0.000000e+00 : f32
    %98 = vector.broadcast %cst_82 : f32 to vector<16x16x32xf32>
    %99 = arith.maximumf %97, %98 : vector<16x16x32xf32>
    %100 = arith.truncf %99 : vector<16x16x32xf32> to vector<16x16x32xbf16>
    %c1_i32_83 = arith.constant 1 : i32
    %101 = arith.addi %87, %c1_i32_83 : i32
    %102 = arith.index_cast %101 : i32 to index
    %c1_84 = arith.constant 1 : index
    %c0_85 = arith.constant 0 : index
    %103 = vector.load %arg13[%102, %c1_84, %c0_85] : memref<18x18x32xbf16, #tpu.memory_space<vmem>>, vector<16x16x32xbf16>
    tpu.vector_store %arg13[%102, %c1_84, %c0_85], %100 {strides = array<i32>} : memref<18x18x32xbf16, #tpu.memory_space<vmem>>, vector<16x16x32xbf16>,
    %c1_i32_86 = arith.constant 1 : i32
    %cst_87 = arith.constant 0.000000e+00 : f32
    %104 = vector.broadcast %cst_87 : f32 to vector<1x32xf32>
    %c0_i32_88 = arith.constant 0 : i32
    %c16_i32_89 = arith.constant 16 : i32
    %105 = arith.muli %c0_i32_88, %c16_i32_89 : i32
    %c0_i32_90 = arith.constant 0 : i32
    %106 = arith.addi %105, %c0_i32_90 : i32
    %107 = arith.index_cast %106 : i32 to index
    %c0_91 = arith.constant 0 : index
    %c0_92 = arith.constant 0 : index
    %108 = vector.load %arg13[%107, %c0_91, %c0_92] : memref<18x18x32xbf16, #tpu.memory_space<vmem>>, vector<16x16x32xbf16>
    %c0_i32_93 = arith.constant 0 : i32
    %109 = arith.addi %105, %c0_i32_93 : i32
    %110 = arith.index_cast %109 : i32 to index
    %c1_94 = arith.constant 1 : index
    %c0_95 = arith.constant 0 : index
    %111 = vector.load %arg13[%110, %c1_94, %c0_95] : memref<18x18x32xbf16, #tpu.memory_space<vmem>>, vector<16x16x32xbf16>
    %c0_i32_96 = arith.constant 0 : i32
    %112 = arith.addi %105, %c0_i32_96 : i32
    %113 = arith.index_cast %112 : i32 to index
    %c2_97 = arith.constant 2 : index
    %c0_98 = arith.constant 0 : index
    %114 = vector.load %arg13[%113, %c2_97, %c0_98] : memref<18x18x32xbf16, #tpu.memory_space<vmem>>, vector<16x16x32xbf16>
    %c1_i32_99 = arith.constant 1 : i32
    %115 = arith.addi %105, %c1_i32_99 : i32
    %116 = arith.index_cast %115 : i32 to index
    %c0_100 = arith.constant 0 : index
    %c0_101 = arith.constant 0 : index
    %117 = vector.load %arg13[%116, %c0_100, %c0_101] : memref<18x18x32xbf16, #tpu.memory_space<vmem>>, vector<16x16x32xbf16>
    %c1_i32_102 = arith.constant 1 : i32
    %118 = arith.addi %105, %c1_i32_102 : i32
    %119 = arith.index_cast %118 : i32 to index
    %c1_103 = arith.constant 1 : index
    %c0_104 = arith.constant 0 : index
    %120 = vector.load %arg13[%119, %c1_103, %c0_104] : memref<18x18x32xbf16, #tpu.memory_space<vmem>>, vector<16x16x32xbf16>
    %c1_i32_105 = arith.constant 1 : i32
    %121 = arith.addi %105, %c1_i32_105 : i32
    %122 = arith.index_cast %121 : i32 to index
    %c2_106 = arith.constant 2 : index
    %c0_107 = arith.constant 0 : index
    %123 = vector.load %arg13[%122, %c2_106, %c0_107] : memref<18x18x32xbf16, #tpu.memory_space<vmem>>, vector<16x16x32xbf16>
    %c2_i32_108 = arith.constant 2 : i32
    %124 = arith.addi %105, %c2_i32_108 : i32
    %125 = arith.index_cast %124 : i32 to index
    %c0_109 = arith.constant 0 : index
    %c0_110 = arith.constant 0 : index
    %126 = vector.load %arg13[%125, %c0_109, %c0_110] : memref<18x18x32xbf16, #tpu.memory_space<vmem>>, vector<16x16x32xbf16>
    %c2_i32_111 = arith.constant 2 : i32
    %127 = arith.addi %105, %c2_i32_111 : i32
    %128 = arith.index_cast %127 : i32 to index
    %c1_112 = arith.constant 1 : index
    %c0_113 = arith.constant 0 : index
    %129 = vector.load %arg13[%128, %c1_112, %c0_113] : memref<18x18x32xbf16, #tpu.memory_space<vmem>>, vector<16x16x32xbf16>
    %c2_i32_114 = arith.constant 2 : i32
    %130 = arith.addi %105, %c2_i32_114 : i32
    %131 = arith.index_cast %130 : i32 to index
    %c2_115 = arith.constant 2 : index
    %c0_116 = arith.constant 0 : index
    %132 = vector.load %arg13[%131, %c2_115, %c0_116] : memref<18x18x32xbf16, #tpu.memory_space<vmem>>, vector<16x16x32xbf16>
    %133 = tpu.concatenate %108, %111, %114, %117, %120, %123, %126, %129, %132 in 2 : vector<16x16x32xbf16>, vector<16x16x32xbf16>, vector<16x16x32xbf16>, vector<16x16x32xbf16>, vector<16x16x32xbf16>, vector<16x16x32xbf16>, vector<16x16x32xbf16>, vector<16x16x32xbf16>, vector<16x16x32xbf16> -> vector<16x16x288xbf16>
    %134 = vector.shape_cast %133 : vector<16x16x288xbf16> to vector<256x288xbf16>
    %cst_117 = arith.constant dense<0.000000e+00> : vector<256x32xf32>
    %135 = tpu.matmul %134, %1, %cst_117 {dimension_numbers = #tpu.dot_dimension_numbers<[1], [0], [0], [1], [0, 0, 1, 1], [], []>} : vector<256x288xbf16>, vector<288x32xbf16>, vector<256x32xf32> -> vector<256x32xf32>
    %cst_118 = arith.constant dense<0.000000e+00> : vector<32xf32>
    %136 = vector.multi_reduction <add>, %135, %cst_118 [0] : vector<256x32xf32> to vector<32xf32>
    %137 = vector.shape_cast %136 : vector<32xf32> to vector<1x32xf32>
    %138 = arith.addf %104, %137 : vector<1x32xf32>
    %139 = arith.mulf %135, %135 : vector<256x32xf32>
    %cst_119 = arith.constant dense<0.000000e+00> : vector<32xf32>
    %140 = vector.multi_reduction <add>, %139, %cst_119 [0] : vector<256x32xf32> to vector<32xf32>
    %141 = vector.shape_cast %140 : vector<32xf32> to vector<1x32xf32>
    %142 = arith.addf %104, %141 : vector<1x32xf32>
    %143 = vector.shape_cast %135 : vector<256x32xf32> to vector<16x16x32xf32>
    %144 = arith.truncf %143 : vector<16x16x32xf32> to vector<16x16x32xbf16>
    %c0_120 = arith.constant 0 : index
    %145 = arith.index_cast %105 : i32 to index
    %c0_121 = arith.constant 0 : index
    %c0_122 = arith.constant 0 : index
    %146 = vector.load %arg12[%c0_120, %145, %c0_121, %c0_122] : memref<1x16x16x32xbf16, #tpu.memory_space<vmem>>, vector<1x16x16x32xbf16>
    %147 = vector.shape_cast %146 : vector<1x16x16x32xbf16> to vector<16x16x32xbf16>
    %148 = vector.shape_cast %144 : vector<16x16x32xbf16> to vector<1x16x16x32xbf16>
    tpu.vector_store %arg12[%c0_120, %145, %c0_121, %c0_122], %148 {strides = array<i32>} : memref<1x16x16x32xbf16, #tpu.memory_space<vmem>>, vector<1x16x16x32xbf16>,
    %c1_i32_123 = arith.constant 1 : i32
    %c0_124 = arith.constant 0 : index
    %c0_125 = arith.constant 0 : index
    %149 = vector.load %arg10[%c0_124, %c0_125] : memref<32x16xf32, #tpu.memory_space<vmem>>, vector<32x16xf32>
    %cst_126 = arith.constant dense<0.000000e+00> : vector<1x16xf32>
    %150 = tpu.matmul %138, %149, %cst_126 {dimension_numbers = #tpu.dot_dimension_numbers<[1], [0], [0], [1], [0, 0, 1, 1], [], []>} : vector<1x32xf32>, vector<32x16xf32>, vector<1x16xf32> -> vector<1x16xf32>
    %c0_127 = arith.constant 0 : index
    %c0_128 = arith.constant 0 : index
    %151 = vector.load %arg10[%c0_127, %c0_128] : memref<32x16xf32, #tpu.memory_space<vmem>>, vector<32x16xf32>
    %cst_129 = arith.constant dense<0.000000e+00> : vector<1x16xf32>
    %152 = tpu.matmul %142, %151, %cst_129 {dimension_numbers = #tpu.dot_dimension_numbers<[1], [0], [0], [1], [0, 0, 1, 1], [], []>} : vector<1x32xf32>, vector<32x16xf32>, vector<1x16xf32> -> vector<1x16xf32>
    %cst_130 = arith.constant 5.120000e+02 : f32
    %153 = vector.broadcast %cst_130 : f32 to vector<1x16xf32>
    %154 = arith.divf %150, %153 : vector<1x16xf32>
    %cst_131 = arith.constant 5.120000e+02 : f32
    %155 = vector.broadcast %cst_131 : f32 to vector<1x16xf32>
    %156 = arith.divf %152, %155 : vector<1x16xf32>
    %157 = arith.mulf %154, %154 : vector<1x16xf32>
    %158 = arith.subf %156, %157 : vector<1x16xf32>
    %cst_132 = arith.constant 0.000000e+00 : f32
    %159 = vector.broadcast %cst_132 : f32 to vector<1x16xf32>
    %160 = arith.maximumf %158, %159 : vector<1x16xf32>
    %cst_133 = arith.constant 9.99999974E-6 : f32
    %161 = vector.broadcast %cst_133 : f32 to vector<1x16xf32>
    %162 = arith.addf %160, %161 : vector<1x16xf32>
    %163 = math.rsqrt %162 : vector<1x16xf32>
    %c0_134 = arith.constant 0 : index
    %c0_135 = arith.constant 0 : index
    %164 = vector.load %arg11[%c0_134, %c0_135] : memref<16x32xf32, #tpu.memory_space<vmem>>, vector<16x32xf32>
    %cst_136 = arith.constant dense<0.000000e+00> : vector<1x32xf32>
    %165 = tpu.matmul %154, %164, %cst_136 {dimension_numbers = #tpu.dot_dimension_numbers<[1], [0], [0], [1], [0, 0, 1, 1], [], []>} : vector<1x16xf32>, vector<16x32xf32>, vector<1x32xf32> -> vector<1x32xf32>
    %c0_137 = arith.constant 0 : index
    %c0_138 = arith.constant 0 : index
    %166 = vector.load %arg11[%c0_137, %c0_138] : memref<16x32xf32, #tpu.memory_space<vmem>>, vector<16x32xf32>
    %cst_139 = arith.constant dense<0.000000e+00> : vector<1x32xf32>
    %167 = tpu.matmul %163, %166, %cst_139 {dimension_numbers = #tpu.dot_dimension_numbers<[1], [0], [0], [1], [0, 0, 1, 1], [], []>} : vector<1x16xf32>, vector<16x32xf32>, vector<1x32xf32> -> vector<1x32xf32>
    %c0_140 = arith.constant 0 : index
    %c0_141 = arith.constant 0 : index
    %168 = vector.load %arg8[%c0_140, %c0_141] : memref<1x32xf32, #tpu.memory_space<vmem>>, vector<1x32xf32>
    %169 = arith.mulf %167, %168 : vector<1x32xf32>
    %c0_142 = arith.constant 0 : index
    %c0_143 = arith.constant 0 : index
    %170 = vector.load %arg9[%c0_142, %c0_143] : memref<1x32xf32, #tpu.memory_space<vmem>>, vector<1x32xf32>
    %171 = arith.mulf %165, %169 : vector<1x32xf32>
    %172 = arith.subf %170, %171 : vector<1x32xf32>
    %c0_i32_144 = arith.constant 0 : i32
    %c16_i32_145 = arith.constant 16 : i32
    %173 = arith.muli %c0_i32_144, %c16_i32_145 : i32
    %c0_146 = arith.constant 0 : index
    %174 = arith.index_cast %173 : i32 to index
    %c0_147 = arith.constant 0 : index
    %c0_148 = arith.constant 0 : index
    %175 = vector.load %arg12[%c0_146, %174, %c0_147, %c0_148] : memref<1x16x16x32xbf16, #tpu.memory_space<vmem>>, vector<1x16x16x32xbf16>
    %176 = vector.shape_cast %175 : vector<1x16x16x32xbf16> to vector<16x16x32xbf16>
    %177 = arith.extf %176 : vector<16x16x32xbf16> to vector<16x16x32xf32>
    %178 = vector.shape_cast %169 : vector<1x32xf32> to vector<1x1x32xf32>
    %179 = vector.broadcast %178 : vector<1x1x32xf32> to vector<16x16x32xf32>
    %180 = arith.mulf %177, %179 : vector<16x16x32xf32>
    %181 = vector.shape_cast %172 : vector<1x32xf32> to vector<1x1x32xf32>
    %182 = vector.broadcast %181 : vector<1x1x32xf32> to vector<16x16x32xf32>
    %183 = arith.addf %180, %182 : vector<16x16x32xf32>
    %cst_149 = arith.constant 0.000000e+00 : f32
    %184 = vector.broadcast %cst_149 : f32 to vector<16x16x32xf32>
    %185 = arith.maximumf %183, %184 : vector<16x16x32xf32>
    %186 = arith.truncf %185 : vector<16x16x32xf32> to vector<16x16x32xbf16>
    %c0_150 = arith.constant 0 : index
    %187 = arith.index_cast %173 : i32 to index
    %c0_151 = arith.constant 0 : index
    %c0_152 = arith.constant 0 : index
    %188 = vector.load %arg12[%c0_150, %187, %c0_151, %c0_152] : memref<1x16x16x32xbf16, #tpu.memory_space<vmem>>, vector<1x16x16x32xbf16>
    %189 = vector.shape_cast %188 : vector<1x16x16x32xbf16> to vector<16x16x32xbf16>
    %190 = vector.shape_cast %186 : vector<16x16x32xbf16> to vector<1x16x16x32xbf16>
    tpu.vector_store %arg12[%c0_150, %187, %c0_151, %c0_152], %190 {strides = array<i32>} : memref<1x16x16x32xbf16, #tpu.memory_space<vmem>>, vector<1x16x16x32xbf16>,
    %c1_i32_153 = arith.constant 1 : i32
    return
  }
  func.func @transform_0(%arg0: i32) -> (i32, i32, i32, i32) {
    %c0_i32 = arith.constant 0 : i32
    %c0_i32_0 = arith.constant 0 : i32
    %c0_i32_1 = arith.constant 0 : i32
    %c0_i32_2 = arith.constant 0 : i32
    return %arg0, %c0_i32, %c0_i32_0, %c0_i32_1 : i32, i32, i32, i32
  }
  func.func @transform_1(%arg0: i32) -> (i32, i32) {
    %c0_i32 = arith.constant 0 : i32
    %c0_i32_0 = arith.constant 0 : i32
    %c0_i32_1 = arith.constant 0 : i32
    return %c0_i32, %c0_i32_0 : i32, i32
  }
  func.func @transform_2(%arg0: i32) -> (i32, i32) {
    %c0_i32 = arith.constant 0 : i32
    %c0_i32_0 = arith.constant 0 : i32
    %c0_i32_1 = arith.constant 0 : i32
    return %c0_i32, %c0_i32_0 : i32, i32
  }
  func.func @transform_3(%arg0: i32) -> (i32, i32) {
    %c0_i32 = arith.constant 0 : i32
    %c0_i32_0 = arith.constant 0 : i32
    %c0_i32_1 = arith.constant 0 : i32
    return %c0_i32, %c0_i32_0 : i32, i32
  }
  func.func @transform_4(%arg0: i32) -> (i32, i32) {
    %c0_i32 = arith.constant 0 : i32
    %c0_i32_0 = arith.constant 0 : i32
    %c0_i32_1 = arith.constant 0 : i32
    return %c0_i32, %c0_i32_0 : i32, i32
  }
  func.func @transform_5(%arg0: i32) -> (i32, i32) {
    %c0_i32 = arith.constant 0 : i32
    %c0_i32_0 = arith.constant 0 : i32
    %c0_i32_1 = arith.constant 0 : i32
    return %c0_i32, %c0_i32_0 : i32, i32
  }
  func.func @transform_6(%arg0: i32) -> (i32, i32) {
    %c0_i32 = arith.constant 0 : i32
    %c0_i32_0 = arith.constant 0 : i32
    %c0_i32_1 = arith.constant 0 : i32
    return %c0_i32, %c0_i32_0 : i32, i32
  }
  func.func @transform_7(%arg0: i32) -> (i32, i32) {
    %c0_i32 = arith.constant 0 : i32
    %c0_i32_0 = arith.constant 0 : i32
    %c0_i32_1 = arith.constant 0 : i32
    return %c0_i32, %c0_i32_0 : i32, i32
  }
  func.func @transform_8(%arg0: i32) -> (i32, i32) {
    %c0_i32 = arith.constant 0 : i32
    %c0_i32_0 = arith.constant 0 : i32
    %c0_i32_1 = arith.constant 0 : i32
    return %c0_i32, %c0_i32_0 : i32, i32
  }
  func.func @transform_9(%arg0: i32) -> (i32, i32) {
    %c0_i32 = arith.constant 0 : i32
    %c0_i32_0 = arith.constant 0 : i32
    %c0_i32_1 = arith.constant 0 : i32
    return %c0_i32, %c0_i32_0 : i32, i32
  }
  func.func @transform_10(%arg0: i32) -> (i32, i32) {
    %c0_i32 = arith.constant 0 : i32
    %c0_i32_0 = arith.constant 0 : i32
    %c0_i32_1 = arith.constant 0 : i32
    return %c0_i32, %c0_i32_0 : i32, i32
  }
  func.func @transform_11(%arg0: i32) -> (i32, i32, i32, i32) {
    %c0_i32 = arith.constant 0 : i32
    %c0_i32_0 = arith.constant 0 : i32
    %c0_i32_1 = arith.constant 0 : i32
    %c0_i32_2 = arith.constant 0 : i32
    return %arg0, %c0_i32, %c0_i32_0, %c0_i32_1 : i32, i32, i32, i32
  }
}

</mosaic_0001>

<llo_original>
// kernel: tpu_custom_call.1
$region0: #{tpu_custom_call.1}
  #allocation0 [shape = 'u32[]', space=smem, size = 0x4, offset = 0x4, fixed_abs, tag = 'smem constant byte address 0x4 - core index']
  #allocation1 [shape = 'u32[144,128]{1,0:T(1,128)}', space=vmem, size = 0x12000, scoped, tag = 'internal scratch']
  #allocation2 [shape = 'bf16[18,18,32]{2,1,0:T(8,128)(2,1)}', space=vmem, size = 0x1b000, scoped, tag = 'scratch operand']
  %s0 = inlined_call_operand.vmem [shape: bf16[2,18,18,16], index: 0, kind: input, shape index: {}]
  %s1 = inlined_call_operand.vmem [shape: bf16[144,32], index: 1, kind: input, shape index: {}]
  %s2 = inlined_call_operand.vmem [shape: f32[1,32], index: 2, kind: input, shape index: {}]
  %s3 = inlined_call_operand.vmem [shape: f32[1,32], index: 3, kind: input, shape index: {}]
  %s4 = inlined_call_operand.vmem [shape: f32[32,16], index: 4, kind: input, shape index: {}]
  %s5 = inlined_call_operand.vmem [shape: f32[16,32], index: 5, kind: input, shape index: {}]
  %s6 = inlined_call_operand.vmem [shape: bf16[288,32], index: 6, kind: input, shape index: {}]
  %s7 = inlined_call_operand.vmem [shape: f32[1,32], index: 7, kind: input, shape index: {}]
  %s8 = inlined_call_operand.vmem [shape: f32[1,32], index: 8, kind: input, shape index: {}]
  %s9 = inlined_call_operand.vmem [shape: f32[32,16], index: 9, kind: input, shape index: {}]
  %s10 = inlined_call_operand.vmem [shape: f32[16,32], index: 10, kind: input, shape index: {}]
  %s11 = inlined_call_operand.hbm [shape: bf16[2,16,16,32], index: 11, kind: output, shape index: {}]
  %s12 = sld [smem:[#allocation0]]
  $region77: #{tpu_custom_call.1} parent=0
    _
  %s14 = ssub.s32 1, %s12
  %s15 = scalar_select 0, %s14, %s12
  $region1: #{tpu_custom_call.1} parent=0
    #allocation3 [shape = 'u8[131072]{0}', space=vmem, size = 0x20000, scoped, tag = 'output window, operand 0']
    #allocation4 [shape = 's32[2]{0}', space=sflag, size = 0x8, scoped, tag = 'scoped memory for tpu_custom_call.1']
    %16 = vsyncpa [#allocation4], 0
    %s17 = scalar_lea.sflag [#allocation4], 1
    %18 = vsyncpa %s17, 0
    loop: start=0, step=1, limit=4
    $region2: #{tpu_custom_call.1} parent=1 // loop_pre_header
      _
    $region3: #{tpu_custom_call.1} parent=1 // loop_header
      %s20 = sphi 0, %s24
      %p21 = scmp.ge.s32.totalorder %s20, 4
      %s30 = sphi 0, %s32
      %s33 = sphi 0, %s30
      %s34 = sphi 0, %s33
      %s50 = sphi 0, %s34
      %s54 = sphi 0, %s54
      %s56 = sphi 0, %s54
      %s57 = sphi 0, %s56
      %s71 = sphi 0, %s57
      %s75 = sphi 0, %s75
      %s77 = sphi 0, %s75
      %s78 = sphi 0, %s77
      %s92 = sphi 0, %s78
      %s96 = sphi 0, %s96
      %s98 = sphi 0, %s96
      %s99 = sphi 0, %s98
      %s113 = sphi 0, %s99
      %s117 = sphi 0, %s117
      %s119 = sphi 0, %s117
      %s120 = sphi 0, %s119
      %s134 = sphi 0, %s120
      %s138 = sphi 0, %s138
      %s140 = sphi 0, %s138
      %s141 = sphi 0, %s140
      %s155 = sphi 0, %s141
      %s159 = sphi 0, %s159
      %s161 = sphi 0, %s159
      %s162 = sphi 0, %s161
      %s176 = sphi 0, %s162
      %s180 = sphi 0, %s180
      %s182 = sphi 0, %s180
      %s183 = sphi 0, %s182
      %s197 = sphi 0, %s183
      %s201 = sphi 0, %s201
      %s203 = sphi 0, %s201
      %s204 = sphi 0, %s203
      %s218 = sphi 0, %s204
      %s222 = sphi 0, %s222
      %s224 = sphi 0, %s222
      %s225 = sphi 0, %s224
      %s239 = sphi 0, %s225
      %s243 = sphi 0, %s243
      %s245 = sphi 0, %s243
      %s246 = sphi 0, %s245
      %s260 = sphi 0, %s246
      %s266 = sphi 0, %s268
      %s269 = sphi 0, %s266
      %s270 = sphi 0, %s269
      %s286 = sphi 0, %s270
    $region4: #{tpu_custom_call.1} parent=1 // loop_header_branch
      %23 = sbr.rel (%p21) target = $region8
    $region5: #{tpu_custom_call.1} parent=1 // loop_body
      %s25 = ssub.s32 %s20, 1
      %s26 = ssub.s32 %s20, 2
      %s27 = sadd.s32 %s20, 1
      %s28 = ssub.s32 %s20, %s27
      %p29 = scmp.eq.s32.totalorder %s28, 0
      %s31 = sadd.s32 %s30, 1
      %s32 = scalar_select %p29, %s30, %s31
      %p35 = pneg %p29
      %p36 = scmp.eq.s32.totalorder %s20, 1
      %p37 = por %p35, %p36
      %p38 = scmp.ne.s32.totalorder %s30, %s33
      %p39 = scmp.eq.s32.totalorder %s20, 0
      %p40 = por %p38, %p39
      %p41 = scmp.ne.s32.totalorder %s30, %s33
      %p42 = scmp.eq.s32.totalorder %s25, 1
      %p43 = por %p41, %p42
      %p44 = scmp.ne.s32.totalorder %s33, %s34
      %p45 = scmp.eq.s32.totalorder %s25, 0
      %p46 = por %p44, %p45
      %p47 = scmp.ne.s32.totalorder %s33, %s34
      %p48 = scmp.eq.s32.totalorder %s26, 1
      %p49 = por %p47, %p48
      %p51 = scmp.ne.s32.totalorder %s34, %s50
      %p52 = scmp.eq.s32.totalorder %s26, 0
      %p53 = por %p51, %p52
      %s55 = sadd.s32 %s54, 1
      %p58 = scmp.eq.s32.totalorder %s20, 1
      %p59 = scmp.ne.s32.totalorder %s54, %s56
      %p60 = scmp.eq.s32.totalorder %s20, 0
      %p61 = por %p59, %p60
      %p62 = scmp.ne.s32.totalorder %s54, %s56
      %p63 = scmp.eq.s32.totalorder %s25, 1
      %p64 = por %p62, %p63
      %p65 = scmp.ne.s32.totalorder %s56, %s57
      %p66 = scmp.eq.s32.totalorder %s25, 0
      %p67 = por %p65, %p66
      %p68 = scmp.ne.s32.totalorder %s56, %s57
      %p69 = scmp.eq.s32.totalorder %s26, 1
      %p70 = por %p68, %p69
      %p72 = scmp.ne.s32.totalorder %s57, %s71
      %p73 = scmp.eq.s32.totalorder %s26, 0
      %p74 = por %p72, %p73
      %s76 = sadd.s32 %s75, 1
      %p79 = scmp.eq.s32.totalorder %s20, 1
      %p80 = scmp.ne.s32.totalorder %s75, %s77
      %p81 = scmp.eq.s32.totalorder %s20, 0
      %p82 = por %p80, %p81
      %p83 = scmp.ne.s32.totalorder %s75, %s77
      %p84 = scmp.eq.s32.totalorder %s25, 1
      %p85 = por %p83, %p84
      %p86 = scmp.ne.s32.totalorder %s77, %s78
      %p87 = scmp.eq.s32.totalorder %s25, 0
      %p88 = por %p86, %p87
      %p89 = scmp.ne.s32.totalorder %s77, %s78
      %p90 = scmp.eq.s32.totalorder %s26, 1
      %p91 = por %p89, %p90
      %p93 = scmp.ne.s32.totalorder %s78, %s92
      %p94 = scmp.eq.s32.totalorder %s26, 0
      %p95 = por %p93, %p94
      %s97 = sadd.s32 %s96, 1
      %p100 = scmp.eq.s32.totalorder %s20, 1
      %p101 = scmp.ne.s32.totalorder %s96, %s98
      %p102 = scmp.eq.s32.totalorder %s20, 0
      %p103 = por %p101, %p102
      %p104 = scmp.ne.s32.totalorder %s96, %s98
      %p105 = scmp.eq.s32.totalorder %s25, 1
      %p106 = por %p104, %p105
      %p107 = scmp.ne.s32.totalorder %s98, %s99
      %p108 = scmp.eq.s32.totalorder %s25, 0
      %p109 = por %p107, %p108
      %p110 = scmp.ne.s32.totalorder %s98, %s99
      %p111 = scmp.eq.s32.totalorder %s26, 1
      %p112 = por %p110, %p111
      %p114 = scmp.ne.s32.totalorder %s99, %s113
      %p115 = scmp.eq.s32.totalorder %s26, 0
      %p116 = por %p114, %p115
      %s118 = sadd.s32 %s117, 1
      %p121 = scmp.eq.s32.totalorder %s20, 1
      %p122 = scmp.ne.s32.totalorder %s117, %s119
      %p123 = scmp.eq.s32.totalorder %s20, 0
      %p124 = por %p122, %p123
      %p125 = scmp.ne.s32.totalorder %s117, %s119
      %p126 = scmp.eq.s32.totalorder %s25, 1
      %p127 = por %p125, %p126
      %p128 = scmp.ne.s32.totalorder %s119, %s120
      %p129 = scmp.eq.s32.totalorder %s25, 0
      %p130 = por %p128, %p129
      %p131 = scmp.ne.s32.totalorder %s119, %s120
      %p132 = scmp.eq.s32.totalorder %s26, 1
      %p133 = por %p131, %p132
      %p135 = scmp.ne.s32.totalorder %s120, %s134
      %p136 = scmp.eq.s32.totalorder %s26, 0
      %p137 = por %p135, %p136
      %s139 = sadd.s32 %s138, 1
      %p142 = scmp.eq.s32.totalorder %s20, 1
      %p143 = scmp.ne.s32.totalorder %s138, %s140
      %p144 = scmp.eq.s32.totalorder %s20, 0
      %p145 = por %p143, %p144
      %p146 = scmp.ne.s32.totalorder %s138, %s140
      %p147 = scmp.eq.s32.totalorder %s25, 1
      %p148 = por %p146, %p147
      %p149 = scmp.ne.s32.totalorder %s140, %s141
      %p150 = scmp.eq.s32.totalorder %s25, 0
      %p151 = por %p149, %p150
      %p152 = scmp.ne.s32.totalorder %s140, %s141
      %p153 = scmp.eq.s32.totalorder %s26, 1
      %p154 = por %p152, %p153
      %p156 = scmp.ne.s32.totalorder %s141, %s155
      %p157 = scmp.eq.s32.totalorder %s26, 0
      %p158 = por %p156, %p157
      %s160 = sadd.s32 %s159, 1
      %p163 = scmp.eq.s32.totalorder %s20, 1
      %p164 = scmp.ne.s32.totalorder %s159, %s161
      %p165 = scmp.eq.s32.totalorder %s20, 0
      %p166 = por %p164, %p165
      %p167 = scmp.ne.s32.totalorder %s159, %s161
      %p168 = scmp.eq.s32.totalorder %s25, 1
      %p169 = por %p167, %p168
      %p170 = scmp.ne.s32.totalorder %s161, %s162
      %p171 = scmp.eq.s32.totalorder %s25, 0
      %p172 = por %p170, %p171
      %p173 = scmp.ne.s32.totalorder %s161, %s162
      %p174 = scmp.eq.s32.totalorder %s26, 1
      %p175 = por %p173, %p174
      %p177 = scmp.ne.s32.totalorder %s162, %s176
      %p178 = scmp.eq.s32.totalorder %s26, 0
      %p179 = por %p177, %p178
      %s181 = sadd.s32 %s180, 1
      %p184 = scmp.eq.s32.totalorder %s20, 1
      %p185 = scmp.ne.s32.totalorder %s180, %s182
      %p186 = scmp.eq.s32.totalorder %s20, 0
      %p187 = por %p185, %p186
      %p188 = scmp.ne.s32.totalorder %s180, %s182
      %p189 = scmp.eq.s32.totalorder %s25, 1
      %p190 = por %p188, %p189
      %p191 = scmp.ne.s32.totalorder %s182, %s183
      %p192 = scmp.eq.s32.totalorder %s25, 0
      %p193 = por %p191, %p192
      %p194 = scmp.ne.s32.totalorder %s182, %s183
      %p195 = scmp.eq.s32.totalorder %s26, 1
      %p196 = por %p194, %p195
      %p198 = scmp.ne.s32.totalorder %s183, %s197
      %p199 = scmp.eq.s32.totalorder %s26, 0
      %p200 = por %p198, %p199
      %s202 = sadd.s32 %s201, 1
      %p205 = scmp.eq.s32.totalorder %s20, 1
      %p206 = scmp.ne.s32.totalorder %s201, %s203
      %p207 = scmp.eq.s32.totalorder %s20, 0
      %p208 = por %p206, %p207
      %p209 = scmp.ne.s32.totalorder %s201, %s203
      %p210 = scmp.eq.s32.totalorder %s25, 1
      %p211 = por %p209, %p210
      %p212 = scmp.ne.s32.totalorder %s203, %s204
      %p213 = scmp.eq.s32.totalorder %s25, 0
      %p214 = por %p212, %p213
      %p215 = scmp.ne.s32.totalorder %s203, %s204
      %p216 = scmp.eq.s32.totalorder %s26, 1
      %p217 = por %p215, %p216
      %p219 = scmp.ne.s32.totalorder %s204, %s218
      %p220 = scmp.eq.s32.totalorder %s26, 0
      %p221 = por %p219, %p220
      %s223 = sadd.s32 %s222, 1
      %p226 = scmp.eq.s32.totalorder %s20, 1
      %p227 = scmp.ne.s32.totalorder %s222, %s224
      %p228 = scmp.eq.s32.totalorder %s20, 0
      %p229 = por %p227, %p228
      %p230 = scmp.ne.s32.totalorder %s222, %s224
      %p231 = scmp.eq.s32.totalorder %s25, 1
      %p232 = por %p230, %p231
      %p233 = scmp.ne.s32.totalorder %s224, %s225
      %p234 = scmp.eq.s32.totalorder %s25, 0
      %p235 = por %p233, %p234
      %p236 = scmp.ne.s32.totalorder %s224, %s225
      %p237 = scmp.eq.s32.totalorder %s26, 1
      %p238 = por %p236, %p237
      %p240 = scmp.ne.s32.totalorder %s225, %s239
      %p241 = scmp.eq.s32.totalorder %s26, 0
      %p242 = por %p240, %p241
      %s244 = sadd.s32 %s243, 1
      %p247 = scmp.eq.s32.totalorder %s20, 1
      %p248 = scmp.ne.s32.totalorder %s243, %s245
      %p249 = scmp.eq.s32.totalorder %s20, 0
      %p250 = por %p248, %p249
      %p251 = scmp.ne.s32.totalorder %s243, %s245
      %p252 = scmp.eq.s32.totalorder %s25, 1
      %p253 = por %p251, %p252
      %p254 = scmp.ne.s32.totalorder %s245, %s246
      %p255 = scmp.eq.s32.totalorder %s25, 0
      %p256 = por %p254, %p255
      %p257 = scmp.ne.s32.totalorder %s245, %s246
      %p258 = scmp.eq.s32.totalorder %s26, 1
      %p259 = por %p257, %p258
      %p261 = scmp.ne.s32.totalorder %s246, %s260
      %p262 = scmp.eq.s32.totalorder %s26, 0
      %p263 = por %p261, %p262
      %s264 = ssub.s32 %s20, %s27
      %p265 = scmp.eq.s32.totalorder %s264, 0
      %s267 = sadd.s32 %s266, 1
      %s268 = scalar_select %p265, %s266, %s267
      %p271 = pneg %p265
      %p272 = scmp.eq.s32.totalorder %s20, 1
      %p273 = por %p271, %p272
      %p274 = scmp.ne.s32.totalorder %s266, %s269
      %p275 = scmp.eq.s32.totalorder %s20, 0
      %p276 = por %p274, %p275
      %p277 = scmp.ne.s32.totalorder %s266, %s269
      %p278 = scmp.eq.s32.totalorder %s25, 1
      %p279 = por %p277, %p278
      %p280 = scmp.ne.s32.totalorder %s269, %s270
      %p281 = scmp.eq.s32.totalorder %s25, 0
      %p282 = por %p280, %p281
      %p283 = scmp.ne.s32.totalorder %s269, %s270
      %p284 = scmp.eq.s32.totalorder %s26, 1
      %p285 = por %p283, %p284
      %p287 = scmp.ne.s32.totalorder %s270, %s286
      %p288 = scmp.eq.s32.totalorder %s26, 0
      %p289 = por %p287, %p288
      %p290 = scmp.le.s32.totalorder 1, %s20
      %p291 = scmp.lt.s32.totalorder %s20, 3
      %p292 = pnand %p290, %p291
      %p293 = pneg %p292
      // Predicated region
      $region9: #{tpu_custom_call.1} parent=5 // pred_check
        _
      $region10: #{tpu_custom_call.1} parent=5 // pred_check_branch
        %295 = sbr.rel (%p292) target = $region12
      $region11: #{tpu_custom_call.1} parent=5 // pred_region
        %s296 = ssub.s32 %s20, 1
        // Predicated region
        $region13: #{tpu_custom_call.1} parent=11 // pred_check
          %p297 = pneg %p67
        $region14: #{tpu_custom_call.1} parent=11 // pred_check_branch
          %299 = sbr.rel (%p297) target = $region16
        $region15: #{tpu_custom_call.1} parent=11 // pred_region
          _
        $region16: #{tpu_custom_call.1} parent=11 // pred_fallthru
          _
        // Predicated region
        $region17: #{tpu_custom_call.1} parent=11 // pred_check
          %p300 = pneg %p88
        $region18: #{tpu_custom_call.1} parent=11 // pred_check_branch
          %302 = sbr.rel (%p300) target = $region20
        $region19: #{tpu_custom_call.1} parent=11 // pred_region
          _
        $region20: #{tpu_custom_call.1} parent=11 // pred_fallthru
          _
        // Predicated region
        $region21: #{tpu_custom_call.1} parent=11 // pred_check
          %p303 = pneg %p109
        $region22: #{tpu_custom_call.1} parent=11 // pred_check_branch
          %305 = sbr.rel (%p303) target = $region24
        $region23: #{tpu_custom_call.1} parent=11 // pred_region
          _
        $region24: #{tpu_custom_call.1} parent=11 // pred_fallthru
          _
        // Predicated region
        $region25: #{tpu_custom_call.1} parent=11 // pred_check
          %p306 = pneg %p130
        $region26: #{tpu_custom_call.1} parent=11 // pred_check_branch
          %308 = sbr.rel (%p306) target = $region28
        $region27: #{tpu_custom_call.1} parent=11 // pred_region
          _
        $region28: #{tpu_custom_call.1} parent=11 // pred_fallthru
          _
        // Predicated region
        $region29: #{tpu_custom_call.1} parent=11 // pred_check
          %p309 = pneg %p151
        $region30: #{tpu_custom_call.1} parent=11 // pred_check_branch
          %311 = sbr.rel (%p309) target = $region32
        $region31: #{tpu_custom_call.1} parent=11 // pred_region
          _
        $region32: #{tpu_custom_call.1} parent=11 // pred_fallthru
          _
        // Predicated region
        $region33: #{tpu_custom_call.1} parent=11 // pred_check
          %p312 = pneg %p172
        $region34: #{tpu_custom_call.1} parent=11 // pred_check_branch
          %314 = sbr.rel (%p312) target = $region36
        $region35: #{tpu_custom_call.1} parent=11 // pred_region
          _
        $region36: #{tpu_custom_call.1} parent=11 // pred_fallthru
          _
        // Predicated region
        $region37: #{tpu_custom_call.1} parent=11 // pred_check
          %p315 = pneg %p193
        $region38: #{tpu_custom_call.1} parent=11 // pred_check_branch
          %317 = sbr.rel (%p315) target = $region40
        $region39: #{tpu_custom_call.1} parent=11 // pred_region
          _
        $region40: #{tpu_custom_call.1} parent=11 // pred_fallthru
          _
        // Predicated region
        $region41: #{tpu_custom_call.1} parent=11 // pred_check
          %p318 = pneg %p214
        $region42: #{tpu_custom_call.1} parent=11 // pred_check_branch
          %320 = sbr.rel (%p318) target = $region44
        $region43: #{tpu_custom_call.1} parent=11 // pred_region
          _
        $region44: #{tpu_custom_call.1} parent=11 // pred_fallthru
          _
        // Predicated region
        $region45: #{tpu_custom_call.1} parent=11 // pred_check
          %p321 = pneg %p235
        $region46: #{tpu_custom_call.1} parent=11 // pred_check_branch
          %323 = sbr.rel (%p321) target = $region48
        $region47: #{tpu_custom_call.1} parent=11 // pred_region
          _
        $region48: #{tpu_custom_call.1} parent=11 // pred_fallthru
          _
        // Predicated region
        $region49: #{tpu_custom_call.1} parent=11 // pred_check
          %p324 = pneg %p256
        $region50: #{tpu_custom_call.1} parent=11 // pred_check_branch
          %326 = sbr.rel (%p324) target = $region52
        $region51: #{tpu_custom_call.1} parent=11 // pred_region
          _
        $region52: #{tpu_custom_call.1} parent=11 // pred_fallthru
          _
      $region12: #{tpu_custom_call.1} parent=5 // pred_fallthru
        _
      %p327 = scmp.lt.s32.totalorder %s20, 2
      // Predicated region
      $region53: #{tpu_custom_call.1} parent=5 // pred_check
        %p328 = pneg %p327
      $region54: #{tpu_custom_call.1} parent=5 // pred_check_branch
        %330 = sbr.rel (%p328) target = $region56
      $region55: #{tpu_custom_call.1} parent=5 // pred_region
        // Predicated region
        $region57: #{tpu_custom_call.1} parent=55 // pred_check
          %p331 = pneg %p40
        $region58: #{tpu_custom_call.1} parent=55 // pred_check_branch
          %333 = sbr.rel (%p331) target = $region60
        $region59: #{tpu_custom_call.1} parent=55 // pred_region
          %p334 = scmp.lt.s32.totalorder %s20, 1
          %s335 = scalar_select %p334, %s20, 1
          %s336 = smul.addr %s335, 54
          %s337 = smul.addr %s336, 4
          %s338 = scalar_lea.vmem %s0, %s337
        $region60: #{tpu_custom_call.1} parent=55 // pred_fallthru
          _
      $region56: #{tpu_custom_call.1} parent=5 // pred_fallthru
        _
      %p339 = scmp.le.s32.totalorder 1, %s20
      %p340 = scmp.lt.s32.totalorder %s20, 3
      %p341 = pnand %p339, %p340
      %p342 = pneg %p341
      // Predicated region
      $region61: #{tpu_custom_call.1} parent=5 // pred_check
        _
      $region62: #{tpu_custom_call.1} parent=5 // pred_check_branch
        %344 = sbr.rel (%p341) target = $region64
      $region63: #{tpu_custom_call.1} parent=5 // pred_region
        %s345 = ssub.s32 %s20, 1
        %p346 = scmp.lt.s32.totalorder %s25, 1
        %s347 = scalar_select %p346, %s25, 1
        %s348 = smul.addr %s347, 54
        %s349 = smul.addr %s348, 4
        %s350 = scalar_lea.vmem %s0, %s349
        %p351 = pneg %p46
        %p352 = pneg %p43
        %p353 = pneg %p67
        %p354 = pneg %p64
        %p355 = pneg %p88
        %p356 = pneg %p85
        %p357 = pneg %p109
        %p358 = pneg %p106
        %p359 = pneg %p130
        %p360 = pneg %p127
        %p361 = pneg %p151
        %p362 = pneg %p148
        %p363 = pneg %p172
        %p364 = pneg %p169
        %p365 = pneg %p193
        %p366 = pneg %p190
        %p367 = pneg %p214
        %p368 = pneg %p211
        %p369 = pneg %p235
        %p370 = pneg %p232
        %p371 = pneg %p256
        %p372 = pneg %p253
        %p373 = pneg %p282
        %p374 = pneg %p279
        %s375 = sand.u32 %s269, 1
        %s376 = scalar_lea.sflag [#allocation4], %s375
        %s377 = sand.u32 %s269, 1
        %s378 = smul.addr %s377, 128
        %s379 = scalar_lea.vmem [#allocation3], %s378
        %p380 = scmp.lt.s32.totalorder %s25, 1
        %s381 = scalar_select %p380, %s25, 1
        %s382 = smul.addr %s381, 54
        %s383 = smul.addr %s382, 4
        %s384 = scalar_lea.vmem %s0, %s383
        %v386 = vld [vmem:[%s1] sm:$0xf]
        %v387 = vld [vmem:[%s1 + $0x4] sm:$0xf]
        %v388 = vld [vmem:[%s1 + $0x8] sm:$0xf]
        %v389 = vld [vmem:[%s1 + $0xc] sm:$0xf]
        %v390 = vld [vmem:[%s1 + $0x10] sm:$0xf]
        %v391 = vld [vmem:[%s1 + $0x14] sm:$0xf]
        %v392 = vld [vmem:[%s1 + $0x18] sm:$0xf]
        %v393 = vld [vmem:[%s1 + $0x1c] sm:$0xf]
        %v394 = vld [vmem:[%s1 + $0x20] sm:$0xf]
        %v395 = vld [vmem:[%s1 + $0x24] sm:$0xf]
        %v396 = vld [vmem:[%s1 + $0x28] sm:$0xf]
        %v397 = vld [vmem:[%s1 + $0x2c] sm:$0xf]
        %v398 = vld [vmem:[%s1 + $0x30] sm:$0xf]
        %v399 = vld [vmem:[%s1 + $0x34] sm:$0xf]
        %v400 = vld [vmem:[%s1 + $0x38] sm:$0xf]
        %v401 = vld [vmem:[%s1 + $0x3c] sm:$0xf]
        %v402 = vld [vmem:[%s1 + $0x40] sm:$0xf]
        %v403 = vld [vmem:[%s1 + $0x44] sm:$0xf]
        %v404 = vld [vmem:[%s6] sm:$0xf]
        %v405 = vld [vmem:[%s6 + $0x4] sm:$0xf]
        %v406 = vld [vmem:[%s6 + $0x8] sm:$0xf]
        %v407 = vld [vmem:[%s6 + $0xc] sm:$0xf]
        %v408 = vld [vmem:[%s6 + $0x10] sm:$0xf]
        %v409 = vld [vmem:[%s6 + $0x14] sm:$0xf]
        %v410 = vld [vmem:[%s6 + $0x18] sm:$0xf]
        %v411 = vld [vmem:[%s6 + $0x1c] sm:$0xf]
        %v412 = vld [vmem:[%s6 + $0x20] sm:$0xf]
        %v413 = vld [vmem:[%s6 + $0x24] sm:$0xf]
        %v414 = vld [vmem:[%s6 + $0x28] sm:$0xf]
        %v415 = vld [vmem:[%s6 + $0x2c] sm:$0xf]
        %v416 = vld [vmem:[%s6 + $0x30] sm:$0xf]
        %v417 = vld [vmem:[%s6 + $0x34] sm:$0xf]
        %v418 = vld [vmem:[%s6 + $0x38] sm:$0xf]
        %v419 = vld [vmem:[%s6 + $0x3c] sm:$0xf]
        %v420 = vld [vmem:[%s6 + $0x40] sm:$0xf]
        %v421 = vld [vmem:[%s6 + $0x44] sm:$0xf]
        %v422 = vld [vmem:[%s6 + $0x48] sm:$0xf]
        %v423 = vld [vmem:[%s6 + $0x4c] sm:$0xf]
        %v424 = vld [vmem:[%s6 + $0x50] sm:$0xf]
        %v425 = vld [vmem:[%s6 + $0x54] sm:$0xf]
        %v426 = vld [vmem:[%s6 + $0x58] sm:$0xf]
        %v427 = vld [vmem:[%s6 + $0x5c] sm:$0xf]
        %v428 = vld [vmem:[%s6 + $0x60] sm:$0xf]
        %v429 = vld [vmem:[%s6 + $0x64] sm:$0xf]
        %v430 = vld [vmem:[%s6 + $0x68] sm:$0xf]
        %v431 = vld [vmem:[%s6 + $0x6c] sm:$0xf]
        %v432 = vld [vmem:[%s6 + $0x70] sm:$0xf]
        %v433 = vld [vmem:[%s6 + $0x74] sm:$0xf]
        %v434 = vld [vmem:[%s6 + $0x78] sm:$0xf]
        %v435 = vld [vmem:[%s6 + $0x7c] sm:$0xf]
        %v436 = vld [vmem:[%s6 + $0x80] sm:$0xf]
        %v437 = vld [vmem:[%s6 + $0x84] sm:$0xf]
        %v438 = vld [vmem:[%s6 + $0x88] sm:$0xf]
        %v439 = vld [vmem:[%s6 + $0x8c] sm:$0xf]
        %vm440 = vcmask 257024
        %441 = vst.msk [vmem:[#allocation2] sm:$0xf] %vm440, 0
        %442 = vst.msk [vmem:[#allocation2 + $0x4] sm:$0xf] %vm440, 0
        %vm443 = vcmask 253952
        %444 = vst.msk [vmem:[#allocation2 + $0x8] sm:$0x1] %vm443, 0
        %s445 = scalar_lea.vmem [#allocation2], 204
        %446 = vst.msk [vmem:[%s445] sm:$0xf] %vm440, 0
        %447 = vst.msk [vmem:[%s445 + $0x4] sm:$0xf] %vm440, 0
        %448 = vst.msk [vmem:[%s445 + $0x8] sm:$0x1] %vm443, 0
        %vm449 = vcmask 253952
        %vm450 = vsmask.f32 256
        %vm451 = vmand %vm449, %vm450
        %v452 = vld [vmem:[#allocation2] sm:$0x1]
        %v453 = vsel %vm451, 0, %v452
        %454 = vst [vmem:[#allocation2] sm:$0x1] %v453
        %v455 = vld [vmem:[#allocation2 + $0xc] sm:$0x1]
        %v456 = vsel %vm451, 0, %v455
        %457 = vst [vmem:[#allocation2 + $0xc] sm:$0x1] %v456
        %v458 = vld [vmem:[#allocation2 + $0x18] sm:$0x1]
        %v459 = vsel %vm451, 0, %v458
        %460 = vst [vmem:[#allocation2 + $0x18] sm:$0x1] %v459
        %v461 = vld [vmem:[#allocation2 + $0x24] sm:$0x1]
        %v462 = vsel %vm451, 0, %v461
        %463 = vst [vmem:[#allocation2 + $0x24] sm:$0x1] %v462
        %v464 = vld [vmem:[#allocation2 + $0x30] sm:$0x1]
        %v465 = vsel %vm451, 0, %v464
        %466 = vst [vmem:[#allocation2 + $0x30] sm:$0x1] %v465
        %v467 = vld [vmem:[#allocation2 + $0x3c] sm:$0x1]
        %v468 = vsel %vm451, 0, %v467
        %469 = vst [vmem:[#allocation2 + $0x3c] sm:$0x1] %v468
        %v470 = vld [vmem:[#allocation2 + $0x48] sm:$0x1]
        %v471 = vsel %vm451, 0, %v470
        %472 = vst [vmem:[#allocation2 + $0x48] sm:$0x1] %v471
        %v473 = vld [vmem:[#allocation2 + $0x54] sm:$0x1]
        %v474 = vsel %vm451, 0, %v473
        %475 = vst [vmem:[#allocation2 + $0x54] sm:$0x1] %v474
        %v476 = vld [vmem:[#allocation2 + $0x60] sm:$0x1]
        %v477 = vsel %vm451, 0, %v476
        %478 = vst [vmem:[#allocation2 + $0x60] sm:$0x1] %v477
        %v479 = vld [vmem:[#allocation2 + $0x6c] sm:$0x1]
        %v480 = vsel %vm451, 0, %v479
        %481 = vst [vmem:[#allocation2 + $0x6c] sm:$0x1] %v480
        %v482 = vld [vmem:[#allocation2 + $0x78] sm:$0x1]
        %v483 = vsel %vm451, 0, %v482
        %484 = vst [vmem:[#allocation2 + $0x78] sm:$0x1] %v483
        %v485 = vld [vmem:[#allocation2 + $0x84] sm:$0x1]
        %v486 = vsel %vm451, 0, %v485
        %487 = vst [vmem:[#allocation2 + $0x84] sm:$0x1] %v486
        %v488 = vld [vmem:[#allocation2 + $0x90] sm:$0x1]
        %v489 = vsel %vm451, 0, %v488
        %490 = vst [vmem:[#allocation2 + $0x90] sm:$0x1] %v489
        %v491 = vld [vmem:[#allocation2 + $0x9c] sm:$0x1]
        %v492 = vsel %vm451, 0, %v491
        %493 = vst [vmem:[#allocation2 + $0x9c] sm:$0x1] %v492
        %v494 = vld [vmem:[#allocation2 + $0xa8] sm:$0x1]
        %v495 = vsel %vm451, 0, %v494
        %496 = vst [vmem:[#allocation2 + $0xa8] sm:$0x1] %v495
        %v497 = vld [vmem:[#allocation2 + $0xb4] sm:$0x1]
        %v498 = vsel %vm451, 0, %v497
        %499 = vst [vmem:[#allocation2 + $0xb4] sm:$0x1] %v498
        %v500 = vld [vmem:[#allocation2 + $0xc0] sm:$0x1]
        %v501 = vsel %vm451, 0, %v500
        %502 = vst [vmem:[#allocation2 + $0xc0] sm:$0x1] %v501
        %v503 = vld [vmem:[#allocation2 + $0xcc] sm:$0x1]
        %v504 = vsel %vm451, 0, %v503
        %505 = vst [vmem:[#allocation2 + $0xcc] sm:$0x1] %v504
        %vm506 = vsmask.f32 7938
        %vm507 = vmand %vm449, %vm506
        %v508 = vld [vmem:[#allocation2 + $0x8] sm:$0x1]
        %v509 = vsel %vm507, 0, %v508
        %510 = vst [vmem:[#allocation2 + $0x8] sm:$0x1] %v509
        %v511 = vld [vmem:[#allocation2 + $0x14] sm:$0x1]
        %v512 = vsel %vm507, 0, %v511
        %513 = vst [vmem:[#allocation2 + $0x14] sm:$0x1] %v512
        %v514 = vld [vmem:[#allocation2 + $0x20] sm:$0x1]
        %v515 = vsel %vm507, 0, %v514
        %516 = vst [vmem:[#allocation2 + $0x20] sm:$0x1] %v515
        %v517 = vld [vmem:[#allocation2 + $0x2c] sm:$0x1]
        %v518 = vsel %vm507, 0, %v517
        %519 = vst [vmem:[#allocation2 + $0x2c] sm:$0x1] %v518
        %v520 = vld [vmem:[#allocation2 + $0x38] sm:$0x1]
        %v521 = vsel %vm507, 0, %v520
        %522 = vst [vmem:[#allocation2 + $0x38] sm:$0x1] %v521
        %v523 = vld [vmem:[#allocation2 + $0x44] sm:$0x1]
        %v524 = vsel %vm507, 0, %v523
        %525 = vst [vmem:[#allocation2 + $0x44] sm:$0x1] %v524
        %v526 = vld [vmem:[#allocation2 + $0x50] sm:$0x1]
        %v527 = vsel %vm507, 0, %v526
        %528 = vst [vmem:[#allocation2 + $0x50] sm:$0x1] %v527
        %v529 = vld [vmem:[#allocation2 + $0x5c] sm:$0x1]
        %v530 = vsel %vm507, 0, %v529
        %531 = vst [vmem:[#allocation2 + $0x5c] sm:$0x1] %v530
        %v532 = vld [vmem:[#allocation2 + $0x68] sm:$0x1]
        %v533 = vsel %vm507, 0, %v532
        %534 = vst [vmem:[#allocation2 + $0x68] sm:$0x1] %v533
        %v535 = vld [vmem:[#allocation2 + $0x74] sm:$0x1]
        %v536 = vsel %vm507, 0, %v535
        %537 = vst [vmem:[#allocation2 + $0x74] sm:$0x1] %v536
        %v538 = vld [vmem:[#allocation2 + $0x80] sm:$0x1]
        %v539 = vsel %vm507, 0, %v538
        %540 = vst [vmem:[#allocation2 + $0x80] sm:$0x1] %v539
        %v541 = vld [vmem:[#allocation2 + $0x8c] sm:$0x1]
        %v542 = vsel %vm507, 0, %v541
        %543 = vst [vmem:[#allocation2 + $0x8c] sm:$0x1] %v542
        %v544 = vld [vmem:[#allocation2 + $0x98] sm:$0x1]
        %v545 = vsel %vm507, 0, %v544
        %546 = vst [vmem:[#allocation2 + $0x98] sm:$0x1] %v545
        %v547 = vld [vmem:[#allocation2 + $0xa4] sm:$0x1]
        %v548 = vsel %vm507, 0, %v547
        %549 = vst [vmem:[#allocation2 + $0xa4] sm:$0x1] %v548
        %v550 = vld [vmem:[#allocation2 + $0xb0] sm:$0x1]
        %v551 = vsel %vm507, 0, %v550
        %552 = vst [vmem:[#allocation2 + $0xb0] sm:$0x1] %v551
        %v553 = vld [vmem:[#allocation2 + $0xbc] sm:$0x1]
        %v554 = vsel %vm507, 0, %v553
        %555 = vst [vmem:[#allocation2 + $0xbc] sm:$0x1] %v554
        %v556 = vld [vmem:[#allocation2 + $0xc8] sm:$0x1]
        %v557 = vsel %vm507, 0, %v556
        %558 = vst [vmem:[#allocation2 + $0xc8] sm:$0x1] %v557
        %v559 = vld [vmem:[#allocation2 + $0xd4] sm:$0x1]
        %v560 = vsel %vm507, 0, %v559
        %561 = vst [vmem:[#allocation2 + $0xd4] sm:$0x1] %v560
        %v562 = vld [vmem:[%s384] sm:$0xf]
        %v563 = vld [vmem:[%s384 + $0x4] sm:$0xf]
        %v564 = vld [vmem:[%s384 + $0xc] sm:$0xf]
        %v565 = vld [vmem:[%s384 + $0x10] sm:$0xf]
        %v566 = vld [vmem:[%s384 + $0x18] sm:$0xf]
        %v567 = vld [vmem:[%s384 + $0x1c] sm:$0xf]
        %v568 = vld [vmem:[%s384 + $0x24] sm:$0xf]
        %v569 = vld [vmem:[%s384 + $0x28] sm:$0xf]
        %v570 = vld [vmem:[%s384 + $0x30] sm:$0xf]
        %v571 = vld [vmem:[%s384 + $0x34] sm:$0xf]
        %v572 = vld [vmem:[%s384 + $0x3c] sm:$0xf]
        %v573 = vld [vmem:[%s384 + $0x40] sm:$0xf]
        %v574 = vld [vmem:[%s384 + $0x48] sm:$0xf]
        %v575 = vld [vmem:[%s384 + $0x4c] sm:$0xf]
        %v576 = vld [vmem:[%s384 + $0x54] sm:$0xf]
        %v577 = vld [vmem:[%s384 + $0x58] sm:$0xf]
        %v578 = vld [vmem:[%s384 + $0x60] sm:$0xf]
        %v579 = vld [vmem:[%s384 + $0x64] sm:$0xf]
        %v580 = vld [vmem:[%s384 + $0x6c] sm:$0xf]
        %v581 = vld [vmem:[%s384 + $0x70] sm:$0xf]
        %v582 = vld [vmem:[%s384 + $0x78] sm:$0xf]
        %v583 = vld [vmem:[%s384 + $0x7c] sm:$0xf]
        %v584 = vld [vmem:[%s384 + $0x84] sm:$0xf]
        %v585 = vld [vmem:[%s384 + $0x88] sm:$0xf]
        %v586 = vld [vmem:[%s384 + $0x90] sm:$0xf]
        %v587 = vld [vmem:[%s384 + $0x94] sm:$0xf]
        %v588 = vld [vmem:[%s384 + $0x9c] sm:$0xf]
        %v589 = vld [vmem:[%s384 + $0xa0] sm:$0xf]
        %v590 = vld [vmem:[%s384 + $0xa8] sm:$0xf]
        %v591 = vld [vmem:[%s384 + $0xac] sm:$0xf]
        %v592 = vld [vmem:[%s384 + $0xb4] sm:$0xf]
        %v593 = vld [vmem:[%s384 + $0xb8] sm:$0xf]
        %v594 = vld [vmem:[%s384 + $0x8] sm:$0x1]
        %v595 = vld [vmem:[%s384 + $0x14] sm:$0x1]
        %v596 = vld [vmem:[%s384 + $0x20] sm:$0x1]
        %v597 = vld [vmem:[%s384 + $0x2c] sm:$0x1]
        %v598 = vld [vmem:[%s384 + $0x38] sm:$0x1]
        %v599 = vld [vmem:[%s384 + $0x44] sm:$0x1]
        %v600 = vld [vmem:[%s384 + $0x50] sm:$0x1]
        %v601 = vld [vmem:[%s384 + $0x5c] sm:$0x1]
        %v602 = vld [vmem:[%s384 + $0x68] sm:$0x1]
        %v603 = vld [vmem:[%s384 + $0x74] sm:$0x1]
        %v604 = vld [vmem:[%s384 + $0x80] sm:$0x1]
        %v605 = vld [vmem:[%s384 + $0x8c] sm:$0x1]
        %v606 = vld [vmem:[%s384 + $0x98] sm:$0x1]
        %v607 = vld [vmem:[%s384 + $0xa4] sm:$0x1]
        %v608 = vld [vmem:[%s384 + $0xb0] sm:$0x1]
        %v609 = vld [vmem:[%s384 + $0xbc] sm:$0x1]
        %v610 = vld [vmem:[%s384] sm:$0xe]
        %v611 = vld [vmem:[%s384 + $0xc] sm:$0xe]
        %v612 = vld [vmem:[%s384 + $0x18] sm:$0xe]
        %v613 = vld [vmem:[%s384 + $0x24] sm:$0xe]
        %v614 = vld [vmem:[%s384 + $0x30] sm:$0xe]
        %v615 = vld [vmem:[%s384 + $0x3c] sm:$0xe]
        %v616 = vld [vmem:[%s384 + $0x48] sm:$0xe]
        %v617 = vld [vmem:[%s384 + $0x54] sm:$0xe]
        %v618 = vld [vmem:[%s384 + $0x60] sm:$0xe]
        %v619 = vld [vmem:[%s384 + $0x6c] sm:$0xe]
        %v620 = vld [vmem:[%s384 + $0x78] sm:$0xe]
        %v621 = vld [vmem:[%s384 + $0x84] sm:$0xe]
        %v622 = vld [vmem:[%s384 + $0x90] sm:$0xe]
        %v623 = vld [vmem:[%s384 + $0x9c] sm:$0xe]
        %v624 = vld [vmem:[%s384 + $0xa8] sm:$0xe]
        %v625 = vld [vmem:[%s384 + $0xb4] sm:$0xe]
        %s626 = scalar_lea.vmem %s384, 12
        %v627 = vld [vmem:[%s626] sm:$0xf]
        %v628 = vld [vmem:[%s626 + $0x4] sm:$0xf]
        %v629 = vld [vmem:[%s626 + $0xc] sm:$0xf]
        %v630 = vld [vmem:[%s626 + $0x10] sm:$0xf]
        %v631 = vld [vmem:[%s626 + $0x18] sm:$0xf]
        %v632 = vld [vmem:[%s626 + $0x1c] sm:$0xf]
        %v633 = vld [vmem:[%s626 + $0x24] sm:$0xf]
        %v634 = vld [vmem:[%s626 + $0x28] sm:$0xf]
        %v635 = vld [vmem:[%s626 + $0x30] sm:$0xf]
        %v636 = vld [vmem:[%s626 + $0x34] sm:$0xf]
        %v637 = vld [vmem:[%s626 + $0x3c] sm:$0xf]
        %v638 = vld [vmem:[%s626 + $0x40] sm:$0xf]
        %v639 = vld [vmem:[%s626 + $0x48] sm:$0xf]
        %v640 = vld [vmem:[%s626 + $0x4c] sm:$0xf]
        %v641 = vld [vmem:[%s626 + $0x54] sm:$0xf]
        %v642 = vld [vmem:[%s626 + $0x58] sm:$0xf]
        %v643 = vld [vmem:[%s626 + $0x60] sm:$0xf]
        %v644 = vld [vmem:[%s626 + $0x64] sm:$0xf]
        %v645 = vld [vmem:[%s626 + $0x6c] sm:$0xf]
        %v646 = vld [vmem:[%s626 + $0x70] sm:$0xf]
        %v647 = vld [vmem:[%s626 + $0x78] sm:$0xf]
        %v648 = vld [vmem:[%s626 + $0x7c] sm:$0xf]
        %v649 = vld [vmem:[%s626 + $0x84] sm:$0xf]
        %v650 = vld [vmem:[%s626 + $0x88] sm:$0xf]
        %v651 = vld [vmem:[%s626 + $0x90] sm:$0xf]
        %v652 = vld [vmem:[%s626 + $0x94] sm:$0xf]
        %v653 = vld [vmem:[%s626 + $0x9c] sm:$0xf]
        %v654 = vld [vmem:[%s626 + $0xa0] sm:$0xf]
        %v655 = vld [vmem:[%s626 + $0xa8] sm:$0xf]
        %v656 = vld [vmem:[%s626 + $0xac] sm:$0xf]
        %v657 = vld [vmem:[%s626 + $0xb4] sm:$0xf]
        %v658 = vld [vmem:[%s626 + $0xb8] sm:$0xf]
        %v659 = vld [vmem:[%s626 + $0x8] sm:$0x1]
        %v660 = vld [vmem:[%s626 + $0x14] sm:$0x1]
        %v661 = vld [vmem:[%s626 + $0x20] sm:$0x1]
        %v662 = vld [vmem:[%s626 + $0x2c] sm:$0x1]
        %v663 = vld [vmem:[%s626 + $0x38] sm:$0x1]
        %v664 = vld [vmem:[%s626 + $0x44] sm:$0x1]
        %v665 = vld [vmem:[%s626 + $0x50] sm:$0x1]
        %v666 = vld [vmem:[%s626 + $0x5c] sm:$0x1]
        %v667 = vld [vmem:[%s626 + $0x68] sm:$0x1]
        %v668 = vld [vmem:[%s626 + $0x74] sm:$0x1]
        %v669 = vld [vmem:[%s626 + $0x80] sm:$0x1]
        %v670 = vld [vmem:[%s626 + $0x8c] sm:$0x1]
        %v671 = vld [vmem:[%s626 + $0x98] sm:$0x1]
        %v672 = vld [vmem:[%s626 + $0xa4] sm:$0x1]
        %v673 = vld [vmem:[%s626 + $0xb0] sm:$0x1]
        %v674 = vld [vmem:[%s626 + $0xbc] sm:$0x1]
        %v675 = vld [vmem:[%s626] sm:$0xe]
        %v676 = vld [vmem:[%s626 + $0xc] sm:$0xe]
        %v677 = vld [vmem:[%s626 + $0x18] sm:$0xe]
        %v678 = vld [vmem:[%s626 + $0x24] sm:$0xe]
        %v679 = vld [vmem:[%s626 + $0x30] sm:$0xe]
        %v680 = vld [vmem:[%s626 + $0x3c] sm:$0xe]
        %v681 = vld [vmem:[%s626 + $0x48] sm:$0xe]
        %v682 = vld [vmem:[%s626 + $0x54] sm:$0xe]
        %v683 = vld [vmem:[%s626 + $0x60] sm:$0xe]
        %v684 = vld [vmem:[%s626 + $0x6c] sm:$0xe]
        %v685 = vld [vmem:[%s626 + $0x78] sm:$0xe]
        %v686 = vld [vmem:[%s626 + $0x84] sm:$0xe]
        %v687 = vld [vmem:[%s626 + $0x90] sm:$0xe]
        %v688 = vld [vmem:[%s626 + $0x9c] sm:$0xe]
        %v689 = vld [vmem:[%s626 + $0xa8] sm:$0xe]
        %v690 = vld [vmem:[%s626 + $0xb4] sm:$0xe]
        %s691 = scalar_lea.vmem %s384, 24
        %v692 = vld [vmem:[%s691] sm:$0xf]
        %v693 = vld [vmem:[%s691 + $0x4] sm:$0xf]
        %v694 = vld [vmem:[%s691 + $0xc] sm:$0xf]
        %v695 = vld [vmem:[%s691 + $0x10] sm:$0xf]
        %v696 = vld [vmem:[%s691 + $0x18] sm:$0xf]
        %v697 = vld [vmem:[%s691 + $0x1c] sm:$0xf]
        %v698 = vld [vmem:[%s691 + $0x24] sm:$0xf]
        %v699 = vld [vmem:[%s691 + $0x28] sm:$0xf]
        %v700 = vld [vmem:[%s691 + $0x30] sm:$0xf]
        %v701 = vld [vmem:[%s691 + $0x34] sm:$0xf]
        %v702 = vld [vmem:[%s691 + $0x3c] sm:$0xf]
        %v703 = vld [vmem:[%s691 + $0x40] sm:$0xf]
        %v704 = vld [vmem:[%s691 + $0x48] sm:$0xf]
        %v705 = vld [vmem:[%s691 + $0x4c] sm:$0xf]
        %v706 = vld [vmem:[%s691 + $0x54] sm:$0xf]
        %v707 = vld [vmem:[%s691 + $0x58] sm:$0xf]
        %v708 = vld [vmem:[%s691 + $0x60] sm:$0xf]
        %v709 = vld [vmem:[%s691 + $0x64] sm:$0xf]
        %v710 = vld [vmem:[%s691 + $0x6c] sm:$0xf]
        %v711 = vld [vmem:[%s691 + $0x70] sm:$0xf]
        %v712 = vld [vmem:[%s691 + $0x78] sm:$0xf]
        %v713 = vld [vmem:[%s691 + $0x7c] sm:$0xf]
        %v714 = vld [vmem:[%s691 + $0x84] sm:$0xf]
        %v715 = vld [vmem:[%s691 + $0x88] sm:$0xf]
        %v716 = vld [vmem:[%s691 + $0x90] sm:$0xf]
        %v717 = vld [vmem:[%s691 + $0x94] sm:$0xf]
        %v718 = vld [vmem:[%s691 + $0x9c] sm:$0xf]
        %v719 = vld [vmem:[%s691 + $0xa0] sm:$0xf]
        %v720 = vld [vmem:[%s691 + $0xa8] sm:$0xf]
        %v721 = vld [vmem:[%s691 + $0xac] sm:$0xf]
        %v722 = vld [vmem:[%s691 + $0xb4] sm:$0xf]
        %v723 = vld [vmem:[%s691 + $0xb8] sm:$0xf]
        %v724 = vld [vmem:[%s691 + $0x8] sm:$0x1]
        %v725 = vld [vmem:[%s691 + $0x14] sm:$0x1]
        %v726 = vld [vmem:[%s691 + $0x20] sm:$0x1]
        %v727 = vld [vmem:[%s691 + $0x2c] sm:$0x1]
        %v728 = vld [vmem:[%s691 + $0x38] sm:$0x1]
        %v729 = vld [vmem:[%s691 + $0x44] sm:$0x1]
        %v730 = vld [vmem:[%s691 + $0x50] sm:$0x1]
        %v731 = vld [vmem:[%s691 + $0x5c] sm:$0x1]
        %v732 = vld [vmem:[%s691 + $0x68] sm:$0x1]
        %v733 = vld [vmem:[%s691 + $0x74] sm:$0x1]
        %v734 = vld [vmem:[%s691 + $0x80] sm:$0x1]
        %v735 = vld [vmem:[%s691 + $0x8c] sm:$0x1]
        %v736 = vld [vmem:[%s691 + $0x98] sm:$0x1]
        %v737 = vld [vmem:[%s691 + $0xa4] sm:$0x1]
        %v738 = vld [vmem:[%s691 + $0xb0] sm:$0x1]
        %v739 = vld [vmem:[%s691 + $0xbc] sm:$0x1]
        %v740 = vld [vmem:[%s691] sm:$0xe]
        %v741 = vld [vmem:[%s691 + $0xc] sm:$0xe]
        %v742 = vld [vmem:[%s691 + $0x18] sm:$0xe]
        %v743 = vld [vmem:[%s691 + $0x24] sm:$0xe]
        %v744 = vld [vmem:[%s691 + $0x30] sm:$0xe]
        %v745 = vld [vmem:[%s691 + $0x3c] sm:$0xe]
        %v746 = vld [vmem:[%s691 + $0x48] sm:$0xe]
        %v747 = vld [vmem:[%s691 + $0x54] sm:$0xe]
        %v748 = vld [vmem:[%s691 + $0x60] sm:$0xe]
        %v749 = vld [vmem:[%s691 + $0x6c] sm:$0xe]
        %v750 = vld [vmem:[%s691 + $0x78] sm:$0xe]
        %v751 = vld [vmem:[%s691 + $0x84] sm:$0xe]
        %v752 = vld [vmem:[%s691 + $0x90] sm:$0xe]
        %v753 = vld [vmem:[%s691 + $0x9c] sm:$0xe]
        %v754 = vld [vmem:[%s691 + $0xa8] sm:$0xe]
        %v755 = vld [vmem:[%s691 + $0xb4] sm:$0xe]
        %v788 = vunpack.c.l.b16 %v562
        %v789 = vunpack.c.l.b16 %v563
        %v790 = vunpack.c.l.b16 %v564
        %v791 = vunpack.c.l.b16 %v565
        %v792 = vunpack.c.l.b16 %v566
        %v793 = vunpack.c.l.b16 %v567
        %v794 = vunpack.c.l.b16 %v568
        %v795 = vunpack.c.l.b16 %v569
        %v796 = vunpack.c.l.b16 %v570
        %v797 = vunpack.c.l.b16 %v571
        %v798 = vunpack.c.l.b16 %v572
        %v799 = vunpack.c.l.b16 %v573
        %v800 = vunpack.c.l.b16 %v574
        %v801 = vunpack.c.l.b16 %v575
        %v802 = vunpack.c.l.b16 %v576
        %v803 = vunpack.c.l.b16 %v577
        %v804 = vunpack.c.l.b16 %v578
        %v805 = vunpack.c.l.b16 %v579
        %v806 = vunpack.c.l.b16 %v580
        %v807 = vunpack.c.l.b16 %v581
        %v808 = vunpack.c.l.b16 %v582
        %v809 = vunpack.c.l.b16 %v583
        %v810 = vunpack.c.l.b16 %v584
        %v811 = vunpack.c.l.b16 %v585
        %v812 = vunpack.c.l.b16 %v586
        %v813 = vunpack.c.l.b16 %v587
        %v814 = vunpack.c.l.b16 %v588
        %v815 = vunpack.c.l.b16 %v589
        %v816 = vunpack.c.l.b16 %v590
        %v817 = vunpack.c.l.b16 %v591
        %v818 = vunpack.c.l.b16 %v592
        %v819 = vunpack.c.l.b16 %v593
        %v820 = vpack.c.b16 %v789, %v788
        %v821 = vpack.c.b16 %v791, %v790
        %v822 = vpack.c.b16 %v793, %v792
        %v823 = vpack.c.b16 %v795, %v794
        %v824 = vpack.c.b16 %v797, %v796
        %v825 = vpack.c.b16 %v799, %v798
        %v826 = vpack.c.b16 %v801, %v800
        %v827 = vpack.c.b16 %v803, %v802
        %v828 = vpack.c.b16 %v805, %v804
        %v829 = vpack.c.b16 %v807, %v806
        %v830 = vpack.c.b16 %v809, %v808
        %v831 = vpack.c.b16 %v811, %v810
        %v832 = vpack.c.b16 %v813, %v812
        %v833 = vpack.c.b16 %v815, %v814
        %v834 = vpack.c.b16 %v817, %v816
        %v835 = vpack.c.b16 %v819, %v818
        %v852 = vunpack.c.l.b16 %v594
        %v853 = vunpack.c.l.b16 %v595
        %v854 = vunpack.c.l.b16 %v596
        %v855 = vunpack.c.l.b16 %v597
        %v856 = vunpack.c.l.b16 %v598
        %v857 = vunpack.c.l.b16 %v599
        %v858 = vunpack.c.l.b16 %v600
        %v859 = vunpack.c.l.b16 %v601
        %v860 = vunpack.c.l.b16 %v602
        %v861 = vunpack.c.l.b16 %v603
        %v862 = vunpack.c.l.b16 %v604
        %v863 = vunpack.c.l.b16 %v605
        %v864 = vunpack.c.l.b16 %v606
        %v865 = vunpack.c.l.b16 %v607
        %v866 = vunpack.c.l.b16 %v608
        %v867 = vunpack.c.l.b16 %v609
        %v868 = vpack.c.b16 %v852, %v852
        %v869 = vpack.c.b16 %v853, %v853
        %v870 = vpack.c.b16 %v854, %v854
        %v871 = vpack.c.b16 %v855, %v855
        %v872 = vpack.c.b16 %v856, %v856
        %v873 = vpack.c.b16 %v857, %v857
        %v874 = vpack.c.b16 %v858, %v858
        %v875 = vpack.c.b16 %v859, %v859
        %v876 = vpack.c.b16 %v860, %v860
        %v877 = vpack.c.b16 %v861, %v861
        %v878 = vpack.c.b16 %v862, %v862
        %v879 = vpack.c.b16 %v863, %v863
        %v880 = vpack.c.b16 %v864, %v864
        %v881 = vpack.c.b16 %v865, %v865
        %v882 = vpack.c.b16 %v866, %v866
        %v883 = vpack.c.b16 %v867, %v867
        %vm884 = vsmask.f32 7424
        %v886 = vshrl.u32 %v820, 16
        %v888 = vshll.u32 %v820, 16
        %v890 = vrot.slane %v888, 1
        %v891 = vor.u32 %v886, %v890
        %v893 = vshll.u32 %v868, 16
        %v895 = vrot.slane %v893, 1
        %v896 = vsel %vm884, %v891, %v895
        %v898 = vshrl.u32 %v821, 16
        %v900 = vshll.u32 %v821, 16
        %v902 = vrot.slane %v900, 1
        %v903 = vor.u32 %v898, %v902
        %v905 = vshll.u32 %v869, 16
        %v907 = vrot.slane %v905, 1
        %v908 = vsel %vm884, %v903, %v907
        %v910 = vshrl.u32 %v822, 16
        %v912 = vshll.u32 %v822, 16
        %v914 = vrot.slane %v912, 1
        %v915 = vor.u32 %v910, %v914
        %v917 = vshll.u32 %v870, 16
        %v919 = vrot.slane %v917, 1
        %v920 = vsel %vm884, %v915, %v919
        %v922 = vshrl.u32 %v823, 16
        %v924 = vshll.u32 %v823, 16
        %v926 = vrot.slane %v924, 1
        %v927 = vor.u32 %v922, %v926
        %v929 = vshll.u32 %v871, 16
        %v931 = vrot.slane %v929, 1
        %v932 = vsel %vm884, %v927, %v931
        %v934 = vshrl.u32 %v824, 16
        %v936 = vshll.u32 %v824, 16
        %v938 = vrot.slane %v936, 1
        %v939 = vor.u32 %v934, %v938
        %v941 = vshll.u32 %v872, 16
        %v943 = vrot.slane %v941, 1
        %v944 = vsel %vm884, %v939, %v943
        %v946 = vshrl.u32 %v825, 16
        %v948 = vshll.u32 %v825, 16
        %v950 = vrot.slane %v948, 1
        %v951 = vor.u32 %v946, %v950
        %v953 = vshll.u32 %v873, 16
        %v955 = vrot.slane %v953, 1
        %v956 = vsel %vm884, %v951, %v955
        %v958 = vshrl.u32 %v826, 16
        %v960 = vshll.u32 %v826, 16
        %v962 = vrot.slane %v960, 1
        %v963 = vor.u32 %v958, %v962
        %v965 = vshll.u32 %v874, 16
        %v967 = vrot.slane %v965, 1
        %v968 = vsel %vm884, %v963, %v967
        %v970 = vshrl.u32 %v827, 16
        %v972 = vshll.u32 %v827, 16
        %v974 = vrot.slane %v972, 1
        %v975 = vor.u32 %v970, %v974
        %v977 = vshll.u32 %v875, 16
        %v979 = vrot.slane %v977, 1
        %v980 = vsel %vm884, %v975, %v979
        %v982 = vshrl.u32 %v828, 16
        %v984 = vshll.u32 %v828, 16
        %v986 = vrot.slane %v984, 1
        %v987 = vor.u32 %v982, %v986
        %v989 = vshll.u32 %v876, 16
        %v991 = vrot.slane %v989, 1
        %v992 = vsel %vm884, %v987, %v991
        %v994 = vshrl.u32 %v829, 16
        %v996 = vshll.u32 %v829, 16
        %v998 = vrot.slane %v996, 1
        %v999 = vor.u32 %v994, %v998
        %v1001 = vshll.u32 %v877, 16
        %v1003 = vrot.slane %v1001, 1
        %v1004 = vsel %vm884, %v999, %v1003
        %v1006 = vshrl.u32 %v830, 16
        %v1008 = vshll.u32 %v830, 16
        %v1010 = vrot.slane %v1008, 1
        %v1011 = vor.u32 %v1006, %v1010
        %v1013 = vshll.u32 %v878, 16
        %v1015 = vrot.slane %v1013, 1
        %v1016 = vsel %vm884, %v1011, %v1015
        %v1018 = vshrl.u32 %v831, 16
        %v1020 = vshll.u32 %v831, 16
        %v1022 = vrot.slane %v1020, 1
        %v1023 = vor.u32 %v1018, %v1022
        %v1025 = vshll.u32 %v879, 16
        %v1027 = vrot.slane %v1025, 1
        %v1028 = vsel %vm884, %v1023, %v1027
        %v1030 = vshrl.u32 %v832, 16
        %v1032 = vshll.u32 %v832, 16
        %v1034 = vrot.slane %v1032, 1
        %v1035 = vor.u32 %v1030, %v1034
        %v1037 = vshll.u32 %v880, 16
        %v1039 = vrot.slane %v1037, 1
        %v1040 = vsel %vm884, %v1035, %v1039
        %v1042 = vshrl.u32 %v833, 16
        %v1044 = vshll.u32 %v833, 16
        %v1046 = vrot.slane %v1044, 1
        %v1047 = vor.u32 %v1042, %v1046
        %v1049 = vshll.u32 %v881, 16
        %v1051 = vrot.slane %v1049, 1
        %v1052 = vsel %vm884, %v1047, %v1051
        %v1054 = vshrl.u32 %v834, 16
        %v1056 = vshll.u32 %v834, 16
        %v1058 = vrot.slane %v1056, 1
        %v1059 = vor.u32 %v1054, %v1058
        %v1061 = vshll.u32 %v882, 16
        %v1063 = vrot.slane %v1061, 1
        %v1064 = vsel %vm884, %v1059, %v1063
        %v1066 = vshrl.u32 %v835, 16
        %v1068 = vshll.u32 %v835, 16
        %v1070 = vrot.slane %v1068, 1
        %v1071 = vor.u32 %v1066, %v1070
        %v1073 = vshll.u32 %v883, 16
        %v1075 = vrot.slane %v1073, 1
        %v1076 = vsel %vm884, %v1071, %v1075
        %1077 = vrot.lane.b32.xlu0 %v896, 16
        %v1078 = vpop.permute.xlu0 %1077
        %1079 = vrot.lane.b32.xlu0 %v908, 16
        %v1080 = vpop.permute.xlu0 %1079
        %1081 = vrot.lane.b32.xlu0 %v920, 16
        %v1082 = vpop.permute.xlu0 %1081
        %1083 = vrot.lane.b32.xlu0 %v932, 16
        %v1084 = vpop.permute.xlu0 %1083
        %1085 = vrot.lane.b32.xlu0 %v944, 16
        %v1086 = vpop.permute.xlu0 %1085
        %1087 = vrot.lane.b32.xlu0 %v956, 16
        %v1088 = vpop.permute.xlu0 %1087
        %1089 = vrot.lane.b32.xlu0 %v968, 16
        %v1090 = vpop.permute.xlu0 %1089
        %1091 = vrot.lane.b32.xlu0 %v980, 16
        %v1092 = vpop.permute.xlu0 %1091
        %1093 = vrot.lane.b32.xlu0 %v992, 16
        %v1094 = vpop.permute.xlu0 %1093
        %1095 = vrot.lane.b32.xlu0 %v1004, 16
        %v1096 = vpop.permute.xlu0 %1095
        %1097 = vrot.lane.b32.xlu0 %v1016, 16
        %v1098 = vpop.permute.xlu0 %1097
        %1099 = vrot.lane.b32.xlu0 %v1028, 16
        %v1100 = vpop.permute.xlu0 %1099
        %1101 = vrot.lane.b32.xlu0 %v1040, 16
        %v1102 = vpop.permute.xlu0 %1101
        %1103 = vrot.lane.b32.xlu0 %v1052, 16
        %v1104 = vpop.permute.xlu0 %1103
        %1105 = vrot.lane.b32.xlu0 %v1064, 16
        %v1106 = vpop.permute.xlu0 %1105
        %1107 = vrot.lane.b32.xlu0 %v1076, 16
        %v1108 = vpop.permute.xlu0 %1107
        %v1125 = vunpack.c.l.b16 %v610
        %v1126 = vunpack.c.l.b16 %v611
        %v1127 = vunpack.c.l.b16 %v612
        %v1128 = vunpack.c.l.b16 %v613
        %v1129 = vunpack.c.l.b16 %v614
        %v1130 = vunpack.c.l.b16 %v615
        %v1131 = vunpack.c.l.b16 %v616
        %v1132 = vunpack.c.l.b16 %v617
        %v1133 = vunpack.c.l.b16 %v618
        %v1134 = vunpack.c.l.b16 %v619
        %v1135 = vunpack.c.l.b16 %v620
        %v1136 = vunpack.c.l.b16 %v621
        %v1137 = vunpack.c.l.b16 %v622
        %v1138 = vunpack.c.l.b16 %v623
        %v1139 = vunpack.c.l.b16 %v624
        %v1140 = vunpack.c.l.b16 %v625
        %v1141 = vpack.c.b16 %v789, %v1125
        %v1142 = vpack.c.b16 %v791, %v1126
        %v1143 = vpack.c.b16 %v793, %v1127
        %v1144 = vpack.c.b16 %v795, %v1128
        %v1145 = vpack.c.b16 %v797, %v1129
        %v1146 = vpack.c.b16 %v799, %v1130
        %v1147 = vpack.c.b16 %v801, %v1131
        %v1148 = vpack.c.b16 %v803, %v1132
        %v1149 = vpack.c.b16 %v805, %v1133
        %v1150 = vpack.c.b16 %v807, %v1134
        %v1151 = vpack.c.b16 %v809, %v1135
        %v1152 = vpack.c.b16 %v811, %v1136
        %v1153 = vpack.c.b16 %v813, %v1137
        %v1154 = vpack.c.b16 %v815, %v1138
        %v1155 = vpack.c.b16 %v817, %v1139
        %v1156 = vpack.c.b16 %v819, %v1140
        %vm1157 = vcmask 1046528
        %v1158 = vrot.slane %v1141, 1
        %v1159 = vrot.slane %v868, 1
        %v1160 = vsel %vm1157, %v1158, %v1159
        %v1161 = vrot.slane %v1142, 1
        %v1162 = vrot.slane %v869, 1
        %v1163 = vsel %vm1157, %v1161, %v1162
        %v1164 = vrot.slane %v1143, 1
        %v1165 = vrot.slane %v870, 1
        %v1166 = vsel %vm1157, %v1164, %v1165
        %v1167 = vrot.slane %v1144, 1
        %v1168 = vrot.slane %v871, 1
        %v1169 = vsel %vm1157, %v1167, %v1168
        %v1170 = vrot.slane %v1145, 1
        %v1171 = vrot.slane %v872, 1
        %v1172 = vsel %vm1157, %v1170, %v1171
        %v1173 = vrot.slane %v1146, 1
        %v1174 = vrot.slane %v873, 1
        %v1175 = vsel %vm1157, %v1173, %v1174
        %v1176 = vrot.slane %v1147, 1
        %v1177 = vrot.slane %v874, 1
        %v1178 = vsel %vm1157, %v1176, %v1177
        %v1179 = vrot.slane %v1148, 1
        %v1180 = vrot.slane %v875, 1
        %v1181 = vsel %vm1157, %v1179, %v1180
        %v1182 = vrot.slane %v1149, 1
        %v1183 = vrot.slane %v876, 1
        %v1184 = vsel %vm1157, %v1182, %v1183
        %v1185 = vrot.slane %v1150, 1
        %v1186 = vrot.slane %v877, 1
        %v1187 = vsel %vm1157, %v1185, %v1186
        %v1188 = vrot.slane %v1151, 1
        %v1189 = vrot.slane %v878, 1
        %v1190 = vsel %vm1157, %v1188, %v1189
        %v1191 = vrot.slane %v1152, 1
        %v1192 = vrot.slane %v879, 1
        %v1193 = vsel %vm1157, %v1191, %v1192
        %v1194 = vrot.slane %v1153, 1
        %v1195 = vrot.slane %v880, 1
        %v1196 = vsel %vm1157, %v1194, %v1195
        %v1197 = vrot.slane %v1154, 1
        %v1198 = vrot.slane %v881, 1
        %v1199 = vsel %vm1157, %v1197, %v1198
        %v1200 = vrot.slane %v1155, 1
        %v1201 = vrot.slane %v882, 1
        %v1202 = vsel %vm1157, %v1200, %v1201
        %v1203 = vrot.slane %v1156, 1
        %v1204 = vrot.slane %v883, 1
        %v1205 = vsel %vm1157, %v1203, %v1204
        %1206 = vrot.lane.b32.xlu0 %v1160, 32
        %v1207 = vpop.permute.xlu0 %1206
        %1208 = vrot.lane.b32.xlu0 %v1163, 32
        %v1209 = vpop.permute.xlu0 %1208
        %1210 = vrot.lane.b32.xlu0 %v1166, 32
        %v1211 = vpop.permute.xlu0 %1210
        %1212 = vrot.lane.b32.xlu0 %v1169, 32
        %v1213 = vpop.permute.xlu0 %1212
        %1214 = vrot.lane.b32.xlu0 %v1172, 32
        %v1215 = vpop.permute.xlu0 %1214
        %1216 = vrot.lane.b32.xlu0 %v1175, 32
        %v1217 = vpop.permute.xlu0 %1216
        %1218 = vrot.lane.b32.xlu0 %v1178, 32
        %v1219 = vpop.permute.xlu0 %1218
        %1220 = vrot.lane.b32.xlu0 %v1181, 32
        %v1221 = vpop.permute.xlu0 %1220
        %1222 = vrot.lane.b32.xlu0 %v1184, 32
        %v1223 = vpop.permute.xlu0 %1222
        %1224 = vrot.lane.b32.xlu0 %v1187, 32
        %v1225 = vpop.permute.xlu0 %1224
        %1226 = vrot.lane.b32.xlu0 %v1190, 32
        %v1227 = vpop.permute.xlu0 %1226
        %1228 = vrot.lane.b32.xlu0 %v1193, 32
        %v1229 = vpop.permute.xlu0 %1228
        %1230 = vrot.lane.b32.xlu0 %v1196, 32
        %v1231 = vpop.permute.xlu0 %1230
        %1232 = vrot.lane.b32.xlu0 %v1199, 32
        %v1233 = vpop.permute.xlu0 %1232
        %1234 = vrot.lane.b32.xlu0 %v1202, 32
        %v1235 = vpop.permute.xlu0 %1234
        %1236 = vrot.lane.b32.xlu0 %v1205, 32
        %v1237 = vpop.permute.xlu0 %1236
        %v1270 = vunpack.c.l.b16 %v627
        %v1271 = vunpack.c.l.b16 %v628
        %v1272 = vunpack.c.l.b16 %v629
        %v1273 = vunpack.c.l.b16 %v630
        %v1274 = vunpack.c.l.b16 %v631
        %v1275 = vunpack.c.l.b16 %v632
        %v1276 = vunpack.c.l.b16 %v633
        %v1277 = vunpack.c.l.b16 %v634
        %v1278 = vunpack.c.l.b16 %v635
        %v1279 = vunpack.c.l.b16 %v636
        %v1280 = vunpack.c.l.b16 %v637
        %v1281 = vunpack.c.l.b16 %v638
        %v1282 = vunpack.c.l.b16 %v639
        %v1283 = vunpack.c.l.b16 %v640
        %v1284 = vunpack.c.l.b16 %v641
        %v1285 = vunpack.c.l.b16 %v642
        %v1286 = vunpack.c.l.b16 %v643
        %v1287 = vunpack.c.l.b16 %v644
        %v1288 = vunpack.c.l.b16 %v645
        %v1289 = vunpack.c.l.b16 %v646
        %v1290 = vunpack.c.l.b16 %v647
        %v1291 = vunpack.c.l.b16 %v648
        %v1292 = vunpack.c.l.b16 %v649
        %v1293 = vunpack.c.l.b16 %v650
        %v1294 = vunpack.c.l.b16 %v651
        %v1295 = vunpack.c.l.b16 %v652
        %v1296 = vunpack.c.l.b16 %v653
        %v1297 = vunpack.c.l.b16 %v654
        %v1298 = vunpack.c.l.b16 %v655
        %v1299 = vunpack.c.l.b16 %v656
        %v1300 = vunpack.c.l.b16 %v657
        %v1301 = vunpack.c.l.b16 %v658
        %v1302 = vpack.c.b16 %v1271, %v1270
        %v1303 = vpack.c.b16 %v1273, %v1272
        %v1304 = vpack.c.b16 %v1275, %v1274
        %v1305 = vpack.c.b16 %v1277, %v1276
        %v1306 = vpack.c.b16 %v1279, %v1278
        %v1307 = vpack.c.b16 %v1281, %v1280
        %v1308 = vpack.c.b16 %v1283, %v1282
        %v1309 = vpack.c.b16 %v1285, %v1284
        %v1310 = vpack.c.b16 %v1287, %v1286
        %v1311 = vpack.c.b16 %v1289, %v1288
        %v1312 = vpack.c.b16 %v1291, %v1290
        %v1313 = vpack.c.b16 %v1293, %v1292
        %v1314 = vpack.c.b16 %v1295, %v1294
        %v1315 = vpack.c.b16 %v1297, %v1296
        %v1316 = vpack.c.b16 %v1299, %v1298
        %v1317 = vpack.c.b16 %v1301, %v1300
        %1318 = vrot.lane.b32.xlu0 %v1302, 48
        %v1319 = vpop.permute.xlu0 %1318
        %1320 = vrot.lane.b32.xlu0 %v1303, 48
        %v1321 = vpop.permute.xlu0 %1320
        %1322 = vrot.lane.b32.xlu0 %v1304, 48
        %v1323 = vpop.permute.xlu0 %1322
        %1324 = vrot.lane.b32.xlu0 %v1305, 48
        %v1325 = vpop.permute.xlu0 %1324
        %1326 = vrot.lane.b32.xlu0 %v1306, 48
        %v1327 = vpop.permute.xlu0 %1326
        %1328 = vrot.lane.b32.xlu0 %v1307, 48
        %v1329 = vpop.permute.xlu0 %1328
        %1330 = vrot.lane.b32.xlu0 %v1308, 48
        %v1331 = vpop.permute.xlu0 %1330
        %1332 = vrot.lane.b32.xlu0 %v1309, 48
        %v1333 = vpop.permute.xlu0 %1332
        %1334 = vrot.lane.b32.xlu0 %v1310, 48
        %v1335 = vpop.permute.xlu0 %1334
        %1336 = vrot.lane.b32.xlu0 %v1311, 48
        %v1337 = vpop.permute.xlu0 %1336
        %1338 = vrot.lane.b32.xlu0 %v1312, 48
        %v1339 = vpop.permute.xlu0 %1338
        %1340 = vrot.lane.b32.xlu0 %v1313, 48
        %v1341 = vpop.permute.xlu0 %1340
        %1342 = vrot.lane.b32.xlu0 %v1314, 48
        %v1343 = vpop.permute.xlu0 %1342
        %1344 = vrot.lane.b32.xlu0 %v1315, 48
        %v1345 = vpop.permute.xlu0 %1344
        %1346 = vrot.lane.b32.xlu0 %v1316, 48
        %v1347 = vpop.permute.xlu0 %1346
        %1348 = vrot.lane.b32.xlu0 %v1317, 48
        %v1349 = vpop.permute.xlu0 %1348
        %v1366 = vunpack.c.l.b16 %v659
        %v1367 = vunpack.c.l.b16 %v660
        %v1368 = vunpack.c.l.b16 %v661
        %v1369 = vunpack.c.l.b16 %v662
        %v1370 = vunpack.c.l.b16 %v663
        %v1371 = vunpack.c.l.b16 %v664
        %v1372 = vunpack.c.l.b16 %v665
        %v1373 = vunpack.c.l.b16 %v666
        %v1374 = vunpack.c.l.b16 %v667
        %v1375 = vunpack.c.l.b16 %v668
        %v1376 = vunpack.c.l.b16 %v669
        %v1377 = vunpack.c.l.b16 %v670
        %v1378 = vunpack.c.l.b16 %v671
        %v1379 = vunpack.c.l.b16 %v672
        %v1380 = vunpack.c.l.b16 %v673
        %v1381 = vunpack.c.l.b16 %v674
        %v1382 = vpack.c.b16 %v1366, %v1366
        %v1383 = vpack.c.b16 %v1367, %v1367
        %v1384 = vpack.c.b16 %v1368, %v1368
        %v1385 = vpack.c.b16 %v1369, %v1369
        %v1386 = vpack.c.b16 %v1370, %v1370
        %v1387 = vpack.c.b16 %v1371, %v1371
        %v1388 = vpack.c.b16 %v1372, %v1372
        %v1389 = vpack.c.b16 %v1373, %v1373
        %v1390 = vpack.c.b16 %v1374, %v1374
        %v1391 = vpack.c.b16 %v1375, %v1375
        %v1392 = vpack.c.b16 %v1376, %v1376
        %v1393 = vpack.c.b16 %v1377, %v1377
        %v1394 = vpack.c.b16 %v1378, %v1378
        %v1395 = vpack.c.b16 %v1379, %v1379
        %v1396 = vpack.c.b16 %v1380, %v1380
        %v1397 = vpack.c.b16 %v1381, %v1381
        %v1399 = vshrl.u32 %v1302, 16
        %v1401 = vshll.u32 %v1302, 16
        %v1403 = vrot.slane %v1401, 1
        %v1404 = vor.u32 %v1399, %v1403
        %v1406 = vshll.u32 %v1382, 16
        %v1408 = vrot.slane %v1406, 1
        %v1409 = vsel %vm884, %v1404, %v1408
        %v1411 = vshrl.u32 %v1303, 16
        %v1413 = vshll.u32 %v1303, 16
        %v1415 = vrot.slane %v1413, 1
        %v1416 = vor.u32 %v1411, %v1415
        %v1418 = vshll.u32 %v1383, 16
        %v1420 = vrot.slane %v1418, 1
        %v1421 = vsel %vm884, %v1416, %v1420
        %v1423 = vshrl.u32 %v1304, 16
        %v1425 = vshll.u32 %v1304, 16
        %v1427 = vrot.slane %v1425, 1
        %v1428 = vor.u32 %v1423, %v1427
        %v1430 = vshll.u32 %v1384, 16
        %v1432 = vrot.slane %v1430, 1
        %v1433 = vsel %vm884, %v1428, %v1432
        %v1435 = vshrl.u32 %v1305, 16
        %v1437 = vshll.u32 %v1305, 16
        %v1439 = vrot.slane %v1437, 1
        %v1440 = vor.u32 %v1435, %v1439
        %v1442 = vshll.u32 %v1385, 16
        %v1444 = vrot.slane %v1442, 1
        %v1445 = vsel %vm884, %v1440, %v1444
        %v1447 = vshrl.u32 %v1306, 16
        %v1449 = vshll.u32 %v1306, 16
        %v1451 = vrot.slane %v1449, 1
        %v1452 = vor.u32 %v1447, %v1451
        %v1454 = vshll.u32 %v1386, 16
        %v1456 = vrot.slane %v1454, 1
        %v1457 = vsel %vm884, %v1452, %v1456
        %v1459 = vshrl.u32 %v1307, 16
        %v1461 = vshll.u32 %v1307, 16
        %v1463 = vrot.slane %v1461, 1
        %v1464 = vor.u32 %v1459, %v1463
        %v1466 = vshll.u32 %v1387, 16
        %v1468 = vrot.slane %v1466, 1
        %v1469 = vsel %vm884, %v1464, %v1468
        %v1471 = vshrl.u32 %v1308, 16
        %v1473 = vshll.u32 %v1308, 16
        %v1475 = vrot.slane %v1473, 1
        %v1476 = vor.u32 %v1471, %v1475
        %v1478 = vshll.u32 %v1388, 16
        %v1480 = vrot.slane %v1478, 1
        %v1481 = vsel %vm884, %v1476, %v1480
        %v1483 = vshrl.u32 %v1309, 16
        %v1485 = vshll.u32 %v1309, 16
        %v1487 = vrot.slane %v1485, 1
        %v1488 = vor.u32 %v1483, %v1487
        %v1490 = vshll.u32 %v1389, 16
        %v1492 = vrot.slane %v1490, 1
        %v1493 = vsel %vm884, %v1488, %v1492
        %v1495 = vshrl.u32 %v1310, 16
        %v1497 = vshll.u32 %v1310, 16
        %v1499 = vrot.slane %v1497, 1
        %v1500 = vor.u32 %v1495, %v1499
        %v1502 = vshll.u32 %v1390, 16
        %v1504 = vrot.slane %v1502, 1
        %v1505 = vsel %vm884, %v1500, %v1504
        %v1507 = vshrl.u32 %v1311, 16
        %v1509 = vshll.u32 %v1311, 16
        %v1511 = vrot.slane %v1509, 1
        %v1512 = vor.u32 %v1507, %v1511
        %v1514 = vshll.u32 %v1391, 16
        %v1516 = vrot.slane %v1514, 1
        %v1517 = vsel %vm884, %v1512, %v1516
        %v1519 = vshrl.u32 %v1312, 16
        %v1521 = vshll.u32 %v1312, 16
        %v1523 = vrot.slane %v1521, 1
        %v1524 = vor.u32 %v1519, %v1523
        %v1526 = vshll.u32 %v1392, 16
        %v1528 = vrot.slane %v1526, 1
        %v1529 = vsel %vm884, %v1524, %v1528
        %v1531 = vshrl.u32 %v1313, 16
        %v1533 = vshll.u32 %v1313, 16
        %v1535 = vrot.slane %v1533, 1
        %v1536 = vor.u32 %v1531, %v1535
        %v1538 = vshll.u32 %v1393, 16
        %v1540 = vrot.slane %v1538, 1
        %v1541 = vsel %vm884, %v1536, %v1540
        %v1543 = vshrl.u32 %v1314, 16
        %v1545 = vshll.u32 %v1314, 16
        %v1547 = vrot.slane %v1545, 1
        %v1548 = vor.u32 %v1543, %v1547
        %v1550 = vshll.u32 %v1394, 16
        %v1552 = vrot.slane %v1550, 1
        %v1553 = vsel %vm884, %v1548, %v1552
        %v1555 = vshrl.u32 %v1315, 16
        %v1557 = vshll.u32 %v1315, 16
        %v1559 = vrot.slane %v1557, 1
        %v1560 = vor.u32 %v1555, %v1559
        %v1562 = vshll.u32 %v1395, 16
        %v1564 = vrot.slane %v1562, 1
        %v1565 = vsel %vm884, %v1560, %v1564
        %v1567 = vshrl.u32 %v1316, 16
        %v1569 = vshll.u32 %v1316, 16
        %v1571 = vrot.slane %v1569, 1
        %v1572 = vor.u32 %v1567, %v1571
        %v1574 = vshll.u32 %v1396, 16
        %v1576 = vrot.slane %v1574, 1
        %v1577 = vsel %vm884, %v1572, %v1576
        %v1579 = vshrl.u32 %v1317, 16
        %v1581 = vshll.u32 %v1317, 16
        %v1583 = vrot.slane %v1581, 1
        %v1584 = vor.u32 %v1579, %v1583
        %v1586 = vshll.u32 %v1397, 16
        %v1588 = vrot.slane %v1586, 1
        %v1589 = vsel %vm884, %v1584, %v1588
        %1590 = vrot.lane.b32.xlu0 %v1409, 64
        %v1591 = vpop.permute.xlu0 %1590
        %1592 = vrot.lane.b32.xlu0 %v1421, 64
        %v1593 = vpop.permute.xlu0 %1592
        %1594 = vrot.lane.b32.xlu0 %v1433, 64
        %v1595 = vpop.permute.xlu0 %1594
        %1596 = vrot.lane.b32.xlu0 %v1445, 64
        %v1597 = vpop.permute.xlu0 %1596
        %1598 = vrot.lane.b32.xlu0 %v1457, 64
        %v1599 = vpop.permute.xlu0 %1598
        %1600 = vrot.lane.b32.xlu0 %v1469, 64
        %v1601 = vpop.permute.xlu0 %1600
        %1602 = vrot.lane.b32.xlu0 %v1481, 64
        %v1603 = vpop.permute.xlu0 %1602
        %1604 = vrot.lane.b32.xlu0 %v1493, 64
        %v1605 = vpop.permute.xlu0 %1604
        %1606 = vrot.lane.b32.xlu0 %v1505, 64
        %v1607 = vpop.permute.xlu0 %1606
        %1608 = vrot.lane.b32.xlu0 %v1517, 64
        %v1609 = vpop.permute.xlu0 %1608
        %1610 = vrot.lane.b32.xlu0 %v1529, 64
        %v1611 = vpop.permute.xlu0 %1610
        %1612 = vrot.lane.b32.xlu0 %v1541, 64
        %v1613 = vpop.permute.xlu0 %1612
        %1614 = vrot.lane.b32.xlu0 %v1553, 64
        %v1615 = vpop.permute.xlu0 %1614
        %1616 = vrot.lane.b32.xlu0 %v1565, 64
        %v1617 = vpop.permute.xlu0 %1616
        %1618 = vrot.lane.b32.xlu0 %v1577, 64
        %v1619 = vpop.permute.xlu0 %1618
        %1620 = vrot.lane.b32.xlu0 %v1589, 64
        %v1621 = vpop.permute.xlu0 %1620
        %v1638 = vunpack.c.l.b16 %v675
        %v1639 = vunpack.c.l.b16 %v676
        %v1640 = vunpack.c.l.b16 %v677
        %v1641 = vunpack.c.l.b16 %v678
        %v1642 = vunpack.c.l.b16 %v679
        %v1643 = vunpack.c.l.b16 %v680
        %v1644 = vunpack.c.l.b16 %v681
        %v1645 = vunpack.c.l.b16 %v682
        %v1646 = vunpack.c.l.b16 %v683
        %v1647 = vunpack.c.l.b16 %v684
        %v1648 = vunpack.c.l.b16 %v685
        %v1649 = vunpack.c.l.b16 %v686
        %v1650 = vunpack.c.l.b16 %v687
        %v1651 = vunpack.c.l.b16 %v688
        %v1652 = vunpack.c.l.b16 %v689
        %v1653 = vunpack.c.l.b16 %v690
        %v1654 = vpack.c.b16 %v1271, %v1638
        %v1655 = vpack.c.b16 %v1273, %v1639
        %v1656 = vpack.c.b16 %v1275, %v1640
        %v1657 = vpack.c.b16 %v1277, %v1641
        %v1658 = vpack.c.b16 %v1279, %v1642
        %v1659 = vpack.c.b16 %v1281, %v1643
        %v1660 = vpack.c.b16 %v1283, %v1644
        %v1661 = vpack.c.b16 %v1285, %v1645
        %v1662 = vpack.c.b16 %v1287, %v1646
        %v1663 = vpack.c.b16 %v1289, %v1647
        %v1664 = vpack.c.b16 %v1291, %v1648
        %v1665 = vpack.c.b16 %v1293, %v1649
        %v1666 = vpack.c.b16 %v1295, %v1650
        %v1667 = vpack.c.b16 %v1297, %v1651
        %v1668 = vpack.c.b16 %v1299, %v1652
        %v1669 = vpack.c.b16 %v1301, %v1653
        %v1670 = vrot.slane %v1654, 1
        %v1671 = vrot.slane %v1382, 1
        %v1672 = vsel %vm1157, %v1670, %v1671
        %v1673 = vrot.slane %v1655, 1
        %v1674 = vrot.slane %v1383, 1
        %v1675 = vsel %vm1157, %v1673, %v1674
        %v1676 = vrot.slane %v1656, 1
        %v1677 = vrot.slane %v1384, 1
        %v1678 = vsel %vm1157, %v1676, %v1677
        %v1679 = vrot.slane %v1657, 1
        %v1680 = vrot.slane %v1385, 1
        %v1681 = vsel %vm1157, %v1679, %v1680
        %v1682 = vrot.slane %v1658, 1
        %v1683 = vrot.slane %v1386, 1
        %v1684 = vsel %vm1157, %v1682, %v1683
        %v1685 = vrot.slane %v1659, 1
        %v1686 = vrot.slane %v1387, 1
        %v1687 = vsel %vm1157, %v1685, %v1686
        %v1688 = vrot.slane %v1660, 1
        %v1689 = vrot.slane %v1388, 1
        %v1690 = vsel %vm1157, %v1688, %v1689
        %v1691 = vrot.slane %v1661, 1
        %v1692 = vrot.slane %v1389, 1
        %v1693 = vsel %vm1157, %v1691, %v1692
        %v1694 = vrot.slane %v1662, 1
        %v1695 = vrot.slane %v1390, 1
        %v1696 = vsel %vm1157, %v1694, %v1695
        %v1697 = vrot.slane %v1663, 1
        %v1698 = vrot.slane %v1391, 1
        %v1699 = vsel %vm1157, %v1697, %v1698
        %v1700 = vrot.slane %v1664, 1
        %v1701 = vrot.slane %v1392, 1
        %v1702 = vsel %vm1157, %v1700, %v1701
        %v1703 = vrot.slane %v1665, 1
        %v1704 = vrot.slane %v1393, 1
        %v1705 = vsel %vm1157, %v1703, %v1704
        %v1706 = vrot.slane %v1666, 1
        %v1707 = vrot.slane %v1394, 1
        %v1708 = vsel %vm1157, %v1706, %v1707
        %v1709 = vrot.slane %v1667, 1
        %v1710 = vrot.slane %v1395, 1
        %v1711 = vsel %vm1157, %v1709, %v1710
        %v1712 = vrot.slane %v1668, 1
        %v1713 = vrot.slane %v1396, 1
        %v1714 = vsel %vm1157, %v1712, %v1713
        %v1715 = vrot.slane %v1669, 1
        %v1716 = vrot.slane %v1397, 1
        %v1717 = vsel %vm1157, %v1715, %v1716
        %1718 = vrot.lane.b32.xlu0 %v1672, 80
        %v1719 = vpop.permute.xlu0 %1718
        %1720 = vrot.lane.b32.xlu0 %v1675, 80
        %v1721 = vpop.permute.xlu0 %1720
        %1722 = vrot.lane.b32.xlu0 %v1678, 80
        %v1723 = vpop.permute.xlu0 %1722
        %1724 = vrot.lane.b32.xlu0 %v1681, 80
        %v1725 = vpop.permute.xlu0 %1724
        %1726 = vrot.lane.b32.xlu0 %v1684, 80
        %v1727 = vpop.permute.xlu0 %1726
        %1728 = vrot.lane.b32.xlu0 %v1687, 80
        %v1729 = vpop.permute.xlu0 %1728
        %1730 = vrot.lane.b32.xlu0 %v1690, 80
        %v1731 = vpop.permute.xlu0 %1730
        %1732 = vrot.lane.b32.xlu0 %v1693, 80
        %v1733 = vpop.permute.xlu0 %1732
        %1734 = vrot.lane.b32.xlu0 %v1696, 80
        %v1735 = vpop.permute.xlu0 %1734
        %1736 = vrot.lane.b32.xlu0 %v1699, 80
        %v1737 = vpop.permute.xlu0 %1736
        %1738 = vrot.lane.b32.xlu0 %v1702, 80
        %v1739 = vpop.permute.xlu0 %1738
        %1740 = vrot.lane.b32.xlu0 %v1705, 80
        %v1741 = vpop.permute.xlu0 %1740
        %1742 = vrot.lane.b32.xlu0 %v1708, 80
        %v1743 = vpop.permute.xlu0 %1742
        %1744 = vrot.lane.b32.xlu0 %v1711, 80
        %v1745 = vpop.permute.xlu0 %1744
        %1746 = vrot.lane.b32.xlu0 %v1714, 80
        %v1747 = vpop.permute.xlu0 %1746
        %1748 = vrot.lane.b32.xlu0 %v1717, 80
        %v1749 = vpop.permute.xlu0 %1748
        %v1782 = vunpack.c.l.b16 %v692
        %v1783 = vunpack.c.l.b16 %v693
        %v1784 = vunpack.c.l.b16 %v694
        %v1785 = vunpack.c.l.b16 %v695
        %v1786 = vunpack.c.l.b16 %v696
        %v1787 = vunpack.c.l.b16 %v697
        %v1788 = vunpack.c.l.b16 %v698
        %v1789 = vunpack.c.l.b16 %v699
        %v1790 = vunpack.c.l.b16 %v700
        %v1791 = vunpack.c.l.b16 %v701
        %v1792 = vunpack.c.l.b16 %v702
        %v1793 = vunpack.c.l.b16 %v703
        %v1794 = vunpack.c.l.b16 %v704
        %v1795 = vunpack.c.l.b16 %v705
        %v1796 = vunpack.c.l.b16 %v706
        %v1797 = vunpack.c.l.b16 %v707
        %v1798 = vunpack.c.l.b16 %v708
        %v1799 = vunpack.c.l.b16 %v709
        %v1800 = vunpack.c.l.b16 %v710
        %v1801 = vunpack.c.l.b16 %v711
        %v1802 = vunpack.c.l.b16 %v712
        %v1803 = vunpack.c.l.b16 %v713
        %v1804 = vunpack.c.l.b16 %v714
        %v1805 = vunpack.c.l.b16 %v715
        %v1806 = vunpack.c.l.b16 %v716
        %v1807 = vunpack.c.l.b16 %v717
        %v1808 = vunpack.c.l.b16 %v718
        %v1809 = vunpack.c.l.b16 %v719
        %v1810 = vunpack.c.l.b16 %v720
        %v1811 = vunpack.c.l.b16 %v721
        %v1812 = vunpack.c.l.b16 %v722
        %v1813 = vunpack.c.l.b16 %v723
        %v1814 = vpack.c.b16 %v1783, %v1782
        %v1815 = vpack.c.b16 %v1785, %v1784
        %v1816 = vpack.c.b16 %v1787, %v1786
        %v1817 = vpack.c.b16 %v1789, %v1788
        %v1818 = vpack.c.b16 %v1791, %v1790
        %v1819 = vpack.c.b16 %v1793, %v1792
        %v1820 = vpack.c.b16 %v1795, %v1794
        %v1821 = vpack.c.b16 %v1797, %v1796
        %v1822 = vpack.c.b16 %v1799, %v1798
        %v1823 = vpack.c.b16 %v1801, %v1800
        %v1824 = vpack.c.b16 %v1803, %v1802
        %v1825 = vpack.c.b16 %v1805, %v1804
        %v1826 = vpack.c.b16 %v1807, %v1806
        %v1827 = vpack.c.b16 %v1809, %v1808
        %v1828 = vpack.c.b16 %v1811, %v1810
        %v1829 = vpack.c.b16 %v1813, %v1812
        %1830 = vrot.lane.b32.xlu0 %v1814, 96
        %v1831 = vpop.permute.xlu0 %1830
        %1832 = vrot.lane.b32.xlu0 %v1815, 96
        %v1833 = vpop.permute.xlu0 %1832
        %1834 = vrot.lane.b32.xlu0 %v1816, 96
        %v1835 = vpop.permute.xlu0 %1834
        %1836 = vrot.lane.b32.xlu0 %v1817, 96
        %v1837 = vpop.permute.xlu0 %1836
        %1838 = vrot.lane.b32.xlu0 %v1818, 96
        %v1839 = vpop.permute.xlu0 %1838
        %1840 = vrot.lane.b32.xlu0 %v1819, 96
        %v1841 = vpop.permute.xlu0 %1840
        %1842 = vrot.lane.b32.xlu0 %v1820, 96
        %v1843 = vpop.permute.xlu0 %1842
        %1844 = vrot.lane.b32.xlu0 %v1821, 96
        %v1845 = vpop.permute.xlu0 %1844
        %1846 = vrot.lane.b32.xlu0 %v1822, 96
        %v1847 = vpop.permute.xlu0 %1846
        %1848 = vrot.lane.b32.xlu0 %v1823, 96
        %v1849 = vpop.permute.xlu0 %1848
        %1850 = vrot.lane.b32.xlu0 %v1824, 96
        %v1851 = vpop.permute.xlu0 %1850
        %1852 = vrot.lane.b32.xlu0 %v1825, 96
        %v1853 = vpop.permute.xlu0 %1852
        %1854 = vrot.lane.b32.xlu0 %v1826, 96
        %v1855 = vpop.permute.xlu0 %1854
        %1856 = vrot.lane.b32.xlu0 %v1827, 96
        %v1857 = vpop.permute.xlu0 %1856
        %1858 = vrot.lane.b32.xlu0 %v1828, 96
        %v1859 = vpop.permute.xlu0 %1858
        %1860 = vrot.lane.b32.xlu0 %v1829, 96
        %v1861 = vpop.permute.xlu0 %1860
        %v1878 = vunpack.c.l.b16 %v724
        %v1879 = vunpack.c.l.b16 %v725
        %v1880 = vunpack.c.l.b16 %v726
        %v1881 = vunpack.c.l.b16 %v727
        %v1882 = vunpack.c.l.b16 %v728
        %v1883 = vunpack.c.l.b16 %v729
        %v1884 = vunpack.c.l.b16 %v730
        %v1885 = vunpack.c.l.b16 %v731
        %v1886 = vunpack.c.l.b16 %v732
        %v1887 = vunpack.c.l.b16 %v733
        %v1888 = vunpack.c.l.b16 %v734
        %v1889 = vunpack.c.l.b16 %v735
        %v1890 = vunpack.c.l.b16 %v736
        %v1891 = vunpack.c.l.b16 %v737
        %v1892 = vunpack.c.l.b16 %v738
        %v1893 = vunpack.c.l.b16 %v739
        %v1894 = vpack.c.b16 %v1878, %v1878
        %v1895 = vpack.c.b16 %v1879, %v1879
        %v1896 = vpack.c.b16 %v1880, %v1880
        %v1897 = vpack.c.b16 %v1881, %v1881
        %v1898 = vpack.c.b16 %v1882, %v1882
        %v1899 = vpack.c.b16 %v1883, %v1883
        %v1900 = vpack.c.b16 %v1884, %v1884
        %v1901 = vpack.c.b16 %v1885, %v1885
        %v1902 = vpack.c.b16 %v1886, %v1886
        %v1903 = vpack.c.b16 %v1887, %v1887
        %v1904 = vpack.c.b16 %v1888, %v1888
        %v1905 = vpack.c.b16 %v1889, %v1889
        %v1906 = vpack.c.b16 %v1890, %v1890
        %v1907 = vpack.c.b16 %v1891, %v1891
        %v1908 = vpack.c.b16 %v1892, %v1892
        %v1909 = vpack.c.b16 %v1893, %v1893
        %v1911 = vshrl.u32 %v1814, 16
        %v1913 = vshll.u32 %v1814, 16
        %v1915 = vrot.slane %v1913, 1
        %v1916 = vor.u32 %v1911, %v1915
        %v1918 = vshll.u32 %v1894, 16
        %v1920 = vrot.slane %v1918, 1
        %v1921 = vsel %vm884, %v1916, %v1920
        %v1923 = vshrl.u32 %v1815, 16
        %v1925 = vshll.u32 %v1815, 16
        %v1927 = vrot.slane %v1925, 1
        %v1928 = vor.u32 %v1923, %v1927
        %v1930 = vshll.u32 %v1895, 16
        %v1932 = vrot.slane %v1930, 1
        %v1933 = vsel %vm884, %v1928, %v1932
        %v1935 = vshrl.u32 %v1816, 16
        %v1937 = vshll.u32 %v1816, 16
        %v1939 = vrot.slane %v1937, 1
        %v1940 = vor.u32 %v1935, %v1939
        %v1942 = vshll.u32 %v1896, 16
        %v1944 = vrot.slane %v1942, 1
        %v1945 = vsel %vm884, %v1940, %v1944
        %v1947 = vshrl.u32 %v1817, 16
        %v1949 = vshll.u32 %v1817, 16
        %v1951 = vrot.slane %v1949, 1
        %v1952 = vor.u32 %v1947, %v1951
        %v1954 = vshll.u32 %v1897, 16
        %v1956 = vrot.slane %v1954, 1
        %v1957 = vsel %vm884, %v1952, %v1956
        %v1959 = vshrl.u32 %v1818, 16
        %v1961 = vshll.u32 %v1818, 16
        %v1963 = vrot.slane %v1961, 1
        %v1964 = vor.u32 %v1959, %v1963
        %v1966 = vshll.u32 %v1898, 16
        %v1968 = vrot.slane %v1966, 1
        %v1969 = vsel %vm884, %v1964, %v1968
        %v1971 = vshrl.u32 %v1819, 16
        %v1973 = vshll.u32 %v1819, 16
        %v1975 = vrot.slane %v1973, 1
        %v1976 = vor.u32 %v1971, %v1975
        %v1978 = vshll.u32 %v1899, 16
        %v1980 = vrot.slane %v1978, 1
        %v1981 = vsel %vm884, %v1976, %v1980
        %v1983 = vshrl.u32 %v1820, 16
        %v1985 = vshll.u32 %v1820, 16
        %v1987 = vrot.slane %v1985, 1
        %v1988 = vor.u32 %v1983, %v1987
        %v1990 = vshll.u32 %v1900, 16
        %v1992 = vrot.slane %v1990, 1
        %v1993 = vsel %vm884, %v1988, %v1992
        %v1995 = vshrl.u32 %v1821, 16
        %v1997 = vshll.u32 %v1821, 16
        %v1999 = vrot.slane %v1997, 1
        %v2000 = vor.u32 %v1995, %v1999
        %v2002 = vshll.u32 %v1901, 16
        %v2004 = vrot.slane %v2002, 1
        %v2005 = vsel %vm884, %v2000, %v2004
        %v2007 = vshrl.u32 %v1822, 16
        %v2009 = vshll.u32 %v1822, 16
        %v2011 = vrot.slane %v2009, 1
        %v2012 = vor.u32 %v2007, %v2011
        %v2014 = vshll.u32 %v1902, 16
        %v2016 = vrot.slane %v2014, 1
        %v2017 = vsel %vm884, %v2012, %v2016
        %v2019 = vshrl.u32 %v1823, 16
        %v2021 = vshll.u32 %v1823, 16
        %v2023 = vrot.slane %v2021, 1
        %v2024 = vor.u32 %v2019, %v2023
        %v2026 = vshll.u32 %v1903, 16
        %v2028 = vrot.slane %v2026, 1
        %v2029 = vsel %vm884, %v2024, %v2028
        %v2031 = vshrl.u32 %v1824, 16
        %v2033 = vshll.u32 %v1824, 16
        %v2035 = vrot.slane %v2033, 1
        %v2036 = vor.u32 %v2031, %v2035
        %v2038 = vshll.u32 %v1904, 16
        %v2040 = vrot.slane %v2038, 1
        %v2041 = vsel %vm884, %v2036, %v2040
        %v2043 = vshrl.u32 %v1825, 16
        %v2045 = vshll.u32 %v1825, 16
        %v2047 = vrot.slane %v2045, 1
        %v2048 = vor.u32 %v2043, %v2047
        %v2050 = vshll.u32 %v1905, 16
        %v2052 = vrot.slane %v2050, 1
        %v2053 = vsel %vm884, %v2048, %v2052
        %v2055 = vshrl.u32 %v1826, 16
        %v2057 = vshll.u32 %v1826, 16
        %v2059 = vrot.slane %v2057, 1
        %v2060 = vor.u32 %v2055, %v2059
        %v2062 = vshll.u32 %v1906, 16
        %v2064 = vrot.slane %v2062, 1
        %v2065 = vsel %vm884, %v2060, %v2064
        %v2067 = vshrl.u32 %v1827, 16
        %v2069 = vshll.u32 %v1827, 16
        %v2071 = vrot.slane %v2069, 1
        %v2072 = vor.u32 %v2067, %v2071
        %v2074 = vshll.u32 %v1907, 16
        %v2076 = vrot.slane %v2074, 1
        %v2077 = vsel %vm884, %v2072, %v2076
        %v2079 = vshrl.u32 %v1828, 16
        %v2081 = vshll.u32 %v1828, 16
        %v2083 = vrot.slane %v2081, 1
        %v2084 = vor.u32 %v2079, %v2083
        %v2086 = vshll.u32 %v1908, 16
        %v2088 = vrot.slane %v2086, 1
        %v2089 = vsel %vm884, %v2084, %v2088
        %v2091 = vshrl.u32 %v1829, 16
        %v2093 = vshll.u32 %v1829, 16
        %v2095 = vrot.slane %v2093, 1
        %v2096 = vor.u32 %v2091, %v2095
        %v2098 = vshll.u32 %v1909, 16
        %v2100 = vrot.slane %v2098, 1
        %v2101 = vsel %vm884, %v2096, %v2100
        %2102 = vrot.lane.b32.xlu0 %v1921, 112
        %v2103 = vpop.permute.xlu0 %2102
        %2104 = vrot.lane.b32.xlu0 %v1933, 112
        %v2105 = vpop.permute.xlu0 %2104
        %2106 = vrot.lane.b32.xlu0 %v1945, 112
        %v2107 = vpop.permute.xlu0 %2106
        %2108 = vrot.lane.b32.xlu0 %v1957, 112
        %v2109 = vpop.permute.xlu0 %2108
        %2110 = vrot.lane.b32.xlu0 %v1969, 112
        %v2111 = vpop.permute.xlu0 %2110
        %2112 = vrot.lane.b32.xlu0 %v1981, 112
        %v2113 = vpop.permute.xlu0 %2112
        %2114 = vrot.lane.b32.xlu0 %v1993, 112
        %v2115 = vpop.permute.xlu0 %2114
        %2116 = vrot.lane.b32.xlu0 %v2005, 112
        %v2117 = vpop.permute.xlu0 %2116
        %2118 = vrot.lane.b32.xlu0 %v2017, 112
        %v2119 = vpop.permute.xlu0 %2118
        %2120 = vrot.lane.b32.xlu0 %v2029, 112
        %v2121 = vpop.permute.xlu0 %2120
        %2122 = vrot.lane.b32.xlu0 %v2041, 112
        %v2123 = vpop.permute.xlu0 %2122
        %2124 = vrot.lane.b32.xlu0 %v2053, 112
        %v2125 = vpop.permute.xlu0 %2124
        %2126 = vrot.lane.b32.xlu0 %v2065, 112
        %v2127 = vpop.permute.xlu0 %2126
        %2128 = vrot.lane.b32.xlu0 %v2077, 112
        %v2129 = vpop.permute.xlu0 %2128
        %2130 = vrot.lane.b32.xlu0 %v2089, 112
        %v2131 = vpop.permute.xlu0 %2130
        %2132 = vrot.lane.b32.xlu0 %v2101, 112
        %v2133 = vpop.permute.xlu0 %2132
        %v2150 = vunpack.c.l.b16 %v740
        %v2151 = vunpack.c.l.b16 %v741
        %v2152 = vunpack.c.l.b16 %v742
        %v2153 = vunpack.c.l.b16 %v743
        %v2154 = vunpack.c.l.b16 %v744
        %v2155 = vunpack.c.l.b16 %v745
        %v2156 = vunpack.c.l.b16 %v746
        %v2157 = vunpack.c.l.b16 %v747
        %v2158 = vunpack.c.l.b16 %v748
        %v2159 = vunpack.c.l.b16 %v749
        %v2160 = vunpack.c.l.b16 %v750
        %v2161 = vunpack.c.l.b16 %v751
        %v2162 = vunpack.c.l.b16 %v752
        %v2163 = vunpack.c.l.b16 %v753
        %v2164 = vunpack.c.l.b16 %v754
        %v2165 = vunpack.c.l.b16 %v755
        %v2166 = vpack.c.b16 %v1783, %v2150
        %v2167 = vpack.c.b16 %v1785, %v2151
        %v2168 = vpack.c.b16 %v1787, %v2152
        %v2169 = vpack.c.b16 %v1789, %v2153
        %v2170 = vpack.c.b16 %v1791, %v2154
        %v2171 = vpack.c.b16 %v1793, %v2155
        %v2172 = vpack.c.b16 %v1795, %v2156
        %v2173 = vpack.c.b16 %v1797, %v2157
        %v2174 = vpack.c.b16 %v1799, %v2158
        %v2175 = vpack.c.b16 %v1801, %v2159
        %v2176 = vpack.c.b16 %v1803, %v2160
        %v2177 = vpack.c.b16 %v1805, %v2161
        %v2178 = vpack.c.b16 %v1807, %v2162
        %v2179 = vpack.c.b16 %v1809, %v2163
        %v2180 = vpack.c.b16 %v1811, %v2164
        %v2181 = vpack.c.b16 %v1813, %v2165
        %v2182 = vrot.slane %v2166, 1
        %v2183 = vrot.slane %v1894, 1
        %v2184 = vsel %vm1157, %v2182, %v2183
        %v2185 = vrot.slane %v2167, 1
        %v2186 = vrot.slane %v1895, 1
        %v2187 = vsel %vm1157, %v2185, %v2186
        %v2188 = vrot.slane %v2168, 1
        %v2189 = vrot.slane %v1896, 1
        %v2190 = vsel %vm1157, %v2188, %v2189
        %v2191 = vrot.slane %v2169, 1
        %v2192 = vrot.slane %v1897, 1
        %v2193 = vsel %vm1157, %v2191, %v2192
        %v2194 = vrot.slane %v2170, 1
        %v2195 = vrot.slane %v1898, 1
        %v2196 = vsel %vm1157, %v2194, %v2195
        %v2197 = vrot.slane %v2171, 1
        %v2198 = vrot.slane %v1899, 1
        %v2199 = vsel %vm1157, %v2197, %v2198
        %v2200 = vrot.slane %v2172, 1
        %v2201 = vrot.slane %v1900, 1
        %v2202 = vsel %vm1157, %v2200, %v2201
        %v2203 = vrot.slane %v2173, 1
        %v2204 = vrot.slane %v1901, 1
        %v2205 = vsel %vm1157, %v2203, %v2204
        %v2206 = vrot.slane %v2174, 1
        %v2207 = vrot.slane %v1902, 1
        %v2208 = vsel %vm1157, %v2206, %v2207
        %v2209 = vrot.slane %v2175, 1
        %v2210 = vrot.slane %v1903, 1
        %v2211 = vsel %vm1157, %v2209, %v2210
        %v2212 = vrot.slane %v2176, 1
        %v2213 = vrot.slane %v1904, 1
        %v2214 = vsel %vm1157, %v2212, %v2213
        %v2215 = vrot.slane %v2177, 1
        %v2216 = vrot.slane %v1905, 1
        %v2217 = vsel %vm1157, %v2215, %v2216
        %v2218 = vrot.slane %v2178, 1
        %v2219 = vrot.slane %v1906, 1
        %v2220 = vsel %vm1157, %v2218, %v2219
        %v2221 = vrot.slane %v2179, 1
        %v2222 = vrot.slane %v1907, 1
        %v2223 = vsel %vm1157, %v2221, %v2222
        %v2224 = vrot.slane %v2180, 1
        %v2225 = vrot.slane %v1908, 1
        %v2226 = vsel %vm1157, %v2224, %v2225
        %v2227 = vrot.slane %v2181, 1
        %v2228 = vrot.slane %v1909, 1
        %v2229 = vsel %vm1157, %v2227, %v2228
        %vm2230 = vcmask 130048
        %v2232 = vsel %vm2230, %v820, %v1078
        %v2234 = vsel %vm2230, %v821, %v1080
        %v2236 = vsel %vm2230, %v822, %v1082
        %v2238 = vsel %vm2230, %v823, %v1084
        %v2240 = vsel %vm2230, %v824, %v1086
        %v2242 = vsel %vm2230, %v825, %v1088
        %v2244 = vsel %vm2230, %v826, %v1090
        %v2246 = vsel %vm2230, %v827, %v1092
        %v2248 = vsel %vm2230, %v828, %v1094
        %v2250 = vsel %vm2230, %v829, %v1096
        %v2252 = vsel %vm2230, %v830, %v1098
        %v2254 = vsel %vm2230, %v831, %v1100
        %v2256 = vsel %vm2230, %v832, %v1102
        %v2258 = vsel %vm2230, %v833, %v1104
        %v2260 = vsel %vm2230, %v834, %v1106
        %v2262 = vsel %vm2230, %v835, %v1108
        %vm2263 = vcmask 261120
        %v2265 = vsel %vm2263, %v2232, %v1207
        %v2267 = vsel %vm2263, %v2234, %v1209
        %v2269 = vsel %vm2263, %v2236, %v1211
        %v2271 = vsel %vm2263, %v2238, %v1213
        %v2273 = vsel %vm2263, %v2240, %v1215
        %v2275 = vsel %vm2263, %v2242, %v1217
        %v2277 = vsel %vm2263, %v2244, %v1219
        %v2279 = vsel %vm2263, %v2246, %v1221
        %v2281 = vsel %vm2263, %v2248, %v1223
        %v2283 = vsel %vm2263, %v2250, %v1225
        %v2285 = vsel %vm2263, %v2252, %v1227
        %v2287 = vsel %vm2263, %v2254, %v1229
        %v2289 = vsel %vm2263, %v2256, %v1231
        %v2291 = vsel %vm2263, %v2258, %v1233
        %v2293 = vsel %vm2263, %v2260, %v1235
        %v2295 = vsel %vm2263, %v2262, %v1237
        %vm2296 = vcmask 392192
        %v2298 = vsel %vm2296, %v2265, %v1319
        %v2300 = vsel %vm2296, %v2267, %v1321
        %v2302 = vsel %vm2296, %v2269, %v1323
        %v2304 = vsel %vm2296, %v2271, %v1325
        %v2306 = vsel %vm2296, %v2273, %v1327
        %v2308 = vsel %vm2296, %v2275, %v1329
        %v2310 = vsel %vm2296, %v2277, %v1331
        %v2312 = vsel %vm2296, %v2279, %v1333
        %v2314 = vsel %vm2296, %v2281, %v1335
        %v2316 = vsel %vm2296, %v2283, %v1337
        %v2318 = vsel %vm2296, %v2285, %v1339
        %v2320 = vsel %vm2296, %v2287, %v1341
        %v2322 = vsel %vm2296, %v2289, %v1343
        %v2324 = vsel %vm2296, %v2291, %v1345
        %v2326 = vsel %vm2296, %v2293, %v1347
        %v2328 = vsel %vm2296, %v2295, %v1349
        %vm2329 = vcmask 523264
        %v2331 = vsel %vm2329, %v2298, %v1591
        %v2333 = vsel %vm2329, %v2300, %v1593
        %v2335 = vsel %vm2329, %v2302, %v1595
        %v2337 = vsel %vm2329, %v2304, %v1597
        %v2339 = vsel %vm2329, %v2306, %v1599
        %v2341 = vsel %vm2329, %v2308, %v1601
        %v2343 = vsel %vm2329, %v2310, %v1603
        %v2345 = vsel %vm2329, %v2312, %v1605
        %v2347 = vsel %vm2329, %v2314, %v1607
        %v2349 = vsel %vm2329, %v2316, %v1609
        %v2351 = vsel %vm2329, %v2318, %v1611
        %v2353 = vsel %vm2329, %v2320, %v1613
        %v2355 = vsel %vm2329, %v2322, %v1615
        %v2357 = vsel %vm2329, %v2324, %v1617
        %v2359 = vsel %vm2329, %v2326, %v1619
        %v2361 = vsel %vm2329, %v2328, %v1621
        %vm2362 = vcmask 654336
        %v2364 = vsel %vm2362, %v2331, %v1719
        %v2366 = vsel %vm2362, %v2333, %v1721
        %v2368 = vsel %vm2362, %v2335, %v1723
        %v2370 = vsel %vm2362, %v2337, %v1725
        %v2372 = vsel %vm2362, %v2339, %v1727
        %v2374 = vsel %vm2362, %v2341, %v1729
        %v2376 = vsel %vm2362, %v2343, %v1731
        %v2378 = vsel %vm2362, %v2345, %v1733
        %v2380 = vsel %vm2362, %v2347, %v1735
        %v2382 = vsel %vm2362, %v2349, %v1737
        %v2384 = vsel %vm2362, %v2351, %v1739
        %v2386 = vsel %vm2362, %v2353, %v1741
        %v2388 = vsel %vm2362, %v2355, %v1743
        %v2390 = vsel %vm2362, %v2357, %v1745
        %v2392 = vsel %vm2362, %v2359, %v1747
        %v2394 = vsel %vm2362, %v2361, %v1749
        %vm2395 = vcmask 785408
        %v2397 = vsel %vm2395, %v2364, %v1831
        %v2399 = vsel %vm2395, %v2366, %v1833
        %v2401 = vsel %vm2395, %v2368, %v1835
        %v2403 = vsel %vm2395, %v2370, %v1837
        %v2405 = vsel %vm2395, %v2372, %v1839
        %v2407 = vsel %vm2395, %v2374, %v1841
        %v2409 = vsel %vm2395, %v2376, %v1843
        %v2411 = vsel %vm2395, %v2378, %v1845
        %v2413 = vsel %vm2395, %v2380, %v1847
        %v2415 = vsel %vm2395, %v2382, %v1849
        %v2417 = vsel %vm2395, %v2384, %v1851
        %v2419 = vsel %vm2395, %v2386, %v1853
        %v2421 = vsel %vm2395, %v2388, %v1855
        %v2423 = vsel %vm2395, %v2390, %v1857
        %v2425 = vsel %vm2395, %v2392, %v1859
        %v2427 = vsel %vm2395, %v2394, %v1861
        %vm2428 = vcmask 916480
        %v2430 = vsel %vm2428, %v2397, %v2103
        %v2433 = vsel %vm2428, %v2399, %v2105
        %v2436 = vsel %vm2428, %v2401, %v2107
        %v2439 = vsel %vm2428, %v2403, %v2109
        %v2442 = vsel %vm2428, %v2405, %v2111
        %v2445 = vsel %vm2428, %v2407, %v2113
        %v2448 = vsel %vm2428, %v2409, %v2115
        %v2451 = vsel %vm2428, %v2411, %v2117
        %v2454 = vsel %vm2428, %v2413, %v2119
        %v2457 = vsel %vm2428, %v2415, %v2121
        %v2460 = vsel %vm2428, %v2417, %v2123
        %v2463 = vsel %vm2428, %v2419, %v2125
        %v2466 = vsel %vm2428, %v2421, %v2127
        %v2469 = vsel %vm2428, %v2423, %v2129
        %v2472 = vsel %vm2428, %v2425, %v2131
        %v2475 = vsel %vm2428, %v2427, %v2133
        %v2495 = vunpack.c.l.b16 %v386
        %v2496 = vunpack.c.l.b16 %v387
        %v2497 = vunpack.c.l.b16 %v388
        %v2498 = vunpack.c.l.b16 %v389
        %v2499 = vunpack.c.l.b16 %v390
        %v2500 = vunpack.c.l.b16 %v391
        %v2501 = vunpack.c.l.b16 %v392
        %v2502 = vunpack.c.l.b16 %v393
        %v2503 = vunpack.c.l.b16 %v394
        %v2504 = vunpack.c.l.b16 %v395
        %v2505 = vunpack.c.l.b16 %v396
        %v2506 = vunpack.c.l.b16 %v397
        %v2507 = vunpack.c.l.b16 %v398
        %v2508 = vunpack.c.l.b16 %v399
        %v2509 = vunpack.c.l.b16 %v400
        %v2510 = vunpack.c.l.b16 %v401
        %v2511 = vunpack.c.l.b16 %v402
        %v2512 = vunpack.c.l.b16 %v403
        %v2513 = vpack.c.b16 %v2496, %v2495
        %v2514 = vpack.c.b16 %v2498, %v2497
        %v2515 = vpack.c.b16 %v2500, %v2499
        %v2516 = vpack.c.b16 %v2502, %v2501
        %v2517 = vpack.c.b16 %v2504, %v2503
        %v2518 = vpack.c.b16 %v2506, %v2505
        %v2519 = vpack.c.b16 %v2508, %v2507
        %v2520 = vpack.c.b16 %v2510, %v2509
        %v2521 = vpack.c.b16 %v2512, %v2511
        %v2532 = vsel %vm2230, %v2184, 0
        %v2535 = vsel %vm2230, %v2187, 0
        %v2538 = vsel %vm2230, %v2190, 0
        %v2541 = vsel %vm2230, %v2193, 0
        %v2544 = vsel %vm2230, %v2196, 0
        %v2547 = vsel %vm2230, %v2199, 0
        %v2550 = vsel %vm2230, %v2202, 0
        %v2553 = vsel %vm2230, %v2205, 0
        %v2556 = vsel %vm2230, %v2208, 0
        %v2559 = vsel %vm2230, %v2211, 0
        %v2562 = vsel %vm2230, %v2214, 0
        %v2565 = vsel %vm2230, %v2217, 0
        %v2568 = vsel %vm2230, %v2220, 0
        %v2571 = vsel %vm2230, %v2223, 0
        %v2574 = vsel %vm2230, %v2226, 0
        %v2577 = vsel %vm2230, %v2229, 0
        %2579 = vmatprep.subr.bf16.mxu0 0
        %2580 = vmatpush1.bf16.msra.mxu0 %v2520
        %2581 = vmatprep.subr.bf16.mxu0 0
        %2582 = vmatpush1.bf16.msra.mxu0 %v2519
        %2583 = vmatprep.subr.bf16.mxu0 0
        %2584 = vmatpush1.bf16.msra.mxu0 %v2518
        %2585 = vmatprep.subr.bf16.mxu0 0
        %2586 = vmatpush1.bf16.msra.mxu0 %v2517
        %2587 = vmatprep.subr.bf16.mxu0 0
        %2588 = vmatpush1.bf16.msra.mxu0 %v2516
        %2589 = vmatprep.subr.bf16.mxu0 0
        %2590 = vmatpush1.bf16.msra.mxu0 %v2515
        %2591 = vmatprep.subr.bf16.mxu0 0
        %2592 = vmatpush1.bf16.msra.mxu0 %v2514
        %2593 = vmatprep.subr.bf16.mxu0 0
        %2594 = vmatpush1.bf16.msra.mxu0 %v2513
        %2595 = vmatprep.subr.bf16.mxu0 0
        %2596 = vmatpush2.bf16.msra.mxu0 0
        %2597 = vmatprep.subr.bf16.mxu0 0
        %2598 = vmatpush2.bf16.msra.mxu0 0
        %2599 = vmatprep.subr.bf16.mxu0 0
        %2600 = vmatpush2.bf16.msra.mxu0 0
        %2601 = vmatprep.subr.bf16.mxu0 0
        %2602 = vmatpush2.bf16.msra.mxu0 0
        %2603 = vmatprep.subr.bf16.mxu0 0
        %2604 = vmatpush2.bf16.msra.mxu0 0
        %2605 = vmatprep.subr.bf16.mxu0 0
        %2606 = vmatpush2.bf16.msra.mxu0 0
        %2607 = vmatprep.subr.bf16.mxu0 0
        %2608 = vmatpush2.bf16.msra.mxu0 0
        %2609 = vmatprep.subr.bf16.mxu0 0
        %2610 = vmatpush2.bf16.msra.mxu0 %v2521
        %2611 = vmatprep.mubr.bf16.mxu0 %v2532
        %2612 = vmatmul.mubr.bf16.gmra.mxu0 %v2430
        %v2613 = vpop.f32.mrf.mxu0
        %v2614 = vadd.f32 0.0, %v2613
        %v2615 = vpop.f32.mrf.mxu0
        %v2616 = vpop.f32.mrf.mxu0
        %v2617 = vadd.f32 0.0, %v2616
        %v2618 = vpop.f32.mrf.mxu0
        %2619 = vmatprep.mubr.bf16.mxu0 %v2535
        %2620 = vmatmul.mubr.bf16.gmra.mxu0 %v2433
        %v2621 = vpop.f32.mrf.mxu0
        %v2622 = vadd.f32 0.0, %v2621
        %v2623 = vpop.f32.mrf.mxu0
        %v2624 = vpop.f32.mrf.mxu0
        %v2625 = vadd.f32 0.0, %v2624
        %v2626 = vpop.f32.mrf.mxu0
        %2627 = vmatprep.mubr.bf16.mxu0 %v2538
        %2628 = vmatmul.mubr.bf16.gmra.mxu0 %v2436
        %v2629 = vpop.f32.mrf.mxu0
        %v2630 = vadd.f32 0.0, %v2629
        %v2631 = vpop.f32.mrf.mxu0
        %v2632 = vpop.f32.mrf.mxu0
        %v2633 = vadd.f32 0.0, %v2632
        %v2634 = vpop.f32.mrf.mxu0
        %2635 = vmatprep.mubr.bf16.mxu0 %v2541
        %2636 = vmatmul.mubr.bf16.gmra.mxu0 %v2439
        %v2637 = vpop.f32.mrf.mxu0
        %v2638 = vadd.f32 0.0, %v2637
        %v2639 = vpop.f32.mrf.mxu0
        %v2640 = vpop.f32.mrf.mxu0
        %v2641 = vadd.f32 0.0, %v2640
        %v2642 = vpop.f32.mrf.mxu0
        %2643 = vmatprep.mubr.bf16.mxu0 %v2544
        %2644 = vmatmul.mubr.bf16.gmra.mxu0 %v2442
        %v2645 = vpop.f32.mrf.mxu0
        %v2646 = vadd.f32 0.0, %v2645
        %v2647 = vpop.f32.mrf.mxu0
        %v2648 = vpop.f32.mrf.mxu0
        %v2649 = vadd.f32 0.0, %v2648
        %v2650 = vpop.f32.mrf.mxu0
        %2651 = vmatprep.mubr.bf16.mxu0 %v2547
        %2652 = vmatmul.mubr.bf16.gmra.mxu0 %v2445
        %v2653 = vpop.f32.mrf.mxu0
        %v2654 = vadd.f32 0.0, %v2653
        %v2655 = vpop.f32.mrf.mxu0
        %v2656 = vpop.f32.mrf.mxu0
        %v2657 = vadd.f32 0.0, %v2656
        %v2658 = vpop.f32.mrf.mxu0
        %2659 = vmatprep.mubr.bf16.mxu0 %v2550
        %2660 = vmatmul.mubr.bf16.gmra.mxu0 %v2448
        %v2661 = vpop.f32.mrf.mxu0
        %v2662 = vadd.f32 0.0, %v2661
        %v2663 = vpop.f32.mrf.mxu0
        %v2664 = vpop.f32.mrf.mxu0
        %v2665 = vadd.f32 0.0, %v2664
        %v2666 = vpop.f32.mrf.mxu0
        %2667 = vmatprep.mubr.bf16.mxu0 %v2553
        %2668 = vmatmul.mubr.bf16.gmra.mxu0 %v2451
        %v2669 = vpop.f32.mrf.mxu0
        %v2670 = vadd.f32 0.0, %v2669
        %v2671 = vpop.f32.mrf.mxu0
        %v2672 = vpop.f32.mrf.mxu0
        %v2673 = vadd.f32 0.0, %v2672
        %v2674 = vpop.f32.mrf.mxu0
        %2675 = vmatprep.mubr.bf16.mxu0 %v2556
        %2676 = vmatmul.mubr.bf16.gmra.mxu0 %v2454
        %v2677 = vpop.f32.mrf.mxu0
        %v2678 = vadd.f32 0.0, %v2677
        %v2679 = vpop.f32.mrf.mxu0
        %v2680 = vpop.f32.mrf.mxu0
        %v2681 = vadd.f32 0.0, %v2680
        %v2682 = vpop.f32.mrf.mxu0
        %2683 = vmatprep.mubr.bf16.mxu0 %v2559
        %2684 = vmatmul.mubr.bf16.gmra.mxu0 %v2457
        %v2685 = vpop.f32.mrf.mxu0
        %v2686 = vadd.f32 0.0, %v2685
        %v2687 = vpop.f32.mrf.mxu0
        %v2688 = vpop.f32.mrf.mxu0
        %v2689 = vadd.f32 0.0, %v2688
        %v2690 = vpop.f32.mrf.mxu0
        %2691 = vmatprep.mubr.bf16.mxu0 %v2562
        %2692 = vmatmul.mubr.bf16.gmra.mxu0 %v2460
        %v2693 = vpop.f32.mrf.mxu0
        %v2694 = vadd.f32 0.0, %v2693
        %v2695 = vpop.f32.mrf.mxu0
        %v2696 = vpop.f32.mrf.mxu0
        %v2697 = vadd.f32 0.0, %v2696
        %v2698 = vpop.f32.mrf.mxu0
        %2699 = vmatprep.mubr.bf16.mxu0 %v2565
        %2700 = vmatmul.mubr.bf16.gmra.mxu0 %v2463
        %v2701 = vpop.f32.mrf.mxu0
        %v2702 = vadd.f32 0.0, %v2701
        %v2703 = vpop.f32.mrf.mxu0
        %v2704 = vpop.f32.mrf.mxu0
        %v2705 = vadd.f32 0.0, %v2704
        %v2706 = vpop.f32.mrf.mxu0
        %2707 = vmatprep.mubr.bf16.mxu0 %v2568
        %2708 = vmatmul.mubr.bf16.gmra.mxu0 %v2466
        %v2709 = vpop.f32.mrf.mxu0
        %v2710 = vadd.f32 0.0, %v2709
        %v2711 = vpop.f32.mrf.mxu0
        %v2712 = vpop.f32.mrf.mxu0
        %v2713 = vadd.f32 0.0, %v2712
        %v2714 = vpop.f32.mrf.mxu0
        %2715 = vmatprep.mubr.bf16.mxu0 %v2571
        %2716 = vmatmul.mubr.bf16.gmra.mxu0 %v2469
        %v2717 = vpop.f32.mrf.mxu0
        %v2718 = vadd.f32 0.0, %v2717
        %v2719 = vpop.f32.mrf.mxu0
        %v2720 = vpop.f32.mrf.mxu0
        %v2721 = vadd.f32 0.0, %v2720
        %v2722 = vpop.f32.mrf.mxu0
        %2723 = vmatprep.mubr.bf16.mxu0 %v2574
        %2724 = vmatmul.mubr.bf16.gmra.mxu0 %v2472
        %v2725 = vpop.f32.mrf.mxu0
        %v2726 = vadd.f32 0.0, %v2725
        %v2727 = vpop.f32.mrf.mxu0
        %v2728 = vpop.f32.mrf.mxu0
        %v2729 = vadd.f32 0.0, %v2728
        %v2730 = vpop.f32.mrf.mxu0
        %2731 = vmatprep.mubr.bf16.mxu0 %v2577
        %2732 = vmatmul.mubr.bf16.gmra.mxu0 %v2475
        %v2733 = vpop.f32.mrf.mxu0
        %v2734 = vadd.f32 0.0, %v2733
        %v2735 = vpop.f32.mrf.mxu0
        %v2736 = vpop.f32.mrf.mxu0
        %v2737 = vadd.f32 0.0, %v2736
        %v2738 = vpop.f32.mrf.mxu0
        %2739 = vdwg.mxu0
        %v2740 = vsel %vm2263, %v2614, 0.0
        %v2741 = vsel %vm2263, %v2617, 0.0
        %v2742 = vadd.f32 %v2740, %v2741
        %v2743 = vsel %vm2263, %v2622, 0.0
        %v2744 = vadd.f32 %v2742, %v2743
        %v2745 = vsel %vm2263, %v2625, 0.0
        %v2746 = vadd.f32 %v2744, %v2745
        %v2747 = vsel %vm2263, %v2630, 0.0
        %v2748 = vadd.f32 %v2746, %v2747
        %v2749 = vsel %vm2263, %v2633, 0.0
        %v2750 = vadd.f32 %v2748, %v2749
        %v2751 = vsel %vm2263, %v2638, 0.0
        %v2752 = vadd.f32 %v2750, %v2751
        %v2753 = vsel %vm2263, %v2641, 0.0
        %v2754 = vadd.f32 %v2752, %v2753
        %v2755 = vsel %vm2263, %v2646, 0.0
        %v2756 = vadd.f32 %v2754, %v2755
        %v2757 = vsel %vm2263, %v2649, 0.0
        %v2758 = vadd.f32 %v2756, %v2757
        %v2759 = vsel %vm2263, %v2654, 0.0
        %v2760 = vadd.f32 %v2758, %v2759
        %v2761 = vsel %vm2263, %v2657, 0.0
        %v2762 = vadd.f32 %v2760, %v2761
        %v2763 = vsel %vm2263, %v2662, 0.0
        %v2764 = vadd.f32 %v2762, %v2763
        %v2765 = vsel %vm2263, %v2665, 0.0
        %v2766 = vadd.f32 %v2764, %v2765
        %v2767 = vsel %vm2263, %v2670, 0.0
        %v2768 = vadd.f32 %v2766, %v2767
        %v2769 = vsel %vm2263, %v2673, 0.0
        %v2770 = vadd.f32 %v2768, %v2769
        %v2771 = vsel %vm2263, %v2678, 0.0
        %v2772 = vadd.f32 %v2770, %v2771
        %v2773 = vsel %vm2263, %v2681, 0.0
        %v2774 = vadd.f32 %v2772, %v2773
        %v2775 = vsel %vm2263, %v2686, 0.0
        %v2776 = vadd.f32 %v2774, %v2775
        %v2777 = vsel %vm2263, %v2689, 0.0
        %v2778 = vadd.f32 %v2776, %v2777
        %v2779 = vsel %vm2263, %v2694, 0.0
        %v2780 = vadd.f32 %v2778, %v2779
        %v2781 = vsel %vm2263, %v2697, 0.0
        %v2782 = vadd.f32 %v2780, %v2781
        %v2783 = vsel %vm2263, %v2702, 0.0
        %v2784 = vadd.f32 %v2782, %v2783
        %v2785 = vsel %vm2263, %v2705, 0.0
        %v2786 = vadd.f32 %v2784, %v2785
        %v2787 = vsel %vm2263, %v2710, 0.0
        %v2788 = vadd.f32 %v2786, %v2787
        %v2789 = vsel %vm2263, %v2713, 0.0
        %v2790 = vadd.f32 %v2788, %v2789
        %v2791 = vsel %vm2263, %v2718, 0.0
        %v2792 = vadd.f32 %v2790, %v2791
        %v2793 = vsel %vm2263, %v2721, 0.0
        %v2794 = vadd.f32 %v2792, %v2793
        %v2795 = vsel %vm2263, %v2726, 0.0
        %v2796 = vadd.f32 %v2794, %v2795
        %v2797 = vsel %vm2263, %v2729, 0.0
        %v2798 = vadd.f32 %v2796, %v2797
        %v2799 = vsel %vm2263, %v2734, 0.0
        %v2800 = vadd.f32 %v2798, %v2799
        %v2801 = vsel %vm2263, %v2737, 0.0
        %v2802 = vadd.f32 %v2800, %v2801
        %v2803 = vrot.slane %v2802, 4
        %v2804 = vadd.f32 %v2802, %v2803
        %v2805 = vrot.slane %v2804, 2
        %v2806 = vadd.f32 %v2804, %v2805
        %v2807 = vrot.slane %v2806, 1
        %v2808 = vadd.f32 %v2806, %v2807
        %v2809 = vadd.f32 %v2808, 0.0
        %v2810 = vmul.f32 %v2614, %v2614
        %v2811 = vmul.f32 %v2617, %v2617
        %v2812 = vmul.f32 %v2622, %v2622
        %v2813 = vmul.f32 %v2625, %v2625
        %v2814 = vmul.f32 %v2630, %v2630
        %v2815 = vmul.f32 %v2633, %v2633
        %v2816 = vmul.f32 %v2638, %v2638
        %v2817 = vmul.f32 %v2641, %v2641
        %v2818 = vmul.f32 %v2646, %v2646
        %v2819 = vmul.f32 %v2649, %v2649
        %v2820 = vmul.f32 %v2654, %v2654
        %v2821 = vmul.f32 %v2657, %v2657
        %v2822 = vmul.f32 %v2662, %v2662
        %v2823 = vmul.f32 %v2665, %v2665
        %v2824 = vmul.f32 %v2670, %v2670
        %v2825 = vmul.f32 %v2673, %v2673
        %v2826 = vmul.f32 %v2678, %v2678
        %v2827 = vmul.f32 %v2681, %v2681
        %v2828 = vmul.f32 %v2686, %v2686
        %v2829 = vmul.f32 %v2689, %v2689
        %v2830 = vmul.f32 %v2694, %v2694
        %v2831 = vmul.f32 %v2697, %v2697
        %v2832 = vmul.f32 %v2702, %v2702
        %v2833 = vmul.f32 %v2705, %v2705
        %v2834 = vmul.f32 %v2710, %v2710
        %v2835 = vmul.f32 %v2713, %v2713
        %v2836 = vmul.f32 %v2718, %v2718
        %v2837 = vmul.f32 %v2721, %v2721
        %v2838 = vmul.f32 %v2726, %v2726
        %v2839 = vmul.f32 %v2729, %v2729
        %v2840 = vmul.f32 %v2734, %v2734
        %v2841 = vmul.f32 %v2737, %v2737
        %v2842 = vsel %vm2263, %v2810, 0.0
        %v2843 = vsel %vm2263, %v2811, 0.0
        %v2844 = vadd.f32 %v2842, %v2843
        %v2845 = vsel %vm2263, %v2812, 0.0
        %v2846 = vadd.f32 %v2844, %v2845
        %v2847 = vsel %vm2263, %v2813, 0.0
        %v2848 = vadd.f32 %v2846, %v2847
        %v2849 = vsel %vm2263, %v2814, 0.0
        %v2850 = vadd.f32 %v2848, %v2849
        %v2851 = vsel %vm2263, %v2815, 0.0
        %v2852 = vadd.f32 %v2850, %v2851
        %v2853 = vsel %vm2263, %v2816, 0.0
        %v2854 = vadd.f32 %v2852, %v2853
        %v2855 = vsel %vm2263, %v2817, 0.0
        %v2856 = vadd.f32 %v2854, %v2855
        %v2857 = vsel %vm2263, %v2818, 0.0
        %v2858 = vadd.f32 %v2856, %v2857
        %v2859 = vsel %vm2263, %v2819, 0.0
        %v2860 = vadd.f32 %v2858, %v2859
        %v2861 = vsel %vm2263, %v2820, 0.0
        %v2862 = vadd.f32 %v2860, %v2861
        %v2863 = vsel %vm2263, %v2821, 0.0
        %v2864 = vadd.f32 %v2862, %v2863
        %v2865 = vsel %vm2263, %v2822, 0.0
        %v2866 = vadd.f32 %v2864, %v2865
        %v2867 = vsel %vm2263, %v2823, 0.0
        %v2868 = vadd.f32 %v2866, %v2867
        %v2869 = vsel %vm2263, %v2824, 0.0
        %v2870 = vadd.f32 %v2868, %v2869
        %v2871 = vsel %vm2263, %v2825, 0.0
        %v2872 = vadd.f32 %v2870, %v2871
        %v2873 = vsel %vm2263, %v2826, 0.0
        %v2874 = vadd.f32 %v2872, %v2873
        %v2875 = vsel %vm2263, %v2827, 0.0
        %v2876 = vadd.f32 %v2874, %v2875
        %v2877 = vsel %vm2263, %v2828, 0.0
        %v2878 = vadd.f32 %v2876, %v2877
        %v2879 = vsel %vm2263, %v2829, 0.0
        %v2880 = vadd.f32 %v2878, %v2879
        %v2881 = vsel %vm2263, %v2830, 0.0
        %v2882 = vadd.f32 %v2880, %v2881
        %v2883 = vsel %vm2263, %v2831, 0.0
        %v2884 = vadd.f32 %v2882, %v2883
        %v2885 = vsel %vm2263, %v2832, 0.0
        %v2886 = vadd.f32 %v2884, %v2885
        %v2887 = vsel %vm2263, %v2833, 0.0
        %v2888 = vadd.f32 %v2886, %v2887
        %v2889 = vsel %vm2263, %v2834, 0.0
        %v2890 = vadd.f32 %v2888, %v2889
        %v2891 = vsel %vm2263, %v2835, 0.0
        %v2892 = vadd.f32 %v2890, %v2891
        %v2893 = vsel %vm2263, %v2836, 0.0
        %v2894 = vadd.f32 %v2892, %v2893
        %v2895 = vsel %vm2263, %v2837, 0.0
        %v2896 = vadd.f32 %v2894, %v2895
        %v2897 = vsel %vm2263, %v2838, 0.0
        %v2898 = vadd.f32 %v2896, %v2897
        %v2899 = vsel %vm2263, %v2839, 0.0
        %v2900 = vadd.f32 %v2898, %v2899
        %v2901 = vsel %vm2263, %v2840, 0.0
        %v2902 = vadd.f32 %v2900, %v2901
        %v2903 = vsel %vm2263, %v2841, 0.0
        %v2904 = vadd.f32 %v2902, %v2903
        %v2905 = vrot.slane %v2904, 4
        %v2906 = vadd.f32 %v2904, %v2905
        %v2907 = vrot.slane %v2906, 2
        %v2908 = vadd.f32 %v2906, %v2907
        %v2909 = vrot.slane %v2908, 1
        %v2910 = vadd.f32 %v2908, %v2909
        %v2911 = vadd.f32 %v2910, 0.0
        %v2912 = vpack.c.bf16 %v2617, %v2614
        %v2913 = vpack.c.bf16 %v2625, %v2622
        %v2914 = vpack.c.bf16 %v2633, %v2630
        %v2915 = vpack.c.bf16 %v2641, %v2638
        %v2916 = vpack.c.bf16 %v2649, %v2646
        %v2917 = vpack.c.bf16 %v2657, %v2654
        %v2918 = vpack.c.bf16 %v2665, %v2662
        %v2919 = vpack.c.bf16 %v2673, %v2670
        %v2920 = vpack.c.bf16 %v2681, %v2678
        %v2921 = vpack.c.bf16 %v2689, %v2686
        %v2922 = vpack.c.bf16 %v2697, %v2694
        %v2923 = vpack.c.bf16 %v2705, %v2702
        %v2924 = vpack.c.bf16 %v2713, %v2710
        %v2925 = vpack.c.bf16 %v2721, %v2718
        %v2926 = vpack.c.bf16 %v2729, %v2726
        %v2927 = vpack.c.bf16 %v2737, %v2734
        %v2944 = vunpack.c.l.b16 %v2912
        %v2945 = vunpack.c.h.b16 %v2912
        %v2946 = vunpack.c.l.b16 %v2913
        %v2947 = vunpack.c.h.b16 %v2913
        %v2948 = vunpack.c.l.b16 %v2914
        %v2949 = vunpack.c.h.b16 %v2914
        %v2950 = vunpack.c.l.b16 %v2915
        %v2951 = vunpack.c.h.b16 %v2915
        %v2952 = vunpack.c.l.b16 %v2916
        %v2953 = vunpack.c.h.b16 %v2916
        %v2954 = vunpack.c.l.b16 %v2917
        %v2955 = vunpack.c.h.b16 %v2917
        %v2956 = vunpack.c.l.b16 %v2918
        %v2957 = vunpack.c.h.b16 %v2918
        %v2958 = vunpack.c.l.b16 %v2919
        %v2959 = vunpack.c.h.b16 %v2919
        %v2960 = vunpack.c.l.b16 %v2920
        %v2961 = vunpack.c.h.b16 %v2920
        %v2962 = vunpack.c.l.b16 %v2921
        %v2963 = vunpack.c.h.b16 %v2921
        %v2964 = vunpack.c.l.b16 %v2922
        %v2965 = vunpack.c.h.b16 %v2922
        %v2966 = vunpack.c.l.b16 %v2923
        %v2967 = vunpack.c.h.b16 %v2923
        %v2968 = vunpack.c.l.b16 %v2924
        %v2969 = vunpack.c.h.b16 %v2924
        %v2970 = vunpack.c.l.b16 %v2925
        %v2971 = vunpack.c.h.b16 %v2925
        %v2972 = vunpack.c.l.b16 %v2926
        %v2973 = vunpack.c.h.b16 %v2926
        %v2974 = vunpack.c.l.b16 %v2927
        %v2975 = vunpack.c.h.b16 %v2927
        %v2976 = vpack.c.b16 %v2944, %v2944
        %v2977 = vpack.c.b16 %v2945, %v2945
        %v2978 = vpack.c.b16 %v2946, %v2946
        %v2979 = vpack.c.b16 %v2947, %v2947
        %v2980 = vpack.c.b16 %v2948, %v2948
        %v2981 = vpack.c.b16 %v2949, %v2949
        %v2982 = vpack.c.b16 %v2950, %v2950
        %v2983 = vpack.c.b16 %v2951, %v2951
        %v2984 = vpack.c.b16 %v2952, %v2952
        %v2985 = vpack.c.b16 %v2953, %v2953
        %v2986 = vpack.c.b16 %v2954, %v2954
        %v2987 = vpack.c.b16 %v2955, %v2955
        %v2988 = vpack.c.b16 %v2956, %v2956
        %v2989 = vpack.c.b16 %v2957, %v2957
        %v2990 = vpack.c.b16 %v2958, %v2958
        %v2991 = vpack.c.b16 %v2959, %v2959
        %v2992 = vpack.c.b16 %v2960, %v2960
        %v2993 = vpack.c.b16 %v2961, %v2961
        %v2994 = vpack.c.b16 %v2962, %v2962
        %v2995 = vpack.c.b16 %v2963, %v2963
        %v2996 = vpack.c.b16 %v2964, %v2964
        %v2997 = vpack.c.b16 %v2965, %v2965
        %v2998 = vpack.c.b16 %v2966, %v2966
        %v2999 = vpack.c.b16 %v2967, %v2967
        %v3000 = vpack.c.b16 %v2968, %v2968
        %v3001 = vpack.c.b16 %v2969, %v2969
        %v3002 = vpack.c.b16 %v2970, %v2970
        %v3003 = vpack.c.b16 %v2971, %v2971
        %v3004 = vpack.c.b16 %v2972, %v2972
        %v3005 = vpack.c.b16 %v2973, %v2973
        %v3006 = vpack.c.b16 %v2974, %v2974
        %v3007 = vpack.c.b16 %v2975, %v2975
        %vm3008 = vsmask.f32 4368
        %vm3009 = vmor %vm450, %vm3008
        %v3011 = vshrl.u32 %v2976, 16
        %v3013 = vrot.slane %v3011, 7
        %v3014 = vshll.u32 %v2976, 16
        %v3016 = vor.u32 %v3013, %v3014
        %v3017 = vrot.slane %v3013, 4
        %v3019 = vshrl.u32 %v2977, 16
        %v3021 = vrot.slane %v3019, 7
        %v3022 = vshll.u32 %v2977, 16
        %v3024 = vor.u32 %v3021, %v3022
        %v3025 = vsel %vm3009, %v3017, %v3024
        %v3026 = vrot.slane %v3021, 4
        %v3028 = vshrl.u32 %v2978, 16
        %v3030 = vrot.slane %v3028, 7
        %v3031 = vshll.u32 %v2978, 16
        %v3033 = vor.u32 %v3030, %v3031
        %v3034 = vrot.slane %v3030, 4
        %v3036 = vshrl.u32 %v2979, 16
        %v3038 = vrot.slane %v3036, 7
        %v3039 = vshll.u32 %v2979, 16
        %v3041 = vor.u32 %v3038, %v3039
        %v3042 = vsel %vm3009, %v3034, %v3041
        %v3043 = vrot.slane %v3038, 4
        %v3045 = vshrl.u32 %v2980, 16
        %v3047 = vrot.slane %v3045, 7
        %v3048 = vshll.u32 %v2980, 16
        %v3050 = vor.u32 %v3047, %v3048
        %v3051 = vrot.slane %v3047, 4
        %v3053 = vshrl.u32 %v2981, 16
        %v3055 = vrot.slane %v3053, 7
        %v3056 = vshll.u32 %v2981, 16
        %v3058 = vor.u32 %v3055, %v3056
        %v3059 = vsel %vm3009, %v3051, %v3058
        %v3060 = vrot.slane %v3055, 4
        %v3062 = vshrl.u32 %v2982, 16
        %v3064 = vrot.slane %v3062, 7
        %v3065 = vshll.u32 %v2982, 16
        %v3067 = vor.u32 %v3064, %v3065
        %v3068 = vrot.slane %v3064, 4
        %v3070 = vshrl.u32 %v2983, 16
        %v3072 = vrot.slane %v3070, 7
        %v3073 = vshll.u32 %v2983, 16
        %v3075 = vor.u32 %v3072, %v3073
        %v3076 = vsel %vm3009, %v3068, %v3075
        %v3077 = vrot.slane %v3072, 4
        %v3079 = vshrl.u32 %v2984, 16
        %v3081 = vrot.slane %v3079, 7
        %v3082 = vshll.u32 %v2984, 16
        %v3084 = vor.u32 %v3081, %v3082
        %v3085 = vrot.slane %v3081, 4
        %v3087 = vshrl.u32 %v2985, 16
        %v3089 = vrot.slane %v3087, 7
        %v3090 = vshll.u32 %v2985, 16
        %v3092 = vor.u32 %v3089, %v3090
        %v3093 = vsel %vm3009, %v3085, %v3092
        %v3094 = vrot.slane %v3089, 4
        %v3096 = vshrl.u32 %v2986, 16
        %v3098 = vrot.slane %v3096, 7
        %v3099 = vshll.u32 %v2986, 16
        %v3101 = vor.u32 %v3098, %v3099
        %v3102 = vrot.slane %v3098, 4
        %v3104 = vshrl.u32 %v2987, 16
        %v3106 = vrot.slane %v3104, 7
        %v3107 = vshll.u32 %v2987, 16
        %v3109 = vor.u32 %v3106, %v3107
        %v3110 = vsel %vm3009, %v3102, %v3109
        %v3111 = vrot.slane %v3106, 4
        %v3113 = vshrl.u32 %v2988, 16
        %v3115 = vrot.slane %v3113, 7
        %v3116 = vshll.u32 %v2988, 16
        %v3118 = vor.u32 %v3115, %v3116
        %v3119 = vrot.slane %v3115, 4
        %v3121 = vshrl.u32 %v2989, 16
        %v3123 = vrot.slane %v3121, 7
        %v3124 = vshll.u32 %v2989, 16
        %v3126 = vor.u32 %v3123, %v3124
        %v3127 = vsel %vm3009, %v3119, %v3126
        %v3128 = vrot.slane %v3123, 4
        %v3130 = vshrl.u32 %v2990, 16
        %v3132 = vrot.slane %v3130, 7
        %v3133 = vshll.u32 %v2990, 16
        %v3135 = vor.u32 %v3132, %v3133
        %v3136 = vrot.slane %v3132, 4
        %v3138 = vshrl.u32 %v2991, 16
        %v3140 = vrot.slane %v3138, 7
        %v3141 = vshll.u32 %v2991, 16
        %v3143 = vor.u32 %v3140, %v3141
        %v3144 = vsel %vm3009, %v3136, %v3143
        %v3145 = vrot.slane %v3140, 4
        %v3147 = vshrl.u32 %v2992, 16
        %v3149 = vrot.slane %v3147, 7
        %v3150 = vshll.u32 %v2992, 16
        %v3152 = vor.u32 %v3149, %v3150
        %v3153 = vrot.slane %v3149, 4
        %v3155 = vshrl.u32 %v2993, 16
        %v3157 = vrot.slane %v3155, 7
        %v3158 = vshll.u32 %v2993, 16
        %v3160 = vor.u32 %v3157, %v3158
        %v3161 = vsel %vm3009, %v3153, %v3160
        %v3162 = vrot.slane %v3157, 4
        %v3164 = vshrl.u32 %v2994, 16
        %v3166 = vrot.slane %v3164, 7
        %v3167 = vshll.u32 %v2994, 16
        %v3169 = vor.u32 %v3166, %v3167
        %v3170 = vrot.slane %v3166, 4
        %v3172 = vshrl.u32 %v2995, 16
        %v3174 = vrot.slane %v3172, 7
        %v3175 = vshll.u32 %v2995, 16
        %v3177 = vor.u32 %v3174, %v3175
        %v3178 = vsel %vm3009, %v3170, %v3177
        %v3179 = vrot.slane %v3174, 4
        %v3181 = vshrl.u32 %v2996, 16
        %v3183 = vrot.slane %v3181, 7
        %v3184 = vshll.u32 %v2996, 16
        %v3186 = vor.u32 %v3183, %v3184
        %v3187 = vrot.slane %v3183, 4
        %v3189 = vshrl.u32 %v2997, 16
        %v3191 = vrot.slane %v3189, 7
        %v3192 = vshll.u32 %v2997, 16
        %v3194 = vor.u32 %v3191, %v3192
        %v3195 = vsel %vm3009, %v3187, %v3194
        %v3196 = vrot.slane %v3191, 4
        %v3198 = vshrl.u32 %v2998, 16
        %v3200 = vrot.slane %v3198, 7
        %v3201 = vshll.u32 %v2998, 16
        %v3203 = vor.u32 %v3200, %v3201
        %v3204 = vrot.slane %v3200, 4
        %v3206 = vshrl.u32 %v2999, 16
        %v3208 = vrot.slane %v3206, 7
        %v3209 = vshll.u32 %v2999, 16
        %v3211 = vor.u32 %v3208, %v3209
        %v3212 = vsel %vm3009, %v3204, %v3211
        %v3213 = vrot.slane %v3208, 4
        %v3215 = vshrl.u32 %v3000, 16
        %v3217 = vrot.slane %v3215, 7
        %v3218 = vshll.u32 %v3000, 16
        %v3220 = vor.u32 %v3217, %v3218
        %v3221 = vrot.slane %v3217, 4
        %v3223 = vshrl.u32 %v3001, 16
        %v3225 = vrot.slane %v3223, 7
        %v3226 = vshll.u32 %v3001, 16
        %v3228 = vor.u32 %v3225, %v3226
        %v3229 = vsel %vm3009, %v3221, %v3228
        %v3230 = vrot.slane %v3225, 4
        %v3232 = vshrl.u32 %v3002, 16
        %v3234 = vrot.slane %v3232, 7
        %v3235 = vshll.u32 %v3002, 16
        %v3237 = vor.u32 %v3234, %v3235
        %v3238 = vrot.slane %v3234, 4
        %v3240 = vshrl.u32 %v3003, 16
        %v3242 = vrot.slane %v3240, 7
        %v3243 = vshll.u32 %v3003, 16
        %v3245 = vor.u32 %v3242, %v3243
        %v3246 = vsel %vm3009, %v3238, %v3245
        %v3247 = vrot.slane %v3242, 4
        %v3249 = vshrl.u32 %v3004, 16
        %v3251 = vrot.slane %v3249, 7
        %v3252 = vshll.u32 %v3004, 16
        %v3254 = vor.u32 %v3251, %v3252
        %v3255 = vrot.slane %v3251, 4
        %v3257 = vshrl.u32 %v3005, 16
        %v3259 = vrot.slane %v3257, 7
        %v3260 = vshll.u32 %v3005, 16
        %v3262 = vor.u32 %v3259, %v3260
        %v3263 = vsel %vm3009, %v3255, %v3262
        %v3264 = vrot.slane %v3259, 4
        %v3266 = vshrl.u32 %v3006, 16
        %v3268 = vrot.slane %v3266, 7
        %v3269 = vshll.u32 %v3006, 16
        %v3271 = vor.u32 %v3268, %v3269
        %v3272 = vrot.slane %v3268, 4
        %v3274 = vshrl.u32 %v3007, 16
        %v3276 = vrot.slane %v3274, 7
        %v3277 = vshll.u32 %v3007, 16
        %v3279 = vor.u32 %v3276, %v3277
        %v3280 = vsel %vm3009, %v3272, %v3279
        %v3281 = vrot.slane %v3276, 4
        %s3330 = scalar_lea.vmem [#allocation2], 12
        %vm3331 = vcmask 257024
        %vm3332 = vmand %vm3331, %vm506
        %v3333 = vld [vmem:[%s3330] sm:$0xf]
        %v3334 = vsel %vm3332, %v3016, %v3333
        %3335 = vst [vmem:[%s3330] sm:$0xf] %v3334
        %3336 = vst.msk [vmem:[%s3330 + $0x4] sm:$0xf] %vm440, %v3025
        %v3337 = vld [vmem:[%s3330 + $0x8] sm:$0x1]
        %v3338 = vsel %vm451, %v3026, %v3337
        %3339 = vst [vmem:[%s3330 + $0x8] sm:$0x1] %v3338
        %v3340 = vld [vmem:[%s3330 + $0xc] sm:$0xf]
        %v3341 = vsel %vm3332, %v3033, %v3340
        %3342 = vst [vmem:[%s3330 + $0xc] sm:$0xf] %v3341
        %3343 = vst.msk [vmem:[%s3330 + $0x10] sm:$0xf] %vm440, %v3042
        %v3344 = vld [vmem:[%s3330 + $0x14] sm:$0x1]
        %v3345 = vsel %vm451, %v3043, %v3344
        %3346 = vst [vmem:[%s3330 + $0x14] sm:$0x1] %v3345
        %v3347 = vld [vmem:[%s3330 + $0x18] sm:$0xf]
        %v3348 = vsel %vm3332, %v3050, %v3347
        %3349 = vst [vmem:[%s3330 + $0x18] sm:$0xf] %v3348
        %3350 = vst.msk [vmem:[%s3330 + $0x1c] sm:$0xf] %vm440, %v3059
        %v3351 = vld [vmem:[%s3330 + $0x20] sm:$0x1]
        %v3352 = vsel %vm451, %v3060, %v3351
        %3353 = vst [vmem:[%s3330 + $0x20] sm:$0x1] %v3352
        %v3354 = vld [vmem:[%s3330 + $0x24] sm:$0xf]
        %v3355 = vsel %vm3332, %v3067, %v3354
        %3356 = vst [vmem:[%s3330 + $0x24] sm:$0xf] %v3355
        %3357 = vst.msk [vmem:[%s3330 + $0x28] sm:$0xf] %vm440, %v3076
        %v3358 = vld [vmem:[%s3330 + $0x2c] sm:$0x1]
        %v3359 = vsel %vm451, %v3077, %v3358
        %3360 = vst [vmem:[%s3330 + $0x2c] sm:$0x1] %v3359
        %v3361 = vld [vmem:[%s3330 + $0x30] sm:$0xf]
        %v3362 = vsel %vm3332, %v3084, %v3361
        %3363 = vst [vmem:[%s3330 + $0x30] sm:$0xf] %v3362
        %3364 = vst.msk [vmem:[%s3330 + $0x34] sm:$0xf] %vm440, %v3093
        %v3365 = vld [vmem:[%s3330 + $0x38] sm:$0x1]
        %v3366 = vsel %vm451, %v3094, %v3365
        %3367 = vst [vmem:[%s3330 + $0x38] sm:$0x1] %v3366
        %v3368 = vld [vmem:[%s3330 + $0x3c] sm:$0xf]
        %v3369 = vsel %vm3332, %v3101, %v3368
        %3370 = vst [vmem:[%s3330 + $0x3c] sm:$0xf] %v3369
        %3371 = vst.msk [vmem:[%s3330 + $0x40] sm:$0xf] %vm440, %v3110
        %v3372 = vld [vmem:[%s3330 + $0x44] sm:$0x1]
        %v3373 = vsel %vm451, %v3111, %v3372
        %3374 = vst [vmem:[%s3330 + $0x44] sm:$0x1] %v3373
        %v3375 = vld [vmem:[%s3330 + $0x48] sm:$0xf]
        %v3376 = vsel %vm3332, %v3118, %v3375
        %3377 = vst [vmem:[%s3330 + $0x48] sm:$0xf] %v3376
        %3378 = vst.msk [vmem:[%s3330 + $0x4c] sm:$0xf] %vm440, %v3127
        %v3379 = vld [vmem:[%s3330 + $0x50] sm:$0x1]
        %v3380 = vsel %vm451, %v3128, %v3379
        %3381 = vst [vmem:[%s3330 + $0x50] sm:$0x1] %v3380
        %v3382 = vld [vmem:[%s3330 + $0x54] sm:$0xf]
        %v3383 = vsel %vm3332, %v3135, %v3382
        %3384 = vst [vmem:[%s3330 + $0x54] sm:$0xf] %v3383
        %3385 = vst.msk [vmem:[%s3330 + $0x58] sm:$0xf] %vm440, %v3144
        %v3386 = vld [vmem:[%s3330 + $0x5c] sm:$0x1]
        %v3387 = vsel %vm451, %v3145, %v3386
        %3388 = vst [vmem:[%s3330 + $0x5c] sm:$0x1] %v3387
        %v3389 = vld [vmem:[%s3330 + $0x60] sm:$0xf]
        %v3390 = vsel %vm3332, %v3152, %v3389
        %3391 = vst [vmem:[%s3330 + $0x60] sm:$0xf] %v3390
        %3392 = vst.msk [vmem:[%s3330 + $0x64] sm:$0xf] %vm440, %v3161
        %v3393 = vld [vmem:[%s3330 + $0x68] sm:$0x1]
        %v3394 = vsel %vm451, %v3162, %v3393
        %3395 = vst [vmem:[%s3330 + $0x68] sm:$0x1] %v3394
        %v3396 = vld [vmem:[%s3330 + $0x6c] sm:$0xf]
        %v3397 = vsel %vm3332, %v3169, %v3396
        %3398 = vst [vmem:[%s3330 + $0x6c] sm:$0xf] %v3397
        %3399 = vst.msk [vmem:[%s3330 + $0x70] sm:$0xf] %vm440, %v3178
        %v3400 = vld [vmem:[%s3330 + $0x74] sm:$0x1]
        %v3401 = vsel %vm451, %v3179, %v3400
        %3402 = vst [vmem:[%s3330 + $0x74] sm:$0x1] %v3401
        %v3403 = vld [vmem:[%s3330 + $0x78] sm:$0xf]
        %v3404 = vsel %vm3332, %v3186, %v3403
        %3405 = vst [vmem:[%s3330 + $0x78] sm:$0xf] %v3404
        %3406 = vst.msk [vmem:[%s3330 + $0x7c] sm:$0xf] %vm440, %v3195
        %v3407 = vld [vmem:[%s3330 + $0x80] sm:$0x1]
        %v3408 = vsel %vm451, %v3196, %v3407
        %3409 = vst [vmem:[%s3330 + $0x80] sm:$0x1] %v3408
        %v3410 = vld [vmem:[%s3330 + $0x84] sm:$0xf]
        %v3411 = vsel %vm3332, %v3203, %v3410
        %3412 = vst [vmem:[%s3330 + $0x84] sm:$0xf] %v3411
        %3413 = vst.msk [vmem:[%s3330 + $0x88] sm:$0xf] %vm440, %v3212
        %v3414 = vld [vmem:[%s3330 + $0x8c] sm:$0x1]
        %v3415 = vsel %vm451, %v3213, %v3414
        %3416 = vst [vmem:[%s3330 + $0x8c] sm:$0x1] %v3415
        %v3417 = vld [vmem:[%s3330 + $0x90] sm:$0xf]
        %v3418 = vsel %vm3332, %v3220, %v3417
        %3419 = vst [vmem:[%s3330 + $0x90] sm:$0xf] %v3418
        %3420 = vst.msk [vmem:[%s3330 + $0x94] sm:$0xf] %vm440, %v3229
        %v3421 = vld [vmem:[%s3330 + $0x98] sm:$0x1]
        %v3422 = vsel %vm451, %v3230, %v3421
        %3423 = vst [vmem:[%s3330 + $0x98] sm:$0x1] %v3422
        %v3424 = vld [vmem:[%s3330 + $0x9c] sm:$0xf]
        %v3425 = vsel %vm3332, %v3237, %v3424
        %3426 = vst [vmem:[%s3330 + $0x9c] sm:$0xf] %v3425
        %3427 = vst.msk [vmem:[%s3330 + $0xa0] sm:$0xf] %vm440, %v3246
        %v3428 = vld [vmem:[%s3330 + $0xa4] sm:$0x1]
        %v3429 = vsel %vm451, %v3247, %v3428
        %3430 = vst [vmem:[%s3330 + $0xa4] sm:$0x1] %v3429
        %v3431 = vld [vmem:[%s3330 + $0xa8] sm:$0xf]
        %v3432 = vsel %vm3332, %v3254, %v3431
        %3433 = vst [vmem:[%s3330 + $0xa8] sm:$0xf] %v3432
        %3434 = vst.msk [vmem:[%s3330 + $0xac] sm:$0xf] %vm440, %v3263
        %v3435 = vld [vmem:[%s3330 + $0xb0] sm:$0x1]
        %v3436 = vsel %vm451, %v3264, %v3435
        %3437 = vst [vmem:[%s3330 + $0xb0] sm:$0x1] %v3436
        %v3438 = vld [vmem:[%s3330 + $0xb4] sm:$0xf]
        %v3439 = vsel %vm3332, %v3271, %v3438
        %3440 = vst [vmem:[%s3330 + $0xb4] sm:$0xf] %v3439
        %3441 = vst.msk [vmem:[%s3330 + $0xb8] sm:$0xf] %vm440, %v3280
        %v3442 = vld [vmem:[%s3330 + $0xbc] sm:$0x1]
        %v3443 = vsel %vm451, %v3281, %v3442
        %3444 = vst [vmem:[%s3330 + $0xbc] sm:$0x1] %v3443
        %v3445 = vld [vmem:[%s4] sm:$0xff]
        %v3446 = vld [vmem:[%s4 + $0x8] sm:$0xff]
        %v3447 = vld [vmem:[%s4 + $0x10] sm:$0xff]
        %v3448 = vld [vmem:[%s4 + $0x18] sm:$0xff]
        %v3450 = vsel %vm2263, %v2809, 0
        %3452 = vmatprep.subr.mxu0 0.0
        %3453 = vmatpush1.msra.mxu0 0.0
        %3454 = vmatprep.subr.mxu0 0.0
        %3455 = vmatpush1.msra.mxu0 0.0
        %3456 = vmatprep.subr.mxu0 0.0
        %3457 = vmatpush1.msra.mxu0 0.0
        %3458 = vmatprep.subr.mxu0 0.0
        %3459 = vmatpush1.msra.mxu0 0.0
        %3460 = vmatprep.subr.mxu0 0.0
        %3461 = vmatpush1.msra.mxu0 0.0
        %3462 = vmatprep.subr.mxu0 0.0
        %3463 = vmatpush1.msra.mxu0 0.0
        %3464 = vmatprep.subr.mxu0 0.0
        %3465 = vmatpush1.msra.mxu0 0.0
        %3466 = vmatprep.subr.mxu0 0.0
        %3467 = vmatpush1.msra.mxu0 0.0
        %3468 = vmatprep.subr.mxu0 0.0
        %3469 = vmatpush1.msra.mxu0 0.0
        %3470 = vmatprep.subr.mxu0 0.0
        %3471 = vmatpush1.msra.mxu0 0.0
        %3472 = vmatprep.subr.mxu0 0.0
        %3473 = vmatpush1.msra.mxu0 0.0
        %3474 = vmatprep.subr.mxu0 0.0
        %3475 = vmatpush1.msra.mxu0 0.0
        %3476 = vmatprep.subr.mxu0 0.0
        %3477 = vmatpush1.msra.mxu0 %v3448
        %3478 = vmatprep.subr.mxu0 0.0
        %3479 = vmatpush1.msra.mxu0 %v3447
        %3480 = vmatprep.subr.mxu0 0.0
        %3481 = vmatpush1.msra.mxu0 %v3446
        %3482 = vmatprep.subr.mxu0 0.0
        %3483 = vmatpush1.msra.mxu0 %v3445
        %3484 = vmatprep.subr.mxu0 0.0
        %3485 = vmatpush2.msra.mxu0 0.0
        %3486 = vmatprep.subr.mxu0 0.0
        %3487 = vmatpush2.msra.mxu0 0.0
        %3488 = vmatprep.subr.mxu0 0.0
        %3489 = vmatpush2.msra.mxu0 0.0
        %3490 = vmatprep.subr.mxu0 0.0
        %3491 = vmatpush2.msra.mxu0 0.0
        %3492 = vmatprep.subr.mxu0 0.0
        %3493 = vmatpush2.msra.mxu0 0.0
        %3494 = vmatprep.subr.mxu0 0.0
        %3495 = vmatpush2.msra.mxu0 0.0
        %3496 = vmatprep.subr.mxu0 0.0
        %3497 = vmatpush2.msra.mxu0 0.0
        %3498 = vmatprep.subr.mxu0 0.0
        %3499 = vmatpush2.msra.mxu0 0.0
        %3500 = vmatprep.subr.mxu0 0.0
        %3501 = vmatpush2.msra.mxu0 0.0
        %3502 = vmatprep.subr.mxu0 0.0
        %3503 = vmatpush2.msra.mxu0 0.0
        %3504 = vmatprep.subr.mxu0 0.0
        %3505 = vmatpush2.msra.mxu0 0.0
        %3506 = vmatprep.subr.mxu0 0.0
        %3507 = vmatpush2.msra.mxu0 0.0
        %3508 = vmatprep.subr.mxu0 0.0
        %3509 = vmatpush2.msra.mxu0 0.0
        %3510 = vmatprep.subr.mxu0 0.0
        %3511 = vmatpush2.msra.mxu0 0.0
        %3512 = vmatprep.subr.mxu0 0.0
        %3513 = vmatpush2.msra.mxu0 0.0
        %3514 = vmatprep.subr.mxu0 0.0
        %3515 = vmatpush2.msra.mxu0 0.0
        %3516 = vmatprep.mubr.f32.mxu0 0.0
        %3517 = vmatmul.mubr.f32.gmra.mxu0 %v3450
        %v3518 = vpop.f32.mrf.mxu0
        %v3519 = vadd.f32 0.0, %v3518
        %v3520 = vpop.f32.mrf.mxu0
        %3521 = vdwg.mxu0
        %v3523 = vsel %vm2263, %v2911, 0
        %3525 = vmatprep.subr.mxu0 0.0
        %3526 = vmatpush1.msra.mxu0 0.0
        %3527 = vmatprep.subr.mxu0 0.0
        %3528 = vmatpush1.msra.mxu0 0.0
        %3529 = vmatprep.subr.mxu0 0.0
        %3530 = vmatpush1.msra.mxu0 0.0
        %3531 = vmatprep.subr.mxu0 0.0
        %3532 = vmatpush1.msra.mxu0 0.0
        %3533 = vmatprep.subr.mxu0 0.0
        %3534 = vmatpush1.msra.mxu0 0.0
        %3535 = vmatprep.subr.mxu0 0.0
        %3536 = vmatpush1.msra.mxu0 0.0
        %3537 = vmatprep.subr.mxu0 0.0
        %3538 = vmatpush1.msra.mxu0 0.0
        %3539 = vmatprep.subr.mxu0 0.0
        %3540 = vmatpush1.msra.mxu0 0.0
        %3541 = vmatprep.subr.mxu0 0.0
        %3542 = vmatpush1.msra.mxu0 0.0
        %3543 = vmatprep.subr.mxu0 0.0
        %3544 = vmatpush1.msra.mxu0 0.0
        %3545 = vmatprep.subr.mxu0 0.0
        %3546 = vmatpush1.msra.mxu0 0.0
        %3547 = vmatprep.subr.mxu0 0.0
        %3548 = vmatpush1.msra.mxu0 0.0
        %3549 = vmatprep.subr.mxu0 0.0
        %3550 = vmatpush1.msra.mxu0 %v3448
        %3551 = vmatprep.subr.mxu0 0.0
        %3552 = vmatpush1.msra.mxu0 %v3447
        %3553 = vmatprep.subr.mxu0 0.0
        %3554 = vmatpush1.msra.mxu0 %v3446
        %3555 = vmatprep.subr.mxu0 0.0
        %3556 = vmatpush1.msra.mxu0 %v3445
        %3557 = vmatprep.subr.mxu0 0.0
        %3558 = vmatpush2.msra.mxu0 0.0
        %3559 = vmatprep.subr.mxu0 0.0
        %3560 = vmatpush2.msra.mxu0 0.0
        %3561 = vmatprep.subr.mxu0 0.0
        %3562 = vmatpush2.msra.mxu0 0.0
        %3563 = vmatprep.subr.mxu0 0.0
        %3564 = vmatpush2.msra.mxu0 0.0
        %3565 = vmatprep.subr.mxu0 0.0
        %3566 = vmatpush2.msra.mxu0 0.0
        %3567 = vmatprep.subr.mxu0 0.0
        %3568 = vmatpush2.msra.mxu0 0.0
        %3569 = vmatprep.subr.mxu0 0.0
        %3570 = vmatpush2.msra.mxu0 0.0
        %3571 = vmatprep.subr.mxu0 0.0
        %3572 = vmatpush2.msra.mxu0 0.0
        %3573 = vmatprep.subr.mxu0 0.0
        %3574 = vmatpush2.msra.mxu0 0.0
        %3575 = vmatprep.subr.mxu0 0.0
        %3576 = vmatpush2.msra.mxu0 0.0
        %3577 = vmatprep.subr.mxu0 0.0
        %3578 = vmatpush2.msra.mxu0 0.0
        %3579 = vmatprep.subr.mxu0 0.0
        %3580 = vmatpush2.msra.mxu0 0.0
        %3581 = vmatprep.subr.mxu0 0.0
        %3582 = vmatpush2.msra.mxu0 0.0
        %3583 = vmatprep.subr.mxu0 0.0
        %3584 = vmatpush2.msra.mxu0 0.0
        %3585 = vmatprep.subr.mxu0 0.0
        %3586 = vmatpush2.msra.mxu0 0.0
        %3587 = vmatprep.subr.mxu0 0.0
        %3588 = vmatpush2.msra.mxu0 0.0
        %3589 = vmatprep.mubr.f32.mxu0 0.0
        %3590 = vmatmul.mubr.f32.gmra.mxu0 %v3523
        %v3591 = vpop.f32.mrf.mxu0
        %v3592 = vadd.f32 0.0, %v3591
        %v3593 = vpop.f32.mrf.mxu0
        %3594 = vdwg.mxu0
        %v3595 = vrcp.pop 512.0
        %v3596 = vmul.f32 %v3519, %v3595
        %v3597 = vmul.f32 %v3592, %v3595
        %v3598 = vmul.f32 %v3596, %v3596
        %v3599 = vsub.f32 %v3597, %v3598
        %v3600 = vmax.f32 %v3599, 0.0
        %v3601 = vadd.f32 %v3600, 1e-05
        %v3602 = vrsqrt.pop %v3601
        %v3603 = vld [vmem:[%s5] sm:$0xff]
        %v3604 = vld [vmem:[%s5 + $0x8] sm:$0xff]
        %v3606 = vsel %vm2230, %v3596, 0
        %3608 = vmatprep.subr.mxu0 0.0
        %3609 = vmatpush1.msra.mxu0 0.0
        %3610 = vmatprep.subr.mxu0 0.0
        %3611 = vmatpush1.msra.mxu0 0.0
        %3612 = vmatprep.subr.mxu0 0.0
        %3613 = vmatpush1.msra.mxu0 0.0
        %3614 = vmatprep.subr.mxu0 0.0
        %3615 = vmatpush1.msra.mxu0 0.0
        %3616 = vmatprep.subr.mxu0 0.0
        %3617 = vmatpush1.msra.mxu0 0.0
        %3618 = vmatprep.subr.mxu0 0.0
        %3619 = vmatpush1.msra.mxu0 0.0
        %3620 = vmatprep.subr.mxu0 0.0
        %3621 = vmatpush1.msra.mxu0 0.0
        %3622 = vmatprep.subr.mxu0 0.0
        %3623 = vmatpush1.msra.mxu0 0.0
        %3624 = vmatprep.subr.mxu0 0.0
        %3625 = vmatpush1.msra.mxu0 0.0
        %3626 = vmatprep.subr.mxu0 0.0
        %3627 = vmatpush1.msra.mxu0 0.0
        %3628 = vmatprep.subr.mxu0 0.0
        %3629 = vmatpush1.msra.mxu0 0.0
        %3630 = vmatprep.subr.mxu0 0.0
        %3631 = vmatpush1.msra.mxu0 0.0
        %3632 = vmatprep.subr.mxu0 0.0
        %3633 = vmatpush1.msra.mxu0 0.0
        %3634 = vmatprep.subr.mxu0 0.0
        %3635 = vmatpush1.msra.mxu0 0.0
        %3636 = vmatprep.subr.mxu0 0.0
        %3637 = vmatpush1.msra.mxu0 %v3604
        %3638 = vmatprep.subr.mxu0 0.0
        %3639 = vmatpush1.msra.mxu0 %v3603
        %3640 = vmatprep.subr.mxu0 0.0
        %3641 = vmatpush2.msra.mxu0 0.0
        %3642 = vmatprep.subr.mxu0 0.0
        %3643 = vmatpush2.msra.mxu0 0.0
        %3644 = vmatprep.subr.mxu0 0.0
        %3645 = vmatpush2.msra.mxu0 0.0
        %3646 = vmatprep.subr.mxu0 0.0
        %3647 = vmatpush2.msra.mxu0 0.0
        %3648 = vmatprep.subr.mxu0 0.0
        %3649 = vmatpush2.msra.mxu0 0.0
        %3650 = vmatprep.subr.mxu0 0.0
        %3651 = vmatpush2.msra.mxu0 0.0
        %3652 = vmatprep.subr.mxu0 0.0
        %3653 = vmatpush2.msra.mxu0 0.0
        %3654 = vmatprep.subr.mxu0 0.0
        %3655 = vmatpush2.msra.mxu0 0.0
        %3656 = vmatprep.subr.mxu0 0.0
        %3657 = vmatpush2.msra.mxu0 0.0
        %3658 = vmatprep.subr.mxu0 0.0
        %3659 = vmatpush2.msra.mxu0 0.0
        %3660 = vmatprep.subr.mxu0 0.0
        %3661 = vmatpush2.msra.mxu0 0.0
        %3662 = vmatprep.subr.mxu0 0.0
        %3663 = vmatpush2.msra.mxu0 0.0
        %3664 = vmatprep.subr.mxu0 0.0
        %3665 = vmatpush2.msra.mxu0 0.0
        %3666 = vmatprep.subr.mxu0 0.0
        %3667 = vmatpush2.msra.mxu0 0.0
        %3668 = vmatprep.subr.mxu0 0.0
        %3669 = vmatpush2.msra.mxu0 0.0
        %3670 = vmatprep.subr.mxu0 0.0
        %3671 = vmatpush2.msra.mxu0 0.0
        %3672 = vmatprep.mubr.f32.mxu0 0.0
        %3673 = vmatmul.mubr.f32.gmra.mxu0 %v3606
        %v3674 = vpop.f32.mrf.mxu0
        %v3675 = vadd.f32 0.0, %v3674
        %v3676 = vpop.f32.mrf.mxu0
        %3677 = vdwg.mxu0
        %v3679 = vsel %vm2230, %v3602, 0
        %3681 = vmatprep.subr.mxu0 0.0
        %3682 = vmatpush1.msra.mxu0 0.0
        %3683 = vmatprep.subr.mxu0 0.0
        %3684 = vmatpush1.msra.mxu0 0.0
        %3685 = vmatprep.subr.mxu0 0.0
        %3686 = vmatpush1.msra.mxu0 0.0
        %3687 = vmatprep.subr.mxu0 0.0
        %3688 = vmatpush1.msra.mxu0 0.0
        %3689 = vmatprep.subr.mxu0 0.0
        %3690 = vmatpush1.msra.mxu0 0.0
        %3691 = vmatprep.subr.mxu0 0.0
        %3692 = vmatpush1.msra.mxu0 0.0
        %3693 = vmatprep.subr.mxu0 0.0
        %3694 = vmatpush1.msra.mxu0 0.0
        %3695 = vmatprep.subr.mxu0 0.0
        %3696 = vmatpush1.msra.mxu0 0.0
        %3697 = vmatprep.subr.mxu0 0.0
        %3698 = vmatpush1.msra.mxu0 0.0
        %3699 = vmatprep.subr.mxu0 0.0
        %3700 = vmatpush1.msra.mxu0 0.0
        %3701 = vmatprep.subr.mxu0 0.0
        %3702 = vmatpush1.msra.mxu0 0.0
        %3703 = vmatprep.subr.mxu0 0.0
        %3704 = vmatpush1.msra.mxu0 0.0
        %3705 = vmatprep.subr.mxu0 0.0
        %3706 = vmatpush1.msra.mxu0 0.0
        %3707 = vmatprep.subr.mxu0 0.0
        %3708 = vmatpush1.msra.mxu0 0.0
        %3709 = vmatprep.subr.mxu0 0.0
        %3710 = vmatpush1.msra.mxu0 %v3604
        %3711 = vmatprep.subr.mxu0 0.0
        %3712 = vmatpush1.msra.mxu0 %v3603
        %3713 = vmatprep.subr.mxu0 0.0
        %3714 = vmatpush2.msra.mxu0 0.0
        %3715 = vmatprep.subr.mxu0 0.0
        %3716 = vmatpush2.msra.mxu0 0.0
        %3717 = vmatprep.subr.mxu0 0.0
        %3718 = vmatpush2.msra.mxu0 0.0
        %3719 = vmatprep.subr.mxu0 0.0
        %3720 = vmatpush2.msra.mxu0 0.0
        %3721 = vmatprep.subr.mxu0 0.0
        %3722 = vmatpush2.msra.mxu0 0.0
        %3723 = vmatprep.subr.mxu0 0.0
        %3724 = vmatpush2.msra.mxu0 0.0
        %3725 = vmatprep.subr.mxu0 0.0
        %3726 = vmatpush2.msra.mxu0 0.0
        %3727 = vmatprep.subr.mxu0 0.0
        %3728 = vmatpush2.msra.mxu0 0.0
        %3729 = vmatprep.subr.mxu0 0.0
        %3730 = vmatpush2.msra.mxu0 0.0
        %3731 = vmatprep.subr.mxu0 0.0
        %3732 = vmatpush2.msra.mxu0 0.0
        %3733 = vmatprep.subr.mxu0 0.0
        %3734 = vmatpush2.msra.mxu0 0.0
        %3735 = vmatprep.subr.mxu0 0.0
        %3736 = vmatpush2.msra.mxu0 0.0
        %3737 = vmatprep.subr.mxu0 0.0
        %3738 = vmatpush2.msra.mxu0 0.0
        %3739 = vmatprep.subr.mxu0 0.0
        %3740 = vmatpush2.msra.mxu0 0.0
        %3741 = vmatprep.subr.mxu0 0.0
        %3742 = vmatpush2.msra.mxu0 0.0
        %3743 = vmatprep.subr.mxu0 0.0
        %3744 = vmatpush2.msra.mxu0 0.0
        %3745 = vmatprep.mubr.f32.mxu0 0.0
        %3746 = vmatmul.mubr.f32.gmra.mxu0 %v3679
        %v3747 = vpop.f32.mrf.mxu0
        %v3748 = vadd.f32 0.0, %v3747
        %v3749 = vpop.f32.mrf.mxu0
        %3750 = vdwg.mxu0
        %v3751 = vld [vmem:[%s2] sm:$0x1]
        %v3752 = vmul.f32 %v3748, %v3751
        %v3753 = vld [vmem:[%s3] sm:$0x1]
        %v3754 = vmul.f32 %v3675, %v3752
        %v3755 = vsub.f32 %v3753, %v3754
        %v3756 = vld [vmem:[%s3330] sm:$0xf]
        %v3757 = vld [vmem:[%s3330 + $0x4] sm:$0xf]
        %v3758 = vld [vmem:[%s3330 + $0x8] sm:$0x1]
        %v3759 = vld [vmem:[%s3330 + $0xc] sm:$0xf]
        %v3760 = vld [vmem:[%s3330 + $0x10] sm:$0xf]
        %v3761 = vld [vmem:[%s3330 + $0x14] sm:$0x1]
        %v3762 = vld [vmem:[%s3330 + $0x18] sm:$0xf]
        %v3763 = vld [vmem:[%s3330 + $0x1c] sm:$0xf]
        %v3764 = vld [vmem:[%s3330 + $0x20] sm:$0x1]
        %v3765 = vld [vmem:[%s3330 + $0x24] sm:$0xf]
        %v3766 = vld [vmem:[%s3330 + $0x28] sm:$0xf]
        %v3767 = vld [vmem:[%s3330 + $0x2c] sm:$0x1]
        %v3768 = vld [vmem:[%s3330 + $0x30] sm:$0xf]
        %v3769 = vld [vmem:[%s3330 + $0x34] sm:$0xf]
        %v3770 = vld [vmem:[%s3330 + $0x38] sm:$0x1]
        %v3771 = vld [vmem:[%s3330 + $0x3c] sm:$0xf]
        %v3772 = vld [vmem:[%s3330 + $0x40] sm:$0xf]
        %v3773 = vld [vmem:[%s3330 + $0x44] sm:$0x1]
        %v3774 = vld [vmem:[%s3330 + $0x48] sm:$0xf]
        %v3775 = vld [vmem:[%s3330 + $0x4c] sm:$0xf]
        %v3776 = vld [vmem:[%s3330 + $0x50] sm:$0x1]
        %v3777 = vld [vmem:[%s3330 + $0x54] sm:$0xf]
        %v3778 = vld [vmem:[%s3330 + $0x58] sm:$0xf]
        %v3779 = vld [vmem:[%s3330 + $0x5c] sm:$0x1]
        %v3780 = vld [vmem:[%s3330 + $0x60] sm:$0xf]
        %v3781 = vld [vmem:[%s3330 + $0x64] sm:$0xf]
        %v3782 = vld [vmem:[%s3330 + $0x68] sm:$0x1]
        %v3783 = vld [vmem:[%s3330 + $0x6c] sm:$0xf]
        %v3784 = vld [vmem:[%s3330 + $0x70] sm:$0xf]
        %v3785 = vld [vmem:[%s3330 + $0x74] sm:$0x1]
        %v3786 = vld [vmem:[%s3330 + $0x78] sm:$0xf]
        %v3787 = vld [vmem:[%s3330 + $0x7c] sm:$0xf]
        %v3788 = vld [vmem:[%s3330 + $0x80] sm:$0x1]
        %v3789 = vld [vmem:[%s3330 + $0x84] sm:$0xf]
        %v3790 = vld [vmem:[%s3330 + $0x88] sm:$0xf]
        %v3791 = vld [vmem:[%s3330 + $0x8c] sm:$0x1]
        %v3792 = vld [vmem:[%s3330 + $0x90] sm:$0xf]
        %v3793 = vld [vmem:[%s3330 + $0x94] sm:$0xf]
        %v3794 = vld [vmem:[%s3330 + $0x98] sm:$0x1]
        %v3795 = vld [vmem:[%s3330 + $0x9c] sm:$0xf]
        %v3796 = vld [vmem:[%s3330 + $0xa0] sm:$0xf]
        %v3797 = vld [vmem:[%s3330 + $0xa4] sm:$0x1]
        %v3798 = vld [vmem:[%s3330 + $0xa8] sm:$0xf]
        %v3799 = vld [vmem:[%s3330 + $0xac] sm:$0xf]
        %v3800 = vld [vmem:[%s3330 + $0xb0] sm:$0x1]
        %v3801 = vld [vmem:[%s3330 + $0xb4] sm:$0xf]
        %v3802 = vld [vmem:[%s3330 + $0xb8] sm:$0xf]
        %v3803 = vld [vmem:[%s3330 + $0xbc] sm:$0x1]
        %v3804 = vunpack.c.l.bf16 %v3756
        %v3805 = vunpack.c.l.bf16 %v3757
        %v3806 = vunpack.c.l.bf16 %v3758
        %v3807 = vunpack.c.l.bf16 %v3759
        %v3808 = vunpack.c.l.bf16 %v3760
        %v3809 = vunpack.c.l.bf16 %v3761
        %v3810 = vunpack.c.l.bf16 %v3762
        %v3811 = vunpack.c.l.bf16 %v3763
        %v3812 = vunpack.c.l.bf16 %v3764
        %v3813 = vunpack.c.l.bf16 %v3765
        %v3814 = vunpack.c.l.bf16 %v3766
        %v3815 = vunpack.c.l.bf16 %v3767
        %v3816 = vunpack.c.l.bf16 %v3768
        %v3817 = vunpack.c.l.bf16 %v3769
        %v3818 = vunpack.c.l.bf16 %v3770
        %v3819 = vunpack.c.l.bf16 %v3771
        %v3820 = vunpack.c.l.bf16 %v3772
        %v3821 = vunpack.c.l.bf16 %v3773
        %v3822 = vunpack.c.l.bf16 %v3774
        %v3823 = vunpack.c.l.bf16 %v3775
        %v3824 = vunpack.c.l.bf16 %v3776
        %v3825 = vunpack.c.l.bf16 %v3777
        %v3826 = vunpack.c.l.bf16 %v3778
        %v3827 = vunpack.c.l.bf16 %v3779
        %v3828 = vunpack.c.l.bf16 %v3780
        %v3829 = vunpack.c.l.bf16 %v3781
        %v3830 = vunpack.c.l.bf16 %v3782
        %v3831 = vunpack.c.l.bf16 %v3783
        %v3832 = vunpack.c.l.bf16 %v3784
        %v3833 = vunpack.c.l.bf16 %v3785
        %v3834 = vunpack.c.l.bf16 %v3786
        %v3835 = vunpack.c.l.bf16 %v3787
        %v3836 = vunpack.c.l.bf16 %v3788
        %v3837 = vunpack.c.l.bf16 %v3789
        %v3838 = vunpack.c.l.bf16 %v3790
        %v3839 = vunpack.c.l.bf16 %v3791
        %v3840 = vunpack.c.l.bf16 %v3792
        %v3841 = vunpack.c.l.bf16 %v3793
        %v3842 = vunpack.c.l.bf16 %v3794
        %v3843 = vunpack.c.l.bf16 %v3795
        %v3844 = vunpack.c.l.bf16 %v3796
        %v3845 = vunpack.c.l.bf16 %v3797
        %v3846 = vunpack.c.l.bf16 %v3798
        %v3847 = vunpack.c.l.bf16 %v3799
        %v3848 = vunpack.c.l.bf16 %v3800
        %v3849 = vunpack.c.l.bf16 %v3801
        %v3850 = vunpack.c.l.bf16 %v3802
        %v3851 = vunpack.c.l.bf16 %v3803
        %v3852 = vlaneseq
        %v3853 = vshrl.u32 %v3852, 7
        %v3854 = vsub.s32 0, %v3853
        %v3855 = vrot.slane %v3752, %v3854
        %v3856 = vmul.f32 %v3804, %v3855
        %v3857 = vmul.f32 %v3805, %v3855
        %v3858 = vmul.f32 %v3806, %v3855
        %v3859 = vmul.f32 %v3807, %v3855
        %v3860 = vmul.f32 %v3808, %v3855
        %v3861 = vmul.f32 %v3809, %v3855
        %v3862 = vmul.f32 %v3810, %v3855
        %v3863 = vmul.f32 %v3811, %v3855
        %v3864 = vmul.f32 %v3812, %v3855
        %v3865 = vmul.f32 %v3813, %v3855
        %v3866 = vmul.f32 %v3814, %v3855
        %v3867 = vmul.f32 %v3815, %v3855
        %v3868 = vmul.f32 %v3816, %v3855
        %v3869 = vmul.f32 %v3817, %v3855
        %v3870 = vmul.f32 %v3818, %v3855
        %v3871 = vmul.f32 %v3819, %v3855
        %v3872 = vmul.f32 %v3820, %v3855
        %v3873 = vmul.f32 %v3821, %v3855
        %v3874 = vmul.f32 %v3822, %v3855
        %v3875 = vmul.f32 %v3823, %v3855
        %v3876 = vmul.f32 %v3824, %v3855
        %v3877 = vmul.f32 %v3825, %v3855
        %v3878 = vmul.f32 %v3826, %v3855
        %v3879 = vmul.f32 %v3827, %v3855
        %v3880 = vmul.f32 %v3828, %v3855
        %v3881 = vmul.f32 %v3829, %v3855
        %v3882 = vmul.f32 %v3830, %v3855
        %v3883 = vmul.f32 %v3831, %v3855
        %v3884 = vmul.f32 %v3832, %v3855
        %v3885 = vmul.f32 %v3833, %v3855
        %v3886 = vmul.f32 %v3834, %v3855
        %v3887 = vmul.f32 %v3835, %v3855
        %v3888 = vmul.f32 %v3836, %v3855
        %v3889 = vmul.f32 %v3837, %v3855
        %v3890 = vmul.f32 %v3838, %v3855
        %v3891 = vmul.f32 %v3839, %v3855
        %v3892 = vmul.f32 %v3840, %v3855
        %v3893 = vmul.f32 %v3841, %v3855
        %v3894 = vmul.f32 %v3842, %v3855
        %v3895 = vmul.f32 %v3843, %v3855
        %v3896 = vmul.f32 %v3844, %v3855
        %v3897 = vmul.f32 %v3845, %v3855
        %v3898 = vmul.f32 %v3846, %v3855
        %v3899 = vmul.f32 %v3847, %v3855
        %v3900 = vmul.f32 %v3848, %v3855
        %v3901 = vmul.f32 %v3849, %v3855
        %v3902 = vmul.f32 %v3850, %v3855
        %v3903 = vmul.f32 %v3851, %v3855
        %v3905 = vlaneseq
        %v3906 = vshrl.u32 %v3905, 7
        %v3907 = vsub.s32 0, %v3906
        %v3908 = vrot.slane %v3755, %v3907
        %v3910 = vadd.f32 %v3856, %v3908
        %v3911 = vadd.f32 %v3857, %v3908
        %v3912 = vadd.f32 %v3858, %v3908
        %v3913 = vadd.f32 %v3859, %v3908
        %v3914 = vadd.f32 %v3860, %v3908
        %v3915 = vadd.f32 %v3861, %v3908
        %v3916 = vadd.f32 %v3862, %v3908
        %v3917 = vadd.f32 %v3863, %v3908
        %v3918 = vadd.f32 %v3864, %v3908
        %v3919 = vadd.f32 %v3865, %v3908
        %v3920 = vadd.f32 %v3866, %v3908
        %v3921 = vadd.f32 %v3867, %v3908
        %v3922 = vadd.f32 %v3868, %v3908
        %v3923 = vadd.f32 %v3869, %v3908
        %v3924 = vadd.f32 %v3870, %v3908
        %v3925 = vadd.f32 %v3871, %v3908
        %v3926 = vadd.f32 %v3872, %v3908
        %v3927 = vadd.f32 %v3873, %v3908
        %v3928 = vadd.f32 %v3874, %v3908
        %v3929 = vadd.f32 %v3875, %v3908
        %v3930 = vadd.f32 %v3876, %v3908
        %v3931 = vadd.f32 %v3877, %v3908
        %v3932 = vadd.f32 %v3878, %v3908
        %v3933 = vadd.f32 %v3879, %v3908
        %v3934 = vadd.f32 %v3880, %v3908
        %v3935 = vadd.f32 %v3881, %v3908
        %v3936 = vadd.f32 %v3882, %v3908
        %v3937 = vadd.f32 %v3883, %v3908
        %v3938 = vadd.f32 %v3884, %v3908
        %v3939 = vadd.f32 %v3885, %v3908
        %v3940 = vadd.f32 %v3886, %v3908
        %v3941 = vadd.f32 %v3887, %v3908
        %v3942 = vadd.f32 %v3888, %v3908
        %v3943 = vadd.f32 %v3889, %v3908
        %v3944 = vadd.f32 %v3890, %v3908
        %v3945 = vadd.f32 %v3891, %v3908
        %v3946 = vadd.f32 %v3892, %v3908
        %v3947 = vadd.f32 %v3893, %v3908
        %v3948 = vadd.f32 %v3894, %v3908
        %v3949 = vadd.f32 %v3895, %v3908
        %v3950 = vadd.f32 %v3896, %v3908
        %v3951 = vadd.f32 %v3897, %v3908
        %v3952 = vadd.f32 %v3898, %v3908
        %v3953 = vadd.f32 %v3899, %v3908
        %v3954 = vadd.f32 %v3900, %v3908
        %v3955 = vadd.f32 %v3901, %v3908
        %v3956 = vadd.f32 %v3902, %v3908
        %v3957 = vadd.f32 %v3903, %v3908
        %v3958 = vmax.f32 %v3910, 0.0
        %v3959 = vmax.f32 %v3911, 0.0
        %v3960 = vmax.f32 %v3912, 0.0
        %v3961 = vmax.f32 %v3913, 0.0
        %v3962 = vmax.f32 %v3914, 0.0
        %v3963 = vmax.f32 %v3915, 0.0
        %v3964 = vmax.f32 %v3916, 0.0
        %v3965 = vmax.f32 %v3917, 0.0
        %v3966 = vmax.f32 %v3918, 0.0
        %v3967 = vmax.f32 %v3919, 0.0
        %v3968 = vmax.f32 %v3920, 0.0
        %v3969 = vmax.f32 %v3921, 0.0
        %v3970 = vmax.f32 %v3922, 0.0
        %v3971 = vmax.f32 %v3923, 0.0
        %v3972 = vmax.f32 %v3924, 0.0
        %v3973 = vmax.f32 %v3925, 0.0
        %v3974 = vmax.f32 %v3926, 0.0
        %v3975 = vmax.f32 %v3927, 0.0
        %v3976 = vmax.f32 %v3928, 0.0
        %v3977 = vmax.f32 %v3929, 0.0
        %v3978 = vmax.f32 %v3930, 0.0
        %v3979 = vmax.f32 %v3931, 0.0
        %v3980 = vmax.f32 %v3932, 0.0
        %v3981 = vmax.f32 %v3933, 0.0
        %v3982 = vmax.f32 %v3934, 0.0
        %v3983 = vmax.f32 %v3935, 0.0
        %v3984 = vmax.f32 %v3936, 0.0
        %v3985 = vmax.f32 %v3937, 0.0
        %v3986 = vmax.f32 %v3938, 0.0
        %v3987 = vmax.f32 %v3939, 0.0
        %v3988 = vmax.f32 %v3940, 0.0
        %v3989 = vmax.f32 %v3941, 0.0
        %v3990 = vmax.f32 %v3942, 0.0
        %v3991 = vmax.f32 %v3943, 0.0
        %v3992 = vmax.f32 %v3944, 0.0
        %v3993 = vmax.f32 %v3945, 0.0
        %v3994 = vmax.f32 %v3946, 0.0
        %v3995 = vmax.f32 %v3947, 0.0
        %v3996 = vmax.f32 %v3948, 0.0
        %v3997 = vmax.f32 %v3949, 0.0
        %v3998 = vmax.f32 %v3950, 0.0
        %v3999 = vmax.f32 %v3951, 0.0
        %v4000 = vmax.f32 %v3952, 0.0
        %v4001 = vmax.f32 %v3953, 0.0
        %v4002 = vmax.f32 %v3954, 0.0
        %v4003 = vmax.f32 %v3955, 0.0
        %v4004 = vmax.f32 %v3956, 0.0
        %v4005 = vmax.f32 %v3957, 0.0
        %v4006 = vpack.c.bf16 %v3959, %v3958
        %v4007 = vpack.c.bf16 %v3960, %v3960
        %v4008 = vpack.c.bf16 %v3962, %v3961
        %v4009 = vpack.c.bf16 %v3963, %v3963
        %v4010 = vpack.c.bf16 %v3965, %v3964
        %v4011 = vpack.c.bf16 %v3966, %v3966
        %v4012 = vpack.c.bf16 %v3968, %v3967
        %v4013 = vpack.c.bf16 %v3969, %v3969
        %v4014 = vpack.c.bf16 %v3971, %v3970
        %v4015 = vpack.c.bf16 %v3972, %v3972
        %v4016 = vpack.c.bf16 %v3974, %v3973
        %v4017 = vpack.c.bf16 %v3975, %v3975
        %v4018 = vpack.c.bf16 %v3977, %v3976
        %v4019 = vpack.c.bf16 %v3978, %v3978
        %v4020 = vpack.c.bf16 %v3980, %v3979
        %v4021 = vpack.c.bf16 %v3981, %v3981
        %v4022 = vpack.c.bf16 %v3983, %v3982
        %v4023 = vpack.c.bf16 %v3984, %v3984
        %v4024 = vpack.c.bf16 %v3986, %v3985
        %v4025 = vpack.c.bf16 %v3987, %v3987
        %v4026 = vpack.c.bf16 %v3989, %v3988
        %v4027 = vpack.c.bf16 %v3990, %v3990
        %v4028 = vpack.c.bf16 %v3992, %v3991
        %v4029 = vpack.c.bf16 %v3993, %v3993
        %v4030 = vpack.c.bf16 %v3995, %v3994
        %v4031 = vpack.c.bf16 %v3996, %v3996
        %v4032 = vpack.c.bf16 %v3998, %v3997
        %v4033 = vpack.c.bf16 %v3999, %v3999
        %v4034 = vpack.c.bf16 %v4001, %v4000
        %v4035 = vpack.c.bf16 %v4002, %v4002
        %v4036 = vpack.c.bf16 %v4004, %v4003
        %v4037 = vpack.c.bf16 %v4005, %v4005
        %v4070 = vunpack.c.l.b16 %v4006
        %v4071 = vunpack.c.h.b16 %v4006
        %v4072 = vunpack.c.l.b16 %v4007
        %v4073 = vunpack.c.l.b16 %v4008
        %v4074 = vunpack.c.h.b16 %v4008
        %v4075 = vunpack.c.l.b16 %v4009
        %v4076 = vunpack.c.l.b16 %v4010
        %v4077 = vunpack.c.h.b16 %v4010
        %v4078 = vunpack.c.l.b16 %v4011
        %v4079 = vunpack.c.l.b16 %v4012
        %v4080 = vunpack.c.h.b16 %v4012
        %v4081 = vunpack.c.l.b16 %v4013
        %v4082 = vunpack.c.l.b16 %v4014
        %v4083 = vunpack.c.h.b16 %v4014
        %v4084 = vunpack.c.l.b16 %v4015
        %v4085 = vunpack.c.l.b16 %v4016
        %v4086 = vunpack.c.h.b16 %v4016
        %v4087 = vunpack.c.l.b16 %v4017
        %v4088 = vunpack.c.l.b16 %v4018
        %v4089 = vunpack.c.h.b16 %v4018
        %v4090 = vunpack.c.l.b16 %v4019
        %v4091 = vunpack.c.l.b16 %v4020
        %v4092 = vunpack.c.h.b16 %v4020
        %v4093 = vunpack.c.l.b16 %v4021
        %v4094 = vunpack.c.l.b16 %v4022
        %v4095 = vunpack.c.h.b16 %v4022
        %v4096 = vunpack.c.l.b16 %v4023
        %v4097 = vunpack.c.l.b16 %v4024
        %v4098 = vunpack.c.h.b16 %v4024
        %v4099 = vunpack.c.l.b16 %v4025
        %v4100 = vunpack.c.l.b16 %v4026
        %v4101 = vunpack.c.h.b16 %v4026
        %v4102 = vunpack.c.l.b16 %v4027
        %v4103 = vunpack.c.l.b16 %v4028
        %v4104 = vunpack.c.h.b16 %v4028
        %v4105 = vunpack.c.l.b16 %v4029
        %v4106 = vunpack.c.l.b16 %v4030
        %v4107 = vunpack.c.h.b16 %v4030
        %v4108 = vunpack.c.l.b16 %v4031
        %v4109 = vunpack.c.l.b16 %v4032
        %v4110 = vunpack.c.h.b16 %v4032
        %v4111 = vunpack.c.l.b16 %v4033
        %v4112 = vunpack.c.l.b16 %v4034
        %v4113 = vunpack.c.h.b16 %v4034
        %v4114 = vunpack.c.l.b16 %v4035
        %v4115 = vunpack.c.l.b16 %v4036
        %v4116 = vunpack.c.h.b16 %v4036
        %v4117 = vunpack.c.l.b16 %v4037
        %v4118 = vpack.c.b16 %v4070, %v4070
        %v4119 = vpack.c.b16 %v4071, %v4071
        %v4120 = vpack.c.b16 %v4072, %v4072
        %v4121 = vpack.c.b16 %v4073, %v4073
        %v4122 = vpack.c.b16 %v4074, %v4074
        %v4123 = vpack.c.b16 %v4075, %v4075
        %v4124 = vpack.c.b16 %v4076, %v4076
        %v4125 = vpack.c.b16 %v4077, %v4077
        %v4126 = vpack.c.b16 %v4078, %v4078
        %v4127 = vpack.c.b16 %v4079, %v4079
        %v4128 = vpack.c.b16 %v4080, %v4080
        %v4129 = vpack.c.b16 %v4081, %v4081
        %v4130 = vpack.c.b16 %v4082, %v4082
        %v4131 = vpack.c.b16 %v4083, %v4083
        %v4132 = vpack.c.b16 %v4084, %v4084
        %v4133 = vpack.c.b16 %v4085, %v4085
        %v4134 = vpack.c.b16 %v4086, %v4086
        %v4135 = vpack.c.b16 %v4087, %v4087
        %v4136 = vpack.c.b16 %v4088, %v4088
        %v4137 = vpack.c.b16 %v4089, %v4089
        %v4138 = vpack.c.b16 %v4090, %v4090
        %v4139 = vpack.c.b16 %v4091, %v4091
        %v4140 = vpack.c.b16 %v4092, %v4092
        %v4141 = vpack.c.b16 %v4093, %v4093
        %v4142 = vpack.c.b16 %v4094, %v4094
        %v4143 = vpack.c.b16 %v4095, %v4095
        %v4144 = vpack.c.b16 %v4096, %v4096
        %v4145 = vpack.c.b16 %v4097, %v4097
        %v4146 = vpack.c.b16 %v4098, %v4098
        %v4147 = vpack.c.b16 %v4099, %v4099
        %v4148 = vpack.c.b16 %v4100, %v4100
        %v4149 = vpack.c.b16 %v4101, %v4101
        %v4150 = vpack.c.b16 %v4102, %v4102
        %v4151 = vpack.c.b16 %v4103, %v4103
        %v4152 = vpack.c.b16 %v4104, %v4104
        %v4153 = vpack.c.b16 %v4105, %v4105
        %v4154 = vpack.c.b16 %v4106, %v4106
        %v4155 = vpack.c.b16 %v4107, %v4107
        %v4156 = vpack.c.b16 %v4108, %v4108
        %v4157 = vpack.c.b16 %v4109, %v4109
        %v4158 = vpack.c.b16 %v4110, %v4110
        %v4159 = vpack.c.b16 %v4111, %v4111
        %v4160 = vpack.c.b16 %v4112, %v4112
        %v4161 = vpack.c.b16 %v4113, %v4113
        %v4162 = vpack.c.b16 %v4114, %v4114
        %v4163 = vpack.c.b16 %v4115, %v4115
        %v4164 = vpack.c.b16 %v4116, %v4116
        %v4165 = vpack.c.b16 %v4117, %v4117
        %v4214 = vsel %vm3332, %v4118, %v3756
        %4215 = vst [vmem:[%s3330] sm:$0xf] %v4214
        %4216 = vst.msk [vmem:[%s3330 + $0x4] sm:$0xf] %vm440, %v4119
        %v4217 = vld [vmem:[%s3330 + $0x8] sm:$0x1]
        %v4218 = vsel %vm451, %v4120, %v4217
        %4219 = vst [vmem:[%s3330 + $0x8] sm:$0x1] %v4218
        %v4220 = vld [vmem:[%s3330 + $0xc] sm:$0xf]
        %v4221 = vsel %vm3332, %v4121, %v4220
        %4222 = vst [vmem:[%s3330 + $0xc] sm:$0xf] %v4221
        %4223 = vst.msk [vmem:[%s3330 + $0x10] sm:$0xf] %vm440, %v4122
        %v4224 = vld [vmem:[%s3330 + $0x14] sm:$0x1]
        %v4225 = vsel %vm451, %v4123, %v4224
        %4226 = vst [vmem:[%s3330 + $0x14] sm:$0x1] %v4225
        %v4227 = vld [vmem:[%s3330 + $0x18] sm:$0xf]
        %v4228 = vsel %vm3332, %v4124, %v4227
        %4229 = vst [vmem:[%s3330 + $0x18] sm:$0xf] %v4228
        %4230 = vst.msk [vmem:[%s3330 + $0x1c] sm:$0xf] %vm440, %v4125
        %v4231 = vld [vmem:[%s3330 + $0x20] sm:$0x1]
        %v4232 = vsel %vm451, %v4126, %v4231
        %4233 = vst [vmem:[%s3330 + $0x20] sm:$0x1] %v4232
        %v4234 = vld [vmem:[%s3330 + $0x24] sm:$0xf]
        %v4235 = vsel %vm3332, %v4127, %v4234
        %4236 = vst [vmem:[%s3330 + $0x24] sm:$0xf] %v4235
        %4237 = vst.msk [vmem:[%s3330 + $0x28] sm:$0xf] %vm440, %v4128
        %v4238 = vld [vmem:[%s3330 + $0x2c] sm:$0x1]
        %v4239 = vsel %vm451, %v4129, %v4238
        %4240 = vst [vmem:[%s3330 + $0x2c] sm:$0x1] %v4239
        %v4241 = vld [vmem:[%s3330 + $0x30] sm:$0xf]
        %v4242 = vsel %vm3332, %v4130, %v4241
        %4243 = vst [vmem:[%s3330 + $0x30] sm:$0xf] %v4242
        %4244 = vst.msk [vmem:[%s3330 + $0x34] sm:$0xf] %vm440, %v4131
        %v4245 = vld [vmem:[%s3330 + $0x38] sm:$0x1]
        %v4246 = vsel %vm451, %v4132, %v4245
        %4247 = vst [vmem:[%s3330 + $0x38] sm:$0x1] %v4246
        %v4248 = vld [vmem:[%s3330 + $0x3c] sm:$0xf]
        %v4249 = vsel %vm3332, %v4133, %v4248
        %4250 = vst [vmem:[%s3330 + $0x3c] sm:$0xf] %v4249
        %4251 = vst.msk [vmem:[%s3330 + $0x40] sm:$0xf] %vm440, %v4134
        %v4252 = vld [vmem:[%s3330 + $0x44] sm:$0x1]
        %v4253 = vsel %vm451, %v4135, %v4252
        %4254 = vst [vmem:[%s3330 + $0x44] sm:$0x1] %v4253
        %v4255 = vld [vmem:[%s3330 + $0x48] sm:$0xf]
        %v4256 = vsel %vm3332, %v4136, %v4255
        %4257 = vst [vmem:[%s3330 + $0x48] sm:$0xf] %v4256
        %4258 = vst.msk [vmem:[%s3330 + $0x4c] sm:$0xf] %vm440, %v4137
        %v4259 = vld [vmem:[%s3330 + $0x50] sm:$0x1]
        %v4260 = vsel %vm451, %v4138, %v4259
        %4261 = vst [vmem:[%s3330 + $0x50] sm:$0x1] %v4260
        %v4262 = vld [vmem:[%s3330 + $0x54] sm:$0xf]
        %v4263 = vsel %vm3332, %v4139, %v4262
        %4264 = vst [vmem:[%s3330 + $0x54] sm:$0xf] %v4263
        %4265 = vst.msk [vmem:[%s3330 + $0x58] sm:$0xf] %vm440, %v4140
        %v4266 = vld [vmem:[%s3330 + $0x5c] sm:$0x1]
        %v4267 = vsel %vm451, %v4141, %v4266
        %4268 = vst [vmem:[%s3330 + $0x5c] sm:$0x1] %v4267
        %v4269 = vld [vmem:[%s3330 + $0x60] sm:$0xf]
        %v4270 = vsel %vm3332, %v4142, %v4269
        %4271 = vst [vmem:[%s3330 + $0x60] sm:$0xf] %v4270
        %4272 = vst.msk [vmem:[%s3330 + $0x64] sm:$0xf] %vm440, %v4143
        %v4273 = vld [vmem:[%s3330 + $0x68] sm:$0x1]
        %v4274 = vsel %vm451, %v4144, %v4273
        %4275 = vst [vmem:[%s3330 + $0x68] sm:$0x1] %v4274
        %v4276 = vld [vmem:[%s3330 + $0x6c] sm:$0xf]
        %v4277 = vsel %vm3332, %v4145, %v4276
        %4278 = vst [vmem:[%s3330 + $0x6c] sm:$0xf] %v4277
        %4279 = vst.msk [vmem:[%s3330 + $0x70] sm:$0xf] %vm440, %v4146
        %v4280 = vld [vmem:[%s3330 + $0x74] sm:$0x1]
        %v4281 = vsel %vm451, %v4147, %v4280
        %4282 = vst [vmem:[%s3330 + $0x74] sm:$0x1] %v4281
        %v4283 = vld [vmem:[%s3330 + $0x78] sm:$0xf]
        %v4284 = vsel %vm3332, %v4148, %v4283
        %4285 = vst [vmem:[%s3330 + $0x78] sm:$0xf] %v4284
        %4286 = vst.msk [vmem:[%s3330 + $0x7c] sm:$0xf] %vm440, %v4149
        %v4287 = vld [vmem:[%s3330 + $0x80] sm:$0x1]
        %v4288 = vsel %vm451, %v4150, %v4287
        %4289 = vst [vmem:[%s3330 + $0x80] sm:$0x1] %v4288
        %v4290 = vld [vmem:[%s3330 + $0x84] sm:$0xf]
        %v4291 = vsel %vm3332, %v4151, %v4290
        %4292 = vst [vmem:[%s3330 + $0x84] sm:$0xf] %v4291
        %4293 = vst.msk [vmem:[%s3330 + $0x88] sm:$0xf] %vm440, %v4152
        %v4294 = vld [vmem:[%s3330 + $0x8c] sm:$0x1]
        %v4295 = vsel %vm451, %v4153, %v4294
        %4296 = vst [vmem:[%s3330 + $0x8c] sm:$0x1] %v4295
        %v4297 = vld [vmem:[%s3330 + $0x90] sm:$0xf]
        %v4298 = vsel %vm3332, %v4154, %v4297
        %4299 = vst [vmem:[%s3330 + $0x90] sm:$0xf] %v4298
        %4300 = vst.msk [vmem:[%s3330 + $0x94] sm:$0xf] %vm440, %v4155
        %v4301 = vld [vmem:[%s3330 + $0x98] sm:$0x1]
        %v4302 = vsel %vm451, %v4156, %v4301
        %4303 = vst [vmem:[%s3330 + $0x98] sm:$0x1] %v4302
        %v4304 = vld [vmem:[%s3330 + $0x9c] sm:$0xf]
        %v4305 = vsel %vm3332, %v4157, %v4304
        %4306 = vst [vmem:[%s3330 + $0x9c] sm:$0xf] %v4305
        %4307 = vst.msk [vmem:[%s3330 + $0xa0] sm:$0xf] %vm440, %v4158
        %v4308 = vld [vmem:[%s3330 + $0xa4] sm:$0x1]
        %v4309 = vsel %vm451, %v4159, %v4308
        %4310 = vst [vmem:[%s3330 + $0xa4] sm:$0x1] %v4309
        %v4311 = vld [vmem:[%s3330 + $0xa8] sm:$0xf]
        %v4312 = vsel %vm3332, %v4160, %v4311
        %4313 = vst [vmem:[%s3330 + $0xa8] sm:$0xf] %v4312
        %4314 = vst.msk [vmem:[%s3330 + $0xac] sm:$0xf] %vm440, %v4161
        %v4315 = vld [vmem:[%s3330 + $0xb0] sm:$0x1]
        %v4316 = vsel %vm451, %v4162, %v4315
        %4317 = vst [vmem:[%s3330 + $0xb0] sm:$0x1] %v4316
        %v4318 = vld [vmem:[%s3330 + $0xb4] sm:$0xf]
        %v4319 = vsel %vm3332, %v4163, %v4318
        %4320 = vst [vmem:[%s3330 + $0xb4] sm:$0xf] %v4319
        %4321 = vst.msk [vmem:[%s3330 + $0xb8] sm:$0xf] %vm440, %v4164
        %v4322 = vld [vmem:[%s3330 + $0xbc] sm:$0x1]
        %v4323 = vsel %vm451, %v4165, %v4322
        %4324 = vst [vmem:[%s3330 + $0xbc] sm:$0x1] %v4323
        %v4325 = vld [vmem:[#allocation2] sm:$0xf]
        %v4326 = vld [vmem:[#allocation2 + $0x4] sm:$0xf]
        %v4327 = vld [vmem:[#allocation2 + $0xc] sm:$0xf]
        %v4328 = vld [vmem:[#allocation2 + $0x10] sm:$0xf]
        %v4329 = vld [vmem:[#allocation2 + $0x18] sm:$0xf]
        %v4330 = vld [vmem:[#allocation2 + $0x1c] sm:$0xf]
        %v4331 = vld [vmem:[#allocation2 + $0x24] sm:$0xf]
        %v4332 = vld [vmem:[#allocation2 + $0x28] sm:$0xf]
        %v4333 = vld [vmem:[#allocation2 + $0x30] sm:$0xf]
        %v4334 = vld [vmem:[#allocation2 + $0x34] sm:$0xf]
        %v4335 = vld [vmem:[#allocation2 + $0x3c] sm:$0xf]
        %v4336 = vld [vmem:[#allocation2 + $0x40] sm:$0xf]
        %v4337 = vld [vmem:[#allocation2 + $0x48] sm:$0xf]
        %v4338 = vld [vmem:[#allocation2 + $0x4c] sm:$0xf]
        %v4339 = vld [vmem:[#allocation2 + $0x54] sm:$0xf]
        %v4340 = vld [vmem:[#allocation2 + $0x58] sm:$0xf]
        %v4341 = vld [vmem:[#allocation2 + $0x60] sm:$0xf]
        %v4342 = vld [vmem:[#allocation2 + $0x64] sm:$0xf]
        %v4343 = vld [vmem:[#allocation2 + $0x6c] sm:$0xf]
        %v4344 = vld [vmem:[#allocation2 + $0x70] sm:$0xf]
        %v4345 = vld [vmem:[#allocation2 + $0x78] sm:$0xf]
        %v4346 = vld [vmem:[#allocation2 + $0x7c] sm:$0xf]
        %v4347 = vld [vmem:[#allocation2 + $0x84] sm:$0xf]
        %v4348 = vld [vmem:[#allocation2 + $0x88] sm:$0xf]
        %v4349 = vld [vmem:[#allocation2 + $0x90] sm:$0xf]
        %v4350 = vld [vmem:[#allocation2 + $0x94] sm:$0xf]
        %v4351 = vld [vmem:[#allocation2 + $0x9c] sm:$0xf]
        %v4352 = vld [vmem:[#allocation2 + $0xa0] sm:$0xf]
        %v4353 = vld [vmem:[#allocation2 + $0xa8] sm:$0xf]
        %v4354 = vld [vmem:[#allocation2 + $0xac] sm:$0xf]
        %v4355 = vld [vmem:[#allocation2 + $0xb4] sm:$0xf]
        %v4356 = vld [vmem:[#allocation2 + $0xb8] sm:$0xf]
        %v4357 = vld [vmem:[#allocation2 + $0x8] sm:$0x1]
        %v4358 = vld [vmem:[#allocation2 + $0x14] sm:$0x1]
        %v4359 = vld [vmem:[#allocation2 + $0x20] sm:$0x1]
        %v4360 = vld [vmem:[#allocation2 + $0x2c] sm:$0x1]
        %v4361 = vld [vmem:[#allocation2 + $0x38] sm:$0x1]
        %v4362 = vld [vmem:[#allocation2 + $0x44] sm:$0x1]
        %v4363 = vld [vmem:[#allocation2 + $0x50] sm:$0x1]
        %v4364 = vld [vmem:[#allocation2 + $0x5c] sm:$0x1]
        %v4365 = vld [vmem:[#allocation2 + $0x68] sm:$0x1]
        %v4366 = vld [vmem:[#allocation2 + $0x74] sm:$0x1]
        %v4367 = vld [vmem:[#allocation2 + $0x80] sm:$0x1]
        %v4368 = vld [vmem:[#allocation2 + $0x8c] sm:$0x1]
        %v4369 = vld [vmem:[#allocation2 + $0x98] sm:$0x1]
        %v4370 = vld [vmem:[#allocation2 + $0xa4] sm:$0x1]
        %v4371 = vld [vmem:[#allocation2 + $0xb0] sm:$0x1]
        %v4372 = vld [vmem:[#allocation2 + $0xbc] sm:$0x1]
        %v4373 = vld [vmem:[#allocation2] sm:$0xe]
        %v4374 = vld [vmem:[#allocation2 + $0xc] sm:$0xe]
        %v4375 = vld [vmem:[#allocation2 + $0x18] sm:$0xe]
        %v4376 = vld [vmem:[#allocation2 + $0x24] sm:$0xe]
        %v4377 = vld [vmem:[#allocation2 + $0x30] sm:$0xe]
        %v4378 = vld [vmem:[#allocation2 + $0x3c] sm:$0xe]
        %v4379 = vld [vmem:[#allocation2 + $0x48] sm:$0xe]
        %v4380 = vld [vmem:[#allocation2 + $0x54] sm:$0xe]
        %v4381 = vld [vmem:[#allocation2 + $0x60] sm:$0xe]
        %v4382 = vld [vmem:[#allocation2 + $0x6c] sm:$0xe]
        %v4383 = vld [vmem:[#allocation2 + $0x78] sm:$0xe]
        %v4384 = vld [vmem:[#allocation2 + $0x84] sm:$0xe]
        %v4385 = vld [vmem:[#allocation2 + $0x90] sm:$0xe]
        %v4386 = vld [vmem:[#allocation2 + $0x9c] sm:$0xe]
        %v4387 = vld [vmem:[#allocation2 + $0xa8] sm:$0xe]
        %v4388 = vld [vmem:[#allocation2 + $0xb4] sm:$0xe]
        %v4389 = vld [vmem:[%s3330] sm:$0xf]
        %v4390 = vld [vmem:[%s3330 + $0x4] sm:$0xf]
        %v4391 = vld [vmem:[%s3330 + $0xc] sm:$0xf]
        %v4392 = vld [vmem:[%s3330 + $0x10] sm:$0xf]
        %v4393 = vld [vmem:[%s3330 + $0x18] sm:$0xf]
        %v4394 = vld [vmem:[%s3330 + $0x1c] sm:$0xf]
        %v4395 = vld [vmem:[%s3330 + $0x24] sm:$0xf]
        %v4396 = vld [vmem:[%s3330 + $0x28] sm:$0xf]
        %v4397 = vld [vmem:[%s3330 + $0x30] sm:$0xf]
        %v4398 = vld [vmem:[%s3330 + $0x34] sm:$0xf]
        %v4399 = vld [vmem:[%s3330 + $0x3c] sm:$0xf]
        %v4400 = vld [vmem:[%s3330 + $0x40] sm:$0xf]
        %v4401 = vld [vmem:[%s3330 + $0x48] sm:$0xf]
        %v4402 = vld [vmem:[%s3330 + $0x4c] sm:$0xf]
        %v4403 = vld [vmem:[%s3330 + $0x54] sm:$0xf]
        %v4404 = vld [vmem:[%s3330 + $0x58] sm:$0xf]
        %v4405 = vld [vmem:[%s3330 + $0x60] sm:$0xf]
        %v4406 = vld [vmem:[%s3330 + $0x64] sm:$0xf]
        %v4407 = vld [vmem:[%s3330 + $0x6c] sm:$0xf]
        %v4408 = vld [vmem:[%s3330 + $0x70] sm:$0xf]
        %v4409 = vld [vmem:[%s3330 + $0x78] sm:$0xf]
        %v4410 = vld [vmem:[%s3330 + $0x7c] sm:$0xf]
        %v4411 = vld [vmem:[%s3330 + $0x84] sm:$0xf]
        %v4412 = vld [vmem:[%s3330 + $0x88] sm:$0xf]
        %v4413 = vld [vmem:[%s3330 + $0x90] sm:$0xf]
        %v4414 = vld [vmem:[%s3330 + $0x94] sm:$0xf]
        %v4415 = vld [vmem:[%s3330 + $0x9c] sm:$0xf]
        %v4416 = vld [vmem:[%s3330 + $0xa0] sm:$0xf]
        %v4417 = vld [vmem:[%s3330 + $0xa8] sm:$0xf]
        %v4418 = vld [vmem:[%s3330 + $0xac] sm:$0xf]
        %v4419 = vld [vmem:[%s3330 + $0xb4] sm:$0xf]
        %v4420 = vld [vmem:[%s3330 + $0xb8] sm:$0xf]
        %v4421 = vld [vmem:[%s3330 + $0x8] sm:$0x1]
        %v4422 = vld [vmem:[%s3330 + $0x14] sm:$0x1]
        %v4423 = vld [vmem:[%s3330 + $0x20] sm:$0x1]
        %v4424 = vld [vmem:[%s3330 + $0x2c] sm:$0x1]
        %v4425 = vld [vmem:[%s3330 + $0x38] sm:$0x1]
        %v4426 = vld [vmem:[%s3330 + $0x44] sm:$0x1]
        %v4427 = vld [vmem:[%s3330 + $0x50] sm:$0x1]
        %v4428 = vld [vmem:[%s3330 + $0x5c] sm:$0x1]
        %v4429 = vld [vmem:[%s3330 + $0x68] sm:$0x1]
        %v4430 = vld [vmem:[%s3330 + $0x74] sm:$0x1]
        %v4431 = vld [vmem:[%s3330 + $0x80] sm:$0x1]
        %v4432 = vld [vmem:[%s3330 + $0x8c] sm:$0x1]
        %v4433 = vld [vmem:[%s3330 + $0x98] sm:$0x1]
        %v4434 = vld [vmem:[%s3330 + $0xa4] sm:$0x1]
        %v4435 = vld [vmem:[%s3330 + $0xb0] sm:$0x1]
        %v4436 = vld [vmem:[%s3330 + $0xbc] sm:$0x1]
        %v4437 = vld [vmem:[%s3330] sm:$0xe]
        %v4438 = vld [vmem:[%s3330 + $0xc] sm:$0xe]
        %v4439 = vld [vmem:[%s3330 + $0x18] sm:$0xe]
        %v4440 = vld [vmem:[%s3330 + $0x24] sm:$0xe]
        %v4441 = vld [vmem:[%s3330 + $0x30] sm:$0xe]
        %v4442 = vld [vmem:[%s3330 + $0x3c] sm:$0xe]
        %v4443 = vld [vmem:[%s3330 + $0x48] sm:$0xe]
        %v4444 = vld [vmem:[%s3330 + $0x54] sm:$0xe]
        %v4445 = vld [vmem:[%s3330 + $0x60] sm:$0xe]
        %v4446 = vld [vmem:[%s3330 + $0x6c] sm:$0xe]
        %v4447 = vld [vmem:[%s3330 + $0x78] sm:$0xe]
        %v4448 = vld [vmem:[%s3330 + $0x84] sm:$0xe]
        %v4449 = vld [vmem:[%s3330 + $0x90] sm:$0xe]
        %v4450 = vld [vmem:[%s3330 + $0x9c] sm:$0xe]
        %v4451 = vld [vmem:[%s3330 + $0xa8] sm:$0xe]
        %v4452 = vld [vmem:[%s3330 + $0xb4] sm:$0xe]
        %s4453 = scalar_lea.vmem [#allocation2], 24
        %v4454 = vld [vmem:[%s4453] sm:$0xf]
        %v4455 = vld [vmem:[%s4453 + $0x4] sm:$0xf]
        %v4456 = vld [vmem:[%s4453 + $0xc] sm:$0xf]
        %v4457 = vld [vmem:[%s4453 + $0x10] sm:$0xf]
        %v4458 = vld [vmem:[%s4453 + $0x18] sm:$0xf]
        %v4459 = vld [vmem:[%s4453 + $0x1c] sm:$0xf]
        %v4460 = vld [vmem:[%s4453 + $0x24] sm:$0xf]
        %v4461 = vld [vmem:[%s4453 + $0x28] sm:$0xf]
        %v4462 = vld [vmem:[%s4453 + $0x30] sm:$0xf]
        %v4463 = vld [vmem:[%s4453 + $0x34] sm:$0xf]
        %v4464 = vld [vmem:[%s4453 + $0x3c] sm:$0xf]
        %v4465 = vld [vmem:[%s4453 + $0x40] sm:$0xf]
        %v4466 = vld [vmem:[%s4453 + $0x48] sm:$0xf]
        %v4467 = vld [vmem:[%s4453 + $0x4c] sm:$0xf]
        %v4468 = vld [vmem:[%s4453 + $0x54] sm:$0xf]
        %v4469 = vld [vmem:[%s4453 + $0x58] sm:$0xf]
        %v4470 = vld [vmem:[%s4453 + $0x60] sm:$0xf]
        %v4471 = vld [vmem:[%s4453 + $0x64] sm:$0xf]
        %v4472 = vld [vmem:[%s4453 + $0x6c] sm:$0xf]
        %v4473 = vld [vmem:[%s4453 + $0x70] sm:$0xf]
        %v4474 = vld [vmem:[%s4453 + $0x78] sm:$0xf]
        %v4475 = vld [vmem:[%s4453 + $0x7c] sm:$0xf]
        %v4476 = vld [vmem:[%s4453 + $0x84] sm:$0xf]
        %v4477 = vld [vmem:[%s4453 + $0x88] sm:$0xf]
        %v4478 = vld [vmem:[%s4453 + $0x90] sm:$0xf]
        %v4479 = vld [vmem:[%s4453 + $0x94] sm:$0xf]
        %v4480 = vld [vmem:[%s4453 + $0x9c] sm:$0xf]
        %v4481 = vld [vmem:[%s4453 + $0xa0] sm:$0xf]
        %v4482 = vld [vmem:[%s4453 + $0xa8] sm:$0xf]
        %v4483 = vld [vmem:[%s4453 + $0xac] sm:$0xf]
        %v4484 = vld [vmem:[%s4453 + $0xb4] sm:$0xf]
        %v4485 = vld [vmem:[%s4453 + $0xb8] sm:$0xf]
        %v4486 = vld [vmem:[%s4453 + $0x8] sm:$0x1]
        %v4487 = vld [vmem:[%s4453 + $0x14] sm:$0x1]
        %v4488 = vld [vmem:[%s4453 + $0x20] sm:$0x1]
        %v4489 = vld [vmem:[%s4453 + $0x2c] sm:$0x1]
        %v4490 = vld [vmem:[%s4453 + $0x38] sm:$0x1]
        %v4491 = vld [vmem:[%s4453 + $0x44] sm:$0x1]
        %v4492 = vld [vmem:[%s4453 + $0x50] sm:$0x1]
        %v4493 = vld [vmem:[%s4453 + $0x5c] sm:$0x1]
        %v4494 = vld [vmem:[%s4453 + $0x68] sm:$0x1]
        %v4495 = vld [vmem:[%s4453 + $0x74] sm:$0x1]
        %v4496 = vld [vmem:[%s4453 + $0x80] sm:$0x1]
        %v4497 = vld [vmem:[%s4453 + $0x8c] sm:$0x1]
        %v4498 = vld [vmem:[%s4453 + $0x98] sm:$0x1]
        %v4499 = vld [vmem:[%s4453 + $0xa4] sm:$0x1]
        %v4500 = vld [vmem:[%s4453 + $0xb0] sm:$0x1]
        %v4501 = vld [vmem:[%s4453 + $0xbc] sm:$0x1]
        %v4502 = vld [vmem:[%s4453] sm:$0xe]
        %v4503 = vld [vmem:[%s4453 + $0xc] sm:$0xe]
        %v4504 = vld [vmem:[%s4453 + $0x18] sm:$0xe]
        %v4505 = vld [vmem:[%s4453 + $0x24] sm:$0xe]
        %v4506 = vld [vmem:[%s4453 + $0x30] sm:$0xe]
        %v4507 = vld [vmem:[%s4453 + $0x3c] sm:$0xe]
        %v4508 = vld [vmem:[%s4453 + $0x48] sm:$0xe]
        %v4509 = vld [vmem:[%s4453 + $0x54] sm:$0xe]
        %v4510 = vld [vmem:[%s4453 + $0x60] sm:$0xe]
        %v4511 = vld [vmem:[%s4453 + $0x6c] sm:$0xe]
        %v4512 = vld [vmem:[%s4453 + $0x78] sm:$0xe]
        %v4513 = vld [vmem:[%s4453 + $0x84] sm:$0xe]
        %v4514 = vld [vmem:[%s4453 + $0x90] sm:$0xe]
        %v4515 = vld [vmem:[%s4453 + $0x9c] sm:$0xe]
        %v4516 = vld [vmem:[%s4453 + $0xa8] sm:$0xe]
        %v4517 = vld [vmem:[%s4453 + $0xb4] sm:$0xe]
        %v4550 = vunpack.c.l.b16 %v4325
        %v4551 = vunpack.c.l.b16 %v4326
        %v4552 = vunpack.c.l.b16 %v4327
        %v4553 = vunpack.c.l.b16 %v4328
        %v4554 = vunpack.c.l.b16 %v4329
        %v4555 = vunpack.c.l.b16 %v4330
        %v4556 = vunpack.c.l.b16 %v4331
        %v4557 = vunpack.c.l.b16 %v4332
        %v4558 = vunpack.c.l.b16 %v4333
        %v4559 = vunpack.c.l.b16 %v4334
        %v4560 = vunpack.c.l.b16 %v4335
        %v4561 = vunpack.c.l.b16 %v4336
        %v4562 = vunpack.c.l.b16 %v4337
        %v4563 = vunpack.c.l.b16 %v4338
        %v4564 = vunpack.c.l.b16 %v4339
        %v4565 = vunpack.c.l.b16 %v4340
        %v4566 = vunpack.c.l.b16 %v4341
        %v4567 = vunpack.c.l.b16 %v4342
        %v4568 = vunpack.c.l.b16 %v4343
        %v4569 = vunpack.c.l.b16 %v4344
        %v4570 = vunpack.c.l.b16 %v4345
        %v4571 = vunpack.c.l.b16 %v4346
        %v4572 = vunpack.c.l.b16 %v4347
        %v4573 = vunpack.c.l.b16 %v4348
        %v4574 = vunpack.c.l.b16 %v4349
        %v4575 = vunpack.c.l.b16 %v4350
        %v4576 = vunpack.c.l.b16 %v4351
        %v4577 = vunpack.c.l.b16 %v4352
        %v4578 = vunpack.c.l.b16 %v4353
        %v4579 = vunpack.c.l.b16 %v4354
        %v4580 = vunpack.c.l.b16 %v4355
        %v4581 = vunpack.c.l.b16 %v4356
        %v4582 = vpack.c.b16 %v4551, %v4550
        %v4583 = vpack.c.b16 %v4553, %v4552
        %v4584 = vpack.c.b16 %v4555, %v4554
        %v4585 = vpack.c.b16 %v4557, %v4556
        %v4586 = vpack.c.b16 %v4559, %v4558
        %v4587 = vpack.c.b16 %v4561, %v4560
        %v4588 = vpack.c.b16 %v4563, %v4562
        %v4589 = vpack.c.b16 %v4565, %v4564
        %v4590 = vpack.c.b16 %v4567, %v4566
        %v4591 = vpack.c.b16 %v4569, %v4568
        %v4592 = vpack.c.b16 %v4571, %v4570
        %v4593 = vpack.c.b16 %v4573, %v4572
        %v4594 = vpack.c.b16 %v4575, %v4574
        %v4595 = vpack.c.b16 %v4577, %v4576
        %v4596 = vpack.c.b16 %v4579, %v4578
        %v4597 = vpack.c.b16 %v4581, %v4580
        %v4614 = vunpack.c.l.b16 %v4357
        %v4615 = vunpack.c.l.b16 %v4358
        %v4616 = vunpack.c.l.b16 %v4359
        %v4617 = vunpack.c.l.b16 %v4360
        %v4618 = vunpack.c.l.b16 %v4361
        %v4619 = vunpack.c.l.b16 %v4362
        %v4620 = vunpack.c.l.b16 %v4363
        %v4621 = vunpack.c.l.b16 %v4364
        %v4622 = vunpack.c.l.b16 %v4365
        %v4623 = vunpack.c.l.b16 %v4366
        %v4624 = vunpack.c.l.b16 %v4367
        %v4625 = vunpack.c.l.b16 %v4368
        %v4626 = vunpack.c.l.b16 %v4369
        %v4627 = vunpack.c.l.b16 %v4370
        %v4628 = vunpack.c.l.b16 %v4371
        %v4629 = vunpack.c.l.b16 %v4372
        %v4630 = vpack.c.b16 %v4614, %v4614
        %v4631 = vpack.c.b16 %v4615, %v4615
        %v4632 = vpack.c.b16 %v4616, %v4616
        %v4633 = vpack.c.b16 %v4617, %v4617
        %v4634 = vpack.c.b16 %v4618, %v4618
        %v4635 = vpack.c.b16 %v4619, %v4619
        %v4636 = vpack.c.b16 %v4620, %v4620
        %v4637 = vpack.c.b16 %v4621, %v4621
        %v4638 = vpack.c.b16 %v4622, %v4622
        %v4639 = vpack.c.b16 %v4623, %v4623
        %v4640 = vpack.c.b16 %v4624, %v4624
        %v4641 = vpack.c.b16 %v4625, %v4625
        %v4642 = vpack.c.b16 %v4626, %v4626
        %v4643 = vpack.c.b16 %v4627, %v4627
        %v4644 = vpack.c.b16 %v4628, %v4628
        %v4645 = vpack.c.b16 %v4629, %v4629
        %v4647 = vshrl.u32 %v4582, 16
        %v4649 = vshll.u32 %v4582, 16
        %v4651 = vrot.slane %v4649, 1
        %v4652 = vor.u32 %v4647, %v4651
        %v4654 = vshll.u32 %v4630, 16
        %v4656 = vrot.slane %v4654, 1
        %v4657 = vsel %vm884, %v4652, %v4656
        %v4659 = vshrl.u32 %v4583, 16
        %v4661 = vshll.u32 %v4583, 16
        %v4663 = vrot.slane %v4661, 1
        %v4664 = vor.u32 %v4659, %v4663
        %v4666 = vshll.u32 %v4631, 16
        %v4668 = vrot.slane %v4666, 1
        %v4669 = vsel %vm884, %v4664, %v4668
        %v4671 = vshrl.u32 %v4584, 16
        %v4673 = vshll.u32 %v4584, 16
        %v4675 = vrot.slane %v4673, 1
        %v4676 = vor.u32 %v4671, %v4675
        %v4678 = vshll.u32 %v4632, 16
        %v4680 = vrot.slane %v4678, 1
        %v4681 = vsel %vm884, %v4676, %v4680
        %v4683 = vshrl.u32 %v4585, 16
        %v4685 = vshll.u32 %v4585, 16
        %v4687 = vrot.slane %v4685, 1
        %v4688 = vor.u32 %v4683, %v4687
        %v4690 = vshll.u32 %v4633, 16
        %v4692 = vrot.slane %v4690, 1
        %v4693 = vsel %vm884, %v4688, %v4692
        %v4695 = vshrl.u32 %v4586, 16
        %v4697 = vshll.u32 %v4586, 16
        %v4699 = vrot.slane %v4697, 1
        %v4700 = vor.u32 %v4695, %v4699
        %v4702 = vshll.u32 %v4634, 16
        %v4704 = vrot.slane %v4702, 1
        %v4705 = vsel %vm884, %v4700, %v4704
        %v4707 = vshrl.u32 %v4587, 16
        %v4709 = vshll.u32 %v4587, 16
        %v4711 = vrot.slane %v4709, 1
        %v4712 = vor.u32 %v4707, %v4711
        %v4714 = vshll.u32 %v4635, 16
        %v4716 = vrot.slane %v4714, 1
        %v4717 = vsel %vm884, %v4712, %v4716
        %v4719 = vshrl.u32 %v4588, 16
        %v4721 = vshll.u32 %v4588, 16
        %v4723 = vrot.slane %v4721, 1
        %v4724 = vor.u32 %v4719, %v4723
        %v4726 = vshll.u32 %v4636, 16
        %v4728 = vrot.slane %v4726, 1
        %v4729 = vsel %vm884, %v4724, %v4728
        %v4731 = vshrl.u32 %v4589, 16
        %v4733 = vshll.u32 %v4589, 16
        %v4735 = vrot.slane %v4733, 1
        %v4736 = vor.u32 %v4731, %v4735
        %v4738 = vshll.u32 %v4637, 16
        %v4740 = vrot.slane %v4738, 1
        %v4741 = vsel %vm884, %v4736, %v4740
        %v4743 = vshrl.u32 %v4590, 16
        %v4745 = vshll.u32 %v4590, 16
        %v4747 = vrot.slane %v4745, 1
        %v4748 = vor.u32 %v4743, %v4747
        %v4750 = vshll.u32 %v4638, 16
        %v4752 = vrot.slane %v4750, 1
        %v4753 = vsel %vm884, %v4748, %v4752
        %v4755 = vshrl.u32 %v4591, 16
        %v4757 = vshll.u32 %v4591, 16
        %v4759 = vrot.slane %v4757, 1
        %v4760 = vor.u32 %v4755, %v4759
        %v4762 = vshll.u32 %v4639, 16
        %v4764 = vrot.slane %v4762, 1
        %v4765 = vsel %vm884, %v4760, %v4764
        %v4767 = vshrl.u32 %v4592, 16
        %v4769 = vshll.u32 %v4592, 16
        %v4771 = vrot.slane %v4769, 1
        %v4772 = vor.u32 %v4767, %v4771
        %v4774 = vshll.u32 %v4640, 16
        %v4776 = vrot.slane %v4774, 1
        %v4777 = vsel %vm884, %v4772, %v4776
        %v4779 = vshrl.u32 %v4593, 16
        %v4781 = vshll.u32 %v4593, 16
        %v4783 = vrot.slane %v4781, 1
        %v4784 = vor.u32 %v4779, %v4783
        %v4786 = vshll.u32 %v4641, 16
        %v4788 = vrot.slane %v4786, 1
        %v4789 = vsel %vm884, %v4784, %v4788
        %v4791 = vshrl.u32 %v4594, 16
        %v4793 = vshll.u32 %v4594, 16
        %v4795 = vrot.slane %v4793, 1
        %v4796 = vor.u32 %v4791, %v4795
        %v4798 = vshll.u32 %v4642, 16
        %v4800 = vrot.slane %v4798, 1
        %v4801 = vsel %vm884, %v4796, %v4800
        %v4803 = vshrl.u32 %v4595, 16
        %v4805 = vshll.u32 %v4595, 16
        %v4807 = vrot.slane %v4805, 1
        %v4808 = vor.u32 %v4803, %v4807
        %v4810 = vshll.u32 %v4643, 16
        %v4812 = vrot.slane %v4810, 1
        %v4813 = vsel %vm884, %v4808, %v4812
        %v4815 = vshrl.u32 %v4596, 16
        %v4817 = vshll.u32 %v4596, 16
        %v4819 = vrot.slane %v4817, 1
        %v4820 = vor.u32 %v4815, %v4819
        %v4822 = vshll.u32 %v4644, 16
        %v4824 = vrot.slane %v4822, 1
        %v4825 = vsel %vm884, %v4820, %v4824
        %v4827 = vshrl.u32 %v4597, 16
        %v4829 = vshll.u32 %v4597, 16
        %v4831 = vrot.slane %v4829, 1
        %v4832 = vor.u32 %v4827, %v4831
        %v4834 = vshll.u32 %v4645, 16
        %v4836 = vrot.slane %v4834, 1
        %v4837 = vsel %vm884, %v4832, %v4836
        %4838 = vrot.lane.b32.xlu0 %v4657, 32
        %v4839 = vpop.permute.xlu0 %4838
        %4840 = vrot.lane.b32.xlu0 %v4669, 32
        %v4841 = vpop.permute.xlu0 %4840
        %4842 = vrot.lane.b32.xlu0 %v4681, 32
        %v4843 = vpop.permute.xlu0 %4842
        %4844 = vrot.lane.b32.xlu0 %v4693, 32
        %v4845 = vpop.permute.xlu0 %4844
        %4846 = vrot.lane.b32.xlu0 %v4705, 32
        %v4847 = vpop.permute.xlu0 %4846
        %4848 = vrot.lane.b32.xlu0 %v4717, 32
        %v4849 = vpop.permute.xlu0 %4848
        %4850 = vrot.lane.b32.xlu0 %v4729, 32
        %v4851 = vpop.permute.xlu0 %4850
        %4852 = vrot.lane.b32.xlu0 %v4741, 32
        %v4853 = vpop.permute.xlu0 %4852
        %4854 = vrot.lane.b32.xlu0 %v4753, 32
        %v4855 = vpop.permute.xlu0 %4854
        %4856 = vrot.lane.b32.xlu0 %v4765, 32
        %v4857 = vpop.permute.xlu0 %4856
        %4858 = vrot.lane.b32.xlu0 %v4777, 32
        %v4859 = vpop.permute.xlu0 %4858
        %4860 = vrot.lane.b32.xlu0 %v4789, 32
        %v4861 = vpop.permute.xlu0 %4860
        %4862 = vrot.lane.b32.xlu0 %v4801, 32
        %v4863 = vpop.permute.xlu0 %4862
        %4864 = vrot.lane.b32.xlu0 %v4813, 32
        %v4865 = vpop.permute.xlu0 %4864
        %4866 = vrot.lane.b32.xlu0 %v4825, 32
        %v4867 = vpop.permute.xlu0 %4866
        %4868 = vrot.lane.b32.xlu0 %v4837, 32
        %v4869 = vpop.permute.xlu0 %4868
        %v4886 = vunpack.c.l.b16 %v4373
        %v4887 = vunpack.c.l.b16 %v4374
        %v4888 = vunpack.c.l.b16 %v4375
        %v4889 = vunpack.c.l.b16 %v4376
        %v4890 = vunpack.c.l.b16 %v4377
        %v4891 = vunpack.c.l.b16 %v4378
        %v4892 = vunpack.c.l.b16 %v4379
        %v4893 = vunpack.c.l.b16 %v4380
        %v4894 = vunpack.c.l.b16 %v4381
        %v4895 = vunpack.c.l.b16 %v4382
        %v4896 = vunpack.c.l.b16 %v4383
        %v4897 = vunpack.c.l.b16 %v4384
        %v4898 = vunpack.c.l.b16 %v4385
        %v4899 = vunpack.c.l.b16 %v4386
        %v4900 = vunpack.c.l.b16 %v4387
        %v4901 = vunpack.c.l.b16 %v4388
        %v4902 = vpack.c.b16 %v4551, %v4886
        %v4903 = vpack.c.b16 %v4553, %v4887
        %v4904 = vpack.c.b16 %v4555, %v4888
        %v4905 = vpack.c.b16 %v4557, %v4889
        %v4906 = vpack.c.b16 %v4559, %v4890
        %v4907 = vpack.c.b16 %v4561, %v4891
        %v4908 = vpack.c.b16 %v4563, %v4892
        %v4909 = vpack.c.b16 %v4565, %v4893
        %v4910 = vpack.c.b16 %v4567, %v4894
        %v4911 = vpack.c.b16 %v4569, %v4895
        %v4912 = vpack.c.b16 %v4571, %v4896
        %v4913 = vpack.c.b16 %v4573, %v4897
        %v4914 = vpack.c.b16 %v4575, %v4898
        %v4915 = vpack.c.b16 %v4577, %v4899
        %v4916 = vpack.c.b16 %v4579, %v4900
        %v4917 = vpack.c.b16 %v4581, %v4901
        %v4918 = vrot.slane %v4902, 1
        %v4919 = vrot.slane %v4630, 1
        %v4920 = vsel %vm1157, %v4918, %v4919
        %v4921 = vrot.slane %v4903, 1
        %v4922 = vrot.slane %v4631, 1
        %v4923 = vsel %vm1157, %v4921, %v4922
        %v4924 = vrot.slane %v4904, 1
        %v4925 = vrot.slane %v4632, 1
        %v4926 = vsel %vm1157, %v4924, %v4925
        %v4927 = vrot.slane %v4905, 1
        %v4928 = vrot.slane %v4633, 1
        %v4929 = vsel %vm1157, %v4927, %v4928
        %v4930 = vrot.slane %v4906, 1
        %v4931 = vrot.slane %v4634, 1
        %v4932 = vsel %vm1157, %v4930, %v4931
        %v4933 = vrot.slane %v4907, 1
        %v4934 = vrot.slane %v4635, 1
        %v4935 = vsel %vm1157, %v4933, %v4934
        %v4936 = vrot.slane %v4908, 1
        %v4937 = vrot.slane %v4636, 1
        %v4938 = vsel %vm1157, %v4936, %v4937
        %v4939 = vrot.slane %v4909, 1
        %v4940 = vrot.slane %v4637, 1
        %v4941 = vsel %vm1157, %v4939, %v4940
        %v4942 = vrot.slane %v4910, 1
        %v4943 = vrot.slane %v4638, 1
        %v4944 = vsel %vm1157, %v4942, %v4943
        %v4945 = vrot.slane %v4911, 1
        %v4946 = vrot.slane %v4639, 1
        %v4947 = vsel %vm1157, %v4945, %v4946
        %v4948 = vrot.slane %v4912, 1
        %v4949 = vrot.slane %v4640, 1
        %v4950 = vsel %vm1157, %v4948, %v4949
        %v4951 = vrot.slane %v4913, 1
        %v4952 = vrot.slane %v4641, 1
        %v4953 = vsel %vm1157, %v4951, %v4952
        %v4954 = vrot.slane %v4914, 1
        %v4955 = vrot.slane %v4642, 1
        %v4956 = vsel %vm1157, %v4954, %v4955
        %v4957 = vrot.slane %v4915, 1
        %v4958 = vrot.slane %v4643, 1
        %v4959 = vsel %vm1157, %v4957, %v4958
        %v4960 = vrot.slane %v4916, 1
        %v4961 = vrot.slane %v4644, 1
        %v4962 = vsel %vm1157, %v4960, %v4961
        %v4963 = vrot.slane %v4917, 1
        %v4964 = vrot.slane %v4645, 1
        %v4965 = vsel %vm1157, %v4963, %v4964
        %4966 = vrot.lane.b32.xlu0 %v4920, 64
        %v4967 = vpop.permute.xlu0 %4966
        %4968 = vrot.lane.b32.xlu0 %v4923, 64
        %v4969 = vpop.permute.xlu0 %4968
        %4970 = vrot.lane.b32.xlu0 %v4926, 64
        %v4971 = vpop.permute.xlu0 %4970
        %4972 = vrot.lane.b32.xlu0 %v4929, 64
        %v4973 = vpop.permute.xlu0 %4972
        %4974 = vrot.lane.b32.xlu0 %v4932, 64
        %v4975 = vpop.permute.xlu0 %4974
        %4976 = vrot.lane.b32.xlu0 %v4935, 64
        %v4977 = vpop.permute.xlu0 %4976
        %4978 = vrot.lane.b32.xlu0 %v4938, 64
        %v4979 = vpop.permute.xlu0 %4978
        %4980 = vrot.lane.b32.xlu0 %v4941, 64
        %v4981 = vpop.permute.xlu0 %4980
        %4982 = vrot.lane.b32.xlu0 %v4944, 64
        %v4983 = vpop.permute.xlu0 %4982
        %4984 = vrot.lane.b32.xlu0 %v4947, 64
        %v4985 = vpop.permute.xlu0 %4984
        %4986 = vrot.lane.b32.xlu0 %v4950, 64
        %v4987 = vpop.permute.xlu0 %4986
        %4988 = vrot.lane.b32.xlu0 %v4953, 64
        %v4989 = vpop.permute.xlu0 %4988
        %4990 = vrot.lane.b32.xlu0 %v4956, 64
        %v4991 = vpop.permute.xlu0 %4990
        %4992 = vrot.lane.b32.xlu0 %v4959, 64
        %v4993 = vpop.permute.xlu0 %4992
        %4994 = vrot.lane.b32.xlu0 %v4962, 64
        %v4995 = vpop.permute.xlu0 %4994
        %4996 = vrot.lane.b32.xlu0 %v4965, 64
        %v4997 = vpop.permute.xlu0 %4996
        %v5030 = vunpack.c.l.b16 %v4389
        %v5031 = vunpack.c.l.b16 %v4390
        %v5032 = vunpack.c.l.b16 %v4391
        %v5033 = vunpack.c.l.b16 %v4392
        %v5034 = vunpack.c.l.b16 %v4393
        %v5035 = vunpack.c.l.b16 %v4394
        %v5036 = vunpack.c.l.b16 %v4395
        %v5037 = vunpack.c.l.b16 %v4396
        %v5038 = vunpack.c.l.b16 %v4397
        %v5039 = vunpack.c.l.b16 %v4398
        %v5040 = vunpack.c.l.b16 %v4399
        %v5041 = vunpack.c.l.b16 %v4400
        %v5042 = vunpack.c.l.b16 %v4401
        %v5043 = vunpack.c.l.b16 %v4402
        %v5044 = vunpack.c.l.b16 %v4403
        %v5045 = vunpack.c.l.b16 %v4404
        %v5046 = vunpack.c.l.b16 %v4405
        %v5047 = vunpack.c.l.b16 %v4406
        %v5048 = vunpack.c.l.b16 %v4407
        %v5049 = vunpack.c.l.b16 %v4408
        %v5050 = vunpack.c.l.b16 %v4409
        %v5051 = vunpack.c.l.b16 %v4410
        %v5052 = vunpack.c.l.b16 %v4411
        %v5053 = vunpack.c.l.b16 %v4412
        %v5054 = vunpack.c.l.b16 %v4413
        %v5055 = vunpack.c.l.b16 %v4414
        %v5056 = vunpack.c.l.b16 %v4415
        %v5057 = vunpack.c.l.b16 %v4416
        %v5058 = vunpack.c.l.b16 %v4417
        %v5059 = vunpack.c.l.b16 %v4418
        %v5060 = vunpack.c.l.b16 %v4419
        %v5061 = vunpack.c.l.b16 %v4420
        %v5062 = vpack.c.b16 %v5031, %v5030
        %v5063 = vpack.c.b16 %v5033, %v5032
        %v5064 = vpack.c.b16 %v5035, %v5034
        %v5065 = vpack.c.b16 %v5037, %v5036
        %v5066 = vpack.c.b16 %v5039, %v5038
        %v5067 = vpack.c.b16 %v5041, %v5040
        %v5068 = vpack.c.b16 %v5043, %v5042
        %v5069 = vpack.c.b16 %v5045, %v5044
        %v5070 = vpack.c.b16 %v5047, %v5046
        %v5071 = vpack.c.b16 %v5049, %v5048
        %v5072 = vpack.c.b16 %v5051, %v5050
        %v5073 = vpack.c.b16 %v5053, %v5052
        %v5074 = vpack.c.b16 %v5055, %v5054
        %v5075 = vpack.c.b16 %v5057, %v5056
        %v5076 = vpack.c.b16 %v5059, %v5058
        %v5077 = vpack.c.b16 %v5061, %v5060
        %5078 = vrot.lane.b32.xlu0 %v5062, 96
        %v5079 = vpop.permute.xlu0 %5078
        %5080 = vrot.lane.b32.xlu0 %v5063, 96
        %v5081 = vpop.permute.xlu0 %5080
        %5082 = vrot.lane.b32.xlu0 %v5064, 96
        %v5083 = vpop.permute.xlu0 %5082
        %5084 = vrot.lane.b32.xlu0 %v5065, 96
        %v5085 = vpop.permute.xlu0 %5084
        %5086 = vrot.lane.b32.xlu0 %v5066, 96
        %v5087 = vpop.permute.xlu0 %5086
        %5088 = vrot.lane.b32.xlu0 %v5067, 96
        %v5089 = vpop.permute.xlu0 %5088
        %5090 = vrot.lane.b32.xlu0 %v5068, 96
        %v5091 = vpop.permute.xlu0 %5090
        %5092 = vrot.lane.b32.xlu0 %v5069, 96
        %v5093 = vpop.permute.xlu0 %5092
        %5094 = vrot.lane.b32.xlu0 %v5070, 96
        %v5095 = vpop.permute.xlu0 %5094
        %5096 = vrot.lane.b32.xlu0 %v5071, 96
        %v5097 = vpop.permute.xlu0 %5096
        %5098 = vrot.lane.b32.xlu0 %v5072, 96
        %v5099 = vpop.permute.xlu0 %5098
        %5100 = vrot.lane.b32.xlu0 %v5073, 96
        %v5101 = vpop.permute.xlu0 %5100
        %5102 = vrot.lane.b32.xlu0 %v5074, 96
        %v5103 = vpop.permute.xlu0 %5102
        %5104 = vrot.lane.b32.xlu0 %v5075, 96
        %v5105 = vpop.permute.xlu0 %5104
        %5106 = vrot.lane.b32.xlu0 %v5076, 96
        %v5107 = vpop.permute.xlu0 %5106
        %5108 = vrot.lane.b32.xlu0 %v5077, 96
        %v5109 = vpop.permute.xlu0 %5108
        %v5126 = vunpack.c.l.b16 %v4421
        %v5127 = vunpack.c.l.b16 %v4422
        %v5128 = vunpack.c.l.b16 %v4423
        %v5129 = vunpack.c.l.b16 %v4424
        %v5130 = vunpack.c.l.b16 %v4425
        %v5131 = vunpack.c.l.b16 %v4426
        %v5132 = vunpack.c.l.b16 %v4427
        %v5133 = vunpack.c.l.b16 %v4428
        %v5134 = vunpack.c.l.b16 %v4429
        %v5135 = vunpack.c.l.b16 %v4430
        %v5136 = vunpack.c.l.b16 %v4431
        %v5137 = vunpack.c.l.b16 %v4432
        %v5138 = vunpack.c.l.b16 %v4433
        %v5139 = vunpack.c.l.b16 %v4434
        %v5140 = vunpack.c.l.b16 %v4435
        %v5141 = vunpack.c.l.b16 %v4436
        %v5142 = vpack.c.b16 %v5126, %v5126
        %v5143 = vpack.c.b16 %v5127, %v5127
        %v5144 = vpack.c.b16 %v5128, %v5128
        %v5145 = vpack.c.b16 %v5129, %v5129
        %v5146 = vpack.c.b16 %v5130, %v5130
        %v5147 = vpack.c.b16 %v5131, %v5131
        %v5148 = vpack.c.b16 %v5132, %v5132
        %v5149 = vpack.c.b16 %v5133, %v5133
        %v5150 = vpack.c.b16 %v5134, %v5134
        %v5151 = vpack.c.b16 %v5135, %v5135
        %v5152 = vpack.c.b16 %v5136, %v5136
        %v5153 = vpack.c.b16 %v5137, %v5137
        %v5154 = vpack.c.b16 %v5138, %v5138
        %v5155 = vpack.c.b16 %v5139, %v5139
        %v5156 = vpack.c.b16 %v5140, %v5140
        %v5157 = vpack.c.b16 %v5141, %v5141
        %v5159 = vshrl.u32 %v5062, 16
        %v5161 = vshll.u32 %v5062, 16
        %v5163 = vrot.slane %v5161, 1
        %v5164 = vor.u32 %v5159, %v5163
        %v5166 = vshll.u32 %v5142, 16
        %v5168 = vrot.slane %v5166, 1
        %v5169 = vsel %vm884, %v5164, %v5168
        %v5171 = vshrl.u32 %v5063, 16
        %v5173 = vshll.u32 %v5063, 16
        %v5175 = vrot.slane %v5173, 1
        %v5176 = vor.u32 %v5171, %v5175
        %v5178 = vshll.u32 %v5143, 16
        %v5180 = vrot.slane %v5178, 1
        %v5181 = vsel %vm884, %v5176, %v5180
        %v5183 = vshrl.u32 %v5064, 16
        %v5185 = vshll.u32 %v5064, 16
        %v5187 = vrot.slane %v5185, 1
        %v5188 = vor.u32 %v5183, %v5187
        %v5190 = vshll.u32 %v5144, 16
        %v5192 = vrot.slane %v5190, 1
        %v5193 = vsel %vm884, %v5188, %v5192
        %v5195 = vshrl.u32 %v5065, 16
        %v5197 = vshll.u32 %v5065, 16
        %v5199 = vrot.slane %v5197, 1
        %v5200 = vor.u32 %v5195, %v5199
        %v5202 = vshll.u32 %v5145, 16
        %v5204 = vrot.slane %v5202, 1
        %v5205 = vsel %vm884, %v5200, %v5204
        %v5207 = vshrl.u32 %v5066, 16
        %v5209 = vshll.u32 %v5066, 16
        %v5211 = vrot.slane %v5209, 1
        %v5212 = vor.u32 %v5207, %v5211
        %v5214 = vshll.u32 %v5146, 16
        %v5216 = vrot.slane %v5214, 1
        %v5217 = vsel %vm884, %v5212, %v5216
        %v5219 = vshrl.u32 %v5067, 16
        %v5221 = vshll.u32 %v5067, 16
        %v5223 = vrot.slane %v5221, 1
        %v5224 = vor.u32 %v5219, %v5223
        %v5226 = vshll.u32 %v5147, 16
        %v5228 = vrot.slane %v5226, 1
        %v5229 = vsel %vm884, %v5224, %v5228
        %v5231 = vshrl.u32 %v5068, 16
        %v5233 = vshll.u32 %v5068, 16
        %v5235 = vrot.slane %v5233, 1
        %v5236 = vor.u32 %v5231, %v5235
        %v5238 = vshll.u32 %v5148, 16
        %v5240 = vrot.slane %v5238, 1
        %v5241 = vsel %vm884, %v5236, %v5240
        %v5243 = vshrl.u32 %v5069, 16
        %v5245 = vshll.u32 %v5069, 16
        %v5247 = vrot.slane %v5245, 1
        %v5248 = vor.u32 %v5243, %v5247
        %v5250 = vshll.u32 %v5149, 16
        %v5252 = vrot.slane %v5250, 1
        %v5253 = vsel %vm884, %v5248, %v5252
        %v5255 = vshrl.u32 %v5070, 16
        %v5257 = vshll.u32 %v5070, 16
        %v5259 = vrot.slane %v5257, 1
        %v5260 = vor.u32 %v5255, %v5259
        %v5262 = vshll.u32 %v5150, 16
        %v5264 = vrot.slane %v5262, 1
        %v5265 = vsel %vm884, %v5260, %v5264
        %v5267 = vshrl.u32 %v5071, 16
        %v5269 = vshll.u32 %v5071, 16
        %v5271 = vrot.slane %v5269, 1
        %v5272 = vor.u32 %v5267, %v5271
        %v5274 = vshll.u32 %v5151, 16
        %v5276 = vrot.slane %v5274, 1
        %v5277 = vsel %vm884, %v5272, %v5276
        %v5279 = vshrl.u32 %v5072, 16
        %v5281 = vshll.u32 %v5072, 16
        %v5283 = vrot.slane %v5281, 1
        %v5284 = vor.u32 %v5279, %v5283
        %v5286 = vshll.u32 %v5152, 16
        %v5288 = vrot.slane %v5286, 1
        %v5289 = vsel %vm884, %v5284, %v5288
        %v5291 = vshrl.u32 %v5073, 16
        %v5293 = vshll.u32 %v5073, 16
        %v5295 = vrot.slane %v5293, 1
        %v5296 = vor.u32 %v5291, %v5295
        %v5298 = vshll.u32 %v5153, 16
        %v5300 = vrot.slane %v5298, 1
        %v5301 = vsel %vm884, %v5296, %v5300
        %v5303 = vshrl.u32 %v5074, 16
        %v5305 = vshll.u32 %v5074, 16
        %v5307 = vrot.slane %v5305, 1
        %v5308 = vor.u32 %v5303, %v5307
        %v5310 = vshll.u32 %v5154, 16
        %v5312 = vrot.slane %v5310, 1
        %v5313 = vsel %vm884, %v5308, %v5312
        %v5315 = vshrl.u32 %v5075, 16
        %v5317 = vshll.u32 %v5075, 16
        %v5319 = vrot.slane %v5317, 1
        %v5320 = vor.u32 %v5315, %v5319
        %v5322 = vshll.u32 %v5155, 16
        %v5324 = vrot.slane %v5322, 1
        %v5325 = vsel %vm884, %v5320, %v5324
        %v5327 = vshrl.u32 %v5076, 16
        %v5329 = vshll.u32 %v5076, 16
        %v5331 = vrot.slane %v5329, 1
        %v5332 = vor.u32 %v5327, %v5331
        %v5334 = vshll.u32 %v5156, 16
        %v5336 = vrot.slane %v5334, 1
        %v5337 = vsel %vm884, %v5332, %v5336
        %v5339 = vshrl.u32 %v5077, 16
        %v5341 = vshll.u32 %v5077, 16
        %v5343 = vrot.slane %v5341, 1
        %v5344 = vor.u32 %v5339, %v5343
        %v5346 = vshll.u32 %v5157, 16
        %v5348 = vrot.slane %v5346, 1
        %v5349 = vsel %vm884, %v5344, %v5348
        %v5366 = vunpack.c.l.b16 %v4437
        %v5367 = vunpack.c.l.b16 %v4438
        %v5368 = vunpack.c.l.b16 %v4439
        %v5369 = vunpack.c.l.b16 %v4440
        %v5370 = vunpack.c.l.b16 %v4441
        %v5371 = vunpack.c.l.b16 %v4442
        %v5372 = vunpack.c.l.b16 %v4443
        %v5373 = vunpack.c.l.b16 %v4444
        %v5374 = vunpack.c.l.b16 %v4445
        %v5375 = vunpack.c.l.b16 %v4446
        %v5376 = vunpack.c.l.b16 %v4447
        %v5377 = vunpack.c.l.b16 %v4448
        %v5378 = vunpack.c.l.b16 %v4449
        %v5379 = vunpack.c.l.b16 %v4450
        %v5380 = vunpack.c.l.b16 %v4451
        %v5381 = vunpack.c.l.b16 %v4452
        %v5382 = vpack.c.b16 %v5031, %v5366
        %v5383 = vpack.c.b16 %v5033, %v5367
        %v5384 = vpack.c.b16 %v5035, %v5368
        %v5385 = vpack.c.b16 %v5037, %v5369
        %v5386 = vpack.c.b16 %v5039, %v5370
        %v5387 = vpack.c.b16 %v5041, %v5371
        %v5388 = vpack.c.b16 %v5043, %v5372
        %v5389 = vpack.c.b16 %v5045, %v5373
        %v5390 = vpack.c.b16 %v5047, %v5374
        %v5391 = vpack.c.b16 %v5049, %v5375
        %v5392 = vpack.c.b16 %v5051, %v5376
        %v5393 = vpack.c.b16 %v5053, %v5377
        %v5394 = vpack.c.b16 %v5055, %v5378
        %v5395 = vpack.c.b16 %v5057, %v5379
        %v5396 = vpack.c.b16 %v5059, %v5380
        %v5397 = vpack.c.b16 %v5061, %v5381
        %v5398 = vrot.slane %v5382, 1
        %v5399 = vrot.slane %v5142, 1
        %v5400 = vsel %vm1157, %v5398, %v5399
        %v5401 = vrot.slane %v5383, 1
        %v5402 = vrot.slane %v5143, 1
        %v5403 = vsel %vm1157, %v5401, %v5402
        %v5404 = vrot.slane %v5384, 1
        %v5405 = vrot.slane %v5144, 1
        %v5406 = vsel %vm1157, %v5404, %v5405
        %v5407 = vrot.slane %v5385, 1
        %v5408 = vrot.slane %v5145, 1
        %v5409 = vsel %vm1157, %v5407, %v5408
        %v5410 = vrot.slane %v5386, 1
        %v5411 = vrot.slane %v5146, 1
        %v5412 = vsel %vm1157, %v5410, %v5411
        %v5413 = vrot.slane %v5387, 1
        %v5414 = vrot.slane %v5147, 1
        %v5415 = vsel %vm1157, %v5413, %v5414
        %v5416 = vrot.slane %v5388, 1
        %v5417 = vrot.slane %v5148, 1
        %v5418 = vsel %vm1157, %v5416, %v5417
        %v5419 = vrot.slane %v5389, 1
        %v5420 = vrot.slane %v5149, 1
        %v5421 = vsel %vm1157, %v5419, %v5420
        %v5422 = vrot.slane %v5390, 1
        %v5423 = vrot.slane %v5150, 1
        %v5424 = vsel %vm1157, %v5422, %v5423
        %v5425 = vrot.slane %v5391, 1
        %v5426 = vrot.slane %v5151, 1
        %v5427 = vsel %vm1157, %v5425, %v5426
        %v5428 = vrot.slane %v5392, 1
        %v5429 = vrot.slane %v5152, 1
        %v5430 = vsel %vm1157, %v5428, %v5429
        %v5431 = vrot.slane %v5393, 1
        %v5432 = vrot.slane %v5153, 1
        %v5433 = vsel %vm1157, %v5431, %v5432
        %v5434 = vrot.slane %v5394, 1
        %v5435 = vrot.slane %v5154, 1
        %v5436 = vsel %vm1157, %v5434, %v5435
        %v5437 = vrot.slane %v5395, 1
        %v5438 = vrot.slane %v5155, 1
        %v5439 = vsel %vm1157, %v5437, %v5438
        %v5440 = vrot.slane %v5396, 1
        %v5441 = vrot.slane %v5156, 1
        %v5442 = vsel %vm1157, %v5440, %v5441
        %v5443 = vrot.slane %v5397, 1
        %v5444 = vrot.slane %v5157, 1
        %v5445 = vsel %vm1157, %v5443, %v5444
        %5446 = vrot.lane.b32.xlu0 %v5400, 32
        %v5447 = vpop.permute.xlu0 %5446
        %5448 = vrot.lane.b32.xlu0 %v5403, 32
        %v5449 = vpop.permute.xlu0 %5448
        %5450 = vrot.lane.b32.xlu0 %v5406, 32
        %v5451 = vpop.permute.xlu0 %5450
        %5452 = vrot.lane.b32.xlu0 %v5409, 32
        %v5453 = vpop.permute.xlu0 %5452
        %5454 = vrot.lane.b32.xlu0 %v5412, 32
        %v5455 = vpop.permute.xlu0 %5454
        %5456 = vrot.lane.b32.xlu0 %v5415, 32
        %v5457 = vpop.permute.xlu0 %5456
        %5458 = vrot.lane.b32.xlu0 %v5418, 32
        %v5459 = vpop.permute.xlu0 %5458
        %5460 = vrot.lane.b32.xlu0 %v5421, 32
        %v5461 = vpop.permute.xlu0 %5460
        %5462 = vrot.lane.b32.xlu0 %v5424, 32
        %v5463 = vpop.permute.xlu0 %5462
        %5464 = vrot.lane.b32.xlu0 %v5427, 32
        %v5465 = vpop.permute.xlu0 %5464
        %5466 = vrot.lane.b32.xlu0 %v5430, 32
        %v5467 = vpop.permute.xlu0 %5466
        %5468 = vrot.lane.b32.xlu0 %v5433, 32
        %v5469 = vpop.permute.xlu0 %5468
        %5470 = vrot.lane.b32.xlu0 %v5436, 32
        %v5471 = vpop.permute.xlu0 %5470
        %5472 = vrot.lane.b32.xlu0 %v5439, 32
        %v5473 = vpop.permute.xlu0 %5472
        %5474 = vrot.lane.b32.xlu0 %v5442, 32
        %v5475 = vpop.permute.xlu0 %5474
        %5476 = vrot.lane.b32.xlu0 %v5445, 32
        %v5477 = vpop.permute.xlu0 %5476
        %v5510 = vunpack.c.l.b16 %v4454
        %v5511 = vunpack.c.l.b16 %v4455
        %v5512 = vunpack.c.l.b16 %v4456
        %v5513 = vunpack.c.l.b16 %v4457
        %v5514 = vunpack.c.l.b16 %v4458
        %v5515 = vunpack.c.l.b16 %v4459
        %v5516 = vunpack.c.l.b16 %v4460
        %v5517 = vunpack.c.l.b16 %v4461
        %v5518 = vunpack.c.l.b16 %v4462
        %v5519 = vunpack.c.l.b16 %v4463
        %v5520 = vunpack.c.l.b16 %v4464
        %v5521 = vunpack.c.l.b16 %v4465
        %v5522 = vunpack.c.l.b16 %v4466
        %v5523 = vunpack.c.l.b16 %v4467
        %v5524 = vunpack.c.l.b16 %v4468
        %v5525 = vunpack.c.l.b16 %v4469
        %v5526 = vunpack.c.l.b16 %v4470
        %v5527 = vunpack.c.l.b16 %v4471
        %v5528 = vunpack.c.l.b16 %v4472
        %v5529 = vunpack.c.l.b16 %v4473
        %v5530 = vunpack.c.l.b16 %v4474
        %v5531 = vunpack.c.l.b16 %v4475
        %v5532 = vunpack.c.l.b16 %v4476
        %v5533 = vunpack.c.l.b16 %v4477
        %v5534 = vunpack.c.l.b16 %v4478
        %v5535 = vunpack.c.l.b16 %v4479
        %v5536 = vunpack.c.l.b16 %v4480
        %v5537 = vunpack.c.l.b16 %v4481
        %v5538 = vunpack.c.l.b16 %v4482
        %v5539 = vunpack.c.l.b16 %v4483
        %v5540 = vunpack.c.l.b16 %v4484
        %v5541 = vunpack.c.l.b16 %v4485
        %v5542 = vpack.c.b16 %v5511, %v5510
        %v5543 = vpack.c.b16 %v5513, %v5512
        %v5544 = vpack.c.b16 %v5515, %v5514
        %v5545 = vpack.c.b16 %v5517, %v5516
        %v5546 = vpack.c.b16 %v5519, %v5518
        %v5547 = vpack.c.b16 %v5521, %v5520
        %v5548 = vpack.c.b16 %v5523, %v5522
        %v5549 = vpack.c.b16 %v5525, %v5524
        %v5550 = vpack.c.b16 %v5527, %v5526
        %v5551 = vpack.c.b16 %v5529, %v5528
        %v5552 = vpack.c.b16 %v5531, %v5530
        %v5553 = vpack.c.b16 %v5533, %v5532
        %v5554 = vpack.c.b16 %v5535, %v5534
        %v5555 = vpack.c.b16 %v5537, %v5536
        %v5556 = vpack.c.b16 %v5539, %v5538
        %v5557 = vpack.c.b16 %v5541, %v5540
        %5558 = vrot.lane.b32.xlu0 %v5542, 64
        %v5559 = vpop.permute.xlu0 %5558
        %5560 = vrot.lane.b32.xlu0 %v5543, 64
        %v5561 = vpop.permute.xlu0 %5560
        %5562 = vrot.lane.b32.xlu0 %v5544, 64
        %v5563 = vpop.permute.xlu0 %5562
        %5564 = vrot.lane.b32.xlu0 %v5545, 64
        %v5565 = vpop.permute.xlu0 %5564
        %5566 = vrot.lane.b32.xlu0 %v5546, 64
        %v5567 = vpop.permute.xlu0 %5566
        %5568 = vrot.lane.b32.xlu0 %v5547, 64
        %v5569 = vpop.permute.xlu0 %5568
        %5570 = vrot.lane.b32.xlu0 %v5548, 64
        %v5571 = vpop.permute.xlu0 %5570
        %5572 = vrot.lane.b32.xlu0 %v5549, 64
        %v5573 = vpop.permute.xlu0 %5572
        %5574 = vrot.lane.b32.xlu0 %v5550, 64
        %v5575 = vpop.permute.xlu0 %5574
        %5576 = vrot.lane.b32.xlu0 %v5551, 64
        %v5577 = vpop.permute.xlu0 %5576
        %5578 = vrot.lane.b32.xlu0 %v5552, 64
        %v5579 = vpop.permute.xlu0 %5578
        %5580 = vrot.lane.b32.xlu0 %v5553, 64
        %v5581 = vpop.permute.xlu0 %5580
        %5582 = vrot.lane.b32.xlu0 %v5554, 64
        %v5583 = vpop.permute.xlu0 %5582
        %5584 = vrot.lane.b32.xlu0 %v5555, 64
        %v5585 = vpop.permute.xlu0 %5584
        %5586 = vrot.lane.b32.xlu0 %v5556, 64
        %v5587 = vpop.permute.xlu0 %5586
        %5588 = vrot.lane.b32.xlu0 %v5557, 64
        %v5589 = vpop.permute.xlu0 %5588
        %v5606 = vunpack.c.l.b16 %v4486
        %v5607 = vunpack.c.l.b16 %v4487
        %v5608 = vunpack.c.l.b16 %v4488
        %v5609 = vunpack.c.l.b16 %v4489
        %v5610 = vunpack.c.l.b16 %v4490
        %v5611 = vunpack.c.l.b16 %v4491
        %v5612 = vunpack.c.l.b16 %v4492
        %v5613 = vunpack.c.l.b16 %v4493
        %v5614 = vunpack.c.l.b16 %v4494
        %v5615 = vunpack.c.l.b16 %v4495
        %v5616 = vunpack.c.l.b16 %v4496
        %v5617 = vunpack.c.l.b16 %v4497
        %v5618 = vunpack.c.l.b16 %v4498
        %v5619 = vunpack.c.l.b16 %v4499
        %v5620 = vunpack.c.l.b16 %v4500
        %v5621 = vunpack.c.l.b16 %v4501
        %v5622 = vpack.c.b16 %v5606, %v5606
        %v5623 = vpack.c.b16 %v5607, %v5607
        %v5624 = vpack.c.b16 %v5608, %v5608
        %v5625 = vpack.c.b16 %v5609, %v5609
        %v5626 = vpack.c.b16 %v5610, %v5610
        %v5627 = vpack.c.b16 %v5611, %v5611
        %v5628 = vpack.c.b16 %v5612, %v5612
        %v5629 = vpack.c.b16 %v5613, %v5613
        %v5630 = vpack.c.b16 %v5614, %v5614
        %v5631 = vpack.c.b16 %v5615, %v5615
        %v5632 = vpack.c.b16 %v5616, %v5616
        %v5633 = vpack.c.b16 %v5617, %v5617
        %v5634 = vpack.c.b16 %v5618, %v5618
        %v5635 = vpack.c.b16 %v5619, %v5619
        %v5636 = vpack.c.b16 %v5620, %v5620
        %v5637 = vpack.c.b16 %v5621, %v5621
        %v5639 = vshrl.u32 %v5542, 16
        %v5641 = vshll.u32 %v5542, 16
        %v5643 = vrot.slane %v5641, 1
        %v5644 = vor.u32 %v5639, %v5643
        %v5646 = vshll.u32 %v5622, 16
        %v5648 = vrot.slane %v5646, 1
        %v5649 = vsel %vm884, %v5644, %v5648
        %v5651 = vshrl.u32 %v5543, 16
        %v5653 = vshll.u32 %v5543, 16
        %v5655 = vrot.slane %v5653, 1
        %v5656 = vor.u32 %v5651, %v5655
        %v5658 = vshll.u32 %v5623, 16
        %v5660 = vrot.slane %v5658, 1
        %v5661 = vsel %vm884, %v5656, %v5660
        %v5663 = vshrl.u32 %v5544, 16
        %v5665 = vshll.u32 %v5544, 16
        %v5667 = vrot.slane %v5665, 1
        %v5668 = vor.u32 %v5663, %v5667
        %v5670 = vshll.u32 %v5624, 16
        %v5672 = vrot.slane %v5670, 1
        %v5673 = vsel %vm884, %v5668, %v5672
        %v5675 = vshrl.u32 %v5545, 16
        %v5677 = vshll.u32 %v5545, 16
        %v5679 = vrot.slane %v5677, 1
        %v5680 = vor.u32 %v5675, %v5679
        %v5682 = vshll.u32 %v5625, 16
        %v5684 = vrot.slane %v5682, 1
        %v5685 = vsel %vm884, %v5680, %v5684
        %v5687 = vshrl.u32 %v5546, 16
        %v5689 = vshll.u32 %v5546, 16
        %v5691 = vrot.slane %v5689, 1
        %v5692 = vor.u32 %v5687, %v5691
        %v5694 = vshll.u32 %v5626, 16
        %v5696 = vrot.slane %v5694, 1
        %v5697 = vsel %vm884, %v5692, %v5696
        %v5699 = vshrl.u32 %v5547, 16
        %v5701 = vshll.u32 %v5547, 16
        %v5703 = vrot.slane %v5701, 1
        %v5704 = vor.u32 %v5699, %v5703
        %v5706 = vshll.u32 %v5627, 16
        %v5708 = vrot.slane %v5706, 1
        %v5709 = vsel %vm884, %v5704, %v5708
        %v5711 = vshrl.u32 %v5548, 16
        %v5713 = vshll.u32 %v5548, 16
        %v5715 = vrot.slane %v5713, 1
        %v5716 = vor.u32 %v5711, %v5715
        %v5718 = vshll.u32 %v5628, 16
        %v5720 = vrot.slane %v5718, 1
        %v5721 = vsel %vm884, %v5716, %v5720
        %v5723 = vshrl.u32 %v5549, 16
        %v5725 = vshll.u32 %v5549, 16
        %v5727 = vrot.slane %v5725, 1
        %v5728 = vor.u32 %v5723, %v5727
        %v5730 = vshll.u32 %v5629, 16
        %v5732 = vrot.slane %v5730, 1
        %v5733 = vsel %vm884, %v5728, %v5732
        %v5735 = vshrl.u32 %v5550, 16
        %v5737 = vshll.u32 %v5550, 16
        %v5739 = vrot.slane %v5737, 1
        %v5740 = vor.u32 %v5735, %v5739
        %v5742 = vshll.u32 %v5630, 16
        %v5744 = vrot.slane %v5742, 1
        %v5745 = vsel %vm884, %v5740, %v5744
        %v5747 = vshrl.u32 %v5551, 16
        %v5749 = vshll.u32 %v5551, 16
        %v5751 = vrot.slane %v5749, 1
        %v5752 = vor.u32 %v5747, %v5751
        %v5754 = vshll.u32 %v5631, 16
        %v5756 = vrot.slane %v5754, 1
        %v5757 = vsel %vm884, %v5752, %v5756
        %v5759 = vshrl.u32 %v5552, 16
        %v5761 = vshll.u32 %v5552, 16
        %v5763 = vrot.slane %v5761, 1
        %v5764 = vor.u32 %v5759, %v5763
        %v5766 = vshll.u32 %v5632, 16
        %v5768 = vrot.slane %v5766, 1
        %v5769 = vsel %vm884, %v5764, %v5768
        %v5771 = vshrl.u32 %v5553, 16
        %v5773 = vshll.u32 %v5553, 16
        %v5775 = vrot.slane %v5773, 1
        %v5776 = vor.u32 %v5771, %v5775
        %v5778 = vshll.u32 %v5633, 16
        %v5780 = vrot.slane %v5778, 1
        %v5781 = vsel %vm884, %v5776, %v5780
        %v5783 = vshrl.u32 %v5554, 16
        %v5785 = vshll.u32 %v5554, 16
        %v5787 = vrot.slane %v5785, 1
        %v5788 = vor.u32 %v5783, %v5787
        %v5790 = vshll.u32 %v5634, 16
        %v5792 = vrot.slane %v5790, 1
        %v5793 = vsel %vm884, %v5788, %v5792
        %v5795 = vshrl.u32 %v5555, 16
        %v5797 = vshll.u32 %v5555, 16
        %v5799 = vrot.slane %v5797, 1
        %v5800 = vor.u32 %v5795, %v5799
        %v5802 = vshll.u32 %v5635, 16
        %v5804 = vrot.slane %v5802, 1
        %v5805 = vsel %vm884, %v5800, %v5804
        %v5807 = vshrl.u32 %v5556, 16
        %v5809 = vshll.u32 %v5556, 16
        %v5811 = vrot.slane %v5809, 1
        %v5812 = vor.u32 %v5807, %v5811
        %v5814 = vshll.u32 %v5636, 16
        %v5816 = vrot.slane %v5814, 1
        %v5817 = vsel %vm884, %v5812, %v5816
        %v5819 = vshrl.u32 %v5557, 16
        %v5821 = vshll.u32 %v5557, 16
        %v5823 = vrot.slane %v5821, 1
        %v5824 = vor.u32 %v5819, %v5823
        %v5826 = vshll.u32 %v5637, 16
        %v5828 = vrot.slane %v5826, 1
        %v5829 = vsel %vm884, %v5824, %v5828
        %5830 = vrot.lane.b32.xlu0 %v5649, 96
        %v5831 = vpop.permute.xlu0 %5830
        %5832 = vrot.lane.b32.xlu0 %v5661, 96
        %v5833 = vpop.permute.xlu0 %5832
        %5834 = vrot.lane.b32.xlu0 %v5673, 96
        %v5835 = vpop.permute.xlu0 %5834
        %5836 = vrot.lane.b32.xlu0 %v5685, 96
        %v5837 = vpop.permute.xlu0 %5836
        %5838 = vrot.lane.b32.xlu0 %v5697, 96
        %v5839 = vpop.permute.xlu0 %5838
        %5840 = vrot.lane.b32.xlu0 %v5709, 96
        %v5841 = vpop.permute.xlu0 %5840
        %5842 = vrot.lane.b32.xlu0 %v5721, 96
        %v5843 = vpop.permute.xlu0 %5842
        %5844 = vrot.lane.b32.xlu0 %v5733, 96
        %v5845 = vpop.permute.xlu0 %5844
        %5846 = vrot.lane.b32.xlu0 %v5745, 96
        %v5847 = vpop.permute.xlu0 %5846
        %5848 = vrot.lane.b32.xlu0 %v5757, 96
        %v5849 = vpop.permute.xlu0 %5848
        %5850 = vrot.lane.b32.xlu0 %v5769, 96
        %v5851 = vpop.permute.xlu0 %5850
        %5852 = vrot.lane.b32.xlu0 %v5781, 96
        %v5853 = vpop.permute.xlu0 %5852
        %5854 = vrot.lane.b32.xlu0 %v5793, 96
        %v5855 = vpop.permute.xlu0 %5854
        %5856 = vrot.lane.b32.xlu0 %v5805, 96
        %v5857 = vpop.permute.xlu0 %5856
        %5858 = vrot.lane.b32.xlu0 %v5817, 96
        %v5859 = vpop.permute.xlu0 %5858
        %5860 = vrot.lane.b32.xlu0 %v5829, 96
        %v5861 = vpop.permute.xlu0 %5860
        %v5878 = vunpack.c.l.b16 %v4502
        %v5879 = vunpack.c.l.b16 %v4503
        %v5880 = vunpack.c.l.b16 %v4504
        %v5881 = vunpack.c.l.b16 %v4505
        %v5882 = vunpack.c.l.b16 %v4506
        %v5883 = vunpack.c.l.b16 %v4507
        %v5884 = vunpack.c.l.b16 %v4508
        %v5885 = vunpack.c.l.b16 %v4509
        %v5886 = vunpack.c.l.b16 %v4510
        %v5887 = vunpack.c.l.b16 %v4511
        %v5888 = vunpack.c.l.b16 %v4512
        %v5889 = vunpack.c.l.b16 %v4513
        %v5890 = vunpack.c.l.b16 %v4514
        %v5891 = vunpack.c.l.b16 %v4515
        %v5892 = vunpack.c.l.b16 %v4516
        %v5893 = vunpack.c.l.b16 %v4517
        %v5894 = vpack.c.b16 %v5511, %v5878
        %v5895 = vpack.c.b16 %v5513, %v5879
        %v5896 = vpack.c.b16 %v5515, %v5880
        %v5897 = vpack.c.b16 %v5517, %v5881
        %v5898 = vpack.c.b16 %v5519, %v5882
        %v5899 = vpack.c.b16 %v5521, %v5883
        %v5900 = vpack.c.b16 %v5523, %v5884
        %v5901 = vpack.c.b16 %v5525, %v5885
        %v5902 = vpack.c.b16 %v5527, %v5886
        %v5903 = vpack.c.b16 %v5529, %v5887
        %v5904 = vpack.c.b16 %v5531, %v5888
        %v5905 = vpack.c.b16 %v5533, %v5889
        %v5906 = vpack.c.b16 %v5535, %v5890
        %v5907 = vpack.c.b16 %v5537, %v5891
        %v5908 = vpack.c.b16 %v5539, %v5892
        %v5909 = vpack.c.b16 %v5541, %v5893
        %v5910 = vrot.slane %v5894, 1
        %v5911 = vrot.slane %v5622, 1
        %v5912 = vsel %vm1157, %v5910, %v5911
        %v5913 = vrot.slane %v5895, 1
        %v5914 = vrot.slane %v5623, 1
        %v5915 = vsel %vm1157, %v5913, %v5914
        %v5916 = vrot.slane %v5896, 1
        %v5917 = vrot.slane %v5624, 1
        %v5918 = vsel %vm1157, %v5916, %v5917
        %v5919 = vrot.slane %v5897, 1
        %v5920 = vrot.slane %v5625, 1
        %v5921 = vsel %vm1157, %v5919, %v5920
        %v5922 = vrot.slane %v5898, 1
        %v5923 = vrot.slane %v5626, 1
        %v5924 = vsel %vm1157, %v5922, %v5923
        %v5925 = vrot.slane %v5899, 1
        %v5926 = vrot.slane %v5627, 1
        %v5927 = vsel %vm1157, %v5925, %v5926
        %v5928 = vrot.slane %v5900, 1
        %v5929 = vrot.slane %v5628, 1
        %v5930 = vsel %vm1157, %v5928, %v5929
        %v5931 = vrot.slane %v5901, 1
        %v5932 = vrot.slane %v5629, 1
        %v5933 = vsel %vm1157, %v5931, %v5932
        %v5934 = vrot.slane %v5902, 1
        %v5935 = vrot.slane %v5630, 1
        %v5936 = vsel %vm1157, %v5934, %v5935
        %v5937 = vrot.slane %v5903, 1
        %v5938 = vrot.slane %v5631, 1
        %v5939 = vsel %vm1157, %v5937, %v5938
        %v5940 = vrot.slane %v5904, 1
        %v5941 = vrot.slane %v5632, 1
        %v5942 = vsel %vm1157, %v5940, %v5941
        %v5943 = vrot.slane %v5905, 1
        %v5944 = vrot.slane %v5633, 1
        %v5945 = vsel %vm1157, %v5943, %v5944
        %v5946 = vrot.slane %v5906, 1
        %v5947 = vrot.slane %v5634, 1
        %v5948 = vsel %vm1157, %v5946, %v5947
        %v5949 = vrot.slane %v5907, 1
        %v5950 = vrot.slane %v5635, 1
        %v5951 = vsel %vm1157, %v5949, %v5950
        %v5952 = vrot.slane %v5908, 1
        %v5953 = vrot.slane %v5636, 1
        %v5954 = vsel %vm1157, %v5952, %v5953
        %v5955 = vrot.slane %v5909, 1
        %v5956 = vrot.slane %v5637, 1
        %v5957 = vsel %vm1157, %v5955, %v5956
        %v5959 = vsel %vm2263, %v4582, %v4839
        %v5961 = vsel %vm2263, %v4583, %v4841
        %v5963 = vsel %vm2263, %v4584, %v4843
        %v5965 = vsel %vm2263, %v4585, %v4845
        %v5967 = vsel %vm2263, %v4586, %v4847
        %v5969 = vsel %vm2263, %v4587, %v4849
        %v5971 = vsel %vm2263, %v4588, %v4851
        %v5973 = vsel %vm2263, %v4589, %v4853
        %v5975 = vsel %vm2263, %v4590, %v4855
        %v5977 = vsel %vm2263, %v4591, %v4857
        %v5979 = vsel %vm2263, %v4592, %v4859
        %v5981 = vsel %vm2263, %v4593, %v4861
        %v5983 = vsel %vm2263, %v4594, %v4863
        %v5985 = vsel %vm2263, %v4595, %v4865
        %v5987 = vsel %vm2263, %v4596, %v4867
        %v5989 = vsel %vm2263, %v4597, %v4869
        %v5991 = vsel %vm2329, %v5959, %v4967
        %v5993 = vsel %vm2329, %v5961, %v4969
        %v5995 = vsel %vm2329, %v5963, %v4971
        %v5997 = vsel %vm2329, %v5965, %v4973
        %v5999 = vsel %vm2329, %v5967, %v4975
        %v6001 = vsel %vm2329, %v5969, %v4977
        %v6003 = vsel %vm2329, %v5971, %v4979
        %v6005 = vsel %vm2329, %v5973, %v4981
        %v6007 = vsel %vm2329, %v5975, %v4983
        %v6009 = vsel %vm2329, %v5977, %v4985
        %v6011 = vsel %vm2329, %v5979, %v4987
        %v6013 = vsel %vm2329, %v5981, %v4989
        %v6015 = vsel %vm2329, %v5983, %v4991
        %v6017 = vsel %vm2329, %v5985, %v4993
        %v6019 = vsel %vm2329, %v5987, %v4995
        %v6021 = vsel %vm2329, %v5989, %v4997
        %v6023 = vsel %vm2395, %v5991, %v5079
        %v6026 = vsel %vm2395, %v5993, %v5081
        %v6029 = vsel %vm2395, %v5995, %v5083
        %v6032 = vsel %vm2395, %v5997, %v5085
        %v6035 = vsel %vm2395, %v5999, %v5087
        %v6038 = vsel %vm2395, %v6001, %v5089
        %v6041 = vsel %vm2395, %v6003, %v5091
        %v6044 = vsel %vm2395, %v6005, %v5093
        %v6047 = vsel %vm2395, %v6007, %v5095
        %v6050 = vsel %vm2395, %v6009, %v5097
        %v6053 = vsel %vm2395, %v6011, %v5099
        %v6056 = vsel %vm2395, %v6013, %v5101
        %v6059 = vsel %vm2395, %v6015, %v5103
        %v6062 = vsel %vm2395, %v6017, %v5105
        %v6065 = vsel %vm2395, %v6019, %v5107
        %v6068 = vsel %vm2395, %v6021, %v5109
        %v6072 = vsel %vm2263, %v5169, %v5447
        %v6075 = vsel %vm2263, %v5181, %v5449
        %v6078 = vsel %vm2263, %v5193, %v5451
        %v6081 = vsel %vm2263, %v5205, %v5453
        %v6084 = vsel %vm2263, %v5217, %v5455
        %v6087 = vsel %vm2263, %v5229, %v5457
        %v6090 = vsel %vm2263, %v5241, %v5459
        %v6093 = vsel %vm2263, %v5253, %v5461
        %v6096 = vsel %vm2263, %v5265, %v5463
        %v6099 = vsel %vm2263, %v5277, %v5465
        %v6102 = vsel %vm2263, %v5289, %v5467
        %v6105 = vsel %vm2263, %v5301, %v5469
        %v6108 = vsel %vm2263, %v5313, %v5471
        %v6111 = vsel %vm2263, %v5325, %v5473
        %v6114 = vsel %vm2263, %v5337, %v5475
        %v6117 = vsel %vm2263, %v5349, %v5477
        %v6119 = vsel %vm2329, %v6072, %v5559
        %v6121 = vsel %vm2329, %v6075, %v5561
        %v6123 = vsel %vm2329, %v6078, %v5563
        %v6125 = vsel %vm2329, %v6081, %v5565
        %v6127 = vsel %vm2329, %v6084, %v5567
        %v6129 = vsel %vm2329, %v6087, %v5569
        %v6131 = vsel %vm2329, %v6090, %v5571
        %v6133 = vsel %vm2329, %v6093, %v5573
        %v6135 = vsel %vm2329, %v6096, %v5575
        %v6137 = vsel %vm2329, %v6099, %v5577
        %v6139 = vsel %vm2329, %v6102, %v5579
        %v6141 = vsel %vm2329, %v6105, %v5581
        %v6143 = vsel %vm2329, %v6108, %v5583
        %v6145 = vsel %vm2329, %v6111, %v5585
        %v6147 = vsel %vm2329, %v6114, %v5587
        %v6149 = vsel %vm2329, %v6117, %v5589
        %v6151 = vsel %vm2395, %v6119, %v5831
        %v6154 = vsel %vm2395, %v6121, %v5833
        %v6157 = vsel %vm2395, %v6123, %v5835
        %v6160 = vsel %vm2395, %v6125, %v5837
        %v6163 = vsel %vm2395, %v6127, %v5839
        %v6166 = vsel %vm2395, %v6129, %v5841
        %v6169 = vsel %vm2395, %v6131, %v5843
        %v6172 = vsel %vm2395, %v6133, %v5845
        %v6175 = vsel %vm2395, %v6135, %v5847
        %v6178 = vsel %vm2395, %v6137, %v5849
        %v6181 = vsel %vm2395, %v6139, %v5851
        %v6184 = vsel %vm2395, %v6141, %v5853
        %v6187 = vsel %vm2395, %v6143, %v5855
        %v6190 = vsel %vm2395, %v6145, %v5857
        %v6193 = vsel %vm2395, %v6147, %v5859
        %v6196 = vsel %vm2395, %v6149, %v5861
        %v6234 = vunpack.c.l.b16 %v404
        %v6235 = vunpack.c.l.b16 %v405
        %v6236 = vunpack.c.l.b16 %v406
        %v6237 = vunpack.c.l.b16 %v407
        %v6238 = vunpack.c.l.b16 %v408
        %v6239 = vunpack.c.l.b16 %v409
        %v6240 = vunpack.c.l.b16 %v410
        %v6241 = vunpack.c.l.b16 %v411
        %v6242 = vunpack.c.l.b16 %v412
        %v6243 = vunpack.c.l.b16 %v413
        %v6244 = vunpack.c.l.b16 %v414
        %v6245 = vunpack.c.l.b16 %v415
        %v6246 = vunpack.c.l.b16 %v416
        %v6247 = vunpack.c.l.b16 %v417
        %v6248 = vunpack.c.l.b16 %v418
        %v6249 = vunpack.c.l.b16 %v419
        %v6250 = vunpack.c.l.b16 %v420
        %v6251 = vunpack.c.l.b16 %v421
        %v6252 = vunpack.c.l.b16 %v422
        %v6253 = vunpack.c.l.b16 %v423
        %v6254 = vunpack.c.l.b16 %v424
        %v6255 = vunpack.c.l.b16 %v425
        %v6256 = vunpack.c.l.b16 %v426
        %v6257 = vunpack.c.l.b16 %v427
        %v6258 = vunpack.c.l.b16 %v428
        %v6259 = vunpack.c.l.b16 %v429
        %v6260 = vunpack.c.l.b16 %v430
        %v6261 = vunpack.c.l.b16 %v431
        %v6262 = vunpack.c.l.b16 %v432
        %v6263 = vunpack.c.l.b16 %v433
        %v6264 = vunpack.c.l.b16 %v434
        %v6265 = vunpack.c.l.b16 %v435
        %v6266 = vunpack.c.l.b16 %v436
        %v6267 = vunpack.c.l.b16 %v437
        %v6268 = vunpack.c.l.b16 %v438
        %v6269 = vunpack.c.l.b16 %v439
        %v6270 = vpack.c.b16 %v6235, %v6234
        %v6271 = vpack.c.b16 %v6237, %v6236
        %v6272 = vpack.c.b16 %v6239, %v6238
        %v6273 = vpack.c.b16 %v6241, %v6240
        %v6274 = vpack.c.b16 %v6243, %v6242
        %v6275 = vpack.c.b16 %v6245, %v6244
        %v6276 = vpack.c.b16 %v6247, %v6246
        %v6277 = vpack.c.b16 %v6249, %v6248
        %v6278 = vpack.c.b16 %v6251, %v6250
        %v6279 = vpack.c.b16 %v6253, %v6252
        %v6280 = vpack.c.b16 %v6255, %v6254
        %v6281 = vpack.c.b16 %v6257, %v6256
        %v6282 = vpack.c.b16 %v6259, %v6258
        %v6283 = vpack.c.b16 %v6261, %v6260
        %v6284 = vpack.c.b16 %v6263, %v6262
        %v6285 = vpack.c.b16 %v6265, %v6264
        %v6286 = vpack.c.b16 %v6267, %v6266
        %v6287 = vpack.c.b16 %v6269, %v6268
        %v6307 = vsel %vm2263, %v5912, 0
        %v6310 = vsel %vm2263, %v5915, 0
        %v6313 = vsel %vm2263, %v5918, 0
        %v6316 = vsel %vm2263, %v5921, 0
        %v6319 = vsel %vm2263, %v5924, 0
        %v6322 = vsel %vm2263, %v5927, 0
        %v6325 = vsel %vm2263, %v5930, 0
        %v6328 = vsel %vm2263, %v5933, 0
        %v6331 = vsel %vm2263, %v5936, 0
        %v6334 = vsel %vm2263, %v5939, 0
        %v6337 = vsel %vm2263, %v5942, 0
        %v6340 = vsel %vm2263, %v5945, 0
        %v6343 = vsel %vm2263, %v5948, 0
        %v6346 = vsel %vm2263, %v5951, 0
        %v6349 = vsel %vm2263, %v5954, 0
        %v6352 = vsel %vm2263, %v5957, 0
        %6354 = vmatprep.subr.bf16.mxu0 0
        %6355 = vmatpush1.bf16.msra.mxu0 %v6277
        %6356 = vmatprep.subr.bf16.mxu0 0
        %6357 = vmatpush1.bf16.msra.mxu0 %v6276
        %6358 = vmatprep.subr.bf16.mxu0 0
        %6359 = vmatpush1.bf16.msra.mxu0 %v6275
        %6360 = vmatprep.subr.bf16.mxu0 0
        %6361 = vmatpush1.bf16.msra.mxu0 %v6274
        %6362 = vmatprep.subr.bf16.mxu0 0
        %6363 = vmatpush1.bf16.msra.mxu0 %v6273
        %6364 = vmatprep.subr.bf16.mxu0 0
        %6365 = vmatpush1.bf16.msra.mxu0 %v6272
        %6366 = vmatprep.subr.bf16.mxu0 0
        %6367 = vmatpush1.bf16.msra.mxu0 %v6271
        %6368 = vmatprep.subr.bf16.mxu0 0
        %6369 = vmatpush1.bf16.msra.mxu0 %v6270
        %6370 = vmatprep.subr.bf16.mxu0 0
        %6371 = vmatpush2.bf16.msra.mxu0 %v6285
        %6372 = vmatprep.subr.bf16.mxu0 0
        %6373 = vmatpush2.bf16.msra.mxu0 %v6284
        %6374 = vmatprep.subr.bf16.mxu0 0
        %6375 = vmatpush2.bf16.msra.mxu0 %v6283
        %6376 = vmatprep.subr.bf16.mxu0 0
        %6377 = vmatpush2.bf16.msra.mxu0 %v6282
        %6378 = vmatprep.subr.bf16.mxu0 0
        %6379 = vmatpush2.bf16.msra.mxu0 %v6281
        %6380 = vmatprep.subr.bf16.mxu0 0
        %6381 = vmatpush2.bf16.msra.mxu0 %v6280
        %6382 = vmatprep.subr.bf16.mxu0 0
        %6383 = vmatpush2.bf16.msra.mxu0 %v6279
        %6384 = vmatprep.subr.bf16.mxu0 0
        %6385 = vmatpush2.bf16.msra.mxu0 %v6278
        %6386 = vmatprep.mubr.bf16.mxu0 %v6151
        %6387 = vmatmul.mubr.bf16.gmra.mxu0 %v6023
        %v6388 = vpop.f32.mrf.mxu0
        %v6389 = vadd.f32 0.0, %v6388
        %v6390 = vpop.f32.mrf.mxu0
        %v6391 = vpop.f32.mrf.mxu0
        %v6392 = vadd.f32 0.0, %v6391
        %v6393 = vpop.f32.mrf.mxu0
        %6394 = vmatprep.mubr.bf16.mxu0 %v6154
        %6395 = vmatmul.mubr.bf16.gmra.mxu0 %v6026
        %v6396 = vpop.f32.mrf.mxu0
        %v6397 = vadd.f32 0.0, %v6396
        %v6398 = vpop.f32.mrf.mxu0
        %v6399 = vpop.f32.mrf.mxu0
        %v6400 = vadd.f32 0.0, %v6399
        %v6401 = vpop.f32.mrf.mxu0
        %6402 = vmatprep.mubr.bf16.mxu0 %v6157
        %6403 = vmatmul.mubr.bf16.gmra.mxu0 %v6029
        %v6404 = vpop.f32.mrf.mxu0
        %v6405 = vadd.f32 0.0, %v6404
        %v6406 = vpop.f32.mrf.mxu0
        %v6407 = vpop.f32.mrf.mxu0
        %v6408 = vadd.f32 0.0, %v6407
        %v6409 = vpop.f32.mrf.mxu0
        %6410 = vmatprep.mubr.bf16.mxu0 %v6160
        %6411 = vmatmul.mubr.bf16.gmra.mxu0 %v6032
        %v6412 = vpop.f32.mrf.mxu0
        %v6413 = vadd.f32 0.0, %v6412
        %v6414 = vpop.f32.mrf.mxu0
        %v6415 = vpop.f32.mrf.mxu0
        %v6416 = vadd.f32 0.0, %v6415
        %v6417 = vpop.f32.mrf.mxu0
        %6418 = vmatprep.mubr.bf16.mxu0 %v6163
        %6419 = vmatmul.mubr.bf16.gmra.mxu0 %v6035
        %v6420 = vpop.f32.mrf.mxu0
        %v6421 = vadd.f32 0.0, %v6420
        %v6422 = vpop.f32.mrf.mxu0
        %v6423 = vpop.f32.mrf.mxu0
        %v6424 = vadd.f32 0.0, %v6423
        %v6425 = vpop.f32.mrf.mxu0
        %6426 = vmatprep.mubr.bf16.mxu0 %v6166
        %6427 = vmatmul.mubr.bf16.gmra.mxu0 %v6038
        %v6428 = vpop.f32.mrf.mxu0
        %v6429 = vadd.f32 0.0, %v6428
        %v6430 = vpop.f32.mrf.mxu0
        %v6431 = vpop.f32.mrf.mxu0
        %v6432 = vadd.f32 0.0, %v6431
        %v6433 = vpop.f32.mrf.mxu0
        %6434 = vmatprep.mubr.bf16.mxu0 %v6169
        %6435 = vmatmul.mubr.bf16.gmra.mxu0 %v6041
        %v6436 = vpop.f32.mrf.mxu0
        %v6437 = vadd.f32 0.0, %v6436
        %v6438 = vpop.f32.mrf.mxu0
        %v6439 = vpop.f32.mrf.mxu0
        %v6440 = vadd.f32 0.0, %v6439
        %v6441 = vpop.f32.mrf.mxu0
        %6442 = vmatprep.mubr.bf16.mxu0 %v6172
        %6443 = vmatmul.mubr.bf16.gmra.mxu0 %v6044
        %v6444 = vpop.f32.mrf.mxu0
        %v6445 = vadd.f32 0.0, %v6444
        %v6446 = vpop.f32.mrf.mxu0
        %v6447 = vpop.f32.mrf.mxu0
        %v6448 = vadd.f32 0.0, %v6447
        %v6449 = vpop.f32.mrf.mxu0
        %6450 = vmatprep.mubr.bf16.mxu0 %v6175
        %6451 = vmatmul.mubr.bf16.gmra.mxu0 %v6047
        %v6452 = vpop.f32.mrf.mxu0
        %v6453 = vadd.f32 0.0, %v6452
        %v6454 = vpop.f32.mrf.mxu0
        %v6455 = vpop.f32.mrf.mxu0
        %v6456 = vadd.f32 0.0, %v6455
        %v6457 = vpop.f32.mrf.mxu0
        %6458 = vmatprep.mubr.bf16.mxu0 %v6178
        %6459 = vmatmul.mubr.bf16.gmra.mxu0 %v6050
        %v6460 = vpop.f32.mrf.mxu0
        %v6461 = vadd.f32 0.0, %v6460
        %v6462 = vpop.f32.mrf.mxu0
        %v6463 = vpop.f32.mrf.mxu0
        %v6464 = vadd.f32 0.0, %v6463
        %v6465 = vpop.f32.mrf.mxu0
        %6466 = vmatprep.mubr.bf16.mxu0 %v6181
        %6467 = vmatmul.mubr.bf16.gmra.mxu0 %v6053
        %v6468 = vpop.f32.mrf.mxu0
        %v6469 = vadd.f32 0.0, %v6468
        %v6470 = vpop.f32.mrf.mxu0
        %v6471 = vpop.f32.mrf.mxu0
        %v6472 = vadd.f32 0.0, %v6471
        %v6473 = vpop.f32.mrf.mxu0
        %6474 = vmatprep.mubr.bf16.mxu0 %v6184
        %6475 = vmatmul.mubr.bf16.gmra.mxu0 %v6056
        %v6476 = vpop.f32.mrf.mxu0
        %v6477 = vadd.f32 0.0, %v6476
        %v6478 = vpop.f32.mrf.mxu0
        %v6479 = vpop.f32.mrf.mxu0
        %v6480 = vadd.f32 0.0, %v6479
        %v6481 = vpop.f32.mrf.mxu0
        %6482 = vmatprep.mubr.bf16.mxu0 %v6187
        %6483 = vmatmul.mubr.bf16.gmra.mxu0 %v6059
        %v6484 = vpop.f32.mrf.mxu0
        %v6485 = vadd.f32 0.0, %v6484
        %v6486 = vpop.f32.mrf.mxu0
        %v6487 = vpop.f32.mrf.mxu0
        %v6488 = vadd.f32 0.0, %v6487
        %v6489 = vpop.f32.mrf.mxu0
        %6490 = vmatprep.mubr.bf16.mxu0 %v6190
        %6491 = vmatmul.mubr.bf16.gmra.mxu0 %v6062
        %v6492 = vpop.f32.mrf.mxu0
        %v6493 = vadd.f32 0.0, %v6492
        %v6494 = vpop.f32.mrf.mxu0
        %v6495 = vpop.f32.mrf.mxu0
        %v6496 = vadd.f32 0.0, %v6495
        %v6497 = vpop.f32.mrf.mxu0
        %6498 = vmatprep.mubr.bf16.mxu0 %v6193
        %6499 = vmatmul.mubr.bf16.gmra.mxu0 %v6065
        %v6500 = vpop.f32.mrf.mxu0
        %v6501 = vadd.f32 0.0, %v6500
        %v6502 = vpop.f32.mrf.mxu0
        %v6503 = vpop.f32.mrf.mxu0
        %v6504 = vadd.f32 0.0, %v6503
        %v6505 = vpop.f32.mrf.mxu0
        %6506 = vmatprep.mubr.bf16.mxu0 %v6196
        %6507 = vmatmul.mubr.bf16.gmra.mxu0 %v6068
        %v6508 = vpop.f32.mrf.mxu0
        %v6509 = vadd.f32 0.0, %v6508
        %v6510 = vpop.f32.mrf.mxu0
        %v6511 = vpop.f32.mrf.mxu0
        %v6512 = vadd.f32 0.0, %v6511
        %v6513 = vpop.f32.mrf.mxu0
        %6514 = vdwg.mxu0
        %6515 = vmatprep.subr.bf16.mxu0 0
        %6516 = vmatpush1.bf16.msra.mxu0 0
        %6517 = vmatprep.subr.bf16.mxu0 0
        %6518 = vmatpush1.bf16.msra.mxu0 0
        %6519 = vmatprep.subr.bf16.mxu0 0
        %6520 = vmatpush1.bf16.msra.mxu0 0
        %6521 = vmatprep.subr.bf16.mxu0 0
        %6522 = vmatpush1.bf16.msra.mxu0 0
        %6523 = vmatprep.subr.bf16.mxu0 0
        %6524 = vmatpush1.bf16.msra.mxu0 0
        %6525 = vmatprep.subr.bf16.mxu0 0
        %6526 = vmatpush1.bf16.msra.mxu0 0
        %6527 = vmatprep.subr.bf16.mxu0 0
        %6528 = vmatpush1.bf16.msra.mxu0 %v6287
        %6529 = vmatprep.subr.bf16.mxu0 0
        %6530 = vmatpush1.bf16.msra.mxu0 %v6286
        %6531 = vmatprep.subr.bf16.mxu0 0
        %6532 = vmatpush2.bf16.msra.mxu0 0
        %6533 = vmatprep.subr.bf16.mxu0 0
        %6534 = vmatpush2.bf16.msra.mxu0 0
        %6535 = vmatprep.subr.bf16.mxu0 0
        %6536 = vmatpush2.bf16.msra.mxu0 0
        %6537 = vmatprep.subr.bf16.mxu0 0
        %6538 = vmatpush2.bf16.msra.mxu0 0
        %6539 = vmatprep.subr.bf16.mxu0 0
        %6540 = vmatpush2.bf16.msra.mxu0 0
        %6541 = vmatprep.subr.bf16.mxu0 0
        %6542 = vmatpush2.bf16.msra.mxu0 0
        %6543 = vmatprep.subr.bf16.mxu0 0
        %6544 = vmatpush2.bf16.msra.mxu0 0
        %6545 = vmatprep.subr.bf16.mxu0 0
        %6546 = vmatpush2.bf16.msra.mxu0 0
        %6547 = vmatprep.mubr.bf16.mxu0 0
        %6548 = vmatmul.mubr.bf16.gmra.mxu0 %v6307
        %v6549 = vpop.f32.mrf.mxu0
        %v6550 = vadd.f32 %v6389, %v6549
        %v6551 = vpop.f32.mrf.mxu0
        %v6552 = vpop.f32.mrf.mxu0
        %v6553 = vadd.f32 %v6392, %v6552
        %v6554 = vpop.f32.mrf.mxu0
        %6555 = vmatprep.mubr.bf16.mxu0 0
        %6556 = vmatmul.mubr.bf16.gmra.mxu0 %v6310
        %v6557 = vpop.f32.mrf.mxu0
        %v6558 = vadd.f32 %v6397, %v6557
        %v6559 = vpop.f32.mrf.mxu0
        %v6560 = vpop.f32.mrf.mxu0
        %v6561 = vadd.f32 %v6400, %v6560
        %v6562 = vpop.f32.mrf.mxu0
        %6563 = vmatprep.mubr.bf16.mxu0 0
        %6564 = vmatmul.mubr.bf16.gmra.mxu0 %v6313
        %v6565 = vpop.f32.mrf.mxu0
        %v6566 = vadd.f32 %v6405, %v6565
        %v6567 = vpop.f32.mrf.mxu0
        %v6568 = vpop.f32.mrf.mxu0
        %v6569 = vadd.f32 %v6408, %v6568
        %v6570 = vpop.f32.mrf.mxu0
        %6571 = vmatprep.mubr.bf16.mxu0 0
        %6572 = vmatmul.mubr.bf16.gmra.mxu0 %v6316
        %v6573 = vpop.f32.mrf.mxu0
        %v6574 = vadd.f32 %v6413, %v6573
        %v6575 = vpop.f32.mrf.mxu0
        %v6576 = vpop.f32.mrf.mxu0
        %v6577 = vadd.f32 %v6416, %v6576
        %v6578 = vpop.f32.mrf.mxu0
        %6579 = vmatprep.mubr.bf16.mxu0 0
        %6580 = vmatmul.mubr.bf16.gmra.mxu0 %v6319
        %v6581 = vpop.f32.mrf.mxu0
        %v6582 = vadd.f32 %v6421, %v6581
        %v6583 = vpop.f32.mrf.mxu0
        %v6584 = vpop.f32.mrf.mxu0
        %v6585 = vadd.f32 %v6424, %v6584
        %v6586 = vpop.f32.mrf.mxu0
        %6587 = vmatprep.mubr.bf16.mxu0 0
        %6588 = vmatmul.mubr.bf16.gmra.mxu0 %v6322
        %v6589 = vpop.f32.mrf.mxu0
        %v6590 = vadd.f32 %v6429, %v6589
        %v6591 = vpop.f32.mrf.mxu0
        %v6592 = vpop.f32.mrf.mxu0
        %v6593 = vadd.f32 %v6432, %v6592
        %v6594 = vpop.f32.mrf.mxu0
        %6595 = vmatprep.mubr.bf16.mxu0 0
        %6596 = vmatmul.mubr.bf16.gmra.mxu0 %v6325
        %v6597 = vpop.f32.mrf.mxu0
        %v6598 = vadd.f32 %v6437, %v6597
        %v6599 = vpop.f32.mrf.mxu0
        %v6600 = vpop.f32.mrf.mxu0
        %v6601 = vadd.f32 %v6440, %v6600
        %v6602 = vpop.f32.mrf.mxu0
        %6603 = vmatprep.mubr.bf16.mxu0 0
        %6604 = vmatmul.mubr.bf16.gmra.mxu0 %v6328
        %v6605 = vpop.f32.mrf.mxu0
        %v6606 = vadd.f32 %v6445, %v6605
        %v6607 = vpop.f32.mrf.mxu0
        %v6608 = vpop.f32.mrf.mxu0
        %v6609 = vadd.f32 %v6448, %v6608
        %v6610 = vpop.f32.mrf.mxu0
        %6611 = vmatprep.mubr.bf16.mxu0 0
        %6612 = vmatmul.mubr.bf16.gmra.mxu0 %v6331
        %v6613 = vpop.f32.mrf.mxu0
        %v6614 = vadd.f32 %v6453, %v6613
        %v6615 = vpop.f32.mrf.mxu0
        %v6616 = vpop.f32.mrf.mxu0
        %v6617 = vadd.f32 %v6456, %v6616
        %v6618 = vpop.f32.mrf.mxu0
        %6619 = vmatprep.mubr.bf16.mxu0 0
        %6620 = vmatmul.mubr.bf16.gmra.mxu0 %v6334
        %v6621 = vpop.f32.mrf.mxu0
        %v6622 = vadd.f32 %v6461, %v6621
        %v6623 = vpop.f32.mrf.mxu0
        %v6624 = vpop.f32.mrf.mxu0
        %v6625 = vadd.f32 %v6464, %v6624
        %v6626 = vpop.f32.mrf.mxu0
        %6627 = vmatprep.mubr.bf16.mxu0 0
        %6628 = vmatmul.mubr.bf16.gmra.mxu0 %v6337
        %v6629 = vpop.f32.mrf.mxu0
        %v6630 = vadd.f32 %v6469, %v6629
        %v6631 = vpop.f32.mrf.mxu0
        %v6632 = vpop.f32.mrf.mxu0
        %v6633 = vadd.f32 %v6472, %v6632
        %v6634 = vpop.f32.mrf.mxu0
        %6635 = vmatprep.mubr.bf16.mxu0 0
        %6636 = vmatmul.mubr.bf16.gmra.mxu0 %v6340
        %v6637 = vpop.f32.mrf.mxu0
        %v6638 = vadd.f32 %v6477, %v6637
        %v6639 = vpop.f32.mrf.mxu0
        %v6640 = vpop.f32.mrf.mxu0
        %v6641 = vadd.f32 %v6480, %v6640
        %v6642 = vpop.f32.mrf.mxu0
        %6643 = vmatprep.mubr.bf16.mxu0 0
        %6644 = vmatmul.mubr.bf16.gmra.mxu0 %v6343
        %v6645 = vpop.f32.mrf.mxu0
        %v6646 = vadd.f32 %v6485, %v6645
        %v6647 = vpop.f32.mrf.mxu0
        %v6648 = vpop.f32.mrf.mxu0
        %v6649 = vadd.f32 %v6488, %v6648
        %v6650 = vpop.f32.mrf.mxu0
        %6651 = vmatprep.mubr.bf16.mxu0 0
        %6652 = vmatmul.mubr.bf16.gmra.mxu0 %v6346
        %v6653 = vpop.f32.mrf.mxu0
        %v6654 = vadd.f32 %v6493, %v6653
        %v6655 = vpop.f32.mrf.mxu0
        %v6656 = vpop.f32.mrf.mxu0
        %v6657 = vadd.f32 %v6496, %v6656
        %v6658 = vpop.f32.mrf.mxu0
        %6659 = vmatprep.mubr.bf16.mxu0 0
        %6660 = vmatmul.mubr.bf16.gmra.mxu0 %v6349
        %v6661 = vpop.f32.mrf.mxu0
        %v6662 = vadd.f32 %v6501, %v6661
        %v6663 = vpop.f32.mrf.mxu0
        %v6664 = vpop.f32.mrf.mxu0
        %v6665 = vadd.f32 %v6504, %v6664
        %v6666 = vpop.f32.mrf.mxu0
        %6667 = vmatprep.mubr.bf16.mxu0 0
        %6668 = vmatmul.mubr.bf16.gmra.mxu0 %v6352
        %v6669 = vpop.f32.mrf.mxu0
        %v6670 = vadd.f32 %v6509, %v6669
        %v6671 = vpop.f32.mrf.mxu0
        %v6672 = vpop.f32.mrf.mxu0
        %v6673 = vadd.f32 %v6512, %v6672
        %v6674 = vpop.f32.mrf.mxu0
        %6675 = vdwg.mxu0
        %v6676 = vsel %vm2263, %v6550, 0.0
        %v6677 = vsel %vm2263, %v6553, 0.0
        %v6678 = vadd.f32 %v6676, %v6677
        %v6679 = vsel %vm2263, %v6558, 0.0
        %v6680 = vadd.f32 %v6678, %v6679
        %v6681 = vsel %vm2263, %v6561, 0.0
        %v6682 = vadd.f32 %v6680, %v6681
        %v6683 = vsel %vm2263, %v6566, 0.0
        %v6684 = vadd.f32 %v6682, %v6683
        %v6685 = vsel %vm2263, %v6569, 0.0
        %v6686 = vadd.f32 %v6684, %v6685
        %v6687 = vsel %vm2263, %v6574, 0.0
        %v6688 = vadd.f32 %v6686, %v6687
        %v6689 = vsel %vm2263, %v6577, 0.0
        %v6690 = vadd.f32 %v6688, %v6689
        %v6691 = vsel %vm2263, %v6582, 0.0
        %v6692 = vadd.f32 %v6690, %v6691
        %v6693 = vsel %vm2263, %v6585, 0.0
        %v6694 = vadd.f32 %v6692, %v6693
        %v6695 = vsel %vm2263, %v6590, 0.0
        %v6696 = vadd.f32 %v6694, %v6695
        %v6697 = vsel %vm2263, %v6593, 0.0
        %v6698 = vadd.f32 %v6696, %v6697
        %v6699 = vsel %vm2263, %v6598, 0.0
        %v6700 = vadd.f32 %v6698, %v6699
        %v6701 = vsel %vm2263, %v6601, 0.0
        %v6702 = vadd.f32 %v6700, %v6701
        %v6703 = vsel %vm2263, %v6606, 0.0
        %v6704 = vadd.f32 %v6702, %v6703
        %v6705 = vsel %vm2263, %v6609, 0.0
        %v6706 = vadd.f32 %v6704, %v6705
        %v6707 = vsel %vm2263, %v6614, 0.0
        %v6708 = vadd.f32 %v6706, %v6707
        %v6709 = vsel %vm2263, %v6617, 0.0
        %v6710 = vadd.f32 %v6708, %v6709
        %v6711 = vsel %vm2263, %v6622, 0.0
        %v6712 = vadd.f32 %v6710, %v6711
        %v6713 = vsel %vm2263, %v6625, 0.0
        %v6714 = vadd.f32 %v6712, %v6713
        %v6715 = vsel %vm2263, %v6630, 0.0
        %v6716 = vadd.f32 %v6714, %v6715
        %v6717 = vsel %vm2263, %v6633, 0.0
        %v6718 = vadd.f32 %v6716, %v6717
        %v6719 = vsel %vm2263, %v6638, 0.0
        %v6720 = vadd.f32 %v6718, %v6719
        %v6721 = vsel %vm2263, %v6641, 0.0
        %v6722 = vadd.f32 %v6720, %v6721
        %v6723 = vsel %vm2263, %v6646, 0.0
        %v6724 = vadd.f32 %v6722, %v6723
        %v6725 = vsel %vm2263, %v6649, 0.0
        %v6726 = vadd.f32 %v6724, %v6725
        %v6727 = vsel %vm2263, %v6654, 0.0
        %v6728 = vadd.f32 %v6726, %v6727
        %v6729 = vsel %vm2263, %v6657, 0.0
        %v6730 = vadd.f32 %v6728, %v6729
        %v6731 = vsel %vm2263, %v6662, 0.0
        %v6732 = vadd.f32 %v6730, %v6731
        %v6733 = vsel %vm2263, %v6665, 0.0
        %v6734 = vadd.f32 %v6732, %v6733
        %v6735 = vsel %vm2263, %v6670, 0.0
        %v6736 = vadd.f32 %v6734, %v6735
        %v6737 = vsel %vm2263, %v6673, 0.0
        %v6738 = vadd.f32 %v6736, %v6737
        %v6739 = vrot.slane %v6738, 4
        %v6740 = vadd.f32 %v6738, %v6739
        %v6741 = vrot.slane %v6740, 2
        %v6742 = vadd.f32 %v6740, %v6741
        %v6743 = vrot.slane %v6742, 1
        %v6744 = vadd.f32 %v6742, %v6743
        %v6745 = vadd.f32 %v6744, 0.0
        %v6746 = vmul.f32 %v6550, %v6550
        %v6747 = vmul.f32 %v6553, %v6553
        %v6748 = vmul.f32 %v6558, %v6558
        %v6749 = vmul.f32 %v6561, %v6561
        %v6750 = vmul.f32 %v6566, %v6566
        %v6751 = vmul.f32 %v6569, %v6569
        %v6752 = vmul.f32 %v6574, %v6574
        %v6753 = vmul.f32 %v6577, %v6577
        %v6754 = vmul.f32 %v6582, %v6582
        %v6755 = vmul.f32 %v6585, %v6585
        %v6756 = vmul.f32 %v6590, %v6590
        %v6757 = vmul.f32 %v6593, %v6593
        %v6758 = vmul.f32 %v6598, %v6598
        %v6759 = vmul.f32 %v6601, %v6601
        %v6760 = vmul.f32 %v6606, %v6606
        %v6761 = vmul.f32 %v6609, %v6609
        %v6762 = vmul.f32 %v6614, %v6614
        %v6763 = vmul.f32 %v6617, %v6617
        %v6764 = vmul.f32 %v6622, %v6622
        %v6765 = vmul.f32 %v6625, %v6625
        %v6766 = vmul.f32 %v6630, %v6630
        %v6767 = vmul.f32 %v6633, %v6633
        %v6768 = vmul.f32 %v6638, %v6638
        %v6769 = vmul.f32 %v6641, %v6641
        %v6770 = vmul.f32 %v6646, %v6646
        %v6771 = vmul.f32 %v6649, %v6649
        %v6772 = vmul.f32 %v6654, %v6654
        %v6773 = vmul.f32 %v6657, %v6657
        %v6774 = vmul.f32 %v6662, %v6662
        %v6775 = vmul.f32 %v6665, %v6665
        %v6776 = vmul.f32 %v6670, %v6670
        %v6777 = vmul.f32 %v6673, %v6673
        %v6778 = vsel %vm2263, %v6746, 0.0
        %v6779 = vsel %vm2263, %v6747, 0.0
        %v6780 = vadd.f32 %v6778, %v6779
        %v6781 = vsel %vm2263, %v6748, 0.0
        %v6782 = vadd.f32 %v6780, %v6781
        %v6783 = vsel %vm2263, %v6749, 0.0
        %v6784 = vadd.f32 %v6782, %v6783
        %v6785 = vsel %vm2263, %v6750, 0.0
        %v6786 = vadd.f32 %v6784, %v6785
        %v6787 = vsel %vm2263, %v6751, 0.0
        %v6788 = vadd.f32 %v6786, %v6787
        %v6789 = vsel %vm2263, %v6752, 0.0
        %v6790 = vadd.f32 %v6788, %v6789
        %v6791 = vsel %vm2263, %v6753, 0.0
        %v6792 = vadd.f32 %v6790, %v6791
        %v6793 = vsel %vm2263, %v6754, 0.0
        %v6794 = vadd.f32 %v6792, %v6793
        %v6795 = vsel %vm2263, %v6755, 0.0
        %v6796 = vadd.f32 %v6794, %v6795
        %v6797 = vsel %vm2263, %v6756, 0.0
        %v6798 = vadd.f32 %v6796, %v6797
        %v6799 = vsel %vm2263, %v6757, 0.0
        %v6800 = vadd.f32 %v6798, %v6799
        %v6801 = vsel %vm2263, %v6758, 0.0
        %v6802 = vadd.f32 %v6800, %v6801
        %v6803 = vsel %vm2263, %v6759, 0.0
        %v6804 = vadd.f32 %v6802, %v6803
        %v6805 = vsel %vm2263, %v6760, 0.0
        %v6806 = vadd.f32 %v6804, %v6805
        %v6807 = vsel %vm2263, %v6761, 0.0
        %v6808 = vadd.f32 %v6806, %v6807
        %v6809 = vsel %vm2263, %v6762, 0.0
        %v6810 = vadd.f32 %v6808, %v6809
        %v6811 = vsel %vm2263, %v6763, 0.0
        %v6812 = vadd.f32 %v6810, %v6811
        %v6813 = vsel %vm2263, %v6764, 0.0
        %v6814 = vadd.f32 %v6812, %v6813
        %v6815 = vsel %vm2263, %v6765, 0.0
        %v6816 = vadd.f32 %v6814, %v6815
        %v6817 = vsel %vm2263, %v6766, 0.0
        %v6818 = vadd.f32 %v6816, %v6817
        %v6819 = vsel %vm2263, %v6767, 0.0
        %v6820 = vadd.f32 %v6818, %v6819
        %v6821 = vsel %vm2263, %v6768, 0.0
        %v6822 = vadd.f32 %v6820, %v6821
        %v6823 = vsel %vm2263, %v6769, 0.0
        %v6824 = vadd.f32 %v6822, %v6823
        %v6825 = vsel %vm2263, %v6770, 0.0
        %v6826 = vadd.f32 %v6824, %v6825
        %v6827 = vsel %vm2263, %v6771, 0.0
        %v6828 = vadd.f32 %v6826, %v6827
        %v6829 = vsel %vm2263, %v6772, 0.0
        %v6830 = vadd.f32 %v6828, %v6829
        %v6831 = vsel %vm2263, %v6773, 0.0
        %v6832 = vadd.f32 %v6830, %v6831
        %v6833 = vsel %vm2263, %v6774, 0.0
        %v6834 = vadd.f32 %v6832, %v6833
        %v6835 = vsel %vm2263, %v6775, 0.0
        %v6836 = vadd.f32 %v6834, %v6835
        %v6837 = vsel %vm2263, %v6776, 0.0
        %v6838 = vadd.f32 %v6836, %v6837
        %v6839 = vsel %vm2263, %v6777, 0.0
        %v6840 = vadd.f32 %v6838, %v6839
        %v6841 = vrot.slane %v6840, 4
        %v6842 = vadd.f32 %v6840, %v6841
        %v6843 = vrot.slane %v6842, 2
        %v6844 = vadd.f32 %v6842, %v6843
        %v6845 = vrot.slane %v6844, 1
        %v6846 = vadd.f32 %v6844, %v6845
        %v6847 = vadd.f32 %v6846, 0.0
        %v6848 = vpack.c.bf16 %v6553, %v6550
        %v6849 = vpack.c.bf16 %v6561, %v6558
        %v6850 = vpack.c.bf16 %v6569, %v6566
        %v6851 = vpack.c.bf16 %v6577, %v6574
        %v6852 = vpack.c.bf16 %v6585, %v6582
        %v6853 = vpack.c.bf16 %v6593, %v6590
        %v6854 = vpack.c.bf16 %v6601, %v6598
        %v6855 = vpack.c.bf16 %v6609, %v6606
        %v6856 = vpack.c.bf16 %v6617, %v6614
        %v6857 = vpack.c.bf16 %v6625, %v6622
        %v6858 = vpack.c.bf16 %v6633, %v6630
        %v6859 = vpack.c.bf16 %v6641, %v6638
        %v6860 = vpack.c.bf16 %v6649, %v6646
        %v6861 = vpack.c.bf16 %v6657, %v6654
        %v6862 = vpack.c.bf16 %v6665, %v6662
        %v6863 = vpack.c.bf16 %v6673, %v6670
        %v6880 = vunpack.c.l.b16 %v6848
        %v6881 = vunpack.c.h.b16 %v6848
        %v6882 = vunpack.c.l.b16 %v6849
        %v6883 = vunpack.c.h.b16 %v6849
        %v6884 = vunpack.c.l.b16 %v6850
        %v6885 = vunpack.c.h.b16 %v6850
        %v6886 = vunpack.c.l.b16 %v6851
        %v6887 = vunpack.c.h.b16 %v6851
        %v6888 = vunpack.c.l.b16 %v6852
        %v6889 = vunpack.c.h.b16 %v6852
        %v6890 = vunpack.c.l.b16 %v6853
        %v6891 = vunpack.c.h.b16 %v6853
        %v6892 = vunpack.c.l.b16 %v6854
        %v6893 = vunpack.c.h.b16 %v6854
        %v6894 = vunpack.c.l.b16 %v6855
        %v6895 = vunpack.c.h.b16 %v6855
        %v6896 = vunpack.c.l.b16 %v6856
        %v6897 = vunpack.c.h.b16 %v6856
        %v6898 = vunpack.c.l.b16 %v6857
        %v6899 = vunpack.c.h.b16 %v6857
        %v6900 = vunpack.c.l.b16 %v6858
        %v6901 = vunpack.c.h.b16 %v6858
        %v6902 = vunpack.c.l.b16 %v6859
        %v6903 = vunpack.c.h.b16 %v6859
        %v6904 = vunpack.c.l.b16 %v6860
        %v6905 = vunpack.c.h.b16 %v6860
        %v6906 = vunpack.c.l.b16 %v6861
        %v6907 = vunpack.c.h.b16 %v6861
        %v6908 = vunpack.c.l.b16 %v6862
        %v6909 = vunpack.c.h.b16 %v6862
        %v6910 = vunpack.c.l.b16 %v6863
        %v6911 = vunpack.c.h.b16 %v6863
        %v6912 = vpack.c.b16 %v6880, %v6880
        %v6913 = vpack.c.b16 %v6881, %v6881
        %v6914 = vpack.c.b16 %v6882, %v6882
        %v6915 = vpack.c.b16 %v6883, %v6883
        %v6916 = vpack.c.b16 %v6884, %v6884
        %v6917 = vpack.c.b16 %v6885, %v6885
        %v6918 = vpack.c.b16 %v6886, %v6886
        %v6919 = vpack.c.b16 %v6887, %v6887
        %v6920 = vpack.c.b16 %v6888, %v6888
        %v6921 = vpack.c.b16 %v6889, %v6889
        %v6922 = vpack.c.b16 %v6890, %v6890
        %v6923 = vpack.c.b16 %v6891, %v6891
        %v6924 = vpack.c.b16 %v6892, %v6892
        %v6925 = vpack.c.b16 %v6893, %v6893
        %v6926 = vpack.c.b16 %v6894, %v6894
        %v6927 = vpack.c.b16 %v6895, %v6895
        %v6928 = vpack.c.b16 %v6896, %v6896
        %v6929 = vpack.c.b16 %v6897, %v6897
        %v6930 = vpack.c.b16 %v6898, %v6898
        %v6931 = vpack.c.b16 %v6899, %v6899
        %v6932 = vpack.c.b16 %v6900, %v6900
        %v6933 = vpack.c.b16 %v6901, %v6901
        %v6934 = vpack.c.b16 %v6902, %v6902
        %v6935 = vpack.c.b16 %v6903, %v6903
        %v6936 = vpack.c.b16 %v6904, %v6904
        %v6937 = vpack.c.b16 %v6905, %v6905
        %v6938 = vpack.c.b16 %v6906, %v6906
        %v6939 = vpack.c.b16 %v6907, %v6907
        %v6940 = vpack.c.b16 %v6908, %v6908
        %v6941 = vpack.c.b16 %v6909, %v6909
        %v6942 = vpack.c.b16 %v6910, %v6910
        %v6943 = vpack.c.b16 %v6911, %v6911
        %6976 = vst.msk [vmem:[%s379] sm:$0xf] %vm440, %v6912
        %6977 = vst.msk [vmem:[%s379 + $0x4] sm:$0xf] %vm440, %v6913
        %6978 = vst.msk [vmem:[%s379 + $0x8] sm:$0xf] %vm440, %v6914
        %6979 = vst.msk [vmem:[%s379 + $0xc] sm:$0xf] %vm440, %v6915
        %6980 = vst.msk [vmem:[%s379 + $0x10] sm:$0xf] %vm440, %v6916
        %6981 = vst.msk [vmem:[%s379 + $0x14] sm:$0xf] %vm440, %v6917
        %6982 = vst.msk [vmem:[%s379 + $0x18] sm:$0xf] %vm440, %v6918
        %6983 = vst.msk [vmem:[%s379 + $0x1c] sm:$0xf] %vm440, %v6919
        %6984 = vst.msk [vmem:[%s379 + $0x20] sm:$0xf] %vm440, %v6920
        %6985 = vst.msk [vmem:[%s379 + $0x24] sm:$0xf] %vm440, %v6921
        %6986 = vst.msk [vmem:[%s379 + $0x28] sm:$0xf] %vm440, %v6922
        %6987 = vst.msk [vmem:[%s379 + $0x2c] sm:$0xf] %vm440, %v6923
        %6988 = vst.msk [vmem:[%s379 + $0x30] sm:$0xf] %vm440, %v6924
        %6989 = vst.msk [vmem:[%s379 + $0x34] sm:$0xf] %vm440, %v6925
        %6990 = vst.msk [vmem:[%s379 + $0x38] sm:$0xf] %vm440, %v6926
        %6991 = vst.msk [vmem:[%s379 + $0x3c] sm:$0xf] %vm440, %v6927
        %6992 = vst.msk [vmem:[%s379 + $0x40] sm:$0xf] %vm440, %v6928
        %6993 = vst.msk [vmem:[%s379 + $0x44] sm:$0xf] %vm440, %v6929
        %6994 = vst.msk [vmem:[%s379 + $0x48] sm:$0xf] %vm440, %v6930
        %6995 = vst.msk [vmem:[%s379 + $0x4c] sm:$0xf] %vm440, %v6931
        %6996 = vst.msk [vmem:[%s379 + $0x50] sm:$0xf] %vm440, %v6932
        %6997 = vst.msk [vmem:[%s379 + $0x54] sm:$0xf] %vm440, %v6933
        %6998 = vst.msk [vmem:[%s379 + $0x58] sm:$0xf] %vm440, %v6934
        %6999 = vst.msk [vmem:[%s379 + $0x5c] sm:$0xf] %vm440, %v6935
        %7000 = vst.msk [vmem:[%s379 + $0x60] sm:$0xf] %vm440, %v6936
        %7001 = vst.msk [vmem:[%s379 + $0x64] sm:$0xf] %vm440, %v6937
        %7002 = vst.msk [vmem:[%s379 + $0x68] sm:$0xf] %vm440, %v6938
        %7003 = vst.msk [vmem:[%s379 + $0x6c] sm:$0xf] %vm440, %v6939
        %7004 = vst.msk [vmem:[%s379 + $0x70] sm:$0xf] %vm440, %v6940
        %7005 = vst.msk [vmem:[%s379 + $0x74] sm:$0xf] %vm440, %v6941
        %7006 = vst.msk [vmem:[%s379 + $0x78] sm:$0xf] %vm440, %v6942
        %7007 = vst.msk [vmem:[%s379 + $0x7c] sm:$0xf] %vm440, %v6943
        %v7008 = vld [vmem:[%s9] sm:$0xff]
        %v7009 = vld [vmem:[%s9 + $0x8] sm:$0xff]
        %v7010 = vld [vmem:[%s9 + $0x10] sm:$0xff]
        %v7011 = vld [vmem:[%s9 + $0x18] sm:$0xff]
        %v7013 = vsel %vm2263, %v6745, 0
        %7015 = vmatprep.subr.mxu0 0.0
        %7016 = vmatpush1.msra.mxu0 0.0
        %7017 = vmatprep.subr.mxu0 0.0
        %7018 = vmatpush1.msra.mxu0 0.0
        %7019 = vmatprep.subr.mxu0 0.0
        %7020 = vmatpush1.msra.mxu0 0.0
        %7021 = vmatprep.subr.mxu0 0.0
        %7022 = vmatpush1.msra.mxu0 0.0
        %7023 = vmatprep.subr.mxu0 0.0
        %7024 = vmatpush1.msra.mxu0 0.0
        %7025 = vmatprep.subr.mxu0 0.0
        %7026 = vmatpush1.msra.mxu0 0.0
        %7027 = vmatprep.subr.mxu0 0.0
        %7028 = vmatpush1.msra.mxu0 0.0
        %7029 = vmatprep.subr.mxu0 0.0
        %7030 = vmatpush1.msra.mxu0 0.0
        %7031 = vmatprep.subr.mxu0 0.0
        %7032 = vmatpush1.msra.mxu0 0.0
        %7033 = vmatprep.subr.mxu0 0.0
        %7034 = vmatpush1.msra.mxu0 0.0
        %7035 = vmatprep.subr.mxu0 0.0
        %7036 = vmatpush1.msra.mxu0 0.0
        %7037 = vmatprep.subr.mxu0 0.0
        %7038 = vmatpush1.msra.mxu0 0.0
        %7039 = vmatprep.subr.mxu0 0.0
        %7040 = vmatpush1.msra.mxu0 %v7011
        %7041 = vmatprep.subr.mxu0 0.0
        %7042 = vmatpush1.msra.mxu0 %v7010
        %7043 = vmatprep.subr.mxu0 0.0
        %7044 = vmatpush1.msra.mxu0 %v7009
        %7045 = vmatprep.subr.mxu0 0.0
        %7046 = vmatpush1.msra.mxu0 %v7008
        %7047 = vmatprep.subr.mxu0 0.0
        %7048 = vmatpush2.msra.mxu0 0.0
        %7049 = vmatprep.subr.mxu0 0.0
        %7050 = vmatpush2.msra.mxu0 0.0
        %7051 = vmatprep.subr.mxu0 0.0
        %7052 = vmatpush2.msra.mxu0 0.0
        %7053 = vmatprep.subr.mxu0 0.0
        %7054 = vmatpush2.msra.mxu0 0.0
        %7055 = vmatprep.subr.mxu0 0.0
        %7056 = vmatpush2.msra.mxu0 0.0
        %7057 = vmatprep.subr.mxu0 0.0
        %7058 = vmatpush2.msra.mxu0 0.0
        %7059 = vmatprep.subr.mxu0 0.0
        %7060 = vmatpush2.msra.mxu0 0.0
        %7061 = vmatprep.subr.mxu0 0.0
        %7062 = vmatpush2.msra.mxu0 0.0
        %7063 = vmatprep.subr.mxu0 0.0
        %7064 = vmatpush2.msra.mxu0 0.0
        %7065 = vmatprep.subr.mxu0 0.0
        %7066 = vmatpush2.msra.mxu0 0.0
        %7067 = vmatprep.subr.mxu0 0.0
        %7068 = vmatpush2.msra.mxu0 0.0
        %7069 = vmatprep.subr.mxu0 0.0
        %7070 = vmatpush2.msra.mxu0 0.0
        %7071 = vmatprep.subr.mxu0 0.0
        %7072 = vmatpush2.msra.mxu0 0.0
        %7073 = vmatprep.subr.mxu0 0.0
        %7074 = vmatpush2.msra.mxu0 0.0
        %7075 = vmatprep.subr.mxu0 0.0
        %7076 = vmatpush2.msra.mxu0 0.0
        %7077 = vmatprep.subr.mxu0 0.0
        %7078 = vmatpush2.msra.mxu0 0.0
        %7079 = vmatprep.mubr.f32.mxu0 0.0
        %7080 = vmatmul.mubr.f32.gmra.mxu0 %v7013
        %v7081 = vpop.f32.mrf.mxu0
        %v7082 = vadd.f32 0.0, %v7081
        %v7083 = vpop.f32.mrf.mxu0
        %7084 = vdwg.mxu0
        %v7086 = vsel %vm2263, %v6847, 0
        %7088 = vmatprep.subr.mxu0 0.0
        %7089 = vmatpush1.msra.mxu0 0.0
        %7090 = vmatprep.subr.mxu0 0.0
        %7091 = vmatpush1.msra.mxu0 0.0
        %7092 = vmatprep.subr.mxu0 0.0
        %7093 = vmatpush1.msra.mxu0 0.0
        %7094 = vmatprep.subr.mxu0 0.0
        %7095 = vmatpush1.msra.mxu0 0.0
        %7096 = vmatprep.subr.mxu0 0.0
        %7097 = vmatpush1.msra.mxu0 0.0
        %7098 = vmatprep.subr.mxu0 0.0
        %7099 = vmatpush1.msra.mxu0 0.0
        %7100 = vmatprep.subr.mxu0 0.0
        %7101 = vmatpush1.msra.mxu0 0.0
        %7102 = vmatprep.subr.mxu0 0.0
        %7103 = vmatpush1.msra.mxu0 0.0
        %7104 = vmatprep.subr.mxu0 0.0
        %7105 = vmatpush1.msra.mxu0 0.0
        %7106 = vmatprep.subr.mxu0 0.0
        %7107 = vmatpush1.msra.mxu0 0.0
        %7108 = vmatprep.subr.mxu0 0.0
        %7109 = vmatpush1.msra.mxu0 0.0
        %7110 = vmatprep.subr.mxu0 0.0
        %7111 = vmatpush1.msra.mxu0 0.0
        %7112 = vmatprep.subr.mxu0 0.0
        %7113 = vmatpush1.msra.mxu0 %v7011
        %7114 = vmatprep.subr.mxu0 0.0
        %7115 = vmatpush1.msra.mxu0 %v7010
        %7116 = vmatprep.subr.mxu0 0.0
        %7117 = vmatpush1.msra.mxu0 %v7009
        %7118 = vmatprep.subr.mxu0 0.0
        %7119 = vmatpush1.msra.mxu0 %v7008
        %7120 = vmatprep.subr.mxu0 0.0
        %7121 = vmatpush2.msra.mxu0 0.0
        %7122 = vmatprep.subr.mxu0 0.0
        %7123 = vmatpush2.msra.mxu0 0.0
        %7124 = vmatprep.subr.mxu0 0.0
        %7125 = vmatpush2.msra.mxu0 0.0
        %7126 = vmatprep.subr.mxu0 0.0
        %7127 = vmatpush2.msra.mxu0 0.0
        %7128 = vmatprep.subr.mxu0 0.0
        %7129 = vmatpush2.msra.mxu0 0.0
        %7130 = vmatprep.subr.mxu0 0.0
        %7131 = vmatpush2.msra.mxu0 0.0
        %7132 = vmatprep.subr.mxu0 0.0
        %7133 = vmatpush2.msra.mxu0 0.0
        %7134 = vmatprep.subr.mxu0 0.0
        %7135 = vmatpush2.msra.mxu0 0.0
        %7136 = vmatprep.subr.mxu0 0.0
        %7137 = vmatpush2.msra.mxu0 0.0
        %7138 = vmatprep.subr.mxu0 0.0
        %7139 = vmatpush2.msra.mxu0 0.0
        %7140 = vmatprep.subr.mxu0 0.0
        %7141 = vmatpush2.msra.mxu0 0.0
        %7142 = vmatprep.subr.mxu0 0.0
        %7143 = vmatpush2.msra.mxu0 0.0
        %7144 = vmatprep.subr.mxu0 0.0
        %7145 = vmatpush2.msra.mxu0 0.0
        %7146 = vmatprep.subr.mxu0 0.0
        %7147 = vmatpush2.msra.mxu0 0.0
        %7148 = vmatprep.subr.mxu0 0.0
        %7149 = vmatpush2.msra.mxu0 0.0
        %7150 = vmatprep.subr.mxu0 0.0
        %7151 = vmatpush2.msra.mxu0 0.0
        %7152 = vmatprep.mubr.f32.mxu0 0.0
        %7153 = vmatmul.mubr.f32.gmra.mxu0 %v7086
        %v7154 = vpop.f32.mrf.mxu0
        %v7155 = vadd.f32 0.0, %v7154
        %v7156 = vpop.f32.mrf.mxu0
        %7157 = vdwg.mxu0
        %v7158 = vmul.f32 %v7082, %v3595
        %v7159 = vmul.f32 %v7155, %v3595
        %v7160 = vmul.f32 %v7158, %v7158
        %v7161 = vsub.f32 %v7159, %v7160
        %v7162 = vmax.f32 %v7161, 0.0
        %v7163 = vadd.f32 %v7162, 1e-05
        %v7164 = vrsqrt.pop %v7163
        %v7165 = vld [vmem:[%s10] sm:$0xff]
        %v7166 = vld [vmem:[%s10 + $0x8] sm:$0xff]
        %v7168 = vsel %vm2230, %v7158, 0
        %7170 = vmatprep.subr.mxu0 0.0
        %7171 = vmatpush1.msra.mxu0 0.0
        %7172 = vmatprep.subr.mxu0 0.0
        %7173 = vmatpush1.msra.mxu0 0.0
        %7174 = vmatprep.subr.mxu0 0.0
        %7175 = vmatpush1.msra.mxu0 0.0
        %7176 = vmatprep.subr.mxu0 0.0
        %7177 = vmatpush1.msra.mxu0 0.0
        %7178 = vmatprep.subr.mxu0 0.0
        %7179 = vmatpush1.msra.mxu0 0.0
        %7180 = vmatprep.subr.mxu0 0.0
        %7181 = vmatpush1.msra.mxu0 0.0
        %7182 = vmatprep.subr.mxu0 0.0
        %7183 = vmatpush1.msra.mxu0 0.0
        %7184 = vmatprep.subr.mxu0 0.0
        %7185 = vmatpush1.msra.mxu0 0.0
        %7186 = vmatprep.subr.mxu0 0.0
        %7187 = vmatpush1.msra.mxu0 0.0
        %7188 = vmatprep.subr.mxu0 0.0
        %7189 = vmatpush1.msra.mxu0 0.0
        %7190 = vmatprep.subr.mxu0 0.0
        %7191 = vmatpush1.msra.mxu0 0.0
        %7192 = vmatprep.subr.mxu0 0.0
        %7193 = vmatpush1.msra.mxu0 0.0
        %7194 = vmatprep.subr.mxu0 0.0
        %7195 = vmatpush1.msra.mxu0 0.0
        %7196 = vmatprep.subr.mxu0 0.0
        %7197 = vmatpush1.msra.mxu0 0.0
        %7198 = vmatprep.subr.mxu0 0.0
        %7199 = vmatpush1.msra.mxu0 %v7166
        %7200 = vmatprep.subr.mxu0 0.0
        %7201 = vmatpush1.msra.mxu0 %v7165
        %7202 = vmatprep.subr.mxu0 0.0
        %7203 = vmatpush2.msra.mxu0 0.0
        %7204 = vmatprep.subr.mxu0 0.0
        %7205 = vmatpush2.msra.mxu0 0.0
        %7206 = vmatprep.subr.mxu0 0.0
        %7207 = vmatpush2.msra.mxu0 0.0
        %7208 = vmatprep.subr.mxu0 0.0
        %7209 = vmatpush2.msra.mxu0 0.0
        %7210 = vmatprep.subr.mxu0 0.0
        %7211 = vmatpush2.msra.mxu0 0.0
        %7212 = vmatprep.subr.mxu0 0.0
        %7213 = vmatpush2.msra.mxu0 0.0
        %7214 = vmatprep.subr.mxu0 0.0
        %7215 = vmatpush2.msra.mxu0 0.0
        %7216 = vmatprep.subr.mxu0 0.0
        %7217 = vmatpush2.msra.mxu0 0.0
        %7218 = vmatprep.subr.mxu0 0.0
        %7219 = vmatpush2.msra.mxu0 0.0
        %7220 = vmatprep.subr.mxu0 0.0
        %7221 = vmatpush2.msra.mxu0 0.0
        %7222 = vmatprep.subr.mxu0 0.0
        %7223 = vmatpush2.msra.mxu0 0.0
        %7224 = vmatprep.subr.mxu0 0.0
        %7225 = vmatpush2.msra.mxu0 0.0
        %7226 = vmatprep.subr.mxu0 0.0
        %7227 = vmatpush2.msra.mxu0 0.0
        %7228 = vmatprep.subr.mxu0 0.0
        %7229 = vmatpush2.msra.mxu0 0.0
        %7230 = vmatprep.subr.mxu0 0.0
        %7231 = vmatpush2.msra.mxu0 0.0
        %7232 = vmatprep.subr.mxu0 0.0
        %7233 = vmatpush2.msra.mxu0 0.0
        %7234 = vmatprep.mubr.f32.mxu0 0.0
        %7235 = vmatmul.mubr.f32.gmra.mxu0 %v7168
        %v7236 = vpop.f32.mrf.mxu0
        %v7237 = vadd.f32 0.0, %v7236
        %v7238 = vpop.f32.mrf.mxu0
        %7239 = vdwg.mxu0
        %v7241 = vsel %vm2230, %v7164, 0
        %7243 = vmatprep.subr.mxu0 0.0
        %7244 = vmatpush1.msra.mxu0 0.0
        %7245 = vmatprep.subr.mxu0 0.0
        %7246 = vmatpush1.msra.mxu0 0.0
        %7247 = vmatprep.subr.mxu0 0.0
        %7248 = vmatpush1.msra.mxu0 0.0
        %7249 = vmatprep.subr.mxu0 0.0
        %7250 = vmatpush1.msra.mxu0 0.0
        %7251 = vmatprep.subr.mxu0 0.0
        %7252 = vmatpush1.msra.mxu0 0.0
        %7253 = vmatprep.subr.mxu0 0.0
        %7254 = vmatpush1.msra.mxu0 0.0
        %7255 = vmatprep.subr.mxu0 0.0
        %7256 = vmatpush1.msra.mxu0 0.0
        %7257 = vmatprep.subr.mxu0 0.0
        %7258 = vmatpush1.msra.mxu0 0.0
        %7259 = vmatprep.subr.mxu0 0.0
        %7260 = vmatpush1.msra.mxu0 0.0
        %7261 = vmatprep.subr.mxu0 0.0
        %7262 = vmatpush1.msra.mxu0 0.0
        %7263 = vmatprep.subr.mxu0 0.0
        %7264 = vmatpush1.msra.mxu0 0.0
        %7265 = vmatprep.subr.mxu0 0.0
        %7266 = vmatpush1.msra.mxu0 0.0
        %7267 = vmatprep.subr.mxu0 0.0
        %7268 = vmatpush1.msra.mxu0 0.0
        %7269 = vmatprep.subr.mxu0 0.0
        %7270 = vmatpush1.msra.mxu0 0.0
        %7271 = vmatprep.subr.mxu0 0.0
        %7272 = vmatpush1.msra.mxu0 %v7166
        %7273 = vmatprep.subr.mxu0 0.0
        %7274 = vmatpush1.msra.mxu0 %v7165
        %7275 = vmatprep.subr.mxu0 0.0
        %7276 = vmatpush2.msra.mxu0 0.0
        %7277 = vmatprep.subr.mxu0 0.0
        %7278 = vmatpush2.msra.mxu0 0.0
        %7279 = vmatprep.subr.mxu0 0.0
        %7280 = vmatpush2.msra.mxu0 0.0
        %7281 = vmatprep.subr.mxu0 0.0
        %7282 = vmatpush2.msra.mxu0 0.0
        %7283 = vmatprep.subr.mxu0 0.0
        %7284 = vmatpush2.msra.mxu0 0.0
        %7285 = vmatprep.subr.mxu0 0.0
        %7286 = vmatpush2.msra.mxu0 0.0
        %7287 = vmatprep.subr.mxu0 0.0
        %7288 = vmatpush2.msra.mxu0 0.0
        %7289 = vmatprep.subr.mxu0 0.0
        %7290 = vmatpush2.msra.mxu0 0.0
        %7291 = vmatprep.subr.mxu0 0.0
        %7292 = vmatpush2.msra.mxu0 0.0
        %7293 = vmatprep.subr.mxu0 0.0
        %7294 = vmatpush2.msra.mxu0 0.0
        %7295 = vmatprep.subr.mxu0 0.0
        %7296 = vmatpush2.msra.mxu0 0.0
        %7297 = vmatprep.subr.mxu0 0.0
        %7298 = vmatpush2.msra.mxu0 0.0
        %7299 = vmatprep.subr.mxu0 0.0
        %7300 = vmatpush2.msra.mxu0 0.0
        %7301 = vmatprep.subr.mxu0 0.0
        %7302 = vmatpush2.msra.mxu0 0.0
        %7303 = vmatprep.subr.mxu0 0.0
        %7304 = vmatpush2.msra.mxu0 0.0
        %7305 = vmatprep.subr.mxu0 0.0
        %7306 = vmatpush2.msra.mxu0 0.0
        %7307 = vmatprep.mubr.f32.mxu0 0.0
        %7308 = vmatmul.mubr.f32.gmra.mxu0 %v7241
        %v7309 = vpop.f32.mrf.mxu0
        %v7310 = vadd.f32 0.0, %v7309
        %v7311 = vpop.f32.mrf.mxu0
        %7312 = vdwg.mxu0
        %v7313 = vld [vmem:[%s7] sm:$0x1]
        %v7314 = vmul.f32 %v7310, %v7313
        %v7315 = vld [vmem:[%s8] sm:$0x1]
        %v7316 = vmul.f32 %v7237, %v7314
        %v7317 = vsub.f32 %v7315, %v7316
        %v7318 = vld [vmem:[%s379] sm:$0xf]
        %v7319 = vld [vmem:[%s379 + $0x4] sm:$0xf]
        %v7320 = vld [vmem:[%s379 + $0x8] sm:$0xf]
        %v7321 = vld [vmem:[%s379 + $0xc] sm:$0xf]
        %v7322 = vld [vmem:[%s379 + $0x10] sm:$0xf]
        %v7323 = vld [vmem:[%s379 + $0x14] sm:$0xf]
        %v7324 = vld [vmem:[%s379 + $0x18] sm:$0xf]
        %v7325 = vld [vmem:[%s379 + $0x1c] sm:$0xf]
        %v7326 = vld [vmem:[%s379 + $0x20] sm:$0xf]
        %v7327 = vld [vmem:[%s379 + $0x24] sm:$0xf]
        %v7328 = vld [vmem:[%s379 + $0x28] sm:$0xf]
        %v7329 = vld [vmem:[%s379 + $0x2c] sm:$0xf]
        %v7330 = vld [vmem:[%s379 + $0x30] sm:$0xf]
        %v7331 = vld [vmem:[%s379 + $0x34] sm:$0xf]
        %v7332 = vld [vmem:[%s379 + $0x38] sm:$0xf]
        %v7333 = vld [vmem:[%s379 + $0x3c] sm:$0xf]
        %v7334 = vld [vmem:[%s379 + $0x40] sm:$0xf]
        %v7335 = vld [vmem:[%s379 + $0x44] sm:$0xf]
        %v7336 = vld [vmem:[%s379 + $0x48] sm:$0xf]
        %v7337 = vld [vmem:[%s379 + $0x4c] sm:$0xf]
        %v7338 = vld [vmem:[%s379 + $0x50] sm:$0xf]
        %v7339 = vld [vmem:[%s379 + $0x54] sm:$0xf]
        %v7340 = vld [vmem:[%s379 + $0x58] sm:$0xf]
        %v7341 = vld [vmem:[%s379 + $0x5c] sm:$0xf]
        %v7342 = vld [vmem:[%s379 + $0x60] sm:$0xf]
        %v7343 = vld [vmem:[%s379 + $0x64] sm:$0xf]
        %v7344 = vld [vmem:[%s379 + $0x68] sm:$0xf]
        %v7345 = vld [vmem:[%s379 + $0x6c] sm:$0xf]
        %v7346 = vld [vmem:[%s379 + $0x70] sm:$0xf]
        %v7347 = vld [vmem:[%s379 + $0x74] sm:$0xf]
        %v7348 = vld [vmem:[%s379 + $0x78] sm:$0xf]
        %v7349 = vld [vmem:[%s379 + $0x7c] sm:$0xf]
        %v7350 = vunpack.c.l.bf16 %v7318
        %v7351 = vunpack.c.l.bf16 %v7319
        %v7352 = vunpack.c.l.bf16 %v7320
        %v7353 = vunpack.c.l.bf16 %v7321
        %v7354 = vunpack.c.l.bf16 %v7322
        %v7355 = vunpack.c.l.bf16 %v7323
        %v7356 = vunpack.c.l.bf16 %v7324
        %v7357 = vunpack.c.l.bf16 %v7325
        %v7358 = vunpack.c.l.bf16 %v7326
        %v7359 = vunpack.c.l.bf16 %v7327
        %v7360 = vunpack.c.l.bf16 %v7328
        %v7361 = vunpack.c.l.bf16 %v7329
        %v7362 = vunpack.c.l.bf16 %v7330
        %v7363 = vunpack.c.l.bf16 %v7331
        %v7364 = vunpack.c.l.bf16 %v7332
        %v7365 = vunpack.c.l.bf16 %v7333
        %v7366 = vunpack.c.l.bf16 %v7334
        %v7367 = vunpack.c.l.bf16 %v7335
        %v7368 = vunpack.c.l.bf16 %v7336
        %v7369 = vunpack.c.l.bf16 %v7337
        %v7370 = vunpack.c.l.bf16 %v7338
        %v7371 = vunpack.c.l.bf16 %v7339
        %v7372 = vunpack.c.l.bf16 %v7340
        %v7373 = vunpack.c.l.bf16 %v7341
        %v7374 = vunpack.c.l.bf16 %v7342
        %v7375 = vunpack.c.l.bf16 %v7343
        %v7376 = vunpack.c.l.bf16 %v7344
        %v7377 = vunpack.c.l.bf16 %v7345
        %v7378 = vunpack.c.l.bf16 %v7346
        %v7379 = vunpack.c.l.bf16 %v7347
        %v7380 = vunpack.c.l.bf16 %v7348
        %v7381 = vunpack.c.l.bf16 %v7349
        %v7382 = vlaneseq
        %v7383 = vshrl.u32 %v7382, 7
        %v7384 = vsub.s32 0, %v7383
        %v7385 = vrot.slane %v7314, %v7384
        %v7386 = vmul.f32 %v7350, %v7385
        %v7387 = vmul.f32 %v7351, %v7385
        %v7388 = vmul.f32 %v7352, %v7385
        %v7389 = vmul.f32 %v7353, %v7385
        %v7390 = vmul.f32 %v7354, %v7385
        %v7391 = vmul.f32 %v7355, %v7385
        %v7392 = vmul.f32 %v7356, %v7385
        %v7393 = vmul.f32 %v7357, %v7385
        %v7394 = vmul.f32 %v7358, %v7385
        %v7395 = vmul.f32 %v7359, %v7385
        %v7396 = vmul.f32 %v7360, %v7385
        %v7397 = vmul.f32 %v7361, %v7385
        %v7398 = vmul.f32 %v7362, %v7385
        %v7399 = vmul.f32 %v7363, %v7385
        %v7400 = vmul.f32 %v7364, %v7385
        %v7401 = vmul.f32 %v7365, %v7385
        %v7402 = vmul.f32 %v7366, %v7385
        %v7403 = vmul.f32 %v7367, %v7385
        %v7404 = vmul.f32 %v7368, %v7385
        %v7405 = vmul.f32 %v7369, %v7385
        %v7406 = vmul.f32 %v7370, %v7385
        %v7407 = vmul.f32 %v7371, %v7385
        %v7408 = vmul.f32 %v7372, %v7385
        %v7409 = vmul.f32 %v7373, %v7385
        %v7410 = vmul.f32 %v7374, %v7385
        %v7411 = vmul.f32 %v7375, %v7385
        %v7412 = vmul.f32 %v7376, %v7385
        %v7413 = vmul.f32 %v7377, %v7385
        %v7414 = vmul.f32 %v7378, %v7385
        %v7415 = vmul.f32 %v7379, %v7385
        %v7416 = vmul.f32 %v7380, %v7385
        %v7417 = vmul.f32 %v7381, %v7385
        %v7419 = vlaneseq
        %v7420 = vshrl.u32 %v7419, 7
        %v7421 = vsub.s32 0, %v7420
        %v7422 = vrot.slane %v7317, %v7421
        %v7424 = vadd.f32 %v7386, %v7422
        %v7425 = vadd.f32 %v7387, %v7422
        %v7426 = vadd.f32 %v7388, %v7422
        %v7427 = vadd.f32 %v7389, %v7422
        %v7428 = vadd.f32 %v7390, %v7422
        %v7429 = vadd.f32 %v7391, %v7422
        %v7430 = vadd.f32 %v7392, %v7422
        %v7431 = vadd.f32 %v7393, %v7422
        %v7432 = vadd.f32 %v7394, %v7422
        %v7433 = vadd.f32 %v7395, %v7422
        %v7434 = vadd.f32 %v7396, %v7422
        %v7435 = vadd.f32 %v7397, %v7422
        %v7436 = vadd.f32 %v7398, %v7422
        %v7437 = vadd.f32 %v7399, %v7422
        %v7438 = vadd.f32 %v7400, %v7422
        %v7439 = vadd.f32 %v7401, %v7422
        %v7440 = vadd.f32 %v7402, %v7422
        %v7441 = vadd.f32 %v7403, %v7422
        %v7442 = vadd.f32 %v7404, %v7422
        %v7443 = vadd.f32 %v7405, %v7422
        %v7444 = vadd.f32 %v7406, %v7422
        %v7445 = vadd.f32 %v7407, %v7422
        %v7446 = vadd.f32 %v7408, %v7422
        %v7447 = vadd.f32 %v7409, %v7422
        %v7448 = vadd.f32 %v7410, %v7422
        %v7449 = vadd.f32 %v7411, %v7422
        %v7450 = vadd.f32 %v7412, %v7422
        %v7451 = vadd.f32 %v7413, %v7422
        %v7452 = vadd.f32 %v7414, %v7422
        %v7453 = vadd.f32 %v7415, %v7422
        %v7454 = vadd.f32 %v7416, %v7422
        %v7455 = vadd.f32 %v7417, %v7422
        %v7456 = vmax.f32 %v7424, 0.0
        %v7457 = vmax.f32 %v7425, 0.0
        %v7458 = vmax.f32 %v7426, 0.0
        %v7459 = vmax.f32 %v7427, 0.0
        %v7460 = vmax.f32 %v7428, 0.0
        %v7461 = vmax.f32 %v7429, 0.0
        %v7462 = vmax.f32 %v7430, 0.0
        %v7463 = vmax.f32 %v7431, 0.0
        %v7464 = vmax.f32 %v7432, 0.0
        %v7465 = vmax.f32 %v7433, 0.0
        %v7466 = vmax.f32 %v7434, 0.0
        %v7467 = vmax.f32 %v7435, 0.0
        %v7468 = vmax.f32 %v7436, 0.0
        %v7469 = vmax.f32 %v7437, 0.0
        %v7470 = vmax.f32 %v7438, 0.0
        %v7471 = vmax.f32 %v7439, 0.0
        %v7472 = vmax.f32 %v7440, 0.0
        %v7473 = vmax.f32 %v7441, 0.0
        %v7474 = vmax.f32 %v7442, 0.0
        %v7475 = vmax.f32 %v7443, 0.0
        %v7476 = vmax.f32 %v7444, 0.0
        %v7477 = vmax.f32 %v7445, 0.0
        %v7478 = vmax.f32 %v7446, 0.0
        %v7479 = vmax.f32 %v7447, 0.0
        %v7480 = vmax.f32 %v7448, 0.0
        %v7481 = vmax.f32 %v7449, 0.0
        %v7482 = vmax.f32 %v7450, 0.0
        %v7483 = vmax.f32 %v7451, 0.0
        %v7484 = vmax.f32 %v7452, 0.0
        %v7485 = vmax.f32 %v7453, 0.0
        %v7486 = vmax.f32 %v7454, 0.0
        %v7487 = vmax.f32 %v7455, 0.0
        %v7488 = vpack.c.bf16 %v7457, %v7456
        %v7489 = vpack.c.bf16 %v7459, %v7458
        %v7490 = vpack.c.bf16 %v7461, %v7460
        %v7491 = vpack.c.bf16 %v7463, %v7462
        %v7492 = vpack.c.bf16 %v7465, %v7464
        %v7493 = vpack.c.bf16 %v7467, %v7466
        %v7494 = vpack.c.bf16 %v7469, %v7468
        %v7495 = vpack.c.bf16 %v7471, %v7470
        %v7496 = vpack.c.bf16 %v7473, %v7472
        %v7497 = vpack.c.bf16 %v7475, %v7474
        %v7498 = vpack.c.bf16 %v7477, %v7476
        %v7499 = vpack.c.bf16 %v7479, %v7478
        %v7500 = vpack.c.bf16 %v7481, %v7480
        %v7501 = vpack.c.bf16 %v7483, %v7482
        %v7502 = vpack.c.bf16 %v7485, %v7484
        %v7503 = vpack.c.bf16 %v7487, %v7486
        %v7520 = vunpack.c.l.b16 %v7488
        %v7521 = vunpack.c.h.b16 %v7488
        %v7522 = vunpack.c.l.b16 %v7489
        %v7523 = vunpack.c.h.b16 %v7489
        %v7524 = vunpack.c.l.b16 %v7490
        %v7525 = vunpack.c.h.b16 %v7490
        %v7526 = vunpack.c.l.b16 %v7491
        %v7527 = vunpack.c.h.b16 %v7491
        %v7528 = vunpack.c.l.b16 %v7492
        %v7529 = vunpack.c.h.b16 %v7492
        %v7530 = vunpack.c.l.b16 %v7493
        %v7531 = vunpack.c.h.b16 %v7493
        %v7532 = vunpack.c.l.b16 %v7494
        %v7533 = vunpack.c.h.b16 %v7494
        %v7534 = vunpack.c.l.b16 %v7495
        %v7535 = vunpack.c.h.b16 %v7495
        %v7536 = vunpack.c.l.b16 %v7496
        %v7537 = vunpack.c.h.b16 %v7496
        %v7538 = vunpack.c.l.b16 %v7497
        %v7539 = vunpack.c.h.b16 %v7497
        %v7540 = vunpack.c.l.b16 %v7498
        %v7541 = vunpack.c.h.b16 %v7498
        %v7542 = vunpack.c.l.b16 %v7499
        %v7543 = vunpack.c.h.b16 %v7499
        %v7544 = vunpack.c.l.b16 %v7500
        %v7545 = vunpack.c.h.b16 %v7500
        %v7546 = vunpack.c.l.b16 %v7501
        %v7547 = vunpack.c.h.b16 %v7501
        %v7548 = vunpack.c.l.b16 %v7502
        %v7549 = vunpack.c.h.b16 %v7502
        %v7550 = vunpack.c.l.b16 %v7503
        %v7551 = vunpack.c.h.b16 %v7503
        %v7552 = vpack.c.b16 %v7520, %v7520
        %v7553 = vpack.c.b16 %v7521, %v7521
        %v7554 = vpack.c.b16 %v7522, %v7522
        %v7555 = vpack.c.b16 %v7523, %v7523
        %v7556 = vpack.c.b16 %v7524, %v7524
        %v7557 = vpack.c.b16 %v7525, %v7525
        %v7558 = vpack.c.b16 %v7526, %v7526
        %v7559 = vpack.c.b16 %v7527, %v7527
        %v7560 = vpack.c.b16 %v7528, %v7528
        %v7561 = vpack.c.b16 %v7529, %v7529
        %v7562 = vpack.c.b16 %v7530, %v7530
        %v7563 = vpack.c.b16 %v7531, %v7531
        %v7564 = vpack.c.b16 %v7532, %v7532
        %v7565 = vpack.c.b16 %v7533, %v7533
        %v7566 = vpack.c.b16 %v7534, %v7534
        %v7567 = vpack.c.b16 %v7535, %v7535
        %v7568 = vpack.c.b16 %v7536, %v7536
        %v7569 = vpack.c.b16 %v7537, %v7537
        %v7570 = vpack.c.b16 %v7538, %v7538
        %v7571 = vpack.c.b16 %v7539, %v7539
        %v7572 = vpack.c.b16 %v7540, %v7540
        %v7573 = vpack.c.b16 %v7541, %v7541
        %v7574 = vpack.c.b16 %v7542, %v7542
        %v7575 = vpack.c.b16 %v7543, %v7543
        %v7576 = vpack.c.b16 %v7544, %v7544
        %v7577 = vpack.c.b16 %v7545, %v7545
        %v7578 = vpack.c.b16 %v7546, %v7546
        %v7579 = vpack.c.b16 %v7547, %v7547
        %v7580 = vpack.c.b16 %v7548, %v7548
        %v7581 = vpack.c.b16 %v7549, %v7549
        %v7582 = vpack.c.b16 %v7550, %v7550
        %v7583 = vpack.c.b16 %v7551, %v7551
        %7616 = vst.msk [vmem:[%s379] sm:$0xf] %vm440, %v7552
        %7617 = vst.msk [vmem:[%s379 + $0x4] sm:$0xf] %vm440, %v7553
        %7618 = vst.msk [vmem:[%s379 + $0x8] sm:$0xf] %vm440, %v7554
        %7619 = vst.msk [vmem:[%s379 + $0xc] sm:$0xf] %vm440, %v7555
        %7620 = vst.msk [vmem:[%s379 + $0x10] sm:$0xf] %vm440, %v7556
        %7621 = vst.msk [vmem:[%s379 + $0x14] sm:$0xf] %vm440, %v7557
        %7622 = vst.msk [vmem:[%s379 + $0x18] sm:$0xf] %vm440, %v7558
        %7623 = vst.msk [vmem:[%s379 + $0x1c] sm:$0xf] %vm440, %v7559
        %7624 = vst.msk [vmem:[%s379 + $0x20] sm:$0xf] %vm440, %v7560
        %7625 = vst.msk [vmem:[%s379 + $0x24] sm:$0xf] %vm440, %v7561
        %7626 = vst.msk [vmem:[%s379 + $0x28] sm:$0xf] %vm440, %v7562
        %7627 = vst.msk [vmem:[%s379 + $0x2c] sm:$0xf] %vm440, %v7563
        %7628 = vst.msk [vmem:[%s379 + $0x30] sm:$0xf] %vm440, %v7564
        %7629 = vst.msk [vmem:[%s379 + $0x34] sm:$0xf] %vm440, %v7565
        %7630 = vst.msk [vmem:[%s379 + $0x38] sm:$0xf] %vm440, %v7566
        %7631 = vst.msk [vmem:[%s379 + $0x3c] sm:$0xf] %vm440, %v7567
        %7632 = vst.msk [vmem:[%s379 + $0x40] sm:$0xf] %vm440, %v7568
        %7633 = vst.msk [vmem:[%s379 + $0x44] sm:$0xf] %vm440, %v7569
        %7634 = vst.msk [vmem:[%s379 + $0x48] sm:$0xf] %vm440, %v7570
        %7635 = vst.msk [vmem:[%s379 + $0x4c] sm:$0xf] %vm440, %v7571
        %7636 = vst.msk [vmem:[%s379 + $0x50] sm:$0xf] %vm440, %v7572
        %7637 = vst.msk [vmem:[%s379 + $0x54] sm:$0xf] %vm440, %v7573
        %7638 = vst.msk [vmem:[%s379 + $0x58] sm:$0xf] %vm440, %v7574
        %7639 = vst.msk [vmem:[%s379 + $0x5c] sm:$0xf] %vm440, %v7575
        %7640 = vst.msk [vmem:[%s379 + $0x60] sm:$0xf] %vm440, %v7576
        %7641 = vst.msk [vmem:[%s379 + $0x64] sm:$0xf] %vm440, %v7577
        %7642 = vst.msk [vmem:[%s379 + $0x68] sm:$0xf] %vm440, %v7578
        %7643 = vst.msk [vmem:[%s379 + $0x6c] sm:$0xf] %vm440, %v7579
        %7644 = vst.msk [vmem:[%s379 + $0x70] sm:$0xf] %vm440, %v7580
        %7645 = vst.msk [vmem:[%s379 + $0x74] sm:$0xf] %vm440, %v7581
        %7646 = vst.msk [vmem:[%s379 + $0x78] sm:$0xf] %vm440, %v7582
        %7647 = vst.msk [vmem:[%s379 + $0x7c] sm:$0xf] %vm440, %v7583
        %s7648 = sand.u32 %s269, 1
        %s7649 = scalar_lea.sflag [#allocation4], %s7648
        %s7650 = sand.u32 %s269, 1
        %s7651 = smul.addr %s7650, 128
        %s7652 = scalar_lea.vmem [#allocation3], %s7651
        // Predicated region
        $region65: #{tpu_custom_call.1} parent=63 // pred_check
          %p7653 = pneg %p279
        $region66: #{tpu_custom_call.1} parent=63 // pred_check_branch
          %7655 = sbr.rel (%p7653) target = $region68
        $region67: #{tpu_custom_call.1} parent=63 // pred_region
          %s7657 = ssub.s32 2048, 2048
          %7658 = vsyncadd %s7649, %s7657
          %s7659 = smul.addr %s25, 32
          %s7660 = smul.addr %s7659, 64
          %s7661 = scalar_lea.hbm %s11, %s7660
          %s7662 = sshll.u32 %s7652, 4
          %s7663 = int_to_ptr.vmem [resolvable:$true] %s7662
          %7668 = dma.vmem_to_hbm [thread:$0]  %s7663, 2048, %s7661, %s7649, 64, 64, 4
        $region68: #{tpu_custom_call.1} parent=63 // pred_fallthru
          _
      $region64: #{tpu_custom_call.1} parent=5 // pred_fallthru
        _
      %p7669 = scmp.le.s32.totalorder 2, %s20
      // Predicated region
      $region69: #{tpu_custom_call.1} parent=5 // pred_check
        %p7670 = pneg %p7669
      $region70: #{tpu_custom_call.1} parent=5 // pred_check_branch
        %7672 = sbr.rel (%p7670) target = $region72
      $region71: #{tpu_custom_call.1} parent=5 // pred_region
        %s7673 = ssub.s32 %s20, 2
        // Predicated region
        $region73: #{tpu_custom_call.1} parent=71 // pred_check
          %p7674 = pneg %p285
        $region74: #{tpu_custom_call.1} parent=71 // pred_check_branch
          %7676 = sbr.rel (%p7674) target = $region76
        $region75: #{tpu_custom_call.1} parent=71 // pred_region
          %s7677 = sand.u32 %s270, 1
          %s7678 = scalar_lea.sflag [#allocation4], %s7677
          %s7679 = sand.u32 %s270, 1
          %s7680 = smul.addr %s7679, 128
          %s7681 = scalar_lea.vmem [#allocation3], %s7680
          %7682 = dma.done %s7678, 2048
        $region76: #{tpu_custom_call.1} parent=71 // pred_fallthru
          _
      $region72: #{tpu_custom_call.1} parent=5 // pred_fallthru
        _
    $region6: #{tpu_custom_call.1} parent=1 // loop_footer
      %s24 = sadd.s32 1, %s20
    $region7: #{tpu_custom_call.1} parent=1 // loop_footer_branch
      %19 = sbr.rel target = $region3
    $region8: #{tpu_custom_call.1} parent=1 // loop_exit
      _
    %7683 = vsyncpa [#allocation4], 1
    %s7684 = scalar_lea.sflag [#allocation4], 1
    %7685 = vsyncpa %s7684, 1

</llo_original>
